<compile_context>
chip_gen: v6e
topology: v6e:2x2x1
jax: 0.10.0
libtpu: 0.0.40
codegen_flags: <defaults>
</compile_context>

<pallas_src>
import functools
import math

import jax
import jax.numpy as jnp
from jax import lax
from jax.experimental import pallas as pl
from jax.experimental.pallas import tpu as pltpu

_VMEM = pl.BlockSpec(memory_space=pltpu.MemorySpace.VMEM)
_PARAMS_32M = pltpu.CompilerParams(vmem_limit_bytes=32 * 1024 * 1024)


def _round_up(x, m):
    return ((x + m - 1) // m) * m


# ------------------------------------------------------------------ matmul kernels
def _mm_bf16_out_kernel(a_ref, b_ref, o_ref):
    o_ref[...] = jnp.dot(a_ref[...], b_ref[...],
                         preferred_element_type=jnp.float32).astype(o_ref.dtype)


def _linear_kernel(a_ref, w_ref, b_ref, o_ref):
    o_ref[...] = (jnp.dot(a_ref[...], w_ref[...],
                          preferred_element_type=jnp.float32) + b_ref[...])


def pallas_matmul_tiled(a_bf16, b_bf16, *, row_tile_target=1024):
    """(M, K) bf16 @ (K, N) bf16 -> (M, N) bf16 (f32 accumulation in-kernel).

    M is padded up to grid_m * tm with grid_m forced EVEN (balanced 2-TC
    occupancy on v7x); the weight block is VMEM-resident (constant index_map).
    """
    M, K = a_bf16.shape
    N = b_bf16.shape[1]
    grid_m = _round_up(max(1, int(pl.cdiv(M, row_tile_target))), 2)
    tm = _round_up(int(pl.cdiv(M, grid_m)), 8)
    m_pad = tm * grid_m
    if m_pad != M:
        a_bf16 = jnp.pad(a_bf16, ((0, m_pad - M), (0, 0)))
    out = pl.pallas_call(
        _mm_bf16_out_kernel,
        out_shape=jax.ShapeDtypeStruct((m_pad, N), jnp.bfloat16),
        grid_spec=pltpu.PrefetchScalarGridSpec(
            num_scalar_prefetch=0,
            grid=(grid_m,),
            in_specs=[
                pl.BlockSpec((tm, K), lambda i: (i, 0)),
                pl.BlockSpec((K, N), lambda i: (0, 0)),   # resident weight
            ],
            out_specs=pl.BlockSpec((tm, N), lambda i: (i, 0)),
        ),
        compiler_params=pltpu.CompilerParams(
            dimension_semantics=("parallel",),
            vmem_limit_bytes=32 * 1024 * 1024,
        ),
    )(a_bf16, b_bf16)
    return out if m_pad == M else out[:M]


def pallas_linear(a_bf16, w_bf16, bias_f32):
    """Small-M linear (M is only T*B here): gridless whole-array kernel."""
    M = a_bf16.shape[0]
    N = w_bf16.shape[1]
    return pl.pallas_call(
        _linear_kernel,
        out_shape=jax.ShapeDtypeStruct((M, N), jnp.float32),
        in_specs=[_VMEM, _VMEM, _VMEM],
        out_specs=_VMEM,
        compiler_params=_PARAMS_32M,
    )(a_bf16, w_bf16, bias_f32.reshape(1, N))


# --------------------------------------- fused attention + LSTM + fc (single call)
def _att_lstm_fc_kernel(x0_ref, xe3_ref, w_ref, b_ref, fcw_ref, fcb_ref,
                        out_ref, xh_scr, last_scr, *, s, T):
    B = x0_ref.shape[0]
    Hd = s * s

    def lstm_step(h_prev, c_prev):
        # xh_scr[:, :Hd] already holds this step's LSTM input; append h_prev so
        # the two gate matmuls collapse into ONE (B, 2Hd) @ (2Hd, 4Hd) MXU op
        # (fused-weight feedback item).  Aligned 256-lane store, no concat op.
        xh_scr[:, Hd:2 * Hd] = h_prev
        gates = (jnp.dot(xh_scr[...].astype(jnp.bfloat16), w_ref[...],
                         preferred_element_type=jnp.float32) + b_ref[...])
        # PyTorch gate order: i, f, g, o -- Hd=256 keeps slices on 128-lane bounds.
        # Note: operands are cast to bf16 for the MXU (f32 accumulation); small
        # recurrent rounding drift vs. the f32 PyTorch reference is expected.
        i_g = jax.nn.sigmoid(gates[:, 0:Hd])
        f_g = jax.nn.sigmoid(gates[:, Hd:2 * Hd])
        g_g = jnp.tanh(gates[:, 2 * Hd:3 * Hd])
        o_g = jax.nn.sigmoid(gates[:, 3 * Hd:4 * Hd])
        c_new = f_g * c_prev + i_g * g_g
        h_new = o_g * jnp.tanh(c_new)
        return h_new, c_new

    # ---- t == 0 (peeled): the reference feeds the raw embedding to the LSTM
    #      with the default zero (h, c) state and NO attention at the first step.
    xh_scr[:, 0:Hd] = x0_ref[...]
    zeros = jnp.zeros((B, Hd), jnp.float32)
    h, c = lstm_step(zeros, zeros)

    # ---- t = 1..T-1: attention(x_t, h_{t-1}) -> LSTM, all inside ONE grid step
    #      (lax.fori_loop removes the per-grid-step launch overhead).
    def step(t, carry):
        h_prev, c_prev = carry
        x3 = xe3_ref[t]                               # (B, s, s) f32, pre-reshaped outside
        # (B, Hd) -> (B, s, s) relayout of h_prev (s=16 < 128 lanes).
        # TODO(synk): replace with a single lane->sublane relayout once Mosaic
        # reliably lowers that reshape; a value-level jnp.reshape of a 256-lane
        # row into (16,16) is not guaranteed to lower, so the proven narrow-store
        # path is kept (x_t's identical relayout is already hoisted out).
        for i in range(s):
            last_scr[:, i, :] = h_prev[:, i * s:(i + 1) * s]
        last3 = last_scr[...]
        # energy[b] = X3[b] @ H3[b]^T  -- tiny (s x s) bmms, f32 like the reference.
        energy = jnp.einsum('bij,bkj->bik', x3, last3,
                            preferred_element_type=jnp.float32)
        # joint softmax over the flattened (s*s) energies, numerically stable,
        # exact divide (matches F.softmax; no approx reciprocal).
        m = jnp.max(jnp.max(energy, axis=2, keepdims=True), axis=1, keepdims=True)
        p = jnp.exp(energy - m)
        denom = jnp.sum(jnp.sum(p, axis=2, keepdims=True), axis=1, keepdims=True)
        w_att = p / denom
        # output[b] = X3[b]^T @ w_att[b]
        att = jnp.einsum('bji,bjk->bik', x3, w_att,
                         preferred_element_type=jnp.float32)
        # flatten(1, -1) straight into the LSTM-input half of the concat slab.
        for j in range(s):
            xh_scr[:, j * s:(j + 1) * s] = att[:, j, :]
        return lstm_step(h_prev, c_prev)

    h, c = lax.fori_loop(1, T, step, (h, c))

    # ---- fused fc head on the final hidden state (output.squeeze(1) == h_T). ----
    out_ref[...] = (jnp.dot(h.astype(jnp.bfloat16), fcw_ref[...],
                            preferred_element_type=jnp.float32) + fcb_ref[...])


def pallas_att_lstm_fc(x0, xe3, lstm_w, lstm_b, fc_w, fc_b, s):
    # TODO(synk): for very long T on v7x (64 MiB VMEM), stream xe3 in
    # double-buffered slabs via manual DMA instead of keeping it fully resident;
    # at the shapes used here it is a few KB so full residency is optimal.
    T, B = xe3.shape[0], xe3.shape[1]
    Hd = s * s
    Cout = fc_w.shape[1]
    return pl.pallas_call(
        functools.partial(_att_lstm_fc_kernel, s=s, T=T),
        out_shape=jax.ShapeDtypeStruct((B, Cout), jnp.float32),
        in_specs=[_VMEM] * 6,
        out_specs=_VMEM,
        scratch_shapes=[
            pltpu.VMEM((B, 2 * Hd), jnp.float32),   # [x_in | h_prev] concat slab
            pltpu.VMEM((B, s, s), jnp.float32),     # (B, s, s) view of h_prev
        ],
        compiler_params=_PARAMS_32M,
    )(x0, xe3, lstm_w, lstm_b.reshape(1, 4 * Hd), fc_w, fc_b.reshape(1, Cout))


# --------------------------------------------------- conv encoder + embed (batched)
def _im2col_nhwc(x, kh, kw, stride, pad):
    # TODO(synk): patch extraction is plain-JAX glue (run once for all T*B
    # frames, now in bf16); a direct in-kernel conv (padded NHWC tile in VMEM +
    # unrolled KHxKW taps) would remove the patch-expansion HBM traffic entirely.
    N, H, W, C = x.shape
    xp = jnp.pad(x, ((0, 0), (pad, pad), (pad, pad), (0, 0)))
    OH = (H + 2 * pad - kh) // stride + 1
    OW = (W + 2 * pad - kw) // stride + 1
    cols = []
    for dy in range(kh):
        for dx in range(kw):
            cols.append(xp[:, dy:dy + stride * OH:stride,
                           dx:dx + stride * OW:stride, :])
    cols = jnp.stack(cols, axis=3)                   # (N, OH, OW, KH*KW, C)
    return cols.reshape(N * OH * OW, kh * kw * C), OH, OW


def conv_encoder_embed(params, frames_bf16):
    """Head conv (7x7/s2/p3, bias-free) -> AdaptiveAvgPool2d((7,7)) -> flatten
    -> embed Linear, for all T*B frames at once.  Returns (N, hidden) f32."""
    N = frames_bf16.shape[0]
    cols, OH, OW = _im2col_nhwc(frames_bf16, 7, 7, stride=2, pad=3)
    cpad = params['conv_head_w'].shape[1]            # Cout padded to 128 lanes
    conv = pallas_matmul_tiled(cols, params['conv_head_w'])      # (N*OH*OW, cpad) bf16
    conv = conv.reshape(N, OH, OW, cpad)
    # vgg19_bn children()[1:-1] keeps only AdaptiveAvgPool2d((7,7)); on a map
    # whose side is a multiple of 7 this is an exact (p x p)/stride-p average.
    p = OH // 7
    assert OH == 7 * p and OW == 7 * p, 'head-conv output must be a multiple of 7'
    # TODO(synk): for large frame counts, fuse this pool as an epilogue of the
    # conv-matmul tile (or fold it into embed_w) to remove the remaining small
    # activation round trip; kept as one cheap fused XLA op on bf16 here.
    pooled = jnp.mean(conv.reshape(N, 7, p, 7, p, cpad).astype(jnp.float32),
                      axis=(2, 4)).astype(jnp.bfloat16)
    flat = pooled.reshape(N, 7 * 7 * cpad)
    return pallas_linear(flat, params['embed_w'], params['embed_b'])


# ------------------------------------------------------------------------ params
def init_params(key, in_channels, hidden_size, out_channels):
    head_ch = 64          # conv head channels, as in the PyTorch module
    cpad = 128            # zero-padded to the 128-lane width (dense stores)
    pool_hw = 7           # AdaptiveAvgPool2d((7, 7))
    ks = jax.random.split(key, 8)
    p = {}

    # Conv2d(in_channels, 64, 7x7, stride 2, pad 3, bias=False) -- PyTorch layout
    conv_w = 0.05 * jax.random.normal(
        ks[0], (head_ch, in_channels, 7, 7), jnp.float32)
    # -> im2col layout (dy, dx, cin) x cout, Cout zero-padded to 128
    w2d = jnp.transpose(conv_w, (2, 3, 1, 0)).reshape(7 * 7 * in_channels, head_ch)
    p['conv_head_w'] = jnp.pad(w2d, ((0, 0), (0, cpad - head_ch))).astype(jnp.bfloat16)

    # embed: Linear(64*7*7 = 3136, hidden) generated in PyTorch NCHW-flatten
    # order, then permuted (c,h,w -> h,w,c) + channel-padded so it matches the
    # lane-dense NHWC flatten used on-device (exactly preserves semantics).
    embed_w = 0.02 * jax.random.normal(
        ks[1], (head_ch * pool_hw * pool_hw, hidden_size), jnp.float32)
    w3 = embed_w.reshape(head_ch, pool_hw, pool_hw, hidden_size)
    w3 = jnp.transpose(w3, (1, 2, 0, 3))
    w3 = jnp.pad(w3, ((0, 0), (0, 0), (0, cpad - head_ch), (0, 0)))
    p['embed_w'] = w3.reshape(pool_hw * pool_hw * cpad,
                              hidden_size).astype(jnp.bfloat16)
    p['embed_b'] = 0.02 * jax.random.normal(ks[2], (hidden_size,), jnp.float32)

    # LSTM (single layer, unidirectional): fused weight [W_ih; W_hh] -> (2H, 4H),
    # stored pre-transposed so gates = [x, h] @ W + b is one MXU matmul.
    w_ih = 0.05 * jax.random.normal(ks[3], (hidden_size, 4 * hidden_size), jnp.float32)
    w_hh = 0.05 * jax.random.normal(ks[4], (hidden_size, 4 * hidden_size), jnp.float32)
    p['lstm_w'] = jnp.concatenate([w_ih, w_hh], axis=0).astype(jnp.bfloat16)
    p['lstm_b'] = 0.01 * jax.random.normal(ks[5], (4 * hidden_size,), jnp.float32)

    # fc: Linear(hidden, out_channels)
    p['fc_w'] = (0.05 * jax.random.normal(
        ks[6], (hidden_size, out_channels), jnp.float32)).astype(jnp.bfloat16)
    p['fc_b'] = 0.02 * jax.random.normal(ks[7], (out_channels,), jnp.float32)
    return p


# ------------------------------------------------------------------ full forward
def conv_attention_lstm_forward(params, x, hidden_size):
    B, T, C, H, W = x.shape
    s = int(math.isqrt(hidden_size))
    assert s * s == hidden_size, 'hidden_size must be a perfect square'

    # (B, T, C, H, W) -> (T*B, H, W, C) bf16: one up-front transpose + cast, the
    # conv encoder + embed then run ONCE, batched over all frames.
    frames = jnp.transpose(x, (1, 0, 3, 4, 2)).reshape(T * B, H, W, C)
    frames = frames.astype(jnp.bfloat16)
    xe = conv_encoder_embed(params, frames)                     # (T*B, hidden) f32
    xe_seq = xe.reshape(T, B, hidden_size)
    x0 = xe_seq[0]                                              # raw embedding at t=0
    xe3 = xe_seq.reshape(T, B, s, s)                            # hoisted (B,s,s) relayout

    # Whole recurrence (attention + LSTM over T steps) + fc fused in one call.
    return pallas_att_lstm_fc(x0, xe3, params['lstm_w'], params['lstm_b'],
                              params['fc_w'], params['fc_b'], s)


if __name__ == "__main__":
    # Small shapes consistent with the module: in_channels=8 images of 28x28;
    # head conv 7x7/s2/p3 -> 14x14x64; AdaptiveAvgPool2d((7,7)) -> 7x7 so the
    # embed sees the module's 64*7*7 = 3136 features; hidden=256 (perfect
    # square -> valid attention reshape, lane-dense gates); fc out=256 (default).
    B, T, C, H, W = 2, 3, 8, 28, 28
    hidden_size = 256
    out_channels = 256

    key = jax.random.PRNGKey(0)
    kx, kp = jax.random.split(key)
    x = jax.random.normal(kx, (B, T, C, H, W), jnp.float32)
    params = init_params(kp, C, hidden_size, out_channels)

    fwd = jax.jit(functools.partial(conv_attention_lstm_forward,
                                    hidden_size=hidden_size))
    out = fwd(params, x)
    jax.block_until_ready(out)
    assert out.shape == (B, out_channels)
    assert bool(jnp.all(jnp.isfinite(out)))
    print("KERNEL_OK")
</pallas_src>

<mosaic_0001>
module attributes {stable_mosaic.version = 11 : i64} {
  func.func @_mm_bf16_out_kernel(%arg0: i32, %arg1: memref<592x392xbf16, #tpu.memory_space<vmem>>, %arg2: memref<392x128xbf16, #tpu.memory_space<vmem>>, %arg3: memref<592x128xbf16, #tpu.memory_space<vmem>>) attributes {dimension_semantics = [#tpu.dimension_semantics<parallel>], iteration_bounds = array<i64: 2>, scalar_prefetch = 0 : i64, scratch_operands = 0 : i64, tpu.core_type = #tpu.core_type<tc>, window_params = [{transform_indices = @transform_0, window_bounds = array<i64: 592, 392>}, {pipeline_mode = #tpu.pipeline_mode<synchronous>, transform_indices = @transform_1, window_bounds = array<i64: 392, 128>}, {transform_indices = @transform_2, window_bounds = array<i64: 592, 128>}]} {
    %c0 = arith.constant 0 : index
    %c0_0 = arith.constant 0 : index
    %0 = vector.load %arg1[%c0, %c0_0] : memref<592x392xbf16, #tpu.memory_space<vmem>>, vector<592x392xbf16>
    %c0_1 = arith.constant 0 : index
    %c0_2 = arith.constant 0 : index
    %1 = vector.load %arg2[%c0_1, %c0_2] : memref<392x128xbf16, #tpu.memory_space<vmem>>, vector<392x128xbf16>
    %cst = arith.constant dense<0.000000e+00> : vector<592x128xf32>
    %2 = tpu.matmul %0, %1, %cst {dimension_numbers = #tpu.dot_dimension_numbers<[1], [0], [0], [1], [0, 0, 1, 1], [], []>} : vector<592x392xbf16>, vector<392x128xbf16>, vector<592x128xf32> -> vector<592x128xf32>
    %3 = arith.truncf %2 : vector<592x128xf32> to vector<592x128xbf16>
    %c0_3 = arith.constant 0 : index
    %c0_4 = arith.constant 0 : index
    %4 = vector.load %arg3[%c0_3, %c0_4] : memref<592x128xbf16, #tpu.memory_space<vmem>>, vector<592x128xbf16>
    tpu.vector_store %arg3[%c0_3, %c0_4], %3 {strides = array<i32>} : memref<592x128xbf16, #tpu.memory_space<vmem>>, vector<592x128xbf16>,
    return
  }
  func.func @transform_0(%arg0: i32) -> (i32, i32) {
    %c0_i32 = arith.constant 0 : i32
    %c0_i32_0 = arith.constant 0 : i32
    return %arg0, %c0_i32 : i32, i32
  }
  func.func @transform_1(%arg0: i32) -> (i32, i32) {
    %c0_i32 = arith.constant 0 : i32
    %c0_i32_0 = arith.constant 0 : i32
    %c0_i32_1 = arith.constant 0 : i32
    return %c0_i32, %c0_i32_0 : i32, i32
  }
  func.func @transform_2(%arg0: i32) -> (i32, i32) {
    %c0_i32 = arith.constant 0 : i32
    %c0_i32_0 = arith.constant 0 : i32
    return %arg0, %c0_i32 : i32, i32
  }
}

module attributes {stable_mosaic.version = 11 : i64} {
  func.func @_linear_kernel(%arg0: memref<6x6272xbf16, #tpu.memory_space<vmem>>, %arg1: memref<6272x256xbf16, #tpu.memory_space<vmem>>, %arg2: memref<1x256xf32, #tpu.memory_space<vmem>>, %arg3: memref<6x256xf32, #tpu.memory_space<vmem>>) attributes {dimension_semantics = [], scalar_prefetch = 0 : i64, scratch_operands = 0 : i64, tpu.core_type = #tpu.core_type<tc>} {
    %c0 = arith.constant 0 : index
    %c0_0 = arith.constant 0 : index
    %0 = vector.load %arg0[%c0, %c0_0] : memref<6x6272xbf16, #tpu.memory_space<vmem>>, vector<6x6272xbf16>
    %c0_1 = arith.constant 0 : index
    %c0_2 = arith.constant 0 : index
    %1 = vector.load %arg1[%c0_1, %c0_2] : memref<6272x256xbf16, #tpu.memory_space<vmem>>, vector<6272x256xbf16>
    %cst = arith.constant dense<0.000000e+00> : vector<6x256xf32>
    %2 = tpu.matmul %0, %1, %cst {dimension_numbers = #tpu.dot_dimension_numbers<[1], [0], [0], [1], [0, 0, 1, 1], [], []>} : vector<6x6272xbf16>, vector<6272x256xbf16>, vector<6x256xf32> -> vector<6x256xf32>
    %c0_3 = arith.constant 0 : index
    %c0_4 = arith.constant 0 : index
    %3 = vector.load %arg2[%c0_3, %c0_4] : memref<1x256xf32, #tpu.memory_space<vmem>>, vector<1x256xf32>
    %4 = vector.broadcast %3 : vector<1x256xf32> to vector<6x256xf32>
    %5 = arith.addf %2, %4 : vector<6x256xf32>
    %c0_5 = arith.constant 0 : index
    %c0_6 = arith.constant 0 : index
    %6 = vector.load %arg3[%c0_5, %c0_6] : memref<6x256xf32, #tpu.memory_space<vmem>>, vector<6x256xf32>
    tpu.vector_store %arg3[%c0_5, %c0_6], %5 {strides = array<i32>} : memref<6x256xf32, #tpu.memory_space<vmem>>, vector<6x256xf32>,
    return
  }
}

module attributes {stable_mosaic.version = 11 : i64} {
  func.func @_att_lstm_fc_kernel(%arg0: memref<2x256xf32, #tpu.memory_space<vmem>>, %arg1: memref<3x2x16x16xf32, #tpu.memory_space<vmem>>, %arg2: memref<512x1024xbf16, #tpu.memory_space<vmem>>, %arg3: memref<1x1024xf32, #tpu.memory_space<vmem>>, %arg4: memref<256x256xbf16, #tpu.memory_space<vmem>>, %arg5: memref<1x256xf32, #tpu.memory_space<vmem>>, %arg6: memref<2x256xf32, #tpu.memory_space<vmem>>, %arg7: memref<2x512xf32, #tpu.memory_space<vmem>>, %arg8: memref<2x16x16xf32, #tpu.memory_space<vmem>>) attributes {dimension_semantics = [], scalar_prefetch = 0 : i64, scratch_operands = 2 : i64, tpu.core_type = #tpu.core_type<tc>} {
    %c0 = arith.constant 0 : index
    %c0_0 = arith.constant 0 : index
    %0 = vector.load %arg0[%c0, %c0_0] : memref<2x256xf32, #tpu.memory_space<vmem>>, vector<2x256xf32>
    %c0_1 = arith.constant 0 : index
    %c0_2 = arith.constant 0 : index
    %1 = vector.load %arg7[%c0_1, %c0_2] : memref<2x512xf32, #tpu.memory_space<vmem>>, vector<2x256xf32>
    tpu.vector_store %arg7[%c0_1, %c0_2], %0 {strides = array<i32>} : memref<2x512xf32, #tpu.memory_space<vmem>>, vector<2x256xf32>,
    %cst = arith.constant 0.000000e+00 : f32
    %2 = vector.broadcast %cst : f32 to vector<2x256xf32>
    %c0_3 = arith.constant 0 : index
    %c256 = arith.constant 256 : index
    %3 = vector.load %arg7[%c0_3, %c256] : memref<2x512xf32, #tpu.memory_space<vmem>>, vector<2x256xf32>
    tpu.vector_store %arg7[%c0_3, %c256], %2 {strides = array<i32>} : memref<2x512xf32, #tpu.memory_space<vmem>>, vector<2x256xf32>,
    %c0_4 = arith.constant 0 : index
    %c0_5 = arith.constant 0 : index
    %4 = vector.load %arg7[%c0_4, %c0_5] : memref<2x512xf32, #tpu.memory_space<vmem>>, vector<2x512xf32>
    %5 = arith.truncf %4 : vector<2x512xf32> to vector<2x512xbf16>
    %c0_6 = arith.constant 0 : index
    %c0_7 = arith.constant 0 : index
    %6 = vector.load %arg2[%c0_6, %c0_7] : memref<512x1024xbf16, #tpu.memory_space<vmem>>, vector<512x1024xbf16>
    %cst_8 = arith.constant dense<0.000000e+00> : vector<2x1024xf32>
    %7 = tpu.matmul %5, %6, %cst_8 {dimension_numbers = #tpu.dot_dimension_numbers<[1], [0], [0], [1], [0, 0, 1, 1], [], []>} : vector<2x512xbf16>, vector<512x1024xbf16>, vector<2x1024xf32> -> vector<2x1024xf32>
    %c0_9 = arith.constant 0 : index
    %c0_10 = arith.constant 0 : index
    %8 = vector.load %arg3[%c0_9, %c0_10] : memref<1x1024xf32, #tpu.memory_space<vmem>>, vector<1x1024xf32>
    %9 = vector.broadcast %8 : vector<1x1024xf32> to vector<2x1024xf32>
    %10 = arith.addf %7, %9 : vector<2x1024xf32>
    %11 = vector.extract_strided_slice %10 {offsets = [0, 0], sizes = [2, 256], strides = [1, 1]} : vector<2x1024xf32> to vector<2x256xf32>
    %12 = arith.negf %11 : vector<2x256xf32>
    %13 = math.exp %12 : vector<2x256xf32>
    %cst_11 = arith.constant 1.000000e+00 : f32
    %14 = vector.broadcast %cst_11 : f32 to vector<2x256xf32>
    %15 = arith.addf %14, %13 : vector<2x256xf32>
    %16 = arith.divf %14, %15 : vector<2x256xf32>
    %17 = vector.extract_strided_slice %10 {offsets = [0, 256], sizes = [2, 256], strides = [1, 1]} : vector<2x1024xf32> to vector<2x256xf32>
    %18 = arith.negf %17 : vector<2x256xf32>
    %19 = math.exp %18 : vector<2x256xf32>
    %cst_12 = arith.constant 1.000000e+00 : f32
    %20 = vector.broadcast %cst_12 : f32 to vector<2x256xf32>
    %21 = arith.addf %20, %19 : vector<2x256xf32>
    %22 = arith.divf %20, %21 : vector<2x256xf32>
    %23 = vector.extract_strided_slice %10 {offsets = [0, 512], sizes = [2, 256], strides = [1, 1]} : vector<2x1024xf32> to vector<2x256xf32>
    %24 = math.tanh %23 : vector<2x256xf32>
    %25 = vector.extract_strided_slice %10 {offsets = [0, 768], sizes = [2, 256], strides = [1, 1]} : vector<2x1024xf32> to vector<2x256xf32>
    %26 = arith.negf %25 : vector<2x256xf32>
    %27 = math.exp %26 : vector<2x256xf32>
    %cst_13 = arith.constant 1.000000e+00 : f32
    %28 = vector.broadcast %cst_13 : f32 to vector<2x256xf32>
    %29 = arith.addf %28, %27 : vector<2x256xf32>
    %30 = arith.divf %28, %29 : vector<2x256xf32>
    %31 = arith.mulf %22, %2 : vector<2x256xf32>
    %32 = arith.mulf %16, %24 : vector<2x256xf32>
    %33 = arith.addf %31, %32 : vector<2x256xf32>
    %34 = math.tanh %33 : vector<2x256xf32>
    %35 = arith.mulf %30, %34 : vector<2x256xf32>
    %c1_i32 = arith.constant 1 : i32
    %c2_i32 = arith.constant 2 : i32
    %36 = arith.addi %c1_i32, %c2_i32 : i32
    %c1_i32_14 = arith.constant 1 : i32
    %37:2 = scf.for %arg9 = %c1_i32 to %36 step %c1_i32_14 iter_args(%arg10 = %35, %arg11 = %33) -> (vector<2x256xf32>, vector<2x256xf32>)  : i32 {
      %45 = arith.index_cast %arg9 : i32 to index
      %c0_23 = arith.constant 0 : index
      %c0_24 = arith.constant 0 : index
      %c0_25 = arith.constant 0 : index
      %46 = vector.load %arg1[%45, %c0_23, %c0_24, %c0_25] : memref<3x2x16x16xf32, #tpu.memory_space<vmem>>, vector<1x2x16x16xf32>
      %47 = vector.shape_cast %46 : vector<1x2x16x16xf32> to vector<2x16x16xf32>
      %48 = vector.extract_strided_slice %arg10 {offsets = [0, 0], sizes = [2, 16], strides = [1, 1]} : vector<2x256xf32> to vector<2x16xf32>
      %c0_26 = arith.constant 0 : index
      %c0_27 = arith.constant 0 : index
      %c0_28 = arith.constant 0 : index
      %49 = vector.load %arg8[%c0_26, %c0_27, %c0_28] : memref<2x16x16xf32, #tpu.memory_space<vmem>>, vector<2x1x16xf32>
      %50 = vector.shape_cast %49 : vector<2x1x16xf32> to vector<2x16xf32>
      %51 = vector.shape_cast %48 : vector<2x16xf32> to vector<2x1x16xf32>
      tpu.vector_store %arg8[%c0_26, %c0_27, %c0_28], %51 {strides = array<i32>} : memref<2x16x16xf32, #tpu.memory_space<vmem>>, vector<2x1x16xf32>,
      %52 = vector.extract_strided_slice %arg10 {offsets = [0, 16], sizes = [2, 16], strides = [1, 1]} : vector<2x256xf32> to vector<2x16xf32>
      %c0_29 = arith.constant 0 : index
      %c1 = arith.constant 1 : index
      %c0_30 = arith.constant 0 : index
      %53 = vector.load %arg8[%c0_29, %c1, %c0_30] : memref<2x16x16xf32, #tpu.memory_space<vmem>>, vector<2x1x16xf32>
      %54 = vector.shape_cast %53 : vector<2x1x16xf32> to vector<2x16xf32>
      %55 = vector.shape_cast %52 : vector<2x16xf32> to vector<2x1x16xf32>
      tpu.vector_store %arg8[%c0_29, %c1, %c0_30], %55 {strides = array<i32>} : memref<2x16x16xf32, #tpu.memory_space<vmem>>, vector<2x1x16xf32>,
      %56 = vector.extract_strided_slice %arg10 {offsets = [0, 32], sizes = [2, 16], strides = [1, 1]} : vector<2x256xf32> to vector<2x16xf32>
      %c0_31 = arith.constant 0 : index
      %c2 = arith.constant 2 : index
      %c0_32 = arith.constant 0 : index
      %57 = vector.load %arg8[%c0_31, %c2, %c0_32] : memref<2x16x16xf32, #tpu.memory_space<vmem>>, vector<2x1x16xf32>
      %58 = vector.shape_cast %57 : vector<2x1x16xf32> to vector<2x16xf32>
      %59 = vector.shape_cast %56 : vector<2x16xf32> to vector<2x1x16xf32>
      tpu.vector_store %arg8[%c0_31, %c2, %c0_32], %59 {strides = array<i32>} : memref<2x16x16xf32, #tpu.memory_space<vmem>>, vector<2x1x16xf32>,
      %60 = vector.extract_strided_slice %arg10 {offsets = [0, 48], sizes = [2, 16], strides = [1, 1]} : vector<2x256xf32> to vector<2x16xf32>
      %c0_33 = arith.constant 0 : index
      %c3 = arith.constant 3 : index
      %c0_34 = arith.constant 0 : index
      %61 = vector.load %arg8[%c0_33, %c3, %c0_34] : memref<2x16x16xf32, #tpu.memory_space<vmem>>, vector<2x1x16xf32>
      %62 = vector.shape_cast %61 : vector<2x1x16xf32> to vector<2x16xf32>
      %63 = vector.shape_cast %60 : vector<2x16xf32> to vector<2x1x16xf32>
      tpu.vector_store %arg8[%c0_33, %c3, %c0_34], %63 {strides = array<i32>} : memref<2x16x16xf32, #tpu.memory_space<vmem>>, vector<2x1x16xf32>,
      %64 = vector.extract_strided_slice %arg10 {offsets = [0, 64], sizes = [2, 16], strides = [1, 1]} : vector<2x256xf32> to vector<2x16xf32>
      %c0_35 = arith.constant 0 : index
      %c4 = arith.constant 4 : index
      %c0_36 = arith.constant 0 : index
      %65 = vector.load %arg8[%c0_35, %c4, %c0_36] : memref<2x16x16xf32, #tpu.memory_space<vmem>>, vector<2x1x16xf32>
      %66 = vector.shape_cast %65 : vector<2x1x16xf32> to vector<2x16xf32>
      %67 = vector.shape_cast %64 : vector<2x16xf32> to vector<2x1x16xf32>
      tpu.vector_store %arg8[%c0_35, %c4, %c0_36], %67 {strides = array<i32>} : memref<2x16x16xf32, #tpu.memory_space<vmem>>, vector<2x1x16xf32>,
      %68 = vector.extract_strided_slice %arg10 {offsets = [0, 80], sizes = [2, 16], strides = [1, 1]} : vector<2x256xf32> to vector<2x16xf32>
      %c0_37 = arith.constant 0 : index
      %c5 = arith.constant 5 : index
      %c0_38 = arith.constant 0 : index
      %69 = vector.load %arg8[%c0_37, %c5, %c0_38] : memref<2x16x16xf32, #tpu.memory_space<vmem>>, vector<2x1x16xf32>
      %70 = vector.shape_cast %69 : vector<2x1x16xf32> to vector<2x16xf32>
      %71 = vector.shape_cast %68 : vector<2x16xf32> to vector<2x1x16xf32>
      tpu.vector_store %arg8[%c0_37, %c5, %c0_38], %71 {strides = array<i32>} : memref<2x16x16xf32, #tpu.memory_space<vmem>>, vector<2x1x16xf32>,
      %72 = vector.extract_strided_slice %arg10 {offsets = [0, 96], sizes = [2, 16], strides = [1, 1]} : vector<2x256xf32> to vector<2x16xf32>
      %c0_39 = arith.constant 0 : index
      %c6 = arith.constant 6 : index
      %c0_40 = arith.constant 0 : index
      %73 = vector.load %arg8[%c0_39, %c6, %c0_40] : memref<2x16x16xf32, #tpu.memory_space<vmem>>, vector<2x1x16xf32>
      %74 = vector.shape_cast %73 : vector<2x1x16xf32> to vector<2x16xf32>
      %75 = vector.shape_cast %72 : vector<2x16xf32> to vector<2x1x16xf32>
      tpu.vector_store %arg8[%c0_39, %c6, %c0_40], %75 {strides = array<i32>} : memref<2x16x16xf32, #tpu.memory_space<vmem>>, vector<2x1x16xf32>,
      %76 = vector.extract_strided_slice %arg10 {offsets = [0, 112], sizes = [2, 16], strides = [1, 1]} : vector<2x256xf32> to vector<2x16xf32>
      %c0_41 = arith.constant 0 : index
      %c7 = arith.constant 7 : index
      %c0_42 = arith.constant 0 : index
      %77 = vector.load %arg8[%c0_41, %c7, %c0_42] : memref<2x16x16xf32, #tpu.memory_space<vmem>>, vector<2x1x16xf32>
      %78 = vector.shape_cast %77 : vector<2x1x16xf32> to vector<2x16xf32>
      %79 = vector.shape_cast %76 : vector<2x16xf32> to vector<2x1x16xf32>
      tpu.vector_store %arg8[%c0_41, %c7, %c0_42], %79 {strides = array<i32>} : memref<2x16x16xf32, #tpu.memory_space<vmem>>, vector<2x1x16xf32>,
      %80 = vector.extract_strided_slice %arg10 {offsets = [0, 128], sizes = [2, 16], strides = [1, 1]} : vector<2x256xf32> to vector<2x16xf32>
      %c0_43 = arith.constant 0 : index
      %c8 = arith.constant 8 : index
      %c0_44 = arith.constant 0 : index
      %81 = vector.load %arg8[%c0_43, %c8, %c0_44] : memref<2x16x16xf32, #tpu.memory_space<vmem>>, vector<2x1x16xf32>
      %82 = vector.shape_cast %81 : vector<2x1x16xf32> to vector<2x16xf32>
      %83 = vector.shape_cast %80 : vector<2x16xf32> to vector<2x1x16xf32>
      tpu.vector_store %arg8[%c0_43, %c8, %c0_44], %83 {strides = array<i32>} : memref<2x16x16xf32, #tpu.memory_space<vmem>>, vector<2x1x16xf32>,
      %84 = vector.extract_strided_slice %arg10 {offsets = [0, 144], sizes = [2, 16], strides = [1, 1]} : vector<2x256xf32> to vector<2x16xf32>
      %c0_45 = arith.constant 0 : index
      %c9 = arith.constant 9 : index
      %c0_46 = arith.constant 0 : index
      %85 = vector.load %arg8[%c0_45, %c9, %c0_46] : memref<2x16x16xf32, #tpu.memory_space<vmem>>, vector<2x1x16xf32>
      %86 = vector.shape_cast %85 : vector<2x1x16xf32> to vector<2x16xf32>
      %87 = vector.shape_cast %84 : vector<2x16xf32> to vector<2x1x16xf32>
      tpu.vector_store %arg8[%c0_45, %c9, %c0_46], %87 {strides = array<i32>} : memref<2x16x16xf32, #tpu.memory_space<vmem>>, vector<2x1x16xf32>,
      %88 = vector.extract_strided_slice %arg10 {offsets = [0, 160], sizes = [2, 16], strides = [1, 1]} : vector<2x256xf32> to vector<2x16xf32>
      %c0_47 = arith.constant 0 : index
      %c10 = arith.constant 10 : index
      %c0_48 = arith.constant 0 : index
      %89 = vector.load %arg8[%c0_47, %c10, %c0_48] : memref<2x16x16xf32, #tpu.memory_space<vmem>>, vector<2x1x16xf32>
      %90 = vector.shape_cast %89 : vector<2x1x16xf32> to vector<2x16xf32>
      %91 = vector.shape_cast %88 : vector<2x16xf32> to vector<2x1x16xf32>
      tpu.vector_store %arg8[%c0_47, %c10, %c0_48], %91 {strides = array<i32>} : memref<2x16x16xf32, #tpu.memory_space<vmem>>, vector<2x1x16xf32>,
      %92 = vector.extract_strided_slice %arg10 {offsets = [0, 176], sizes = [2, 16], strides = [1, 1]} : vector<2x256xf32> to vector<2x16xf32>
      %c0_49 = arith.constant 0 : index
      %c11 = arith.constant 11 : index
      %c0_50 = arith.constant 0 : index
      %93 = vector.load %arg8[%c0_49, %c11, %c0_50] : memref<2x16x16xf32, #tpu.memory_space<vmem>>, vector<2x1x16xf32>
      %94 = vector.shape_cast %93 : vector<2x1x16xf32> to vector<2x16xf32>
      %95 = vector.shape_cast %92 : vector<2x16xf32> to vector<2x1x16xf32>
      tpu.vector_store %arg8[%c0_49, %c11, %c0_50], %95 {strides = array<i32>} : memref<2x16x16xf32, #tpu.memory_space<vmem>>, vector<2x1x16xf32>,
      %96 = vector.extract_strided_slice %arg10 {offsets = [0, 192], sizes = [2, 16], strides = [1, 1]} : vector<2x256xf32> to vector<2x16xf32>
      %c0_51 = arith.constant 0 : index
      %c12 = arith.constant 12 : index
      %c0_52 = arith.constant 0 : index
      %97 = vector.load %arg8[%c0_51, %c12, %c0_52] : memref<2x16x16xf32, #tpu.memory_space<vmem>>, vector<2x1x16xf32>
      %98 = vector.shape_cast %97 : vector<2x1x16xf32> to vector<2x16xf32>
      %99 = vector.shape_cast %96 : vector<2x16xf32> to vector<2x1x16xf32>
      tpu.vector_store %arg8[%c0_51, %c12, %c0_52], %99 {strides = array<i32>} : memref<2x16x16xf32, #tpu.memory_space<vmem>>, vector<2x1x16xf32>,
      %100 = vector.extract_strided_slice %arg10 {offsets = [0, 208], sizes = [2, 16], strides = [1, 1]} : vector<2x256xf32> to vector<2x16xf32>
      %c0_53 = arith.constant 0 : index
      %c13 = arith.constant 13 : index
      %c0_54 = arith.constant 0 : index
      %101 = vector.load %arg8[%c0_53, %c13, %c0_54] : memref<2x16x16xf32, #tpu.memory_space<vmem>>, vector<2x1x16xf32>
      %102 = vector.shape_cast %101 : vector<2x1x16xf32> to vector<2x16xf32>
      %103 = vector.shape_cast %100 : vector<2x16xf32> to vector<2x1x16xf32>
      tpu.vector_store %arg8[%c0_53, %c13, %c0_54], %103 {strides = array<i32>} : memref<2x16x16xf32, #tpu.memory_space<vmem>>, vector<2x1x16xf32>,
      %104 = vector.extract_strided_slice %arg10 {offsets = [0, 224], sizes = [2, 16], strides = [1, 1]} : vector<2x256xf32> to vector<2x16xf32>
      %c0_55 = arith.constant 0 : index
      %c14 = arith.constant 14 : index
      %c0_56 = arith.constant 0 : index
      %105 = vector.load %arg8[%c0_55, %c14, %c0_56] : memref<2x16x16xf32, #tpu.memory_space<vmem>>, vector<2x1x16xf32>
      %106 = vector.shape_cast %105 : vector<2x1x16xf32> to vector<2x16xf32>
      %107 = vector.shape_cast %104 : vector<2x16xf32> to vector<2x1x16xf32>
      tpu.vector_store %arg8[%c0_55, %c14, %c0_56], %107 {strides = array<i32>} : memref<2x16x16xf32, #tpu.memory_space<vmem>>, vector<2x1x16xf32>,
      %108 = vector.extract_strided_slice %arg10 {offsets = [0, 240], sizes = [2, 16], strides = [1, 1]} : vector<2x256xf32> to vector<2x16xf32>
      %c0_57 = arith.constant 0 : index
      %c15 = arith.constant 15 : index
      %c0_58 = arith.constant 0 : index
      %109 = vector.load %arg8[%c0_57, %c15, %c0_58] : memref<2x16x16xf32, #tpu.memory_space<vmem>>, vector<2x1x16xf32>
      %110 = vector.shape_cast %109 : vector<2x1x16xf32> to vector<2x16xf32>
      %111 = vector.shape_cast %108 : vector<2x16xf32> to vector<2x1x16xf32>
      tpu.vector_store %arg8[%c0_57, %c15, %c0_58], %111 {strides = array<i32>} : memref<2x16x16xf32, #tpu.memory_space<vmem>>, vector<2x1x16xf32>,
      %c0_59 = arith.constant 0 : index
      %c0_60 = arith.constant 0 : index
      %c0_61 = arith.constant 0 : index
      %112 = vector.load %arg8[%c0_59, %c0_60, %c0_61] : memref<2x16x16xf32, #tpu.memory_space<vmem>>, vector<2x16x16xf32>
      "tpu.trace_start"() <{level = 10 : i32, message = "bij,bkj->bik"}> : () -> ()
      %cst_62 = arith.constant dense<0.000000e+00> : vector<2x16x16xf32>
      %113 = tpu.matmul %47, %112, %cst_62 {dimension_numbers = #tpu.dot_dimension_numbers<[2], [2], [1], [1], [0, 0, 0, 1, 1, 1], [0], [0]>} : vector<2x16x16xf32>, vector<2x16x16xf32>, vector<2x16x16xf32> -> vector<2x16x16xf32>
      "tpu.trace_stop"() : () -> ()
      %cst_63 = arith.constant dense<0xFF800000> : vector<2x16xf32>
      %114 = vector.multi_reduction <maximumf>, %113, %cst_63 [2] : vector<2x16x16xf32> to vector<2x16xf32>
      %115 = vector.shape_cast %114 : vector<2x16xf32> to vector<2x16x1xf32>
      %cst_64 = arith.constant dense<0xFF800000> : vector<2x1xf32>
      %116 = vector.multi_reduction <maximumf>, %115, %cst_64 [1] : vector<2x16x1xf32> to vector<2x1xf32>
      %117 = vector.shape_cast %116 : vector<2x1xf32> to vector<2x1x1xf32>
      %118 = vector.broadcast %117 : vector<2x1x1xf32> to vector<2x16x16xf32>
      %119 = arith.subf %113, %118 : vector<2x16x16xf32>
      %120 = math.exp %119 : vector<2x16x16xf32>
      %cst_65 = arith.constant dense<0.000000e+00> : vector<2x16xf32>
      %121 = vector.multi_reduction <add>, %120, %cst_65 [2] : vector<2x16x16xf32> to vector<2x16xf32>
      %122 = vector.shape_cast %121 : vector<2x16xf32> to vector<2x16x1xf32>
      %cst_66 = arith.constant dense<0.000000e+00> : vector<2x1xf32>
      %123 = vector.multi_reduction <add>, %122, %cst_66 [1] : vector<2x16x1xf32> to vector<2x1xf32>
      %124 = vector.shape_cast %123 : vector<2x1xf32> to vector<2x1x1xf32>
      %125 = vector.broadcast %124 : vector<2x1x1xf32> to vector<2x16x16xf32>
      %126 = arith.divf %120, %125 : vector<2x16x16xf32>
      "tpu.trace_start"() <{level = 10 : i32, message = "bji,bjk->bik"}> : () -> ()
      %cst_67 = arith.constant dense<0.000000e+00> : vector<2x16x16xf32>
      %127 = tpu.matmul %47, %126, %cst_67 {dimension_numbers = #tpu.dot_dimension_numbers<[1], [1], [2], [2], [0, 0, 0, 2, 1, 2], [0], [0]>} : vector<2x16x16xf32>, vector<2x16x16xf32>, vector<2x16x16xf32> -> vector<2x16x16xf32>
      "tpu.trace_stop"() : () -> ()
      %128 = vector.extract_strided_slice %127 {offsets = [0, 0, 0], sizes = [2, 1, 16], strides = [1, 1, 1]} : vector<2x16x16xf32> to vector<2x1x16xf32>
      %129 = vector.shape_cast %128 : vector<2x1x16xf32> to vector<2x16xf32>
      %c0_68 = arith.constant 0 : index
      %c0_69 = arith.constant 0 : index
      %130 = vector.load %arg7[%c0_68, %c0_69] : memref<2x512xf32, #tpu.memory_space<vmem>>, vector<2x16xf32>
      tpu.vector_store %arg7[%c0_68, %c0_69], %129 {strides = array<i32>} : memref<2x512xf32, #tpu.memory_space<vmem>>, vector<2x16xf32>,
      %131 = vector.extract_strided_slice %127 {offsets = [0, 1, 0], sizes = [2, 1, 16], strides = [1, 1, 1]} : vector<2x16x16xf32> to vector<2x1x16xf32>
      %132 = vector.shape_cast %131 : vector<2x1x16xf32> to vector<2x16xf32>
      %c0_70 = arith.constant 0 : index
      %c16 = arith.constant 16 : index
      %133 = vector.load %arg7[%c0_70, %c16] : memref<2x512xf32, #tpu.memory_space<vmem>>, vector<2x16xf32>
      tpu.vector_store %arg7[%c0_70, %c16], %132 {strides = array<i32>} : memref<2x512xf32, #tpu.memory_space<vmem>>, vector<2x16xf32>,
      %134 = vector.extract_strided_slice %127 {offsets = [0, 2, 0], sizes = [2, 1, 16], strides = [1, 1, 1]} : vector<2x16x16xf32> to vector<2x1x16xf32>
      %135 = vector.shape_cast %134 : vector<2x1x16xf32> to vector<2x16xf32>
      %c0_71 = arith.constant 0 : index
      %c32 = arith.constant 32 : index
      %136 = vector.load %arg7[%c0_71, %c32] : memref<2x512xf32, #tpu.memory_space<vmem>>, vector<2x16xf32>
      tpu.vector_store %arg7[%c0_71, %c32], %135 {strides = array<i32>} : memref<2x512xf32, #tpu.memory_space<vmem>>, vector<2x16xf32>,
      %137 = vector.extract_strided_slice %127 {offsets = [0, 3, 0], sizes = [2, 1, 16], strides = [1, 1, 1]} : vector<2x16x16xf32> to vector<2x1x16xf32>
      %138 = vector.shape_cast %137 : vector<2x1x16xf32> to vector<2x16xf32>
      %c0_72 = arith.constant 0 : index
      %c48 = arith.constant 48 : index
      %139 = vector.load %arg7[%c0_72, %c48] : memref<2x512xf32, #tpu.memory_space<vmem>>, vector<2x16xf32>
      tpu.vector_store %arg7[%c0_72, %c48], %138 {strides = array<i32>} : memref<2x512xf32, #tpu.memory_space<vmem>>, vector<2x16xf32>,
      %140 = vector.extract_strided_slice %127 {offsets = [0, 4, 0], sizes = [2, 1, 16], strides = [1, 1, 1]} : vector<2x16x16xf32> to vector<2x1x16xf32>
      %141 = vector.shape_cast %140 : vector<2x1x16xf32> to vector<2x16xf32>
      %c0_73 = arith.constant 0 : index
      %c64 = arith.constant 64 : index
      %142 = vector.load %arg7[%c0_73, %c64] : memref<2x512xf32, #tpu.memory_space<vmem>>, vector<2x16xf32>
      tpu.vector_store %arg7[%c0_73, %c64], %141 {strides = array<i32>} : memref<2x512xf32, #tpu.memory_space<vmem>>, vector<2x16xf32>,
      %143 = vector.extract_strided_slice %127 {offsets = [0, 5, 0], sizes = [2, 1, 16], strides = [1, 1, 1]} : vector<2x16x16xf32> to vector<2x1x16xf32>
      %144 = vector.shape_cast %143 : vector<2x1x16xf32> to vector<2x16xf32>
      %c0_74 = arith.constant 0 : index
      %c80 = arith.constant 80 : index
      %145 = vector.load %arg7[%c0_74, %c80] : memref<2x512xf32, #tpu.memory_space<vmem>>, vector<2x16xf32>
      tpu.vector_store %arg7[%c0_74, %c80], %144 {strides = array<i32>} : memref<2x512xf32, #tpu.memory_space<vmem>>, vector<2x16xf32>,
      %146 = vector.extract_strided_slice %127 {offsets = [0, 6, 0], sizes = [2, 1, 16], strides = [1, 1, 1]} : vector<2x16x16xf32> to vector<2x1x16xf32>
      %147 = vector.shape_cast %146 : vector<2x1x16xf32> to vector<2x16xf32>
      %c0_75 = arith.constant 0 : index
      %c96 = arith.constant 96 : index
      %148 = vector.load %arg7[%c0_75, %c96] : memref<2x512xf32, #tpu.memory_space<vmem>>, vector<2x16xf32>
      tpu.vector_store %arg7[%c0_75, %c96], %147 {strides = array<i32>} : memref<2x512xf32, #tpu.memory_space<vmem>>, vector<2x16xf32>,
      %149 = vector.extract_strided_slice %127 {offsets = [0, 7, 0], sizes = [2, 1, 16], strides = [1, 1, 1]} : vector<2x16x16xf32> to vector<2x1x16xf32>
      %150 = vector.shape_cast %149 : vector<2x1x16xf32> to vector<2x16xf32>
      %c0_76 = arith.constant 0 : index
      %c112 = arith.constant 112 : index
      %151 = vector.load %arg7[%c0_76, %c112] : memref<2x512xf32, #tpu.memory_space<vmem>>, vector<2x16xf32>
      tpu.vector_store %arg7[%c0_76, %c112], %150 {strides = array<i32>} : memref<2x512xf32, #tpu.memory_space<vmem>>, vector<2x16xf32>,
      %152 = vector.extract_strided_slice %127 {offsets = [0, 8, 0], sizes = [2, 1, 16], strides = [1, 1, 1]} : vector<2x16x16xf32> to vector<2x1x16xf32>
      %153 = vector.shape_cast %152 : vector<2x1x16xf32> to vector<2x16xf32>
      %c0_77 = arith.constant 0 : index
      %c128 = arith.constant 128 : index
      %154 = vector.load %arg7[%c0_77, %c128] : memref<2x512xf32, #tpu.memory_space<vmem>>, vector<2x16xf32>
      tpu.vector_store %arg7[%c0_77, %c128], %153 {strides = array<i32>} : memref<2x512xf32, #tpu.memory_space<vmem>>, vector<2x16xf32>,
      %155 = vector.extract_strided_slice %127 {offsets = [0, 9, 0], sizes = [2, 1, 16], strides = [1, 1, 1]} : vector<2x16x16xf32> to vector<2x1x16xf32>
      %156 = vector.shape_cast %155 : vector<2x1x16xf32> to vector<2x16xf32>
      %c0_78 = arith.constant 0 : index
      %c144 = arith.constant 144 : index
      %157 = vector.load %arg7[%c0_78, %c144] : memref<2x512xf32, #tpu.memory_space<vmem>>, vector<2x16xf32>
      tpu.vector_store %arg7[%c0_78, %c144], %156 {strides = array<i32>} : memref<2x512xf32, #tpu.memory_space<vmem>>, vector<2x16xf32>,
      %158 = vector.extract_strided_slice %127 {offsets = [0, 10, 0], sizes = [2, 1, 16], strides = [1, 1, 1]} : vector<2x16x16xf32> to vector<2x1x16xf32>
      %159 = vector.shape_cast %158 : vector<2x1x16xf32> to vector<2x16xf32>
      %c0_79 = arith.constant 0 : index
      %c160 = arith.constant 160 : index
      %160 = vector.load %arg7[%c0_79, %c160] : memref<2x512xf32, #tpu.memory_space<vmem>>, vector<2x16xf32>
      tpu.vector_store %arg7[%c0_79, %c160], %159 {strides = array<i32>} : memref<2x512xf32, #tpu.memory_space<vmem>>, vector<2x16xf32>,
      %161 = vector.extract_strided_slice %127 {offsets = [0, 11, 0], sizes = [2, 1, 16], strides = [1, 1, 1]} : vector<2x16x16xf32> to vector<2x1x16xf32>
      %162 = vector.shape_cast %161 : vector<2x1x16xf32> to vector<2x16xf32>
      %c0_80 = arith.constant 0 : index
      %c176 = arith.constant 176 : index
      %163 = vector.load %arg7[%c0_80, %c176] : memref<2x512xf32, #tpu.memory_space<vmem>>, vector<2x16xf32>
      tpu.vector_store %arg7[%c0_80, %c176], %162 {strides = array<i32>} : memref<2x512xf32, #tpu.memory_space<vmem>>, vector<2x16xf32>,
      %164 = vector.extract_strided_slice %127 {offsets = [0, 12, 0], sizes = [2, 1, 16], strides = [1, 1, 1]} : vector<2x16x16xf32> to vector<2x1x16xf32>
      %165 = vector.shape_cast %164 : vector<2x1x16xf32> to vector<2x16xf32>
      %c0_81 = arith.constant 0 : index
      %c192 = arith.constant 192 : index
      %166 = vector.load %arg7[%c0_81, %c192] : memref<2x512xf32, #tpu.memory_space<vmem>>, vector<2x16xf32>
      tpu.vector_store %arg7[%c0_81, %c192], %165 {strides = array<i32>} : memref<2x512xf32, #tpu.memory_space<vmem>>, vector<2x16xf32>,
      %167 = vector.extract_strided_slice %127 {offsets = [0, 13, 0], sizes = [2, 1, 16], strides = [1, 1, 1]} : vector<2x16x16xf32> to vector<2x1x16xf32>
      %168 = vector.shape_cast %167 : vector<2x1x16xf32> to vector<2x16xf32>
      %c0_82 = arith.constant 0 : index
      %c208 = arith.constant 208 : index
      %169 = vector.load %arg7[%c0_82, %c208] : memref<2x512xf32, #tpu.memory_space<vmem>>, vector<2x16xf32>
      tpu.vector_store %arg7[%c0_82, %c208], %168 {strides = array<i32>} : memref<2x512xf32, #tpu.memory_space<vmem>>, vector<2x16xf32>,
      %170 = vector.extract_strided_slice %127 {offsets = [0, 14, 0], sizes = [2, 1, 16], strides = [1, 1, 1]} : vector<2x16x16xf32> to vector<2x1x16xf32>
      %171 = vector.shape_cast %170 : vector<2x1x16xf32> to vector<2x16xf32>
      %c0_83 = arith.constant 0 : index
      %c224 = arith.constant 224 : index
      %172 = vector.load %arg7[%c0_83, %c224] : memref<2x512xf32, #tpu.memory_space<vmem>>, vector<2x16xf32>
      tpu.vector_store %arg7[%c0_83, %c224], %171 {strides = array<i32>} : memref<2x512xf32, #tpu.memory_space<vmem>>, vector<2x16xf32>,
      %173 = vector.extract_strided_slice %127 {offsets = [0, 15, 0], sizes = [2, 1, 16], strides = [1, 1, 1]} : vector<2x16x16xf32> to vector<2x1x16xf32>
      %174 = vector.shape_cast %173 : vector<2x1x16xf32> to vector<2x16xf32>
      %c0_84 = arith.constant 0 : index
      %c240 = arith.constant 240 : index
      %175 = vector.load %arg7[%c0_84, %c240] : memref<2x512xf32, #tpu.memory_space<vmem>>, vector<2x16xf32>
      tpu.vector_store %arg7[%c0_84, %c240], %174 {strides = array<i32>} : memref<2x512xf32, #tpu.memory_space<vmem>>, vector<2x16xf32>,
      %c0_85 = arith.constant 0 : index
      %c256_86 = arith.constant 256 : index
      %176 = vector.load %arg7[%c0_85, %c256_86] : memref<2x512xf32, #tpu.memory_space<vmem>>, vector<2x256xf32>
      tpu.vector_store %arg7[%c0_85, %c256_86], %arg10 {strides = array<i32>} : memref<2x512xf32, #tpu.memory_space<vmem>>, vector<2x256xf32>,
      %c0_87 = arith.constant 0 : index
      %c0_88 = arith.constant 0 : index
      %177 = vector.load %arg7[%c0_87, %c0_88] : memref<2x512xf32, #tpu.memory_space<vmem>>, vector<2x512xf32>
      %178 = arith.truncf %177 : vector<2x512xf32> to vector<2x512xbf16>
      %c0_89 = arith.constant 0 : index
      %c0_90 = arith.constant 0 : index
      %179 = vector.load %arg2[%c0_89, %c0_90] : memref<512x1024xbf16, #tpu.memory_space<vmem>>, vector<512x1024xbf16>
      %cst_91 = arith.constant dense<0.000000e+00> : vector<2x1024xf32>
      %180 = tpu.matmul %178, %179, %cst_91 {dimension_numbers = #tpu.dot_dimension_numbers<[1], [0], [0], [1], [0, 0, 1, 1], [], []>} : vector<2x512xbf16>, vector<512x1024xbf16>, vector<2x1024xf32> -> vector<2x1024xf32>
      %c0_92 = arith.constant 0 : index
      %c0_93 = arith.constant 0 : index
      %181 = vector.load %arg3[%c0_92, %c0_93] : memref<1x1024xf32, #tpu.memory_space<vmem>>, vector<1x1024xf32>
      %182 = vector.broadcast %181 : vector<1x1024xf32> to vector<2x1024xf32>
      %183 = arith.addf %180, %182 : vector<2x1024xf32>
      %184 = vector.extract_strided_slice %183 {offsets = [0, 0], sizes = [2, 256], strides = [1, 1]} : vector<2x1024xf32> to vector<2x256xf32>
      %185 = arith.negf %184 : vector<2x256xf32>
      %186 = math.exp %185 : vector<2x256xf32>
      %cst_94 = arith.constant 1.000000e+00 : f32
      %187 = vector.broadcast %cst_94 : f32 to vector<2x256xf32>
      %188 = arith.addf %187, %186 : vector<2x256xf32>
      %189 = arith.divf %187, %188 : vector<2x256xf32>
      %190 = vector.extract_strided_slice %183 {offsets = [0, 256], sizes = [2, 256], strides = [1, 1]} : vector<2x1024xf32> to vector<2x256xf32>
      %191 = arith.negf %190 : vector<2x256xf32>
      %192 = math.exp %191 : vector<2x256xf32>
      %cst_95 = arith.constant 1.000000e+00 : f32
      %193 = vector.broadcast %cst_95 : f32 to vector<2x256xf32>
      %194 = arith.addf %193, %192 : vector<2x256xf32>
      %195 = arith.divf %193, %194 : vector<2x256xf32>
      %196 = vector.extract_strided_slice %183 {offsets = [0, 512], sizes = [2, 256], strides = [1, 1]} : vector<2x1024xf32> to vector<2x256xf32>
      %197 = math.tanh %196 : vector<2x256xf32>
      %198 = vector.extract_strided_slice %183 {offsets = [0, 768], sizes = [2, 256], strides = [1, 1]} : vector<2x1024xf32> to vector<2x256xf32>
      %199 = arith.negf %198 : vector<2x256xf32>
      %200 = math.exp %199 : vector<2x256xf32>
      %cst_96 = arith.constant 1.000000e+00 : f32
      %201 = vector.broadcast %cst_96 : f32 to vector<2x256xf32>
      %202 = arith.addf %201, %200 : vector<2x256xf32>
      %203 = arith.divf %201, %202 : vector<2x256xf32>
      %204 = arith.mulf %195, %arg11 : vector<2x256xf32>
      %205 = arith.mulf %189, %197 : vector<2x256xf32>
      %206 = arith.addf %204, %205 : vector<2x256xf32>
      %207 = math.tanh %206 : vector<2x256xf32>
      %208 = arith.mulf %203, %207 : vector<2x256xf32>
      scf.yield %208, %206 : vector<2x256xf32>, vector<2x256xf32>
    }
    %c2_i32_15 = arith.constant 2 : i32
    %38 = arith.truncf %37#0 : vector<2x256xf32> to vector<2x256xbf16>
    %c0_16 = arith.constant 0 : index
    %c0_17 = arith.constant 0 : index
    %39 = vector.load %arg4[%c0_16, %c0_17] : memref<256x256xbf16, #tpu.memory_space<vmem>>, vector<256x256xbf16>
    %cst_18 = arith.constant dense<0.000000e+00> : vector<2x256xf32>
    %40 = tpu.matmul %38, %39, %cst_18 {dimension_numbers = #tpu.dot_dimension_numbers<[1], [0], [0], [1], [0, 0, 1, 1], [], []>} : vector<2x256xbf16>, vector<256x256xbf16>, vector<2x256xf32> -> vector<2x256xf32>
    %c0_19 = arith.constant 0 : index
    %c0_20 = arith.constant 0 : index
    %41 = vector.load %arg5[%c0_19, %c0_20] : memref<1x256xf32, #tpu.memory_space<vmem>>, vector<1x256xf32>
    %42 = vector.broadcast %41 : vector<1x256xf32> to vector<2x256xf32>
    %43 = arith.addf %40, %42 : vector<2x256xf32>
    %c0_21 = arith.constant 0 : index
    %c0_22 = arith.constant 0 : index
    %44 = vector.load %arg6[%c0_21, %c0_22] : memref<2x256xf32, #tpu.memory_space<vmem>>, vector<2x256xf32>
    tpu.vector_store %arg6[%c0_21, %c0_22], %43 {strides = array<i32>} : memref<2x256xf32, #tpu.memory_space<vmem>>, vector<2x256xf32>,
    return
  }
}

</mosaic_0001>

<llo_original>
// kernel: conv_attention_lstm_forward.3
$region0: #{conv_attention_lstm_forward.3}
  #allocation0 [shape = 'u32[]', space=smem, size = 0x4, offset = 0x4, fixed_abs, tag = 'smem constant byte address 0x4 - core index']
  #allocation1 [shape = 'u32[144,128]{1,0:T(1,128)}', space=vmem, size = 0x12000, scoped, tag = 'internal scratch']
  %s0 = inlined_call_operand.vmem [shape: bf16[1184,392], index: 0, kind: input, shape index: {}]
  %s1 = inlined_call_operand.vmem [shape: bf16[392,128], index: 1, kind: input, shape index: {}]
  %s2 = inlined_call_operand.vmem [shape: bf16[1184,128], index: 2, kind: output, shape index: {}]
  %s3 = sld [smem:[#allocation0]]
  $region41: #{conv_attention_lstm_forward.3} parent=0
    _
  %s5 = ssub.s32 1, %s3
  %s6 = scalar_select 0, %s5, %s3
  loop: start=0, step=1, limit=4
  $region2: #{conv_attention_lstm_forward.3} parent=0 // loop_pre_header
    _
  $region3: #{conv_attention_lstm_forward.3} parent=0 // loop_header
    %s8 = sphi 0, %s12
    %p9 = scmp.ge.s32.totalorder %s8, 4
    %s18 = sphi 0, %s20
    %s21 = sphi 0, %s18
    %s22 = sphi 0, %s21
    %s38 = sphi 0, %s22
    %s42 = sphi 0, %s42
    %s44 = sphi 0, %s42
    %s45 = sphi 0, %s44
    %s59 = sphi 0, %s45
    %s65 = sphi 0, %s67
    %s68 = sphi 0, %s65
    %s69 = sphi 0, %s68
    %s85 = sphi 0, %s69
  $region4: #{conv_attention_lstm_forward.3} parent=0 // loop_header_branch
    %11 = sbr.rel (%p9) target = $region8
  $region5: #{conv_attention_lstm_forward.3} parent=0 // loop_body
    %s13 = ssub.s32 %s8, 1
    %s14 = ssub.s32 %s8, 2
    %s15 = sadd.s32 %s8, 1
    %s16 = ssub.s32 %s8, %s15
    %p17 = scmp.eq.s32.totalorder %s16, 0
    %s19 = sadd.s32 %s18, 1
    %s20 = scalar_select %p17, %s18, %s19
    %p23 = pneg %p17
    %p24 = scmp.eq.s32.totalorder %s8, 1
    %p25 = por %p23, %p24
    %p26 = scmp.ne.s32.totalorder %s18, %s21
    %p27 = scmp.eq.s32.totalorder %s8, 0
    %p28 = por %p26, %p27
    %p29 = scmp.ne.s32.totalorder %s18, %s21
    %p30 = scmp.eq.s32.totalorder %s13, 1
    %p31 = por %p29, %p30
    %p32 = scmp.ne.s32.totalorder %s21, %s22
    %p33 = scmp.eq.s32.totalorder %s13, 0
    %p34 = por %p32, %p33
    %p35 = scmp.ne.s32.totalorder %s21, %s22
    %p36 = scmp.eq.s32.totalorder %s14, 1
    %p37 = por %p35, %p36
    %p39 = scmp.ne.s32.totalorder %s22, %s38
    %p40 = scmp.eq.s32.totalorder %s14, 0
    %p41 = por %p39, %p40
    %s43 = sadd.s32 %s42, 1
    %p46 = scmp.eq.s32.totalorder %s8, 1
    %p47 = scmp.ne.s32.totalorder %s42, %s44
    %p48 = scmp.eq.s32.totalorder %s8, 0
    %p49 = por %p47, %p48
    %p50 = scmp.ne.s32.totalorder %s42, %s44
    %p51 = scmp.eq.s32.totalorder %s13, 1
    %p52 = por %p50, %p51
    %p53 = scmp.ne.s32.totalorder %s44, %s45
    %p54 = scmp.eq.s32.totalorder %s13, 0
    %p55 = por %p53, %p54
    %p56 = scmp.ne.s32.totalorder %s44, %s45
    %p57 = scmp.eq.s32.totalorder %s14, 1
    %p58 = por %p56, %p57
    %p60 = scmp.ne.s32.totalorder %s45, %s59
    %p61 = scmp.eq.s32.totalorder %s14, 0
    %p62 = por %p60, %p61
    %s63 = ssub.s32 %s8, %s15
    %p64 = scmp.eq.s32.totalorder %s63, 0
    %s66 = sadd.s32 %s65, 1
    %s67 = scalar_select %p64, %s65, %s66
    %p70 = pneg %p64
    %p71 = scmp.eq.s32.totalorder %s8, 1
    %p72 = por %p70, %p71
    %p73 = scmp.ne.s32.totalorder %s65, %s68
    %p74 = scmp.eq.s32.totalorder %s8, 0
    %p75 = por %p73, %p74
    %p76 = scmp.ne.s32.totalorder %s65, %s68
    %p77 = scmp.eq.s32.totalorder %s13, 1
    %p78 = por %p76, %p77
    %p79 = scmp.ne.s32.totalorder %s68, %s69
    %p80 = scmp.eq.s32.totalorder %s13, 0
    %p81 = por %p79, %p80
    %p82 = scmp.ne.s32.totalorder %s68, %s69
    %p83 = scmp.eq.s32.totalorder %s14, 1
    %p84 = por %p82, %p83
    %p86 = scmp.ne.s32.totalorder %s69, %s85
    %p87 = scmp.eq.s32.totalorder %s14, 0
    %p88 = por %p86, %p87
    %p89 = scmp.le.s32.totalorder 1, %s8
    %p90 = scmp.lt.s32.totalorder %s8, 3
    %p91 = pnand %p89, %p90
    %p92 = pneg %p91
    // Predicated region
    $region9: #{conv_attention_lstm_forward.3} parent=5 // pred_check
      _
    $region10: #{conv_attention_lstm_forward.3} parent=5 // pred_check_branch
      %94 = sbr.rel (%p91) target = $region12
    $region11: #{conv_attention_lstm_forward.3} parent=5 // pred_region
      %s95 = ssub.s32 %s8, 1
      // Predicated region
      $region13: #{conv_attention_lstm_forward.3} parent=11 // pred_check
        %p96 = pneg %p55
      $region14: #{conv_attention_lstm_forward.3} parent=11 // pred_check_branch
        %98 = sbr.rel (%p96) target = $region16
      $region15: #{conv_attention_lstm_forward.3} parent=11 // pred_region
        _
      $region16: #{conv_attention_lstm_forward.3} parent=11 // pred_fallthru
        _
    $region12: #{conv_attention_lstm_forward.3} parent=5 // pred_fallthru
      _
    %p99 = scmp.lt.s32.totalorder %s8, 2
    // Predicated region
    $region17: #{conv_attention_lstm_forward.3} parent=5 // pred_check
      %p100 = pneg %p99
    $region18: #{conv_attention_lstm_forward.3} parent=5 // pred_check_branch
      %102 = sbr.rel (%p100) target = $region20
    $region19: #{conv_attention_lstm_forward.3} parent=5 // pred_region
      // Predicated region
      $region21: #{conv_attention_lstm_forward.3} parent=19 // pred_check
        %p103 = pneg %p28
      $region22: #{conv_attention_lstm_forward.3} parent=19 // pred_check_branch
        %105 = sbr.rel (%p103) target = $region24
      $region23: #{conv_attention_lstm_forward.3} parent=19 // pred_region
        %s106 = smul.u32 74, %s8
        %p107 = scmp.lt.s32.totalorder %s106, 147
        %s108 = scalar_select %p107, %s106, 147
        %s109 = smul.addr %s108, 4
        %s110 = smul.addr %s109, 4
        %s111 = scalar_lea.vmem %s0, %s110
        %s112 = smul.u32 74, %s8
      $region24: #{conv_attention_lstm_forward.3} parent=19 // pred_fallthru
        _
    $region20: #{conv_attention_lstm_forward.3} parent=5 // pred_fallthru
      _
    %p113 = scmp.le.s32.totalorder 1, %s8
    %p114 = scmp.lt.s32.totalorder %s8, 3
    %p115 = pnand %p113, %p114
    %p116 = pneg %p115
    // Predicated region
    $region25: #{conv_attention_lstm_forward.3} parent=5 // pred_check
      _
    $region26: #{conv_attention_lstm_forward.3} parent=5 // pred_check_branch
      %118 = sbr.rel (%p115) target = $region28
    $region27: #{conv_attention_lstm_forward.3} parent=5 // pred_region
      %s119 = ssub.s32 %s8, 1
      %s120 = smul.u32 74, %s13
      %p121 = scmp.lt.s32.totalorder %s120, 147
      %s122 = scalar_select %p121, %s120, 147
      %s123 = smul.addr %s122, 4
      %s124 = smul.addr %s123, 4
      %s125 = scalar_lea.vmem %s0, %s124
      %p126 = pneg %p34
      %p127 = pneg %p31
      %p128 = pneg %p55
      %p129 = pneg %p52
      %p130 = pneg %p81
      %p131 = pneg %p78
      %s132 = smul.u32 74, %s13
      %p133 = scmp.lt.s32.totalorder %s132, 147
      %s134 = scalar_select %p133, %s132, 147
      %s135 = smul.addr %s134, 4
      %s136 = scalar_lea.vmem %s2, %s135
      %s137 = smul.u32 74, %s13
      %p138 = scmp.lt.s32.totalorder %s137, 147
      %s139 = scalar_select %p138, %s137, 147
      %s140 = smul.addr %s139, 4
      %s141 = smul.addr %s140, 4
      %s142 = scalar_lea.vmem %s0, %s141
      %s143 = smul.u32 74, %s13
      %s144 = smul.u32 74, %s13
      %p145 = scmp.lt.s32.totalorder %s144, 147
      %s146 = scalar_select %p145, %s144, 147
      %s147 = smul.addr %s146, 4
      %s148 = scalar_lea.vmem %s2, %s147
      %s149 = smul.u32 74, %s13
      %v151 = vld [vmem:[%s142] sm:$0xff]
      %v152 = vld [vmem:[%s142 + $0x8] sm:$0xff]
      %v153 = vld [vmem:[%s142 + $0x10] sm:$0xff]
      %v154 = vld [vmem:[%s142 + $0x18] sm:$0xff]
      %v155 = vld [vmem:[%s142 + $0x20] sm:$0xff]
      %v156 = vld [vmem:[%s142 + $0x28] sm:$0xff]
      %v157 = vld [vmem:[%s142 + $0x30] sm:$0xff]
      %v158 = vld [vmem:[%s142 + $0x38] sm:$0xff]
      %v159 = vld [vmem:[%s142 + $0x40] sm:$0xff]
      %v160 = vld [vmem:[%s142 + $0x48] sm:$0xff]
      %v161 = vld [vmem:[%s142 + $0x50] sm:$0xff]
      %v162 = vld [vmem:[%s142 + $0x58] sm:$0xff]
      %v163 = vld [vmem:[%s142 + $0x60] sm:$0xff]
      %v164 = vld [vmem:[%s142 + $0x68] sm:$0xff]
      %v165 = vld [vmem:[%s142 + $0x70] sm:$0xff]
      %v166 = vld [vmem:[%s142 + $0x78] sm:$0xff]
      %v167 = vld [vmem:[%s142 + $0x80] sm:$0xff]
      %v168 = vld [vmem:[%s142 + $0x88] sm:$0xff]
      %v169 = vld [vmem:[%s142 + $0x90] sm:$0xff]
      %v170 = vld [vmem:[%s142 + $0x98] sm:$0xff]
      %v171 = vld [vmem:[%s142 + $0xa0] sm:$0xff]
      %v172 = vld [vmem:[%s142 + $0xa8] sm:$0xff]
      %v173 = vld [vmem:[%s142 + $0xb0] sm:$0xff]
      %v174 = vld [vmem:[%s142 + $0xb8] sm:$0xff]
      %v175 = vld [vmem:[%s142 + $0xc0] sm:$0xff]
      %v176 = vld [vmem:[%s142 + $0xc8] sm:$0xff]
      %v177 = vld [vmem:[%s142 + $0xd0] sm:$0xff]
      %v178 = vld [vmem:[%s142 + $0xd8] sm:$0xff]
      %v179 = vld [vmem:[%s142 + $0xe0] sm:$0xff]
      %v180 = vld [vmem:[%s142 + $0xe8] sm:$0xff]
      %v181 = vld [vmem:[%s142 + $0xf0] sm:$0xff]
      %v182 = vld [vmem:[%s142 + $0xf8] sm:$0xff]
      %v183 = vld [vmem:[%s142 + $0x100] sm:$0xff]
      %v184 = vld [vmem:[%s142 + $0x108] sm:$0xff]
      %v185 = vld [vmem:[%s142 + $0x110] sm:$0xff]
      %v186 = vld [vmem:[%s142 + $0x118] sm:$0xff]
      %v187 = vld [vmem:[%s142 + $0x120] sm:$0xff]
      %v188 = vld [vmem:[%s142 + $0x128] sm:$0xff]
      %v189 = vld [vmem:[%s142 + $0x130] sm:$0xff]
      %v190 = vld [vmem:[%s142 + $0x138] sm:$0xff]
      %v191 = vld [vmem:[%s142 + $0x140] sm:$0xff]
      %v192 = vld [vmem:[%s142 + $0x148] sm:$0xff]
      %v193 = vld [vmem:[%s142 + $0x150] sm:$0xff]
      %v194 = vld [vmem:[%s142 + $0x158] sm:$0xff]
      %v195 = vld [vmem:[%s142 + $0x160] sm:$0xff]
      %v196 = vld [vmem:[%s142 + $0x168] sm:$0xff]
      %v197 = vld [vmem:[%s142 + $0x170] sm:$0xff]
      %v198 = vld [vmem:[%s142 + $0x178] sm:$0xff]
      %v199 = vld [vmem:[%s142 + $0x180] sm:$0xff]
      %v200 = vld [vmem:[%s142 + $0x188] sm:$0xff]
      %v201 = vld [vmem:[%s142 + $0x190] sm:$0xff]
      %v202 = vld [vmem:[%s142 + $0x198] sm:$0xff]
      %v203 = vld [vmem:[%s142 + $0x1a0] sm:$0xff]
      %v204 = vld [vmem:[%s142 + $0x1a8] sm:$0xff]
      %v205 = vld [vmem:[%s142 + $0x1b0] sm:$0xff]
      %v206 = vld [vmem:[%s142 + $0x1b8] sm:$0xff]
      %v207 = vld [vmem:[%s142 + $0x1c0] sm:$0xff]
      %v208 = vld [vmem:[%s142 + $0x1c8] sm:$0xff]
      %v209 = vld [vmem:[%s142 + $0x1d0] sm:$0xff]
      %v210 = vld [vmem:[%s142 + $0x1d8] sm:$0xff]
      %v211 = vld [vmem:[%s142 + $0x1e0] sm:$0xff]
      %v212 = vld [vmem:[%s142 + $0x1e8] sm:$0xff]
      %v213 = vld [vmem:[%s142 + $0x1f0] sm:$0xff]
      %v214 = vld [vmem:[%s142 + $0x1f8] sm:$0xff]
      %v215 = vld [vmem:[%s142 + $0x200] sm:$0xff]
      %v216 = vld [vmem:[%s142 + $0x208] sm:$0xff]
      %v217 = vld [vmem:[%s142 + $0x210] sm:$0xff]
      %v218 = vld [vmem:[%s142 + $0x218] sm:$0xff]
      %v219 = vld [vmem:[%s142 + $0x220] sm:$0xff]
      %v220 = vld [vmem:[%s142 + $0x228] sm:$0xff]
      %v221 = vld [vmem:[%s142 + $0x230] sm:$0xff]
      %v222 = vld [vmem:[%s142 + $0x238] sm:$0xff]
      %v223 = vld [vmem:[%s142 + $0x240] sm:$0xff]
      %v224 = vld [vmem:[%s142 + $0x248] sm:$0xff]
      %v225 = vld [vmem:[%s142 + $0x250] sm:$0xff]
      %v226 = vld [vmem:[%s142 + $0x258] sm:$0xff]
      %v227 = vld [vmem:[%s142 + $0x260] sm:$0xff]
      %v228 = vld [vmem:[%s142 + $0x268] sm:$0xff]
      %v229 = vld [vmem:[%s142 + $0x270] sm:$0xff]
      %v230 = vld [vmem:[%s142 + $0x278] sm:$0xff]
      %v231 = vld [vmem:[%s142 + $0x280] sm:$0xff]
      %v232 = vld [vmem:[%s142 + $0x288] sm:$0xff]
      %v233 = vld [vmem:[%s142 + $0x290] sm:$0xff]
      %v234 = vld [vmem:[%s142 + $0x298] sm:$0xff]
      %v235 = vld [vmem:[%s142 + $0x2a0] sm:$0xff]
      %v236 = vld [vmem:[%s142 + $0x2a8] sm:$0xff]
      %v237 = vld [vmem:[%s142 + $0x2b0] sm:$0xff]
      %v238 = vld [vmem:[%s142 + $0x2b8] sm:$0xff]
      %v239 = vld [vmem:[%s142 + $0x2c0] sm:$0xff]
      %v240 = vld [vmem:[%s142 + $0x2c8] sm:$0xff]
      %v241 = vld [vmem:[%s142 + $0x2d0] sm:$0xff]
      %v242 = vld [vmem:[%s142 + $0x2d8] sm:$0xff]
      %v243 = vld [vmem:[%s142 + $0x2e0] sm:$0xff]
      %v244 = vld [vmem:[%s142 + $0x2e8] sm:$0xff]
      %v245 = vld [vmem:[%s142 + $0x2f0] sm:$0xff]
      %v246 = vld [vmem:[%s142 + $0x2f8] sm:$0xff]
      %v247 = vld [vmem:[%s142 + $0x300] sm:$0xff]
      %v248 = vld [vmem:[%s142 + $0x308] sm:$0xff]
      %v249 = vld [vmem:[%s142 + $0x310] sm:$0xff]
      %v250 = vld [vmem:[%s142 + $0x318] sm:$0xff]
      %v251 = vld [vmem:[%s142 + $0x320] sm:$0xff]
      %v252 = vld [vmem:[%s142 + $0x328] sm:$0xff]
      %v253 = vld [vmem:[%s142 + $0x330] sm:$0xff]
      %v254 = vld [vmem:[%s142 + $0x338] sm:$0xff]
      %v255 = vld [vmem:[%s142 + $0x340] sm:$0xff]
      %v256 = vld [vmem:[%s142 + $0x348] sm:$0xff]
      %v257 = vld [vmem:[%s142 + $0x350] sm:$0xff]
      %v258 = vld [vmem:[%s142 + $0x358] sm:$0xff]
      %v259 = vld [vmem:[%s142 + $0x360] sm:$0xff]
      %v260 = vld [vmem:[%s142 + $0x368] sm:$0xff]
      %v261 = vld [vmem:[%s142 + $0x370] sm:$0xff]
      %v262 = vld [vmem:[%s142 + $0x378] sm:$0xff]
      %v263 = vld [vmem:[%s142 + $0x380] sm:$0xff]
      %v264 = vld [vmem:[%s142 + $0x388] sm:$0xff]
      %v265 = vld [vmem:[%s142 + $0x390] sm:$0xff]
      %v266 = vld [vmem:[%s142 + $0x398] sm:$0xff]
      %v267 = vld [vmem:[%s142 + $0x3a0] sm:$0xff]
      %v268 = vld [vmem:[%s142 + $0x3a8] sm:$0xff]
      %v269 = vld [vmem:[%s142 + $0x3b0] sm:$0xff]
      %v270 = vld [vmem:[%s142 + $0x3b8] sm:$0xff]
      %v271 = vld [vmem:[%s142 + $0x3c0] sm:$0xff]
      %v272 = vld [vmem:[%s142 + $0x3c8] sm:$0xff]
      %v273 = vld [vmem:[%s142 + $0x3d0] sm:$0xff]
      %v274 = vld [vmem:[%s142 + $0x3d8] sm:$0xff]
      %v275 = vld [vmem:[%s142 + $0x3e0] sm:$0xff]
      %v276 = vld [vmem:[%s142 + $0x3e8] sm:$0xff]
      %v277 = vld [vmem:[%s142 + $0x3f0] sm:$0xff]
      %v278 = vld [vmem:[%s142 + $0x3f8] sm:$0xff]
      %v279 = vld [vmem:[%s142 + $0x400] sm:$0xff]
      %v280 = vld [vmem:[%s142 + $0x408] sm:$0xff]
      %v281 = vld [vmem:[%s142 + $0x410] sm:$0xff]
      %v282 = vld [vmem:[%s142 + $0x418] sm:$0xff]
      %v283 = vld [vmem:[%s142 + $0x420] sm:$0xff]
      %v284 = vld [vmem:[%s142 + $0x428] sm:$0xff]
      %v285 = vld [vmem:[%s142 + $0x430] sm:$0xff]
      %v286 = vld [vmem:[%s142 + $0x438] sm:$0xff]
      %v287 = vld [vmem:[%s142 + $0x440] sm:$0xff]
      %v288 = vld [vmem:[%s142 + $0x448] sm:$0xff]
      %v289 = vld [vmem:[%s142 + $0x450] sm:$0xff]
      %v290 = vld [vmem:[%s142 + $0x458] sm:$0xff]
      %v291 = vld [vmem:[%s142 + $0x460] sm:$0xff]
      %v292 = vld [vmem:[%s142 + $0x468] sm:$0xff]
      %v293 = vld [vmem:[%s142 + $0x470] sm:$0xff]
      %v294 = vld [vmem:[%s142 + $0x478] sm:$0xff]
      %v295 = vld [vmem:[%s142 + $0x480] sm:$0xff]
      %v296 = vld [vmem:[%s142 + $0x488] sm:$0xff]
      %v297 = vld [vmem:[%s142 + $0x490] sm:$0xff]
      %v298 = vld [vmem:[%s142 + $0x498] sm:$0xff]
      %v299 = vld [vmem:[%s1] sm:$0xf]
      %v300 = vld [vmem:[%s1 + $0x4] sm:$0xf]
      %v301 = vld [vmem:[%s1 + $0x8] sm:$0xf]
      %v302 = vld [vmem:[%s1 + $0xc] sm:$0xf]
      %v303 = vld [vmem:[%s1 + $0x10] sm:$0xf]
      %v304 = vld [vmem:[%s1 + $0x14] sm:$0xf]
      %v305 = vld [vmem:[%s1 + $0x18] sm:$0xf]
      %v306 = vld [vmem:[%s1 + $0x1c] sm:$0xf]
      %v307 = vld [vmem:[%s1 + $0x20] sm:$0xf]
      %v308 = vld [vmem:[%s1 + $0x24] sm:$0xf]
      %v309 = vld [vmem:[%s1 + $0x28] sm:$0xf]
      %v310 = vld [vmem:[%s1 + $0x2c] sm:$0xf]
      %v311 = vld [vmem:[%s1 + $0x30] sm:$0xf]
      %v312 = vld [vmem:[%s1 + $0x34] sm:$0xf]
      %v313 = vld [vmem:[%s1 + $0x38] sm:$0xf]
      %v314 = vld [vmem:[%s1 + $0x3c] sm:$0xf]
      %v315 = vld [vmem:[%s1 + $0x40] sm:$0xf]
      %v316 = vld [vmem:[%s1 + $0x44] sm:$0xf]
      %v317 = vld [vmem:[%s1 + $0x48] sm:$0xf]
      %v318 = vld [vmem:[%s1 + $0x4c] sm:$0xf]
      %v319 = vld [vmem:[%s1 + $0x50] sm:$0xf]
      %v320 = vld [vmem:[%s1 + $0x54] sm:$0xf]
      %v321 = vld [vmem:[%s1 + $0x58] sm:$0xf]
      %v322 = vld [vmem:[%s1 + $0x5c] sm:$0xf]
      %v323 = vld [vmem:[%s1 + $0x60] sm:$0xf]
      %v324 = vld [vmem:[%s1 + $0x64] sm:$0xf]
      %v325 = vld [vmem:[%s1 + $0x68] sm:$0xf]
      %v326 = vld [vmem:[%s1 + $0x6c] sm:$0xf]
      %v327 = vld [vmem:[%s1 + $0x70] sm:$0xf]
      %v328 = vld [vmem:[%s1 + $0x74] sm:$0xf]
      %v329 = vld [vmem:[%s1 + $0x78] sm:$0xf]
      %v330 = vld [vmem:[%s1 + $0x7c] sm:$0xf]
      %v331 = vld [vmem:[%s1 + $0x80] sm:$0xf]
      %v332 = vld [vmem:[%s1 + $0x84] sm:$0xf]
      %v333 = vld [vmem:[%s1 + $0x88] sm:$0xf]
      %v334 = vld [vmem:[%s1 + $0x8c] sm:$0xf]
      %v335 = vld [vmem:[%s1 + $0x90] sm:$0xf]
      %v336 = vld [vmem:[%s1 + $0x94] sm:$0xf]
      %v337 = vld [vmem:[%s1 + $0x98] sm:$0xf]
      %v338 = vld [vmem:[%s1 + $0x9c] sm:$0xf]
      %v339 = vld [vmem:[%s1 + $0xa0] sm:$0xf]
      %v340 = vld [vmem:[%s1 + $0xa4] sm:$0xf]
      %v341 = vld [vmem:[%s1 + $0xa8] sm:$0xf]
      %v342 = vld [vmem:[%s1 + $0xac] sm:$0xf]
      %v343 = vld [vmem:[%s1 + $0xb0] sm:$0xf]
      %v344 = vld [vmem:[%s1 + $0xb4] sm:$0xf]
      %v345 = vld [vmem:[%s1 + $0xb8] sm:$0xf]
      %v346 = vld [vmem:[%s1 + $0xbc] sm:$0xf]
      %v347 = vld [vmem:[%s1 + $0xc0] sm:$0xf]
      %v496 = vunpack.c.l.b16 %v151
      %v497 = vunpack.c.h.b16 %v151
      %v498 = vunpack.c.l.b16 %v152
      %v499 = vunpack.c.h.b16 %v152
      %v500 = vunpack.c.l.b16 %v153
      %v501 = vunpack.c.h.b16 %v153
      %v502 = vunpack.c.l.b16 %v154
      %v503 = vunpack.c.h.b16 %v154
      %v504 = vunpack.c.l.b16 %v155
      %v505 = vunpack.c.h.b16 %v155
      %v506 = vunpack.c.l.b16 %v156
      %v507 = vunpack.c.h.b16 %v156
      %v508 = vunpack.c.l.b16 %v157
      %v509 = vunpack.c.h.b16 %v157
      %v510 = vunpack.c.l.b16 %v158
      %v511 = vunpack.c.h.b16 %v158
      %v512 = vunpack.c.l.b16 %v159
      %v513 = vunpack.c.h.b16 %v159
      %v514 = vunpack.c.l.b16 %v160
      %v515 = vunpack.c.h.b16 %v160
      %v516 = vunpack.c.l.b16 %v161
      %v517 = vunpack.c.h.b16 %v161
      %v518 = vunpack.c.l.b16 %v162
      %v519 = vunpack.c.h.b16 %v162
      %v520 = vunpack.c.l.b16 %v163
      %v521 = vunpack.c.h.b16 %v163
      %v522 = vunpack.c.l.b16 %v164
      %v523 = vunpack.c.h.b16 %v164
      %v524 = vunpack.c.l.b16 %v165
      %v525 = vunpack.c.h.b16 %v165
      %v526 = vunpack.c.l.b16 %v166
      %v527 = vunpack.c.h.b16 %v166
      %v528 = vunpack.c.l.b16 %v167
      %v529 = vunpack.c.h.b16 %v167
      %v530 = vunpack.c.l.b16 %v168
      %v531 = vunpack.c.h.b16 %v168
      %v532 = vunpack.c.l.b16 %v169
      %v533 = vunpack.c.h.b16 %v169
      %v534 = vunpack.c.l.b16 %v170
      %v535 = vunpack.c.h.b16 %v170
      %v536 = vunpack.c.l.b16 %v171
      %v537 = vunpack.c.h.b16 %v171
      %v538 = vunpack.c.l.b16 %v172
      %v539 = vunpack.c.h.b16 %v172
      %v540 = vunpack.c.l.b16 %v173
      %v541 = vunpack.c.h.b16 %v173
      %v542 = vunpack.c.l.b16 %v174
      %v543 = vunpack.c.h.b16 %v174
      %v544 = vunpack.c.l.b16 %v175
      %v545 = vunpack.c.h.b16 %v175
      %v546 = vunpack.c.l.b16 %v176
      %v547 = vunpack.c.h.b16 %v176
      %v548 = vunpack.c.l.b16 %v177
      %v549 = vunpack.c.h.b16 %v177
      %v550 = vunpack.c.l.b16 %v178
      %v551 = vunpack.c.h.b16 %v178
      %v552 = vunpack.c.l.b16 %v179
      %v553 = vunpack.c.h.b16 %v179
      %v554 = vunpack.c.l.b16 %v180
      %v555 = vunpack.c.h.b16 %v180
      %v556 = vunpack.c.l.b16 %v181
      %v557 = vunpack.c.h.b16 %v181
      %v558 = vunpack.c.l.b16 %v182
      %v559 = vunpack.c.h.b16 %v182
      %v560 = vunpack.c.l.b16 %v183
      %v561 = vunpack.c.h.b16 %v183
      %v562 = vunpack.c.l.b16 %v184
      %v563 = vunpack.c.h.b16 %v184
      %v564 = vunpack.c.l.b16 %v185
      %v565 = vunpack.c.h.b16 %v185
      %v566 = vunpack.c.l.b16 %v186
      %v567 = vunpack.c.h.b16 %v186
      %v568 = vunpack.c.l.b16 %v187
      %v569 = vunpack.c.h.b16 %v187
      %v570 = vunpack.c.l.b16 %v188
      %v571 = vunpack.c.h.b16 %v188
      %v572 = vunpack.c.l.b16 %v189
      %v573 = vunpack.c.h.b16 %v189
      %v574 = vunpack.c.l.b16 %v190
      %v575 = vunpack.c.h.b16 %v190
      %v576 = vunpack.c.l.b16 %v191
      %v577 = vunpack.c.h.b16 %v191
      %v578 = vunpack.c.l.b16 %v192
      %v579 = vunpack.c.h.b16 %v192
      %v580 = vunpack.c.l.b16 %v193
      %v581 = vunpack.c.h.b16 %v193
      %v582 = vunpack.c.l.b16 %v194
      %v583 = vunpack.c.h.b16 %v194
      %v584 = vunpack.c.l.b16 %v195
      %v585 = vunpack.c.h.b16 %v195
      %v586 = vunpack.c.l.b16 %v196
      %v587 = vunpack.c.h.b16 %v196
      %v588 = vunpack.c.l.b16 %v197
      %v589 = vunpack.c.h.b16 %v197
      %v590 = vunpack.c.l.b16 %v198
      %v591 = vunpack.c.h.b16 %v198
      %v592 = vunpack.c.l.b16 %v199
      %v593 = vunpack.c.h.b16 %v199
      %v594 = vunpack.c.l.b16 %v200
      %v595 = vunpack.c.h.b16 %v200
      %v596 = vunpack.c.l.b16 %v201
      %v597 = vunpack.c.h.b16 %v201
      %v598 = vunpack.c.l.b16 %v202
      %v599 = vunpack.c.h.b16 %v202
      %v600 = vunpack.c.l.b16 %v203
      %v601 = vunpack.c.h.b16 %v203
      %v602 = vunpack.c.l.b16 %v204
      %v603 = vunpack.c.h.b16 %v204
      %v604 = vunpack.c.l.b16 %v205
      %v605 = vunpack.c.h.b16 %v205
      %v606 = vunpack.c.l.b16 %v206
      %v607 = vunpack.c.h.b16 %v206
      %v608 = vunpack.c.l.b16 %v207
      %v609 = vunpack.c.h.b16 %v207
      %v610 = vunpack.c.l.b16 %v208
      %v611 = vunpack.c.h.b16 %v208
      %v612 = vunpack.c.l.b16 %v209
      %v613 = vunpack.c.h.b16 %v209
      %v614 = vunpack.c.l.b16 %v210
      %v615 = vunpack.c.h.b16 %v210
      %v616 = vunpack.c.l.b16 %v211
      %v617 = vunpack.c.h.b16 %v211
      %v618 = vunpack.c.l.b16 %v212
      %v619 = vunpack.c.h.b16 %v212
      %v620 = vunpack.c.l.b16 %v213
      %v621 = vunpack.c.h.b16 %v213
      %v622 = vunpack.c.l.b16 %v214
      %v623 = vunpack.c.h.b16 %v214
      %v624 = vunpack.c.l.b16 %v215
      %v625 = vunpack.c.h.b16 %v215
      %v626 = vunpack.c.l.b16 %v216
      %v627 = vunpack.c.h.b16 %v216
      %v628 = vunpack.c.l.b16 %v217
      %v629 = vunpack.c.h.b16 %v217
      %v630 = vunpack.c.l.b16 %v218
      %v631 = vunpack.c.h.b16 %v218
      %v632 = vunpack.c.l.b16 %v219
      %v633 = vunpack.c.h.b16 %v219
      %v634 = vunpack.c.l.b16 %v220
      %v635 = vunpack.c.h.b16 %v220
      %v636 = vunpack.c.l.b16 %v221
      %v637 = vunpack.c.h.b16 %v221
      %v638 = vunpack.c.l.b16 %v222
      %v639 = vunpack.c.h.b16 %v222
      %v640 = vunpack.c.l.b16 %v223
      %v641 = vunpack.c.h.b16 %v223
      %v642 = vunpack.c.l.b16 %v224
      %v643 = vunpack.c.h.b16 %v224
      %v644 = vunpack.c.l.b16 %v225
      %v645 = vunpack.c.h.b16 %v225
      %v646 = vunpack.c.l.b16 %v226
      %v647 = vunpack.c.h.b16 %v226
      %v648 = vunpack.c.l.b16 %v227
      %v649 = vunpack.c.h.b16 %v227
      %v650 = vunpack.c.l.b16 %v228
      %v651 = vunpack.c.h.b16 %v228
      %v652 = vunpack.c.l.b16 %v229
      %v653 = vunpack.c.h.b16 %v229
      %v654 = vunpack.c.l.b16 %v230
      %v655 = vunpack.c.h.b16 %v230
      %v656 = vunpack.c.l.b16 %v231
      %v657 = vunpack.c.h.b16 %v231
      %v658 = vunpack.c.l.b16 %v232
      %v659 = vunpack.c.h.b16 %v232
      %v660 = vunpack.c.l.b16 %v233
      %v661 = vunpack.c.h.b16 %v233
      %v662 = vunpack.c.l.b16 %v234
      %v663 = vunpack.c.h.b16 %v234
      %v664 = vunpack.c.l.b16 %v235
      %v665 = vunpack.c.h.b16 %v235
      %v666 = vunpack.c.l.b16 %v236
      %v667 = vunpack.c.h.b16 %v236
      %v668 = vunpack.c.l.b16 %v237
      %v669 = vunpack.c.h.b16 %v237
      %v670 = vunpack.c.l.b16 %v238
      %v671 = vunpack.c.h.b16 %v238
      %v672 = vunpack.c.l.b16 %v239
      %v673 = vunpack.c.h.b16 %v239
      %v674 = vunpack.c.l.b16 %v240
      %v675 = vunpack.c.h.b16 %v240
      %v676 = vunpack.c.l.b16 %v241
      %v677 = vunpack.c.h.b16 %v241
      %v678 = vunpack.c.l.b16 %v242
      %v679 = vunpack.c.h.b16 %v242
      %v680 = vunpack.c.l.b16 %v243
      %v681 = vunpack.c.h.b16 %v243
      %v682 = vunpack.c.l.b16 %v244
      %v683 = vunpack.c.h.b16 %v244
      %v684 = vunpack.c.l.b16 %v245
      %v685 = vunpack.c.h.b16 %v245
      %v686 = vunpack.c.l.b16 %v246
      %v687 = vunpack.c.h.b16 %v246
      %v688 = vunpack.c.l.b16 %v247
      %v689 = vunpack.c.h.b16 %v247
      %v690 = vunpack.c.l.b16 %v248
      %v691 = vunpack.c.h.b16 %v248
      %v692 = vunpack.c.l.b16 %v249
      %v693 = vunpack.c.h.b16 %v249
      %v694 = vunpack.c.l.b16 %v250
      %v695 = vunpack.c.h.b16 %v250
      %v696 = vunpack.c.l.b16 %v251
      %v697 = vunpack.c.h.b16 %v251
      %v698 = vunpack.c.l.b16 %v252
      %v699 = vunpack.c.h.b16 %v252
      %v700 = vunpack.c.l.b16 %v253
      %v701 = vunpack.c.h.b16 %v253
      %v702 = vunpack.c.l.b16 %v254
      %v703 = vunpack.c.h.b16 %v254
      %v704 = vunpack.c.l.b16 %v255
      %v705 = vunpack.c.h.b16 %v255
      %v706 = vunpack.c.l.b16 %v256
      %v707 = vunpack.c.h.b16 %v256
      %v708 = vunpack.c.l.b16 %v257
      %v709 = vunpack.c.h.b16 %v257
      %v710 = vunpack.c.l.b16 %v258
      %v711 = vunpack.c.h.b16 %v258
      %v712 = vunpack.c.l.b16 %v259
      %v713 = vunpack.c.h.b16 %v259
      %v714 = vunpack.c.l.b16 %v260
      %v715 = vunpack.c.h.b16 %v260
      %v716 = vunpack.c.l.b16 %v261
      %v717 = vunpack.c.h.b16 %v261
      %v718 = vunpack.c.l.b16 %v262
      %v719 = vunpack.c.h.b16 %v262
      %v720 = vunpack.c.l.b16 %v263
      %v721 = vunpack.c.h.b16 %v263
      %v722 = vunpack.c.l.b16 %v264
      %v723 = vunpack.c.h.b16 %v264
      %v724 = vunpack.c.l.b16 %v265
      %v725 = vunpack.c.h.b16 %v265
      %v726 = vunpack.c.l.b16 %v266
      %v727 = vunpack.c.h.b16 %v266
      %v728 = vunpack.c.l.b16 %v267
      %v729 = vunpack.c.h.b16 %v267
      %v730 = vunpack.c.l.b16 %v268
      %v731 = vunpack.c.h.b16 %v268
      %v732 = vunpack.c.l.b16 %v269
      %v733 = vunpack.c.h.b16 %v269
      %v734 = vunpack.c.l.b16 %v270
      %v735 = vunpack.c.h.b16 %v270
      %v736 = vunpack.c.l.b16 %v271
      %v737 = vunpack.c.h.b16 %v271
      %v738 = vunpack.c.l.b16 %v272
      %v739 = vunpack.c.h.b16 %v272
      %v740 = vunpack.c.l.b16 %v273
      %v741 = vunpack.c.h.b16 %v273
      %v742 = vunpack.c.l.b16 %v274
      %v743 = vunpack.c.h.b16 %v274
      %v744 = vunpack.c.l.b16 %v275
      %v745 = vunpack.c.h.b16 %v275
      %v746 = vunpack.c.l.b16 %v276
      %v747 = vunpack.c.h.b16 %v276
      %v748 = vunpack.c.l.b16 %v277
      %v749 = vunpack.c.h.b16 %v277
      %v750 = vunpack.c.l.b16 %v278
      %v751 = vunpack.c.h.b16 %v278
      %v752 = vunpack.c.l.b16 %v279
      %v753 = vunpack.c.h.b16 %v279
      %v754 = vunpack.c.l.b16 %v280
      %v755 = vunpack.c.h.b16 %v280
      %v756 = vunpack.c.l.b16 %v281
      %v757 = vunpack.c.h.b16 %v281
      %v758 = vunpack.c.l.b16 %v282
      %v759 = vunpack.c.h.b16 %v282
      %v760 = vunpack.c.l.b16 %v283
      %v761 = vunpack.c.h.b16 %v283
      %v762 = vunpack.c.l.b16 %v284
      %v763 = vunpack.c.h.b16 %v284
      %v764 = vunpack.c.l.b16 %v285
      %v765 = vunpack.c.h.b16 %v285
      %v766 = vunpack.c.l.b16 %v286
      %v767 = vunpack.c.h.b16 %v286
      %v768 = vunpack.c.l.b16 %v287
      %v769 = vunpack.c.h.b16 %v287
      %v770 = vunpack.c.l.b16 %v288
      %v771 = vunpack.c.h.b16 %v288
      %v772 = vunpack.c.l.b16 %v289
      %v773 = vunpack.c.h.b16 %v289
      %v774 = vunpack.c.l.b16 %v290
      %v775 = vunpack.c.h.b16 %v290
      %v776 = vunpack.c.l.b16 %v291
      %v777 = vunpack.c.h.b16 %v291
      %v778 = vunpack.c.l.b16 %v292
      %v779 = vunpack.c.h.b16 %v292
      %v780 = vunpack.c.l.b16 %v293
      %v781 = vunpack.c.h.b16 %v293
      %v782 = vunpack.c.l.b16 %v294
      %v783 = vunpack.c.h.b16 %v294
      %v784 = vunpack.c.l.b16 %v295
      %v785 = vunpack.c.h.b16 %v295
      %v786 = vunpack.c.l.b16 %v296
      %v787 = vunpack.c.h.b16 %v296
      %v788 = vunpack.c.l.b16 %v297
      %v789 = vunpack.c.h.b16 %v297
      %v790 = vunpack.c.l.b16 %v298
      %v791 = vunpack.c.h.b16 %v298
      %v792 = vpack.c.b16 %v500, %v496
      %v793 = vpack.c.b16 %v501, %v497
      %v794 = vpack.c.b16 %v502, %v498
      %v795 = vpack.c.b16 %v503, %v499
      %v796 = vpack.c.b16 %v508, %v504
      %v797 = vpack.c.b16 %v509, %v505
      %v798 = vpack.c.b16 %v510, %v506
      %v799 = vpack.c.b16 %v511, %v507
      %v800 = vpack.c.b16 %v516, %v512
      %v801 = vpack.c.b16 %v517, %v513
      %v802 = vpack.c.b16 %v518, %v514
      %v803 = vpack.c.b16 %v519, %v515
      %v804 = vpack.c.b16 %v524, %v520
      %v805 = vpack.c.b16 %v525, %v521
      %v806 = vpack.c.b16 %v526, %v522
      %v807 = vpack.c.b16 %v527, %v523
      %v808 = vpack.c.b16 %v532, %v528
      %v809 = vpack.c.b16 %v533, %v529
      %v810 = vpack.c.b16 %v534, %v530
      %v811 = vpack.c.b16 %v535, %v531
      %v812 = vpack.c.b16 %v540, %v536
      %v813 = vpack.c.b16 %v541, %v537
      %v814 = vpack.c.b16 %v542, %v538
      %v815 = vpack.c.b16 %v543, %v539
      %v816 = vpack.c.b16 %v548, %v544
      %v817 = vpack.c.b16 %v549, %v545
      %v818 = vpack.c.b16 %v550, %v546
      %v819 = vpack.c.b16 %v551, %v547
      %v820 = vpack.c.b16 %v556, %v552
      %v821 = vpack.c.b16 %v557, %v553
      %v822 = vpack.c.b16 %v558, %v554
      %v823 = vpack.c.b16 %v559, %v555
      %v824 = vpack.c.b16 %v564, %v560
      %v825 = vpack.c.b16 %v565, %v561
      %v826 = vpack.c.b16 %v566, %v562
      %v827 = vpack.c.b16 %v567, %v563
      %v828 = vpack.c.b16 %v572, %v568
      %v829 = vpack.c.b16 %v573, %v569
      %v830 = vpack.c.b16 %v574, %v570
      %v831 = vpack.c.b16 %v575, %v571
      %v832 = vpack.c.b16 %v580, %v576
      %v833 = vpack.c.b16 %v581, %v577
      %v834 = vpack.c.b16 %v582, %v578
      %v835 = vpack.c.b16 %v583, %v579
      %v836 = vpack.c.b16 %v588, %v584
      %v837 = vpack.c.b16 %v589, %v585
      %v838 = vpack.c.b16 %v590, %v586
      %v839 = vpack.c.b16 %v591, %v587
      %v840 = vpack.c.b16 %v596, %v592
      %v841 = vpack.c.b16 %v597, %v593
      %v842 = vpack.c.b16 %v598, %v594
      %v843 = vpack.c.b16 %v599, %v595
      %v844 = vpack.c.b16 %v604, %v600
      %v845 = vpack.c.b16 %v605, %v601
      %v846 = vpack.c.b16 %v606, %v602
      %v847 = vpack.c.b16 %v607, %v603
      %v848 = vpack.c.b16 %v612, %v608
      %v849 = vpack.c.b16 %v613, %v609
      %v850 = vpack.c.b16 %v614, %v610
      %v851 = vpack.c.b16 %v615, %v611
      %v852 = vpack.c.b16 %v620, %v616
      %v853 = vpack.c.b16 %v621, %v617
      %v854 = vpack.c.b16 %v622, %v618
      %v855 = vpack.c.b16 %v623, %v619
      %v856 = vpack.c.b16 %v628, %v624
      %v857 = vpack.c.b16 %v629, %v625
      %v858 = vpack.c.b16 %v630, %v626
      %v859 = vpack.c.b16 %v631, %v627
      %v860 = vpack.c.b16 %v636, %v632
      %v861 = vpack.c.b16 %v637, %v633
      %v862 = vpack.c.b16 %v638, %v634
      %v863 = vpack.c.b16 %v639, %v635
      %v864 = vpack.c.b16 %v644, %v640
      %v865 = vpack.c.b16 %v645, %v641
      %v866 = vpack.c.b16 %v646, %v642
      %v867 = vpack.c.b16 %v647, %v643
      %v868 = vpack.c.b16 %v652, %v648
      %v869 = vpack.c.b16 %v653, %v649
      %v870 = vpack.c.b16 %v654, %v650
      %v871 = vpack.c.b16 %v655, %v651
      %v872 = vpack.c.b16 %v660, %v656
      %v873 = vpack.c.b16 %v661, %v657
      %v874 = vpack.c.b16 %v662, %v658
      %v875 = vpack.c.b16 %v663, %v659
      %v876 = vpack.c.b16 %v668, %v664
      %v877 = vpack.c.b16 %v669, %v665
      %v878 = vpack.c.b16 %v670, %v666
      %v879 = vpack.c.b16 %v671, %v667
      %v880 = vpack.c.b16 %v676, %v672
      %v881 = vpack.c.b16 %v677, %v673
      %v882 = vpack.c.b16 %v678, %v674
      %v883 = vpack.c.b16 %v679, %v675
      %v884 = vpack.c.b16 %v684, %v680
      %v885 = vpack.c.b16 %v685, %v681
      %v886 = vpack.c.b16 %v686, %v682
      %v887 = vpack.c.b16 %v687, %v683
      %v888 = vpack.c.b16 %v692, %v688
      %v889 = vpack.c.b16 %v693, %v689
      %v890 = vpack.c.b16 %v694, %v690
      %v891 = vpack.c.b16 %v695, %v691
      %v892 = vpack.c.b16 %v700, %v696
      %v893 = vpack.c.b16 %v701, %v697
      %v894 = vpack.c.b16 %v702, %v698
      %v895 = vpack.c.b16 %v703, %v699
      %v896 = vpack.c.b16 %v708, %v704
      %v897 = vpack.c.b16 %v709, %v705
      %v898 = vpack.c.b16 %v710, %v706
      %v899 = vpack.c.b16 %v711, %v707
      %v900 = vpack.c.b16 %v716, %v712
      %v901 = vpack.c.b16 %v717, %v713
      %v902 = vpack.c.b16 %v718, %v714
      %v903 = vpack.c.b16 %v719, %v715
      %v904 = vpack.c.b16 %v724, %v720
      %v905 = vpack.c.b16 %v725, %v721
      %v906 = vpack.c.b16 %v726, %v722
      %v907 = vpack.c.b16 %v727, %v723
      %v908 = vpack.c.b16 %v732, %v728
      %v909 = vpack.c.b16 %v733, %v729
      %v910 = vpack.c.b16 %v734, %v730
      %v911 = vpack.c.b16 %v735, %v731
      %v912 = vpack.c.b16 %v740, %v736
      %v913 = vpack.c.b16 %v741, %v737
      %v914 = vpack.c.b16 %v742, %v738
      %v915 = vpack.c.b16 %v743, %v739
      %v916 = vpack.c.b16 %v748, %v744
      %v917 = vpack.c.b16 %v749, %v745
      %v918 = vpack.c.b16 %v750, %v746
      %v919 = vpack.c.b16 %v751, %v747
      %v920 = vpack.c.b16 %v756, %v752
      %v921 = vpack.c.b16 %v757, %v753
      %v922 = vpack.c.b16 %v758, %v754
      %v923 = vpack.c.b16 %v759, %v755
      %v924 = vpack.c.b16 %v764, %v760
      %v925 = vpack.c.b16 %v765, %v761
      %v926 = vpack.c.b16 %v766, %v762
      %v927 = vpack.c.b16 %v767, %v763
      %v928 = vpack.c.b16 %v772, %v768
      %v929 = vpack.c.b16 %v773, %v769
      %v930 = vpack.c.b16 %v774, %v770
      %v931 = vpack.c.b16 %v775, %v771
      %v932 = vpack.c.b16 %v780, %v776
      %v933 = vpack.c.b16 %v781, %v777
      %v934 = vpack.c.b16 %v782, %v778
      %v935 = vpack.c.b16 %v783, %v779
      %v936 = vpack.c.b16 %v788, %v784
      %v937 = vpack.c.b16 %v789, %v785
      %v938 = vpack.c.b16 %v790, %v786
      %v939 = vpack.c.b16 %v791, %v787
      %v1100 = vunpack.c.l.b16 %v299
      %v1101 = vunpack.c.l.b16 %v300
      %v1102 = vunpack.c.l.b16 %v301
      %v1103 = vunpack.c.l.b16 %v302
      %v1104 = vunpack.c.l.b16 %v303
      %v1105 = vunpack.c.l.b16 %v304
      %v1106 = vunpack.c.l.b16 %v305
      %v1107 = vunpack.c.l.b16 %v306
      %v1108 = vunpack.c.l.b16 %v307
      %v1109 = vunpack.c.l.b16 %v308
      %v1110 = vunpack.c.l.b16 %v309
      %v1111 = vunpack.c.l.b16 %v310
      %v1112 = vunpack.c.l.b16 %v311
      %v1113 = vunpack.c.l.b16 %v312
      %v1114 = vunpack.c.l.b16 %v313
      %v1115 = vunpack.c.l.b16 %v314
      %v1116 = vunpack.c.l.b16 %v315
      %v1117 = vunpack.c.l.b16 %v316
      %v1118 = vunpack.c.l.b16 %v317
      %v1119 = vunpack.c.l.b16 %v318
      %v1120 = vunpack.c.l.b16 %v319
      %v1121 = vunpack.c.l.b16 %v320
      %v1122 = vunpack.c.l.b16 %v321
      %v1123 = vunpack.c.l.b16 %v322
      %v1124 = vunpack.c.l.b16 %v323
      %v1125 = vunpack.c.l.b16 %v324
      %v1126 = vunpack.c.l.b16 %v325
      %v1127 = vunpack.c.l.b16 %v326
      %v1128 = vunpack.c.l.b16 %v327
      %v1129 = vunpack.c.l.b16 %v328
      %v1130 = vunpack.c.l.b16 %v329
      %v1131 = vunpack.c.l.b16 %v330
      %v1132 = vunpack.c.l.b16 %v331
      %v1133 = vunpack.c.l.b16 %v332
      %v1134 = vunpack.c.l.b16 %v333
      %v1135 = vunpack.c.l.b16 %v334
      %v1136 = vunpack.c.l.b16 %v335
      %v1137 = vunpack.c.l.b16 %v336
      %v1138 = vunpack.c.l.b16 %v337
      %v1139 = vunpack.c.l.b16 %v338
      %v1140 = vunpack.c.l.b16 %v339
      %v1141 = vunpack.c.l.b16 %v340
      %v1142 = vunpack.c.l.b16 %v341
      %v1143 = vunpack.c.l.b16 %v342
      %v1144 = vunpack.c.l.b16 %v343
      %v1145 = vunpack.c.l.b16 %v344
      %v1146 = vunpack.c.l.b16 %v345
      %v1147 = vunpack.c.l.b16 %v346
      %v1148 = vunpack.c.l.b16 %v347
      %v1149 = vpack.c.b16 %v1101, %v1100
      %v1150 = vpack.c.b16 %v1103, %v1102
      %v1151 = vpack.c.b16 %v1105, %v1104
      %v1152 = vpack.c.b16 %v1107, %v1106
      %v1153 = vpack.c.b16 %v1109, %v1108
      %v1154 = vpack.c.b16 %v1111, %v1110
      %v1155 = vpack.c.b16 %v1113, %v1112
      %v1156 = vpack.c.b16 %v1115, %v1114
      %v1157 = vpack.c.b16 %v1117, %v1116
      %v1158 = vpack.c.b16 %v1119, %v1118
      %v1159 = vpack.c.b16 %v1121, %v1120
      %v1160 = vpack.c.b16 %v1123, %v1122
      %v1161 = vpack.c.b16 %v1125, %v1124
      %v1162 = vpack.c.b16 %v1127, %v1126
      %v1163 = vpack.c.b16 %v1129, %v1128
      %v1164 = vpack.c.b16 %v1131, %v1130
      %v1165 = vpack.c.b16 %v1133, %v1132
      %v1166 = vpack.c.b16 %v1135, %v1134
      %v1167 = vpack.c.b16 %v1137, %v1136
      %v1168 = vpack.c.b16 %v1139, %v1138
      %v1169 = vpack.c.b16 %v1141, %v1140
      %v1170 = vpack.c.b16 %v1143, %v1142
      %v1171 = vpack.c.b16 %v1145, %v1144
      %v1172 = vpack.c.b16 %v1147, %v1146
      %v1173 = vpack.c.b16 %v1148, %v1148
      %vm1198 = vcmask 64512
      %v1200 = vsel %vm1198, %v795, 0
      %v1203 = vsel %vm1198, %v799, 0
      %v1206 = vsel %vm1198, %v803, 0
      %v1209 = vsel %vm1198, %v807, 0
      %v1212 = vsel %vm1198, %v811, 0
      %v1215 = vsel %vm1198, %v815, 0
      %v1218 = vsel %vm1198, %v819, 0
      %v1221 = vsel %vm1198, %v823, 0
      %v1224 = vsel %vm1198, %v827, 0
      %v1227 = vsel %vm1198, %v831, 0
      %v1230 = vsel %vm1198, %v835, 0
      %v1233 = vsel %vm1198, %v839, 0
      %v1236 = vsel %vm1198, %v843, 0
      %v1239 = vsel %vm1198, %v847, 0
      %v1242 = vsel %vm1198, %v851, 0
      %v1245 = vsel %vm1198, %v855, 0
      %v1248 = vsel %vm1198, %v859, 0
      %v1251 = vsel %vm1198, %v863, 0
      %v1254 = vsel %vm1198, %v867, 0
      %v1257 = vsel %vm1198, %v871, 0
      %v1260 = vsel %vm1198, %v875, 0
      %v1263 = vsel %vm1198, %v879, 0
      %v1266 = vsel %vm1198, %v883, 0
      %v1269 = vsel %vm1198, %v887, 0
      %v1272 = vsel %vm1198, %v891, 0
      %v1275 = vsel %vm1198, %v895, 0
      %v1278 = vsel %vm1198, %v899, 0
      %v1281 = vsel %vm1198, %v903, 0
      %v1284 = vsel %vm1198, %v907, 0
      %v1287 = vsel %vm1198, %v911, 0
      %v1290 = vsel %vm1198, %v915, 0
      %v1293 = vsel %vm1198, %v919, 0
      %v1296 = vsel %vm1198, %v923, 0
      %v1299 = vsel %vm1198, %v927, 0
      %v1302 = vsel %vm1198, %v931, 0
      %v1305 = vsel %vm1198, %v935, 0
      %v1308 = vsel %vm1198, %v939, 0
      %vm1310 = vcmask 1043456
      %v1312 = vsel %vm1310, %v1173, 0
      %1314 = vmatprep.subr.bf16.mxu0 0
      %1315 = vmatpush1.bf16.msra.mxu0 %v1156
      %1316 = vmatprep.subr.bf16.mxu0 0
      %1317 = vmatpush1.bf16.msra.mxu0 %v1155
      %1318 = vmatprep.subr.bf16.mxu0 0
      %1319 = vmatpush1.bf16.msra.mxu0 %v1154
      %1320 = vmatprep.subr.bf16.mxu0 0
      %1321 = vmatpush1.bf16.msra.mxu0 %v1153
      %1322 = vmatprep.subr.bf16.mxu0 0
      %1323 = vmatpush1.bf16.msra.mxu0 %v1152
      %1324 = vmatprep.subr.bf16.mxu0 0
      %1325 = vmatpush1.bf16.msra.mxu0 %v1151
      %1326 = vmatprep.subr.bf16.mxu0 0
      %1327 = vmatpush1.bf16.msra.mxu0 %v1150
      %1328 = vmatprep.subr.bf16.mxu0 0
      %1329 = vmatpush1.bf16.msra.mxu0 %v1149
      %1330 = vmatprep.subr.bf16.mxu0 0
      %1331 = vmatpush2.bf16.msra.mxu0 %v1164
      %1332 = vmatprep.subr.bf16.mxu0 0
      %1333 = vmatpush2.bf16.msra.mxu0 %v1163
      %1334 = vmatprep.subr.bf16.mxu0 0
      %1335 = vmatpush2.bf16.msra.mxu0 %v1162
      %1336 = vmatprep.subr.bf16.mxu0 0
      %1337 = vmatpush2.bf16.msra.mxu0 %v1161
      %1338 = vmatprep.subr.bf16.mxu0 0
      %1339 = vmatpush2.bf16.msra.mxu0 %v1160
      %1340 = vmatprep.subr.bf16.mxu0 0
      %1341 = vmatpush2.bf16.msra.mxu0 %v1159
      %1342 = vmatprep.subr.bf16.mxu0 0
      %1343 = vmatpush2.bf16.msra.mxu0 %v1158
      %1344 = vmatprep.subr.bf16.mxu0 0
      %1345 = vmatpush2.bf16.msra.mxu0 %v1157
      %1346 = vmatprep.mubr.bf16.mxu0 %v793
      %1347 = vmatmul.mubr.bf16.gmra.mxu0 %v792
      %v1348 = vpop.f32.mrf.mxu0
      %v1349 = vadd.f32 0.0, %v1348
      %v1350 = vpop.f32.mrf.mxu0
      %v1351 = vpop.f32.mrf.mxu0
      %v1352 = vadd.f32 0.0, %v1351
      %v1353 = vpop.f32.mrf.mxu0
      %1354 = vmatprep.mubr.bf16.mxu0 %v797
      %1355 = vmatmul.mubr.bf16.gmra.mxu0 %v796
      %v1356 = vpop.f32.mrf.mxu0
      %v1357 = vadd.f32 0.0, %v1356
      %v1358 = vpop.f32.mrf.mxu0
      %v1359 = vpop.f32.mrf.mxu0
      %v1360 = vadd.f32 0.0, %v1359
      %v1361 = vpop.f32.mrf.mxu0
      %1362 = vmatprep.mubr.bf16.mxu0 %v801
      %1363 = vmatmul.mubr.bf16.gmra.mxu0 %v800
      %v1364 = vpop.f32.mrf.mxu0
      %v1365 = vadd.f32 0.0, %v1364
      %v1366 = vpop.f32.mrf.mxu0
      %v1367 = vpop.f32.mrf.mxu0
      %v1368 = vadd.f32 0.0, %v1367
      %v1369 = vpop.f32.mrf.mxu0
      %1370 = vmatprep.mubr.bf16.mxu0 %v805
      %1371 = vmatmul.mubr.bf16.gmra.mxu0 %v804
      %v1372 = vpop.f32.mrf.mxu0
      %v1373 = vadd.f32 0.0, %v1372
      %v1374 = vpop.f32.mrf.mxu0
      %v1375 = vpop.f32.mrf.mxu0
      %v1376 = vadd.f32 0.0, %v1375
      %v1377 = vpop.f32.mrf.mxu0
      %1378 = vmatprep.mubr.bf16.mxu0 %v809
      %1379 = vmatmul.mubr.bf16.gmra.mxu0 %v808
      %v1380 = vpop.f32.mrf.mxu0
      %v1381 = vadd.f32 0.0, %v1380
      %v1382 = vpop.f32.mrf.mxu0
      %v1383 = vpop.f32.mrf.mxu0
      %v1384 = vadd.f32 0.0, %v1383
      %v1385 = vpop.f32.mrf.mxu0
      %1386 = vmatprep.mubr.bf16.mxu0 %v813
      %1387 = vmatmul.mubr.bf16.gmra.mxu0 %v812
      %v1388 = vpop.f32.mrf.mxu0
      %v1389 = vadd.f32 0.0, %v1388
      %v1390 = vpop.f32.mrf.mxu0
      %v1391 = vpop.f32.mrf.mxu0
      %v1392 = vadd.f32 0.0, %v1391
      %v1393 = vpop.f32.mrf.mxu0
      %1394 = vmatprep.mubr.bf16.mxu0 %v817
      %1395 = vmatmul.mubr.bf16.gmra.mxu0 %v816
      %v1396 = vpop.f32.mrf.mxu0
      %v1397 = vadd.f32 0.0, %v1396
      %v1398 = vpop.f32.mrf.mxu0
      %v1399 = vpop.f32.mrf.mxu0
      %v1400 = vadd.f32 0.0, %v1399
      %v1401 = vpop.f32.mrf.mxu0
      %1402 = vmatprep.mubr.bf16.mxu0 %v821
      %1403 = vmatmul.mubr.bf16.gmra.mxu0 %v820
      %v1404 = vpop.f32.mrf.mxu0
      %v1405 = vadd.f32 0.0, %v1404
      %v1406 = vpop.f32.mrf.mxu0
      %v1407 = vpop.f32.mrf.mxu0
      %v1408 = vadd.f32 0.0, %v1407
      %v1409 = vpop.f32.mrf.mxu0
      %1410 = vmatprep.mubr.bf16.mxu0 %v825
      %1411 = vmatmul.mubr.bf16.gmra.mxu0 %v824
      %v1412 = vpop.f32.mrf.mxu0
      %v1413 = vadd.f32 0.0, %v1412
      %v1414 = vpop.f32.mrf.mxu0
      %v1415 = vpop.f32.mrf.mxu0
      %v1416 = vadd.f32 0.0, %v1415
      %v1417 = vpop.f32.mrf.mxu0
      %1418 = vmatprep.mubr.bf16.mxu0 %v829
      %1419 = vmatmul.mubr.bf16.gmra.mxu0 %v828
      %v1420 = vpop.f32.mrf.mxu0
      %v1421 = vadd.f32 0.0, %v1420
      %v1422 = vpop.f32.mrf.mxu0
      %v1423 = vpop.f32.mrf.mxu0
      %v1424 = vadd.f32 0.0, %v1423
      %v1425 = vpop.f32.mrf.mxu0
      %1426 = vmatprep.mubr.bf16.mxu0 %v833
      %1427 = vmatmul.mubr.bf16.gmra.mxu0 %v832
      %v1428 = vpop.f32.mrf.mxu0
      %v1429 = vadd.f32 0.0, %v1428
      %v1430 = vpop.f32.mrf.mxu0
      %v1431 = vpop.f32.mrf.mxu0
      %v1432 = vadd.f32 0.0, %v1431
      %v1433 = vpop.f32.mrf.mxu0
      %1434 = vmatprep.mubr.bf16.mxu0 %v837
      %1435 = vmatmul.mubr.bf16.gmra.mxu0 %v836
      %v1436 = vpop.f32.mrf.mxu0
      %v1437 = vadd.f32 0.0, %v1436
      %v1438 = vpop.f32.mrf.mxu0
      %v1439 = vpop.f32.mrf.mxu0
      %v1440 = vadd.f32 0.0, %v1439
      %v1441 = vpop.f32.mrf.mxu0
      %1442 = vmatprep.mubr.bf16.mxu0 %v841
      %1443 = vmatmul.mubr.bf16.gmra.mxu0 %v840
      %v1444 = vpop.f32.mrf.mxu0
      %v1445 = vadd.f32 0.0, %v1444
      %v1446 = vpop.f32.mrf.mxu0
      %v1447 = vpop.f32.mrf.mxu0
      %v1448 = vadd.f32 0.0, %v1447
      %v1449 = vpop.f32.mrf.mxu0
      %1450 = vmatprep.mubr.bf16.mxu0 %v845
      %1451 = vmatmul.mubr.bf16.gmra.mxu0 %v844
      %v1452 = vpop.f32.mrf.mxu0
      %v1453 = vadd.f32 0.0, %v1452
      %v1454 = vpop.f32.mrf.mxu0
      %v1455 = vpop.f32.mrf.mxu0
      %v1456 = vadd.f32 0.0, %v1455
      %v1457 = vpop.f32.mrf.mxu0
      %1458 = vmatprep.mubr.bf16.mxu0 %v849
      %1459 = vmatmul.mubr.bf16.gmra.mxu0 %v848
      %v1460 = vpop.f32.mrf.mxu0
      %v1461 = vadd.f32 0.0, %v1460
      %v1462 = vpop.f32.mrf.mxu0
      %v1463 = vpop.f32.mrf.mxu0
      %v1464 = vadd.f32 0.0, %v1463
      %v1465 = vpop.f32.mrf.mxu0
      %1466 = vmatprep.mubr.bf16.mxu0 %v853
      %1467 = vmatmul.mubr.bf16.gmra.mxu0 %v852
      %v1468 = vpop.f32.mrf.mxu0
      %v1469 = vadd.f32 0.0, %v1468
      %v1470 = vpop.f32.mrf.mxu0
      %v1471 = vpop.f32.mrf.mxu0
      %v1472 = vadd.f32 0.0, %v1471
      %v1473 = vpop.f32.mrf.mxu0
      %1474 = vmatprep.mubr.bf16.mxu0 %v857
      %1475 = vmatmul.mubr.bf16.gmra.mxu0 %v856
      %v1476 = vpop.f32.mrf.mxu0
      %v1477 = vadd.f32 0.0, %v1476
      %v1478 = vpop.f32.mrf.mxu0
      %v1479 = vpop.f32.mrf.mxu0
      %v1480 = vadd.f32 0.0, %v1479
      %v1481 = vpop.f32.mrf.mxu0
      %1482 = vmatprep.mubr.bf16.mxu0 %v861
      %1483 = vmatmul.mubr.bf16.gmra.mxu0 %v860
      %v1484 = vpop.f32.mrf.mxu0
      %v1485 = vadd.f32 0.0, %v1484
      %v1486 = vpop.f32.mrf.mxu0
      %v1487 = vpop.f32.mrf.mxu0
      %v1488 = vadd.f32 0.0, %v1487
      %v1489 = vpop.f32.mrf.mxu0
      %1490 = vmatprep.mubr.bf16.mxu0 %v865
      %1491 = vmatmul.mubr.bf16.gmra.mxu0 %v864
      %v1492 = vpop.f32.mrf.mxu0
      %v1493 = vadd.f32 0.0, %v1492
      %v1494 = vpop.f32.mrf.mxu0
      %v1495 = vpop.f32.mrf.mxu0
      %v1496 = vadd.f32 0.0, %v1495
      %v1497 = vpop.f32.mrf.mxu0
      %1498 = vmatprep.mubr.bf16.mxu0 %v869
      %1499 = vmatmul.mubr.bf16.gmra.mxu0 %v868
      %v1500 = vpop.f32.mrf.mxu0
      %v1501 = vadd.f32 0.0, %v1500
      %v1502 = vpop.f32.mrf.mxu0
      %v1503 = vpop.f32.mrf.mxu0
      %v1504 = vadd.f32 0.0, %v1503
      %v1505 = vpop.f32.mrf.mxu0
      %1506 = vmatprep.mubr.bf16.mxu0 %v873
      %1507 = vmatmul.mubr.bf16.gmra.mxu0 %v872
      %v1508 = vpop.f32.mrf.mxu0
      %v1509 = vadd.f32 0.0, %v1508
      %v1510 = vpop.f32.mrf.mxu0
      %v1511 = vpop.f32.mrf.mxu0
      %v1512 = vadd.f32 0.0, %v1511
      %v1513 = vpop.f32.mrf.mxu0
      %1514 = vmatprep.mubr.bf16.mxu0 %v877
      %1515 = vmatmul.mubr.bf16.gmra.mxu0 %v876
      %v1516 = vpop.f32.mrf.mxu0
      %v1517 = vadd.f32 0.0, %v1516
      %v1518 = vpop.f32.mrf.mxu0
      %v1519 = vpop.f32.mrf.mxu0
      %v1520 = vadd.f32 0.0, %v1519
      %v1521 = vpop.f32.mrf.mxu0
      %1522 = vmatprep.mubr.bf16.mxu0 %v881
      %1523 = vmatmul.mubr.bf16.gmra.mxu0 %v880
      %v1524 = vpop.f32.mrf.mxu0
      %v1525 = vadd.f32 0.0, %v1524
      %v1526 = vpop.f32.mrf.mxu0
      %v1527 = vpop.f32.mrf.mxu0
      %v1528 = vadd.f32 0.0, %v1527
      %v1529 = vpop.f32.mrf.mxu0
      %1530 = vmatprep.mubr.bf16.mxu0 %v885
      %1531 = vmatmul.mubr.bf16.gmra.mxu0 %v884
      %v1532 = vpop.f32.mrf.mxu0
      %v1533 = vadd.f32 0.0, %v1532
      %v1534 = vpop.f32.mrf.mxu0
      %v1535 = vpop.f32.mrf.mxu0
      %v1536 = vadd.f32 0.0, %v1535
      %v1537 = vpop.f32.mrf.mxu0
      %1538 = vmatprep.mubr.bf16.mxu0 %v889
      %1539 = vmatmul.mubr.bf16.gmra.mxu0 %v888
      %v1540 = vpop.f32.mrf.mxu0
      %v1541 = vadd.f32 0.0, %v1540
      %v1542 = vpop.f32.mrf.mxu0
      %v1543 = vpop.f32.mrf.mxu0
      %v1544 = vadd.f32 0.0, %v1543
      %v1545 = vpop.f32.mrf.mxu0
      %1546 = vmatprep.mubr.bf16.mxu0 %v893
      %1547 = vmatmul.mubr.bf16.gmra.mxu0 %v892
      %v1548 = vpop.f32.mrf.mxu0
      %v1549 = vadd.f32 0.0, %v1548
      %v1550 = vpop.f32.mrf.mxu0
      %v1551 = vpop.f32.mrf.mxu0
      %v1552 = vadd.f32 0.0, %v1551
      %v1553 = vpop.f32.mrf.mxu0
      %1554 = vmatprep.mubr.bf16.mxu0 %v897
      %1555 = vmatmul.mubr.bf16.gmra.mxu0 %v896
      %v1556 = vpop.f32.mrf.mxu0
      %v1557 = vadd.f32 0.0, %v1556
      %v1558 = vpop.f32.mrf.mxu0
      %v1559 = vpop.f32.mrf.mxu0
      %v1560 = vadd.f32 0.0, %v1559
      %v1561 = vpop.f32.mrf.mxu0
      %1562 = vmatprep.mubr.bf16.mxu0 %v901
      %1563 = vmatmul.mubr.bf16.gmra.mxu0 %v900
      %v1564 = vpop.f32.mrf.mxu0
      %v1565 = vadd.f32 0.0, %v1564
      %v1566 = vpop.f32.mrf.mxu0
      %v1567 = vpop.f32.mrf.mxu0
      %v1568 = vadd.f32 0.0, %v1567
      %v1569 = vpop.f32.mrf.mxu0
      %1570 = vmatprep.mubr.bf16.mxu0 %v905
      %1571 = vmatmul.mubr.bf16.gmra.mxu0 %v904
      %v1572 = vpop.f32.mrf.mxu0
      %v1573 = vadd.f32 0.0, %v1572
      %v1574 = vpop.f32.mrf.mxu0
      %v1575 = vpop.f32.mrf.mxu0
      %v1576 = vadd.f32 0.0, %v1575
      %v1577 = vpop.f32.mrf.mxu0
      %1578 = vmatprep.mubr.bf16.mxu0 %v909
      %1579 = vmatmul.mubr.bf16.gmra.mxu0 %v908
      %v1580 = vpop.f32.mrf.mxu0
      %v1581 = vadd.f32 0.0, %v1580
      %v1582 = vpop.f32.mrf.mxu0
      %v1583 = vpop.f32.mrf.mxu0
      %v1584 = vadd.f32 0.0, %v1583
      %v1585 = vpop.f32.mrf.mxu0
      %1586 = vmatprep.mubr.bf16.mxu0 %v913
      %1587 = vmatmul.mubr.bf16.gmra.mxu0 %v912
      %v1588 = vpop.f32.mrf.mxu0
      %v1589 = vadd.f32 0.0, %v1588
      %v1590 = vpop.f32.mrf.mxu0
      %v1591 = vpop.f32.mrf.mxu0
      %v1592 = vadd.f32 0.0, %v1591
      %v1593 = vpop.f32.mrf.mxu0
      %1594 = vmatprep.mubr.bf16.mxu0 %v917
      %1595 = vmatmul.mubr.bf16.gmra.mxu0 %v916
      %v1596 = vpop.f32.mrf.mxu0
      %v1597 = vadd.f32 0.0, %v1596
      %v1598 = vpop.f32.mrf.mxu0
      %v1599 = vpop.f32.mrf.mxu0
      %v1600 = vadd.f32 0.0, %v1599
      %v1601 = vpop.f32.mrf.mxu0
      %1602 = vmatprep.mubr.bf16.mxu0 %v921
      %1603 = vmatmul.mubr.bf16.gmra.mxu0 %v920
      %v1604 = vpop.f32.mrf.mxu0
      %v1605 = vadd.f32 0.0, %v1604
      %v1606 = vpop.f32.mrf.mxu0
      %v1607 = vpop.f32.mrf.mxu0
      %v1608 = vadd.f32 0.0, %v1607
      %v1609 = vpop.f32.mrf.mxu0
      %1610 = vmatprep.mubr.bf16.mxu0 %v925
      %1611 = vmatmul.mubr.bf16.gmra.mxu0 %v924
      %v1612 = vpop.f32.mrf.mxu0
      %v1613 = vadd.f32 0.0, %v1612
      %v1614 = vpop.f32.mrf.mxu0
      %v1615 = vpop.f32.mrf.mxu0
      %v1616 = vadd.f32 0.0, %v1615
      %v1617 = vpop.f32.mrf.mxu0
      %1618 = vmatprep.mubr.bf16.mxu0 %v929
      %1619 = vmatmul.mubr.bf16.gmra.mxu0 %v928
      %v1620 = vpop.f32.mrf.mxu0
      %v1621 = vadd.f32 0.0, %v1620
      %v1622 = vpop.f32.mrf.mxu0
      %v1623 = vpop.f32.mrf.mxu0
      %v1624 = vadd.f32 0.0, %v1623
      %v1625 = vpop.f32.mrf.mxu0
      %1626 = vmatprep.mubr.bf16.mxu0 %v933
      %1627 = vmatmul.mubr.bf16.gmra.mxu0 %v932
      %v1628 = vpop.f32.mrf.mxu0
      %v1629 = vadd.f32 0.0, %v1628
      %v1630 = vpop.f32.mrf.mxu0
      %v1631 = vpop.f32.mrf.mxu0
      %v1632 = vadd.f32 0.0, %v1631
      %v1633 = vpop.f32.mrf.mxu0
      %1634 = vmatprep.mubr.bf16.mxu0 %v937
      %1635 = vmatmul.mubr.bf16.gmra.mxu0 %v936
      %v1636 = vpop.f32.mrf.mxu0
      %v1637 = vadd.f32 0.0, %v1636
      %v1638 = vpop.f32.mrf.mxu0
      %v1639 = vpop.f32.mrf.mxu0
      %v1640 = vadd.f32 0.0, %v1639
      %v1641 = vpop.f32.mrf.mxu0
      %1642 = vdwg.mxu0
      %1643 = vmatprep.subr.bf16.mxu0 0
      %1644 = vmatpush1.bf16.msra.mxu0 %v1172
      %1645 = vmatprep.subr.bf16.mxu0 0
      %1646 = vmatpush1.bf16.msra.mxu0 %v1171
      %1647 = vmatprep.subr.bf16.mxu0 0
      %1648 = vmatpush1.bf16.msra.mxu0 %v1170
      %1649 = vmatprep.subr.bf16.mxu0 0
      %1650 = vmatpush1.bf16.msra.mxu0 %v1169
      %1651 = vmatprep.subr.bf16.mxu0 0
      %1652 = vmatpush1.bf16.msra.mxu0 %v1168
      %1653 = vmatprep.subr.bf16.mxu0 0
      %1654 = vmatpush1.bf16.msra.mxu0 %v1167
      %1655 = vmatprep.subr.bf16.mxu0 0
      %1656 = vmatpush1.bf16.msra.mxu0 %v1166
      %1657 = vmatprep.subr.bf16.mxu0 0
      %1658 = vmatpush1.bf16.msra.mxu0 %v1165
      %1659 = vmatprep.subr.bf16.mxu0 0
      %1660 = vmatpush2.bf16.msra.mxu0 0
      %1661 = vmatprep.subr.bf16.mxu0 0
      %1662 = vmatpush2.bf16.msra.mxu0 0
      %1663 = vmatprep.subr.bf16.mxu0 0
      %1664 = vmatpush2.bf16.msra.mxu0 0
      %1665 = vmatprep.subr.bf16.mxu0 0
      %1666 = vmatpush2.bf16.msra.mxu0 0
      %1667 = vmatprep.subr.bf16.mxu0 0
      %1668 = vmatpush2.bf16.msra.mxu0 0
      %1669 = vmatprep.subr.bf16.mxu0 0
      %1670 = vmatpush2.bf16.msra.mxu0 0
      %1671 = vmatprep.subr.bf16.mxu0 0
      %1672 = vmatpush2.bf16.msra.mxu0 0
      %1673 = vmatprep.subr.bf16.mxu0 0
      %1674 = vmatpush2.bf16.msra.mxu0 %v1312
      %1675 = vmatprep.mubr.bf16.mxu0 %v1200
      %1676 = vmatmul.mubr.bf16.gmra.mxu0 %v794
      %v1677 = vpop.f32.mrf.mxu0
      %v1678 = vadd.f32 %v1349, %v1677
      %v1679 = vpop.f32.mrf.mxu0
      %v1680 = vpop.f32.mrf.mxu0
      %v1681 = vadd.f32 %v1352, %v1680
      %v1682 = vpop.f32.mrf.mxu0
      %1683 = vmatprep.mubr.bf16.mxu0 %v1203
      %1684 = vmatmul.mubr.bf16.gmra.mxu0 %v798
      %v1685 = vpop.f32.mrf.mxu0
      %v1686 = vadd.f32 %v1357, %v1685
      %v1687 = vpop.f32.mrf.mxu0
      %v1688 = vpop.f32.mrf.mxu0
      %v1689 = vadd.f32 %v1360, %v1688
      %v1690 = vpop.f32.mrf.mxu0
      %1691 = vmatprep.mubr.bf16.mxu0 %v1206
      %1692 = vmatmul.mubr.bf16.gmra.mxu0 %v802
      %v1693 = vpop.f32.mrf.mxu0
      %v1694 = vadd.f32 %v1365, %v1693
      %v1695 = vpop.f32.mrf.mxu0
      %v1696 = vpop.f32.mrf.mxu0
      %v1697 = vadd.f32 %v1368, %v1696
      %v1698 = vpop.f32.mrf.mxu0
      %1699 = vmatprep.mubr.bf16.mxu0 %v1209
      %1700 = vmatmul.mubr.bf16.gmra.mxu0 %v806
      %v1701 = vpop.f32.mrf.mxu0
      %v1702 = vadd.f32 %v1373, %v1701
      %v1703 = vpop.f32.mrf.mxu0
      %v1704 = vpop.f32.mrf.mxu0
      %v1705 = vadd.f32 %v1376, %v1704
      %v1706 = vpop.f32.mrf.mxu0
      %1707 = vmatprep.mubr.bf16.mxu0 %v1212
      %1708 = vmatmul.mubr.bf16.gmra.mxu0 %v810
      %v1709 = vpop.f32.mrf.mxu0
      %v1710 = vadd.f32 %v1381, %v1709
      %v1711 = vpop.f32.mrf.mxu0
      %v1712 = vpop.f32.mrf.mxu0
      %v1713 = vadd.f32 %v1384, %v1712
      %v1714 = vpop.f32.mrf.mxu0
      %1715 = vmatprep.mubr.bf16.mxu0 %v1215
      %1716 = vmatmul.mubr.bf16.gmra.mxu0 %v814
      %v1717 = vpop.f32.mrf.mxu0
      %v1718 = vadd.f32 %v1389, %v1717
      %v1719 = vpop.f32.mrf.mxu0
      %v1720 = vpop.f32.mrf.mxu0
      %v1721 = vadd.f32 %v1392, %v1720
      %v1722 = vpop.f32.mrf.mxu0
      %1723 = vmatprep.mubr.bf16.mxu0 %v1218
      %1724 = vmatmul.mubr.bf16.gmra.mxu0 %v818
      %v1725 = vpop.f32.mrf.mxu0
      %v1726 = vadd.f32 %v1397, %v1725
      %v1727 = vpop.f32.mrf.mxu0
      %v1728 = vpop.f32.mrf.mxu0
      %v1729 = vadd.f32 %v1400, %v1728
      %v1730 = vpop.f32.mrf.mxu0
      %1731 = vmatprep.mubr.bf16.mxu0 %v1221
      %1732 = vmatmul.mubr.bf16.gmra.mxu0 %v822
      %v1733 = vpop.f32.mrf.mxu0
      %v1734 = vadd.f32 %v1405, %v1733
      %v1735 = vpop.f32.mrf.mxu0
      %v1736 = vpop.f32.mrf.mxu0
      %v1737 = vadd.f32 %v1408, %v1736
      %v1738 = vpop.f32.mrf.mxu0
      %1739 = vmatprep.mubr.bf16.mxu0 %v1224
      %1740 = vmatmul.mubr.bf16.gmra.mxu0 %v826
      %v1741 = vpop.f32.mrf.mxu0
      %v1742 = vadd.f32 %v1413, %v1741
      %v1743 = vpop.f32.mrf.mxu0
      %v1744 = vpop.f32.mrf.mxu0
      %v1745 = vadd.f32 %v1416, %v1744
      %v1746 = vpop.f32.mrf.mxu0
      %1747 = vmatprep.mubr.bf16.mxu0 %v1227
      %1748 = vmatmul.mubr.bf16.gmra.mxu0 %v830
      %v1749 = vpop.f32.mrf.mxu0
      %v1750 = vadd.f32 %v1421, %v1749
      %v1751 = vpop.f32.mrf.mxu0
      %v1752 = vpop.f32.mrf.mxu0
      %v1753 = vadd.f32 %v1424, %v1752
      %v1754 = vpop.f32.mrf.mxu0
      %1755 = vmatprep.mubr.bf16.mxu0 %v1230
      %1756 = vmatmul.mubr.bf16.gmra.mxu0 %v834
      %v1757 = vpop.f32.mrf.mxu0
      %v1758 = vadd.f32 %v1429, %v1757
      %v1759 = vpop.f32.mrf.mxu0
      %v1760 = vpop.f32.mrf.mxu0
      %v1761 = vadd.f32 %v1432, %v1760
      %v1762 = vpop.f32.mrf.mxu0
      %1763 = vmatprep.mubr.bf16.mxu0 %v1233
      %1764 = vmatmul.mubr.bf16.gmra.mxu0 %v838
      %v1765 = vpop.f32.mrf.mxu0
      %v1766 = vadd.f32 %v1437, %v1765
      %v1767 = vpop.f32.mrf.mxu0
      %v1768 = vpop.f32.mrf.mxu0
      %v1769 = vadd.f32 %v1440, %v1768
      %v1770 = vpop.f32.mrf.mxu0
      %1771 = vmatprep.mubr.bf16.mxu0 %v1236
      %1772 = vmatmul.mubr.bf16.gmra.mxu0 %v842
      %v1773 = vpop.f32.mrf.mxu0
      %v1774 = vadd.f32 %v1445, %v1773
      %v1775 = vpop.f32.mrf.mxu0
      %v1776 = vpop.f32.mrf.mxu0
      %v1777 = vadd.f32 %v1448, %v1776
      %v1778 = vpop.f32.mrf.mxu0
      %1779 = vmatprep.mubr.bf16.mxu0 %v1239
      %1780 = vmatmul.mubr.bf16.gmra.mxu0 %v846
      %v1781 = vpop.f32.mrf.mxu0
      %v1782 = vadd.f32 %v1453, %v1781
      %v1783 = vpop.f32.mrf.mxu0
      %v1784 = vpop.f32.mrf.mxu0
      %v1785 = vadd.f32 %v1456, %v1784
      %v1786 = vpop.f32.mrf.mxu0
      %1787 = vmatprep.mubr.bf16.mxu0 %v1242
      %1788 = vmatmul.mubr.bf16.gmra.mxu0 %v850
      %v1789 = vpop.f32.mrf.mxu0
      %v1790 = vadd.f32 %v1461, %v1789
      %v1791 = vpop.f32.mrf.mxu0
      %v1792 = vpop.f32.mrf.mxu0
      %v1793 = vadd.f32 %v1464, %v1792
      %v1794 = vpop.f32.mrf.mxu0
      %1795 = vmatprep.mubr.bf16.mxu0 %v1245
      %1796 = vmatmul.mubr.bf16.gmra.mxu0 %v854
      %v1797 = vpop.f32.mrf.mxu0
      %v1798 = vadd.f32 %v1469, %v1797
      %v1799 = vpop.f32.mrf.mxu0
      %v1800 = vpop.f32.mrf.mxu0
      %v1801 = vadd.f32 %v1472, %v1800
      %v1802 = vpop.f32.mrf.mxu0
      %1803 = vmatprep.mubr.bf16.mxu0 %v1248
      %1804 = vmatmul.mubr.bf16.gmra.mxu0 %v858
      %v1805 = vpop.f32.mrf.mxu0
      %v1806 = vadd.f32 %v1477, %v1805
      %v1807 = vpop.f32.mrf.mxu0
      %v1808 = vpop.f32.mrf.mxu0
      %v1809 = vadd.f32 %v1480, %v1808
      %v1810 = vpop.f32.mrf.mxu0
      %1811 = vmatprep.mubr.bf16.mxu0 %v1251
      %1812 = vmatmul.mubr.bf16.gmra.mxu0 %v862
      %v1813 = vpop.f32.mrf.mxu0
      %v1814 = vadd.f32 %v1485, %v1813
      %v1815 = vpop.f32.mrf.mxu0
      %v1816 = vpop.f32.mrf.mxu0
      %v1817 = vadd.f32 %v1488, %v1816
      %v1818 = vpop.f32.mrf.mxu0
      %1819 = vmatprep.mubr.bf16.mxu0 %v1254
      %1820 = vmatmul.mubr.bf16.gmra.mxu0 %v866
      %v1821 = vpop.f32.mrf.mxu0
      %v1822 = vadd.f32 %v1493, %v1821
      %v1823 = vpop.f32.mrf.mxu0
      %v1824 = vpop.f32.mrf.mxu0
      %v1825 = vadd.f32 %v1496, %v1824
      %v1826 = vpop.f32.mrf.mxu0
      %1827 = vmatprep.mubr.bf16.mxu0 %v1257
      %1828 = vmatmul.mubr.bf16.gmra.mxu0 %v870
      %v1829 = vpop.f32.mrf.mxu0
      %v1830 = vadd.f32 %v1501, %v1829
      %v1831 = vpop.f32.mrf.mxu0
      %v1832 = vpop.f32.mrf.mxu0
      %v1833 = vadd.f32 %v1504, %v1832
      %v1834 = vpop.f32.mrf.mxu0
      %1835 = vmatprep.mubr.bf16.mxu0 %v1260
      %1836 = vmatmul.mubr.bf16.gmra.mxu0 %v874
      %v1837 = vpop.f32.mrf.mxu0
      %v1838 = vadd.f32 %v1509, %v1837
      %v1839 = vpop.f32.mrf.mxu0
      %v1840 = vpop.f32.mrf.mxu0
      %v1841 = vadd.f32 %v1512, %v1840
      %v1842 = vpop.f32.mrf.mxu0
      %1843 = vmatprep.mubr.bf16.mxu0 %v1263
      %1844 = vmatmul.mubr.bf16.gmra.mxu0 %v878
      %v1845 = vpop.f32.mrf.mxu0
      %v1846 = vadd.f32 %v1517, %v1845
      %v1847 = vpop.f32.mrf.mxu0
      %v1848 = vpop.f32.mrf.mxu0
      %v1849 = vadd.f32 %v1520, %v1848
      %v1850 = vpop.f32.mrf.mxu0
      %1851 = vmatprep.mubr.bf16.mxu0 %v1266
      %1852 = vmatmul.mubr.bf16.gmra.mxu0 %v882
      %v1853 = vpop.f32.mrf.mxu0
      %v1854 = vadd.f32 %v1525, %v1853
      %v1855 = vpop.f32.mrf.mxu0
      %v1856 = vpop.f32.mrf.mxu0
      %v1857 = vadd.f32 %v1528, %v1856
      %v1858 = vpop.f32.mrf.mxu0
      %1859 = vmatprep.mubr.bf16.mxu0 %v1269
      %1860 = vmatmul.mubr.bf16.gmra.mxu0 %v886
      %v1861 = vpop.f32.mrf.mxu0
      %v1862 = vadd.f32 %v1533, %v1861
      %v1863 = vpop.f32.mrf.mxu0
      %v1864 = vpop.f32.mrf.mxu0
      %v1865 = vadd.f32 %v1536, %v1864
      %v1866 = vpop.f32.mrf.mxu0
      %1867 = vmatprep.mubr.bf16.mxu0 %v1272
      %1868 = vmatmul.mubr.bf16.gmra.mxu0 %v890
      %v1869 = vpop.f32.mrf.mxu0
      %v1870 = vadd.f32 %v1541, %v1869
      %v1871 = vpop.f32.mrf.mxu0
      %v1872 = vpop.f32.mrf.mxu0
      %v1873 = vadd.f32 %v1544, %v1872
      %v1874 = vpop.f32.mrf.mxu0
      %1875 = vmatprep.mubr.bf16.mxu0 %v1275
      %1876 = vmatmul.mubr.bf16.gmra.mxu0 %v894
      %v1877 = vpop.f32.mrf.mxu0
      %v1878 = vadd.f32 %v1549, %v1877
      %v1879 = vpop.f32.mrf.mxu0
      %v1880 = vpop.f32.mrf.mxu0
      %v1881 = vadd.f32 %v1552, %v1880
      %v1882 = vpop.f32.mrf.mxu0
      %1883 = vmatprep.mubr.bf16.mxu0 %v1278
      %1884 = vmatmul.mubr.bf16.gmra.mxu0 %v898
      %v1885 = vpop.f32.mrf.mxu0
      %v1886 = vadd.f32 %v1557, %v1885
      %v1887 = vpop.f32.mrf.mxu0
      %v1888 = vpop.f32.mrf.mxu0
      %v1889 = vadd.f32 %v1560, %v1888
      %v1890 = vpop.f32.mrf.mxu0
      %1891 = vmatprep.mubr.bf16.mxu0 %v1281
      %1892 = vmatmul.mubr.bf16.gmra.mxu0 %v902
      %v1893 = vpop.f32.mrf.mxu0
      %v1894 = vadd.f32 %v1565, %v1893
      %v1895 = vpop.f32.mrf.mxu0
      %v1896 = vpop.f32.mrf.mxu0
      %v1897 = vadd.f32 %v1568, %v1896
      %v1898 = vpop.f32.mrf.mxu0
      %1899 = vmatprep.mubr.bf16.mxu0 %v1284
      %1900 = vmatmul.mubr.bf16.gmra.mxu0 %v906
      %v1901 = vpop.f32.mrf.mxu0
      %v1902 = vadd.f32 %v1573, %v1901
      %v1903 = vpop.f32.mrf.mxu0
      %v1904 = vpop.f32.mrf.mxu0
      %v1905 = vadd.f32 %v1576, %v1904
      %v1906 = vpop.f32.mrf.mxu0
      %1907 = vmatprep.mubr.bf16.mxu0 %v1287
      %1908 = vmatmul.mubr.bf16.gmra.mxu0 %v910
      %v1909 = vpop.f32.mrf.mxu0
      %v1910 = vadd.f32 %v1581, %v1909
      %v1911 = vpop.f32.mrf.mxu0
      %v1912 = vpop.f32.mrf.mxu0
      %v1913 = vadd.f32 %v1584, %v1912
      %v1914 = vpop.f32.mrf.mxu0
      %1915 = vmatprep.mubr.bf16.mxu0 %v1290
      %1916 = vmatmul.mubr.bf16.gmra.mxu0 %v914
      %v1917 = vpop.f32.mrf.mxu0
      %v1918 = vadd.f32 %v1589, %v1917
      %v1919 = vpop.f32.mrf.mxu0
      %v1920 = vpop.f32.mrf.mxu0
      %v1921 = vadd.f32 %v1592, %v1920
      %v1922 = vpop.f32.mrf.mxu0
      %1923 = vmatprep.mubr.bf16.mxu0 %v1293
      %1924 = vmatmul.mubr.bf16.gmra.mxu0 %v918
      %v1925 = vpop.f32.mrf.mxu0
      %v1926 = vadd.f32 %v1597, %v1925
      %v1927 = vpop.f32.mrf.mxu0
      %v1928 = vpop.f32.mrf.mxu0
      %v1929 = vadd.f32 %v1600, %v1928
      %v1930 = vpop.f32.mrf.mxu0
      %1931 = vmatprep.mubr.bf16.mxu0 %v1296
      %1932 = vmatmul.mubr.bf16.gmra.mxu0 %v922
      %v1933 = vpop.f32.mrf.mxu0
      %v1934 = vadd.f32 %v1605, %v1933
      %v1935 = vpop.f32.mrf.mxu0
      %v1936 = vpop.f32.mrf.mxu0
      %v1937 = vadd.f32 %v1608, %v1936
      %v1938 = vpop.f32.mrf.mxu0
      %1939 = vmatprep.mubr.bf16.mxu0 %v1299
      %1940 = vmatmul.mubr.bf16.gmra.mxu0 %v926
      %v1941 = vpop.f32.mrf.mxu0
      %v1942 = vadd.f32 %v1613, %v1941
      %v1943 = vpop.f32.mrf.mxu0
      %v1944 = vpop.f32.mrf.mxu0
      %v1945 = vadd.f32 %v1616, %v1944
      %v1946 = vpop.f32.mrf.mxu0
      %1947 = vmatprep.mubr.bf16.mxu0 %v1302
      %1948 = vmatmul.mubr.bf16.gmra.mxu0 %v930
      %v1949 = vpop.f32.mrf.mxu0
      %v1950 = vadd.f32 %v1621, %v1949
      %v1951 = vpop.f32.mrf.mxu0
      %v1952 = vpop.f32.mrf.mxu0
      %v1953 = vadd.f32 %v1624, %v1952
      %v1954 = vpop.f32.mrf.mxu0
      %1955 = vmatprep.mubr.bf16.mxu0 %v1305
      %1956 = vmatmul.mubr.bf16.gmra.mxu0 %v934
      %v1957 = vpop.f32.mrf.mxu0
      %v1958 = vadd.f32 %v1629, %v1957
      %v1959 = vpop.f32.mrf.mxu0
      %v1960 = vpop.f32.mrf.mxu0
      %v1961 = vadd.f32 %v1632, %v1960
      %v1962 = vpop.f32.mrf.mxu0
      %1963 = vmatprep.mubr.bf16.mxu0 %v1308
      %1964 = vmatmul.mubr.bf16.gmra.mxu0 %v938
      %v1965 = vpop.f32.mrf.mxu0
      %v1966 = vadd.f32 %v1637, %v1965
      %v1967 = vpop.f32.mrf.mxu0
      %v1968 = vpop.f32.mrf.mxu0
      %v1969 = vadd.f32 %v1640, %v1968
      %v1970 = vpop.f32.mrf.mxu0
      %1971 = vdwg.mxu0
      %v1972 = vpack.c.bf16 %v1681, %v1678
      %v1973 = vpack.c.bf16 %v1689, %v1686
      %v1974 = vpack.c.bf16 %v1697, %v1694
      %v1975 = vpack.c.bf16 %v1705, %v1702
      %v1976 = vpack.c.bf16 %v1713, %v1710
      %v1977 = vpack.c.bf16 %v1721, %v1718
      %v1978 = vpack.c.bf16 %v1729, %v1726
      %v1979 = vpack.c.bf16 %v1737, %v1734
      %v1980 = vpack.c.bf16 %v1745, %v1742
      %v1981 = vpack.c.bf16 %v1753, %v1750
      %v1982 = vpack.c.bf16 %v1761, %v1758
      %v1983 = vpack.c.bf16 %v1769, %v1766
      %v1984 = vpack.c.bf16 %v1777, %v1774
      %v1985 = vpack.c.bf16 %v1785, %v1782
      %v1986 = vpack.c.bf16 %v1793, %v1790
      %v1987 = vpack.c.bf16 %v1801, %v1798
      %v1988 = vpack.c.bf16 %v1809, %v1806
      %v1989 = vpack.c.bf16 %v1817, %v1814
      %v1990 = vpack.c.bf16 %v1825, %v1822
      %v1991 = vpack.c.bf16 %v1833, %v1830
      %v1992 = vpack.c.bf16 %v1841, %v1838
      %v1993 = vpack.c.bf16 %v1849, %v1846
      %v1994 = vpack.c.bf16 %v1857, %v1854
      %v1995 = vpack.c.bf16 %v1865, %v1862
      %v1996 = vpack.c.bf16 %v1873, %v1870
      %v1997 = vpack.c.bf16 %v1881, %v1878
      %v1998 = vpack.c.bf16 %v1889, %v1886
      %v1999 = vpack.c.bf16 %v1897, %v1894
      %v2000 = vpack.c.bf16 %v1905, %v1902
      %v2001 = vpack.c.bf16 %v1913, %v1910
      %v2002 = vpack.c.bf16 %v1921, %v1918
      %v2003 = vpack.c.bf16 %v1929, %v1926
      %v2004 = vpack.c.bf16 %v1937, %v1934
      %v2005 = vpack.c.bf16 %v1945, %v1942
      %v2006 = vpack.c.bf16 %v1953, %v1950
      %v2007 = vpack.c.bf16 %v1961, %v1958
      %v2008 = vpack.c.bf16 %v1969, %v1966
      %v2046 = vunpack.c.l.b16 %v1972
      %v2047 = vunpack.c.h.b16 %v1972
      %v2048 = vunpack.c.l.b16 %v1973
      %v2049 = vunpack.c.h.b16 %v1973
      %v2050 = vunpack.c.l.b16 %v1974
      %v2051 = vunpack.c.h.b16 %v1974
      %v2052 = vunpack.c.l.b16 %v1975
      %v2053 = vunpack.c.h.b16 %v1975
      %v2054 = vunpack.c.l.b16 %v1976
      %v2055 = vunpack.c.h.b16 %v1976
      %v2056 = vunpack.c.l.b16 %v1977
      %v2057 = vunpack.c.h.b16 %v1977
      %v2058 = vunpack.c.l.b16 %v1978
      %v2059 = vunpack.c.h.b16 %v1978
      %v2060 = vunpack.c.l.b16 %v1979
      %v2061 = vunpack.c.h.b16 %v1979
      %v2062 = vunpack.c.l.b16 %v1980
      %v2063 = vunpack.c.h.b16 %v1980
      %v2064 = vunpack.c.l.b16 %v1981
      %v2065 = vunpack.c.h.b16 %v1981
      %v2066 = vunpack.c.l.b16 %v1982
      %v2067 = vunpack.c.h.b16 %v1982
      %v2068 = vunpack.c.l.b16 %v1983
      %v2069 = vunpack.c.h.b16 %v1983
      %v2070 = vunpack.c.l.b16 %v1984
      %v2071 = vunpack.c.h.b16 %v1984
      %v2072 = vunpack.c.l.b16 %v1985
      %v2073 = vunpack.c.h.b16 %v1985
      %v2074 = vunpack.c.l.b16 %v1986
      %v2075 = vunpack.c.h.b16 %v1986
      %v2076 = vunpack.c.l.b16 %v1987
      %v2077 = vunpack.c.h.b16 %v1987
      %v2078 = vunpack.c.l.b16 %v1988
      %v2079 = vunpack.c.h.b16 %v1988
      %v2080 = vunpack.c.l.b16 %v1989
      %v2081 = vunpack.c.h.b16 %v1989
      %v2082 = vunpack.c.l.b16 %v1990
      %v2083 = vunpack.c.h.b16 %v1990
      %v2084 = vunpack.c.l.b16 %v1991
      %v2085 = vunpack.c.h.b16 %v1991
      %v2086 = vunpack.c.l.b16 %v1992
      %v2087 = vunpack.c.h.b16 %v1992
      %v2088 = vunpack.c.l.b16 %v1993
      %v2089 = vunpack.c.h.b16 %v1993
      %v2090 = vunpack.c.l.b16 %v1994
      %v2091 = vunpack.c.h.b16 %v1994
      %v2092 = vunpack.c.l.b16 %v1995
      %v2093 = vunpack.c.h.b16 %v1995
      %v2094 = vunpack.c.l.b16 %v1996
      %v2095 = vunpack.c.h.b16 %v1996
      %v2096 = vunpack.c.l.b16 %v1997
      %v2097 = vunpack.c.h.b16 %v1997
      %v2098 = vunpack.c.l.b16 %v1998
      %v2099 = vunpack.c.h.b16 %v1998
      %v2100 = vunpack.c.l.b16 %v1999
      %v2101 = vunpack.c.h.b16 %v1999
      %v2102 = vunpack.c.l.b16 %v2000
      %v2103 = vunpack.c.h.b16 %v2000
      %v2104 = vunpack.c.l.b16 %v2001
      %v2105 = vunpack.c.h.b16 %v2001
      %v2106 = vunpack.c.l.b16 %v2002
      %v2107 = vunpack.c.h.b16 %v2002
      %v2108 = vunpack.c.l.b16 %v2003
      %v2109 = vunpack.c.h.b16 %v2003
      %v2110 = vunpack.c.l.b16 %v2004
      %v2111 = vunpack.c.h.b16 %v2004
      %v2112 = vunpack.c.l.b16 %v2005
      %v2113 = vunpack.c.h.b16 %v2005
      %v2114 = vunpack.c.l.b16 %v2006
      %v2115 = vunpack.c.h.b16 %v2006
      %v2116 = vunpack.c.l.b16 %v2007
      %v2117 = vunpack.c.h.b16 %v2007
      %v2118 = vunpack.c.l.b16 %v2008
      %v2119 = vunpack.c.h.b16 %v2008
      %v2120 = vpack.c.b16 %v2046, %v2046
      %v2121 = vpack.c.b16 %v2047, %v2047
      %v2122 = vpack.c.b16 %v2048, %v2048
      %v2123 = vpack.c.b16 %v2049, %v2049
      %v2124 = vpack.c.b16 %v2050, %v2050
      %v2125 = vpack.c.b16 %v2051, %v2051
      %v2126 = vpack.c.b16 %v2052, %v2052
      %v2127 = vpack.c.b16 %v2053, %v2053
      %v2128 = vpack.c.b16 %v2054, %v2054
      %v2129 = vpack.c.b16 %v2055, %v2055
      %v2130 = vpack.c.b16 %v2056, %v2056
      %v2131 = vpack.c.b16 %v2057, %v2057
      %v2132 = vpack.c.b16 %v2058, %v2058
      %v2133 = vpack.c.b16 %v2059, %v2059
      %v2134 = vpack.c.b16 %v2060, %v2060
      %v2135 = vpack.c.b16 %v2061, %v2061
      %v2136 = vpack.c.b16 %v2062, %v2062
      %v2137 = vpack.c.b16 %v2063, %v2063
      %v2138 = vpack.c.b16 %v2064, %v2064
      %v2139 = vpack.c.b16 %v2065, %v2065
      %v2140 = vpack.c.b16 %v2066, %v2066
      %v2141 = vpack.c.b16 %v2067, %v2067
      %v2142 = vpack.c.b16 %v2068, %v2068
      %v2143 = vpack.c.b16 %v2069, %v2069
      %v2144 = vpack.c.b16 %v2070, %v2070
      %v2145 = vpack.c.b16 %v2071, %v2071
      %v2146 = vpack.c.b16 %v2072, %v2072
      %v2147 = vpack.c.b16 %v2073, %v2073
      %v2148 = vpack.c.b16 %v2074, %v2074
      %v2149 = vpack.c.b16 %v2075, %v2075
      %v2150 = vpack.c.b16 %v2076, %v2076
      %v2151 = vpack.c.b16 %v2077, %v2077
      %v2152 = vpack.c.b16 %v2078, %v2078
      %v2153 = vpack.c.b16 %v2079, %v2079
      %v2154 = vpack.c.b16 %v2080, %v2080
      %v2155 = vpack.c.b16 %v2081, %v2081
      %v2156 = vpack.c.b16 %v2082, %v2082
      %v2157 = vpack.c.b16 %v2083, %v2083
      %v2158 = vpack.c.b16 %v2084, %v2084
      %v2159 = vpack.c.b16 %v2085, %v2085
      %v2160 = vpack.c.b16 %v2086, %v2086
      %v2161 = vpack.c.b16 %v2087, %v2087
      %v2162 = vpack.c.b16 %v2088, %v2088
      %v2163 = vpack.c.b16 %v2089, %v2089
      %v2164 = vpack.c.b16 %v2090, %v2090
      %v2165 = vpack.c.b16 %v2091, %v2091
      %v2166 = vpack.c.b16 %v2092, %v2092
      %v2167 = vpack.c.b16 %v2093, %v2093
      %v2168 = vpack.c.b16 %v2094, %v2094
      %v2169 = vpack.c.b16 %v2095, %v2095
      %v2170 = vpack.c.b16 %v2096, %v2096
      %v2171 = vpack.c.b16 %v2097, %v2097
      %v2172 = vpack.c.b16 %v2098, %v2098
      %v2173 = vpack.c.b16 %v2099, %v2099
      %v2174 = vpack.c.b16 %v2100, %v2100
      %v2175 = vpack.c.b16 %v2101, %v2101
      %v2176 = vpack.c.b16 %v2102, %v2102
      %v2177 = vpack.c.b16 %v2103, %v2103
      %v2178 = vpack.c.b16 %v2104, %v2104
      %v2179 = vpack.c.b16 %v2105, %v2105
      %v2180 = vpack.c.b16 %v2106, %v2106
      %v2181 = vpack.c.b16 %v2107, %v2107
      %v2182 = vpack.c.b16 %v2108, %v2108
      %v2183 = vpack.c.b16 %v2109, %v2109
      %v2184 = vpack.c.b16 %v2110, %v2110
      %v2185 = vpack.c.b16 %v2111, %v2111
      %v2186 = vpack.c.b16 %v2112, %v2112
      %v2187 = vpack.c.b16 %v2113, %v2113
      %v2188 = vpack.c.b16 %v2114, %v2114
      %v2189 = vpack.c.b16 %v2115, %v2115
      %v2190 = vpack.c.b16 %v2116, %v2116
      %v2191 = vpack.c.b16 %v2117, %v2117
      %v2192 = vpack.c.b16 %v2118, %v2118
      %v2193 = vpack.c.b16 %v2119, %v2119
      %2268 = vst [vmem:[%s148] sm:$0xf] %v2120
      %2269 = vst [vmem:[%s148 + $0x4] sm:$0xf] %v2121
      %2270 = vst [vmem:[%s148 + $0x8] sm:$0xf] %v2122
      %2271 = vst [vmem:[%s148 + $0xc] sm:$0xf] %v2123
      %2272 = vst [vmem:[%s148 + $0x10] sm:$0xf] %v2124
      %2273 = vst [vmem:[%s148 + $0x14] sm:$0xf] %v2125
      %2274 = vst [vmem:[%s148 + $0x18] sm:$0xf] %v2126
      %2275 = vst [vmem:[%s148 + $0x1c] sm:$0xf] %v2127
      %2276 = vst [vmem:[%s148 + $0x20] sm:$0xf] %v2128
      %2277 = vst [vmem:[%s148 + $0x24] sm:$0xf] %v2129
      %2278 = vst [vmem:[%s148 + $0x28] sm:$0xf] %v2130
      %2279 = vst [vmem:[%s148 + $0x2c] sm:$0xf] %v2131
      %2280 = vst [vmem:[%s148 + $0x30] sm:$0xf] %v2132
      %2281 = vst [vmem:[%s148 + $0x34] sm:$0xf] %v2133
      %2282 = vst [vmem:[%s148 + $0x38] sm:$0xf] %v2134
      %2283 = vst [vmem:[%s148 + $0x3c] sm:$0xf] %v2135
      %2284 = vst [vmem:[%s148 + $0x40] sm:$0xf] %v2136
      %2285 = vst [vmem:[%s148 + $0x44] sm:$0xf] %v2137
      %2286 = vst [vmem:[%s148 + $0x48] sm:$0xf] %v2138
      %2287 = vst [vmem:[%s148 + $0x4c] sm:$0xf] %v2139
      %2288 = vst [vmem:[%s148 + $0x50] sm:$0xf] %v2140
      %2289 = vst [vmem:[%s148 + $0x54] sm:$0xf] %v2141
      %2290 = vst [vmem:[%s148 + $0x58] sm:$0xf] %v2142
      %2291 = vst [vmem:[%s148 + $0x5c] sm:$0xf] %v2143
      %2292 = vst [vmem:[%s148 + $0x60] sm:$0xf] %v2144
      %2293 = vst [vmem:[%s148 + $0x64] sm:$0xf] %v2145
      %2294 = vst [vmem:[%s148 + $0x68] sm:$0xf] %v2146
      %2295 = vst [vmem:[%s148 + $0x6c] sm:$0xf] %v2147
      %2296 = vst [vmem:[%s148 + $0x70] sm:$0xf] %v2148
      %2297 = vst [vmem:[%s148 + $0x74] sm:$0xf] %v2149
      %2298 = vst [vmem:[%s148 + $0x78] sm:$0xf] %v2150
      %2299 = vst [vmem:[%s148 + $0x7c] sm:$0xf] %v2151
      %2300 = vst [vmem:[%s148 + $0x80] sm:$0xf] %v2152
      %2301 = vst [vmem:[%s148 + $0x84] sm:$0xf] %v2153
      %2302 = vst [vmem:[%s148 + $0x88] sm:$0xf] %v2154
      %2303 = vst [vmem:[%s148 + $0x8c] sm:$0xf] %v2155
      %2304 = vst [vmem:[%s148 + $0x90] sm:$0xf] %v2156
      %2305 = vst [vmem:[%s148 + $0x94] sm:$0xf] %v2157
      %2306 = vst [vmem:[%s148 + $0x98] sm:$0xf] %v2158
      %2307 = vst [vmem:[%s148 + $0x9c] sm:$0xf] %v2159
      %2308 = vst [vmem:[%s148 + $0xa0] sm:$0xf] %v2160
      %2309 = vst [vmem:[%s148 + $0xa4] sm:$0xf] %v2161
      %2310 = vst [vmem:[%s148 + $0xa8] sm:$0xf] %v2162
      %2311 = vst [vmem:[%s148 + $0xac] sm:$0xf] %v2163
      %2312 = vst [vmem:[%s148 + $0xb0] sm:$0xf] %v2164
      %2313 = vst [vmem:[%s148 + $0xb4] sm:$0xf] %v2165
      %2314 = vst [vmem:[%s148 + $0xb8] sm:$0xf] %v2166
      %2315 = vst [vmem:[%s148 + $0xbc] sm:$0xf] %v2167
      %2316 = vst [vmem:[%s148 + $0xc0] sm:$0xf] %v2168
      %2317 = vst [vmem:[%s148 + $0xc4] sm:$0xf] %v2169
      %2318 = vst [vmem:[%s148 + $0xc8] sm:$0xf] %v2170
      %2319 = vst [vmem:[%s148 + $0xcc] sm:$0xf] %v2171
      %2320 = vst [vmem:[%s148 + $0xd0] sm:$0xf] %v2172
      %2321 = vst [vmem:[%s148 + $0xd4] sm:$0xf] %v2173
      %2322 = vst [vmem:[%s148 + $0xd8] sm:$0xf] %v2174
      %2323 = vst [vmem:[%s148 + $0xdc] sm:$0xf] %v2175
      %2324 = vst [vmem:[%s148 + $0xe0] sm:$0xf] %v2176
      %2325 = vst [vmem:[%s148 + $0xe4] sm:$0xf] %v2177
      %2326 = vst [vmem:[%s148 + $0xe8] sm:$0xf] %v2178
      %2327 = vst [vmem:[%s148 + $0xec] sm:$0xf] %v2179
      %2328 = vst [vmem:[%s148 + $0xf0] sm:$0xf] %v2180
      %2329 = vst [vmem:[%s148 + $0xf4] sm:$0xf] %v2181
      %2330 = vst [vmem:[%s148 + $0xf8] sm:$0xf] %v2182
      %2331 = vst [vmem:[%s148 + $0xfc] sm:$0xf] %v2183
      %2332 = vst [vmem:[%s148 + $0x100] sm:$0xf] %v2184
      %2333 = vst [vmem:[%s148 + $0x104] sm:$0xf] %v2185
      %2334 = vst [vmem:[%s148 + $0x108] sm:$0xf] %v2186
      %2335 = vst [vmem:[%s148 + $0x10c] sm:$0xf] %v2187
      %2336 = vst [vmem:[%s148 + $0x110] sm:$0xf] %v2188
      %2337 = vst [vmem:[%s148 + $0x114] sm:$0xf] %v2189
      %2338 = vst [vmem:[%s148 + $0x118] sm:$0xf] %v2190
      %2339 = vst [vmem:[%s148 + $0x11c] sm:$0xf] %v2191
      %2340 = vst [vmem:[%s148 + $0x120] sm:$0xf] %v2192
      %2341 = vst [vmem:[%s148 + $0x124] sm:$0xf] %v2193
      %s2342 = smul.u32 74, %s13
      %p2343 = scmp.lt.s32.totalorder %s2342, 147
      %s2344 = scalar_select %p2343, %s2342, 147
      %s2345 = smul.addr %s2344, 4
      %s2346 = scalar_lea.vmem %s2, %s2345
      // Predicated region
      $region29: #{conv_attention_lstm_forward.3} parent=27 // pred_check
        %p2347 = pneg %p78
      $region30: #{conv_attention_lstm_forward.3} parent=27 // pred_check_branch
        %2349 = sbr.rel (%p2347) target = $region32
      $region31: #{conv_attention_lstm_forward.3} parent=27 // pred_region
        %s2350 = smul.u32 74, %s13
      $region32: #{conv_attention_lstm_forward.3} parent=27 // pred_fallthru
        _
    $region28: #{conv_attention_lstm_forward.3} parent=5 // pred_fallthru
      _
    %p2351 = scmp.le.s32.totalorder 2, %s8
    // Predicated region
    $region33: #{conv_attention_lstm_forward.3} parent=5 // pred_check
      %p2352 = pneg %p2351
    $region34: #{conv_attention_lstm_forward.3} parent=5 // pred_check_branch
      %2354 = sbr.rel (%p2352) target = $region36
    $region35: #{conv_attention_lstm_forward.3} parent=5 // pred_region
      %s2355 = ssub.s32 %s8, 2
      // Predicated region
      $region37: #{conv_attention_lstm_forward.3} parent=35 // pred_check
        %p2356 = pneg %p84
      $region38: #{conv_attention_lstm_forward.3} parent=35 // pred_check_branch
        %2358 = sbr.rel (%p2356) target = $region40
      $region39: #{conv_attention_lstm_forward.3} parent=35 // pred_region
        %s2359 = smul.u32 74, %s14
        %p2360 = scmp.lt.s32.totalorder %s2359, 147
        %s2361 = scalar_select %p2360, %s2359, 147
        %s2362 = smul.addr %s2361, 4
        %s2363 = scalar_lea.vmem %s2, %s2362
      $region40: #{conv_attention_lstm_forward.3} parent=35 // pred_fallthru
        _
    $region36: #{conv_attention_lstm_forward.3} parent=5 // pred_fallthru
      _
  $region6: #{conv_attention_lstm_forward.3} parent=0 // loop_footer
    %s12 = sadd.s32 1, %s8
  $region7: #{conv_attention_lstm_forward.3} parent=0 // loop_footer_branch
    %7 = sbr.rel target = $region3
  $region8: #{conv_attention_lstm_forward.3} parent=0 // loop_exit
    _

// kernel: conv_attention_lstm_forward.4
$region0: #{conv_attention_lstm_forward.4}
  #allocation0 [shape = 'u32[]', space=smem, size = 0x4, offset = 0x4, fixed_abs, tag = 'smem constant byte address 0x4 - core index']
  #allocation1 [shape = 'u32[144,128]{1,0:T(1,128)}', space=vmem, size = 0x12000, scoped, tag = 'internal scratch']
  %s0 = inlined_call_operand.vmem [shape: bf16[6,6272], index: 0, kind: input, shape index: {}]
  %s1 = inlined_call_operand.vmem [shape: bf16[6272,256], index: 1, kind: input, shape index: {}]
  %s2 = inlined_call_operand.vmem [shape: f32[1,256], index: 2, kind: input, shape index: {}]
  %s3 = inlined_call_operand.vmem [shape: f32[6,256], index: 3, kind: output, shape index: {}]
  %s4 = sld [smem:[#allocation0]]
  $region22: #{conv_attention_lstm_forward.4} parent=0
    _
  %s6 = ssub.s32 1, %s4
  %s7 = scalar_select 0, %s6, %s4
  // Predicated region
  $region2: #{conv_attention_lstm_forward.4} parent=0 // pred_check
    _
  $region3: #{conv_attention_lstm_forward.4} parent=0 // pred_check_branch
    %9 = sbr.rel (0) target = $region5
  $region4: #{conv_attention_lstm_forward.4} parent=0 // pred_region
    _
  $region5: #{conv_attention_lstm_forward.4} parent=0 // pred_fallthru
    _
  // Predicated region
  $region6: #{conv_attention_lstm_forward.4} parent=0 // pred_check
    _
  $region7: #{conv_attention_lstm_forward.4} parent=0 // pred_check_branch
    %11 = sbr.rel (0) target = $region9
  $region8: #{conv_attention_lstm_forward.4} parent=0 // pred_region
    _
  $region9: #{conv_attention_lstm_forward.4} parent=0 // pred_fallthru
    _
  // Predicated region
  $region10: #{conv_attention_lstm_forward.4} parent=0 // pred_check
    _
  $region11: #{conv_attention_lstm_forward.4} parent=0 // pred_check_branch
    %13 = sbr.rel (0) target = $region13
  $region12: #{conv_attention_lstm_forward.4} parent=0 // pred_region
    _
  $region13: #{conv_attention_lstm_forward.4} parent=0 // pred_fallthru
    _
  %v15 = vld [vmem:[%s0] sm:$0x77]
  %v16 = vld [vmem:[%s0 + $0x8] sm:$0x77]
  %v17 = vld [vmem:[%s0 + $0x10] sm:$0x77]
  %v18 = vld [vmem:[%s0 + $0x18] sm:$0x77]
  %v19 = vld [vmem:[%s0 + $0x20] sm:$0x77]
  %v20 = vld [vmem:[%s0 + $0x28] sm:$0x77]
  %v21 = vld [vmem:[%s0 + $0x30] sm:$0x77]
  %v22 = vld [vmem:[%s0 + $0x38] sm:$0x77]
  %v23 = vld [vmem:[%s0 + $0x40] sm:$0x77]
  %v24 = vld [vmem:[%s0 + $0x48] sm:$0x77]
  %v25 = vld [vmem:[%s0 + $0x50] sm:$0x77]
  %v26 = vld [vmem:[%s0 + $0x58] sm:$0x77]
  %v27 = vld [vmem:[%s0 + $0x60] sm:$0x77]
  %v28 = vld [vmem:[%s0 + $0x68] sm:$0x77]
  %v29 = vld [vmem:[%s0 + $0x70] sm:$0x77]
  %v30 = vld [vmem:[%s0 + $0x78] sm:$0x77]
  %v31 = vld [vmem:[%s0 + $0x80] sm:$0x77]
  %v32 = vld [vmem:[%s0 + $0x88] sm:$0x77]
  %v33 = vld [vmem:[%s0 + $0x90] sm:$0x77]
  %v34 = vld [vmem:[%s0 + $0x98] sm:$0x77]
  %v35 = vld [vmem:[%s0 + $0xa0] sm:$0x77]
  %v36 = vld [vmem:[%s0 + $0xa8] sm:$0x77]
  %v37 = vld [vmem:[%s0 + $0xb0] sm:$0x77]
  %v38 = vld [vmem:[%s0 + $0xb8] sm:$0x77]
  %v39 = vld [vmem:[%s0 + $0xc0] sm:$0x7]
  %v40 = vld [vmem:[%s1] sm:$0xff]
  %v41 = vld [vmem:[%s1 + $0x8] sm:$0xff]
  %v42 = vld [vmem:[%s1 + $0x10] sm:$0xff]
  %v43 = vld [vmem:[%s1 + $0x18] sm:$0xff]
  %v44 = vld [vmem:[%s1 + $0x20] sm:$0xff]
  %v45 = vld [vmem:[%s1 + $0x28] sm:$0xff]
  %v46 = vld [vmem:[%s1 + $0x30] sm:$0xff]
  %v47 = vld [vmem:[%s1 + $0x38] sm:$0xff]
  %v48 = vld [vmem:[%s1 + $0x40] sm:$0xff]
  %v49 = vld [vmem:[%s1 + $0x48] sm:$0xff]
  %v50 = vld [vmem:[%s1 + $0x50] sm:$0xff]
  %v51 = vld [vmem:[%s1 + $0x58] sm:$0xff]
  %v52 = vld [vmem:[%s1 + $0x60] sm:$0xff]
  %v53 = vld [vmem:[%s1 + $0x68] sm:$0xff]
  %v54 = vld [vmem:[%s1 + $0x70] sm:$0xff]
  %v55 = vld [vmem:[%s1 + $0x78] sm:$0xff]
  %v56 = vld [vmem:[%s1 + $0x80] sm:$0xff]
  %v57 = vld [vmem:[%s1 + $0x88] sm:$0xff]
  %v58 = vld [vmem:[%s1 + $0x90] sm:$0xff]
  %v59 = vld [vmem:[%s1 + $0x98] sm:$0xff]
  %v60 = vld [vmem:[%s1 + $0xa0] sm:$0xff]
  %v61 = vld [vmem:[%s1 + $0xa8] sm:$0xff]
  %v62 = vld [vmem:[%s1 + $0xb0] sm:$0xff]
  %v63 = vld [vmem:[%s1 + $0xb8] sm:$0xff]
  %v64 = vld [vmem:[%s1 + $0xc0] sm:$0xff]
  %v65 = vld [vmem:[%s1 + $0xc8] sm:$0xff]
  %v66 = vld [vmem:[%s1 + $0xd0] sm:$0xff]
  %v67 = vld [vmem:[%s1 + $0xd8] sm:$0xff]
  %v68 = vld [vmem:[%s1 + $0xe0] sm:$0xff]
  %v69 = vld [vmem:[%s1 + $0xe8] sm:$0xff]
  %v70 = vld [vmem:[%s1 + $0xf0] sm:$0xff]
  %v71 = vld [vmem:[%s1 + $0xf8] sm:$0xff]
  %v72 = vld [vmem:[%s1 + $0x100] sm:$0xff]
  %v73 = vld [vmem:[%s1 + $0x108] sm:$0xff]
  %v74 = vld [vmem:[%s1 + $0x110] sm:$0xff]
  %v75 = vld [vmem:[%s1 + $0x118] sm:$0xff]
  %v76 = vld [vmem:[%s1 + $0x120] sm:$0xff]
  %v77 = vld [vmem:[%s1 + $0x128] sm:$0xff]
  %v78 = vld [vmem:[%s1 + $0x130] sm:$0xff]
  %v79 = vld [vmem:[%s1 + $0x138] sm:$0xff]
  %v80 = vld [vmem:[%s1 + $0x140] sm:$0xff]
  %v81 = vld [vmem:[%s1 + $0x148] sm:$0xff]
  %v82 = vld [vmem:[%s1 + $0x150] sm:$0xff]
  %v83 = vld [vmem:[%s1 + $0x158] sm:$0xff]
  %v84 = vld [vmem:[%s1 + $0x160] sm:$0xff]
  %v85 = vld [vmem:[%s1 + $0x168] sm:$0xff]
  %v86 = vld [vmem:[%s1 + $0x170] sm:$0xff]
  %v87 = vld [vmem:[%s1 + $0x178] sm:$0xff]
  %v88 = vld [vmem:[%s1 + $0x180] sm:$0xff]
  %v89 = vld [vmem:[%s1 + $0x188] sm:$0xff]
  %v90 = vld [vmem:[%s1 + $0x190] sm:$0xff]
  %v91 = vld [vmem:[%s1 + $0x198] sm:$0xff]
  %v92 = vld [vmem:[%s1 + $0x1a0] sm:$0xff]
  %v93 = vld [vmem:[%s1 + $0x1a8] sm:$0xff]
  %v94 = vld [vmem:[%s1 + $0x1b0] sm:$0xff]
  %v95 = vld [vmem:[%s1 + $0x1b8] sm:$0xff]
  %v96 = vld [vmem:[%s1 + $0x1c0] sm:$0xff]
  %v97 = vld [vmem:[%s1 + $0x1c8] sm:$0xff]
  %v98 = vld [vmem:[%s1 + $0x1d0] sm:$0xff]
  %v99 = vld [vmem:[%s1 + $0x1d8] sm:$0xff]
  %v100 = vld [vmem:[%s1 + $0x1e0] sm:$0xff]
  %v101 = vld [vmem:[%s1 + $0x1e8] sm:$0xff]
  %v102 = vld [vmem:[%s1 + $0x1f0] sm:$0xff]
  %v103 = vld [vmem:[%s1 + $0x1f8] sm:$0xff]
  %v104 = vld [vmem:[%s1 + $0x200] sm:$0xff]
  %v105 = vld [vmem:[%s1 + $0x208] sm:$0xff]
  %v106 = vld [vmem:[%s1 + $0x210] sm:$0xff]
  %v107 = vld [vmem:[%s1 + $0x218] sm:$0xff]
  %v108 = vld [vmem:[%s1 + $0x220] sm:$0xff]
  %v109 = vld [vmem:[%s1 + $0x228] sm:$0xff]
  %v110 = vld [vmem:[%s1 + $0x230] sm:$0xff]
  %v111 = vld [vmem:[%s1 + $0x238] sm:$0xff]
  %v112 = vld [vmem:[%s1 + $0x240] sm:$0xff]
  %v113 = vld [vmem:[%s1 + $0x248] sm:$0xff]
  %v114 = vld [vmem:[%s1 + $0x250] sm:$0xff]
  %v115 = vld [vmem:[%s1 + $0x258] sm:$0xff]
  %v116 = vld [vmem:[%s1 + $0x260] sm:$0xff]
  %v117 = vld [vmem:[%s1 + $0x268] sm:$0xff]
  %v118 = vld [vmem:[%s1 + $0x270] sm:$0xff]
  %v119 = vld [vmem:[%s1 + $0x278] sm:$0xff]
  %v120 = vld [vmem:[%s1 + $0x280] sm:$0xff]
  %v121 = vld [vmem:[%s1 + $0x288] sm:$0xff]
  %v122 = vld [vmem:[%s1 + $0x290] sm:$0xff]
  %v123 = vld [vmem:[%s1 + $0x298] sm:$0xff]
  %v124 = vld [vmem:[%s1 + $0x2a0] sm:$0xff]
  %v125 = vld [vmem:[%s1 + $0x2a8] sm:$0xff]
  %v126 = vld [vmem:[%s1 + $0x2b0] sm:$0xff]
  %v127 = vld [vmem:[%s1 + $0x2b8] sm:$0xff]
  %v128 = vld [vmem:[%s1 + $0x2c0] sm:$0xff]
  %v129 = vld [vmem:[%s1 + $0x2c8] sm:$0xff]
  %v130 = vld [vmem:[%s1 + $0x2d0] sm:$0xff]
  %v131 = vld [vmem:[%s1 + $0x2d8] sm:$0xff]
  %v132 = vld [vmem:[%s1 + $0x2e0] sm:$0xff]
  %v133 = vld [vmem:[%s1 + $0x2e8] sm:$0xff]
  %v134 = vld [vmem:[%s1 + $0x2f0] sm:$0xff]
  %v135 = vld [vmem:[%s1 + $0x2f8] sm:$0xff]
  %v136 = vld [vmem:[%s1 + $0x300] sm:$0xff]
  %v137 = vld [vmem:[%s1 + $0x308] sm:$0xff]
  %v138 = vld [vmem:[%s1 + $0x310] sm:$0xff]
  %v139 = vld [vmem:[%s1 + $0x318] sm:$0xff]
  %v140 = vld [vmem:[%s1 + $0x320] sm:$0xff]
  %v141 = vld [vmem:[%s1 + $0x328] sm:$0xff]
  %v142 = vld [vmem:[%s1 + $0x330] sm:$0xff]
  %v143 = vld [vmem:[%s1 + $0x338] sm:$0xff]
  %v144 = vld [vmem:[%s1 + $0x340] sm:$0xff]
  %v145 = vld [vmem:[%s1 + $0x348] sm:$0xff]
  %v146 = vld [vmem:[%s1 + $0x350] sm:$0xff]
  %v147 = vld [vmem:[%s1 + $0x358] sm:$0xff]
  %v148 = vld [vmem:[%s1 + $0x360] sm:$0xff]
  %v149 = vld [vmem:[%s1 + $0x368] sm:$0xff]
  %v150 = vld [vmem:[%s1 + $0x370] sm:$0xff]
  %v151 = vld [vmem:[%s1 + $0x378] sm:$0xff]
  %v152 = vld [vmem:[%s1 + $0x380] sm:$0xff]
  %v153 = vld [vmem:[%s1 + $0x388] sm:$0xff]
  %v154 = vld [vmem:[%s1 + $0x390] sm:$0xff]
  %v155 = vld [vmem:[%s1 + $0x398] sm:$0xff]
  %v156 = vld [vmem:[%s1 + $0x3a0] sm:$0xff]
  %v157 = vld [vmem:[%s1 + $0x3a8] sm:$0xff]
  %v158 = vld [vmem:[%s1 + $0x3b0] sm:$0xff]
  %v159 = vld [vmem:[%s1 + $0x3b8] sm:$0xff]
  %v160 = vld [vmem:[%s1 + $0x3c0] sm:$0xff]
  %v161 = vld [vmem:[%s1 + $0x3c8] sm:$0xff]
  %v162 = vld [vmem:[%s1 + $0x3d0] sm:$0xff]
  %v163 = vld [vmem:[%s1 + $0x3d8] sm:$0xff]
  %v164 = vld [vmem:[%s1 + $0x3e0] sm:$0xff]
  %v165 = vld [vmem:[%s1 + $0x3e8] sm:$0xff]
  %v166 = vld [vmem:[%s1 + $0x3f0] sm:$0xff]
  %v167 = vld [vmem:[%s1 + $0x3f8] sm:$0xff]
  %v168 = vld [vmem:[%s1 + $0x400] sm:$0xff]
  %v169 = vld [vmem:[%s1 + $0x408] sm:$0xff]
  %v170 = vld [vmem:[%s1 + $0x410] sm:$0xff]
  %v171 = vld [vmem:[%s1 + $0x418] sm:$0xff]
  %v172 = vld [vmem:[%s1 + $0x420] sm:$0xff]
  %v173 = vld [vmem:[%s1 + $0x428] sm:$0xff]
  %v174 = vld [vmem:[%s1 + $0x430] sm:$0xff]
  %v175 = vld [vmem:[%s1 + $0x438] sm:$0xff]
  %v176 = vld [vmem:[%s1 + $0x440] sm:$0xff]
  %v177 = vld [vmem:[%s1 + $0x448] sm:$0xff]
  %v178 = vld [vmem:[%s1 + $0x450] sm:$0xff]
  %v179 = vld [vmem:[%s1 + $0x458] sm:$0xff]
  %v180 = vld [vmem:[%s1 + $0x460] sm:$0xff]
  %v181 = vld [vmem:[%s1 + $0x468] sm:$0xff]
  %v182 = vld [vmem:[%s1 + $0x470] sm:$0xff]
  %v183 = vld [vmem:[%s1 + $0x478] sm:$0xff]
  %v184 = vld [vmem:[%s1 + $0x480] sm:$0xff]
  %v185 = vld [vmem:[%s1 + $0x488] sm:$0xff]
  %v186 = vld [vmem:[%s1 + $0x490] sm:$0xff]
  %v187 = vld [vmem:[%s1 + $0x498] sm:$0xff]
  %v188 = vld [vmem:[%s1 + $0x4a0] sm:$0xff]
  %v189 = vld [vmem:[%s1 + $0x4a8] sm:$0xff]
  %v190 = vld [vmem:[%s1 + $0x4b0] sm:$0xff]
  %v191 = vld [vmem:[%s1 + $0x4b8] sm:$0xff]
  %v192 = vld [vmem:[%s1 + $0x4c0] sm:$0xff]
  %v193 = vld [vmem:[%s1 + $0x4c8] sm:$0xff]
  %v194 = vld [vmem:[%s1 + $0x4d0] sm:$0xff]
  %v195 = vld [vmem:[%s1 + $0x4d8] sm:$0xff]
  %v196 = vld [vmem:[%s1 + $0x4e0] sm:$0xff]
  %v197 = vld [vmem:[%s1 + $0x4e8] sm:$0xff]
  %v198 = vld [vmem:[%s1 + $0x4f0] sm:$0xff]
  %v199 = vld [vmem:[%s1 + $0x4f8] sm:$0xff]
  %v200 = vld [vmem:[%s1 + $0x500] sm:$0xff]
  %v201 = vld [vmem:[%s1 + $0x508] sm:$0xff]
  %v202 = vld [vmem:[%s1 + $0x510] sm:$0xff]
  %v203 = vld [vmem:[%s1 + $0x518] sm:$0xff]
  %v204 = vld [vmem:[%s1 + $0x520] sm:$0xff]
  %v205 = vld [vmem:[%s1 + $0x528] sm:$0xff]
  %v206 = vld [vmem:[%s1 + $0x530] sm:$0xff]
  %v207 = vld [vmem:[%s1 + $0x538] sm:$0xff]
  %v208 = vld [vmem:[%s1 + $0x540] sm:$0xff]
  %v209 = vld [vmem:[%s1 + $0x548] sm:$0xff]
  %v210 = vld [vmem:[%s1 + $0x550] sm:$0xff]
  %v211 = vld [vmem:[%s1 + $0x558] sm:$0xff]
  %v212 = vld [vmem:[%s1 + $0x560] sm:$0xff]
  %v213 = vld [vmem:[%s1 + $0x568] sm:$0xff]
  %v214 = vld [vmem:[%s1 + $0x570] sm:$0xff]
  %v215 = vld [vmem:[%s1 + $0x578] sm:$0xff]
  %v216 = vld [vmem:[%s1 + $0x580] sm:$0xff]
  %v217 = vld [vmem:[%s1 + $0x588] sm:$0xff]
  %v218 = vld [vmem:[%s1 + $0x590] sm:$0xff]
  %v219 = vld [vmem:[%s1 + $0x598] sm:$0xff]
  %v220 = vld [vmem:[%s1 + $0x5a0] sm:$0xff]
  %v221 = vld [vmem:[%s1 + $0x5a8] sm:$0xff]
  %v222 = vld [vmem:[%s1 + $0x5b0] sm:$0xff]
  %v223 = vld [vmem:[%s1 + $0x5b8] sm:$0xff]
  %v224 = vld [vmem:[%s1 + $0x5c0] sm:$0xff]
  %v225 = vld [vmem:[%s1 + $0x5c8] sm:$0xff]
  %v226 = vld [vmem:[%s1 + $0x5d0] sm:$0xff]
  %v227 = vld [vmem:[%s1 + $0x5d8] sm:$0xff]
  %v228 = vld [vmem:[%s1 + $0x5e0] sm:$0xff]
  %v229 = vld [vmem:[%s1 + $0x5e8] sm:$0xff]
  %v230 = vld [vmem:[%s1 + $0x5f0] sm:$0xff]
  %v231 = vld [vmem:[%s1 + $0x5f8] sm:$0xff]
  %v232 = vld [vmem:[%s1 + $0x600] sm:$0xff]
  %v233 = vld [vmem:[%s1 + $0x608] sm:$0xff]
  %v234 = vld [vmem:[%s1 + $0x610] sm:$0xff]
  %v235 = vld [vmem:[%s1 + $0x618] sm:$0xff]
  %v236 = vld [vmem:[%s1 + $0x620] sm:$0xff]
  %v237 = vld [vmem:[%s1 + $0x628] sm:$0xff]
  %v238 = vld [vmem:[%s1 + $0x630] sm:$0xff]
  %v239 = vld [vmem:[%s1 + $0x638] sm:$0xff]
  %v240 = vld [vmem:[%s1 + $0x640] sm:$0xff]
  %v241 = vld [vmem:[%s1 + $0x648] sm:$0xff]
  %v242 = vld [vmem:[%s1 + $0x650] sm:$0xff]
  %v243 = vld [vmem:[%s1 + $0x658] sm:$0xff]
  %v244 = vld [vmem:[%s1 + $0x660] sm:$0xff]
  %v245 = vld [vmem:[%s1 + $0x668] sm:$0xff]
  %v246 = vld [vmem:[%s1 + $0x670] sm:$0xff]
  %v247 = vld [vmem:[%s1 + $0x678] sm:$0xff]
  %v248 = vld [vmem:[%s1 + $0x680] sm:$0xff]
  %v249 = vld [vmem:[%s1 + $0x688] sm:$0xff]
  %v250 = vld [vmem:[%s1 + $0x690] sm:$0xff]
  %v251 = vld [vmem:[%s1 + $0x698] sm:$0xff]
  %v252 = vld [vmem:[%s1 + $0x6a0] sm:$0xff]
  %v253 = vld [vmem:[%s1 + $0x6a8] sm:$0xff]
  %v254 = vld [vmem:[%s1 + $0x6b0] sm:$0xff]
  %v255 = vld [vmem:[%s1 + $0x6b8] sm:$0xff]
  %v256 = vld [vmem:[%s1 + $0x6c0] sm:$0xff]
  %v257 = vld [vmem:[%s1 + $0x6c8] sm:$0xff]
  %v258 = vld [vmem:[%s1 + $0x6d0] sm:$0xff]
  %v259 = vld [vmem:[%s1 + $0x6d8] sm:$0xff]
  %v260 = vld [vmem:[%s1 + $0x6e0] sm:$0xff]
  %v261 = vld [vmem:[%s1 + $0x6e8] sm:$0xff]
  %v262 = vld [vmem:[%s1 + $0x6f0] sm:$0xff]
  %v263 = vld [vmem:[%s1 + $0x6f8] sm:$0xff]
  %v264 = vld [vmem:[%s1 + $0x700] sm:$0xff]
  %v265 = vld [vmem:[%s1 + $0x708] sm:$0xff]
  %v266 = vld [vmem:[%s1 + $0x710] sm:$0xff]
  %v267 = vld [vmem:[%s1 + $0x718] sm:$0xff]
  %v268 = vld [vmem:[%s1 + $0x720] sm:$0xff]
  %v269 = vld [vmem:[%s1 + $0x728] sm:$0xff]
  %v270 = vld [vmem:[%s1 + $0x730] sm:$0xff]
  %v271 = vld [vmem:[%s1 + $0x738] sm:$0xff]
  %v272 = vld [vmem:[%s1 + $0x740] sm:$0xff]
  %v273 = vld [vmem:[%s1 + $0x748] sm:$0xff]
  %v274 = vld [vmem:[%s1 + $0x750] sm:$0xff]
  %v275 = vld [vmem:[%s1 + $0x758] sm:$0xff]
  %v276 = vld [vmem:[%s1 + $0x760] sm:$0xff]
  %v277 = vld [vmem:[%s1 + $0x768] sm:$0xff]
  %v278 = vld [vmem:[%s1 + $0x770] sm:$0xff]
  %v279 = vld [vmem:[%s1 + $0x778] sm:$0xff]
  %v280 = vld [vmem:[%s1 + $0x780] sm:$0xff]
  %v281 = vld [vmem:[%s1 + $0x788] sm:$0xff]
  %v282 = vld [vmem:[%s1 + $0x790] sm:$0xff]
  %v283 = vld [vmem:[%s1 + $0x798] sm:$0xff]
  %v284 = vld [vmem:[%s1 + $0x7a0] sm:$0xff]
  %v285 = vld [vmem:[%s1 + $0x7a8] sm:$0xff]
  %v286 = vld [vmem:[%s1 + $0x7b0] sm:$0xff]
  %v287 = vld [vmem:[%s1 + $0x7b8] sm:$0xff]
  %v288 = vld [vmem:[%s1 + $0x7c0] sm:$0xff]
  %v289 = vld [vmem:[%s1 + $0x7c8] sm:$0xff]
  %v290 = vld [vmem:[%s1 + $0x7d0] sm:$0xff]
  %v291 = vld [vmem:[%s1 + $0x7d8] sm:$0xff]
  %v292 = vld [vmem:[%s1 + $0x7e0] sm:$0xff]
  %v293 = vld [vmem:[%s1 + $0x7e8] sm:$0xff]
  %v294 = vld [vmem:[%s1 + $0x7f0] sm:$0xff]
  %v295 = vld [vmem:[%s1 + $0x7f8] sm:$0xff]
  %v296 = vld [vmem:[%s1 + $0x800] sm:$0xff]
  %v297 = vld [vmem:[%s1 + $0x808] sm:$0xff]
  %v298 = vld [vmem:[%s1 + $0x810] sm:$0xff]
  %v299 = vld [vmem:[%s1 + $0x818] sm:$0xff]
  %v300 = vld [vmem:[%s1 + $0x820] sm:$0xff]
  %v301 = vld [vmem:[%s1 + $0x828] sm:$0xff]
  %v302 = vld [vmem:[%s1 + $0x830] sm:$0xff]
  %v303 = vld [vmem:[%s1 + $0x838] sm:$0xff]
  %v304 = vld [vmem:[%s1 + $0x840] sm:$0xff]
  %v305 = vld [vmem:[%s1 + $0x848] sm:$0xff]
  %v306 = vld [vmem:[%s1 + $0x850] sm:$0xff]
  %v307 = vld [vmem:[%s1 + $0x858] sm:$0xff]
  %v308 = vld [vmem:[%s1 + $0x860] sm:$0xff]
  %v309 = vld [vmem:[%s1 + $0x868] sm:$0xff]
  %v310 = vld [vmem:[%s1 + $0x870] sm:$0xff]
  %v311 = vld [vmem:[%s1 + $0x878] sm:$0xff]
  %v312 = vld [vmem:[%s1 + $0x880] sm:$0xff]
  %v313 = vld [vmem:[%s1 + $0x888] sm:$0xff]
  %v314 = vld [vmem:[%s1 + $0x890] sm:$0xff]
  %v315 = vld [vmem:[%s1 + $0x898] sm:$0xff]
  %v316 = vld [vmem:[%s1 + $0x8a0] sm:$0xff]
  %v317 = vld [vmem:[%s1 + $0x8a8] sm:$0xff]
  %v318 = vld [vmem:[%s1 + $0x8b0] sm:$0xff]
  %v319 = vld [vmem:[%s1 + $0x8b8] sm:$0xff]
  %v320 = vld [vmem:[%s1 + $0x8c0] sm:$0xff]
  %v321 = vld [vmem:[%s1 + $0x8c8] sm:$0xff]
  %v322 = vld [vmem:[%s1 + $0x8d0] sm:$0xff]
  %v323 = vld [vmem:[%s1 + $0x8d8] sm:$0xff]
  %v324 = vld [vmem:[%s1 + $0x8e0] sm:$0xff]
  %v325 = vld [vmem:[%s1 + $0x8e8] sm:$0xff]
  %v326 = vld [vmem:[%s1 + $0x8f0] sm:$0xff]
  %v327 = vld [vmem:[%s1 + $0x8f8] sm:$0xff]
  %v328 = vld [vmem:[%s1 + $0x900] sm:$0xff]
  %v329 = vld [vmem:[%s1 + $0x908] sm:$0xff]
  %v330 = vld [vmem:[%s1 + $0x910] sm:$0xff]
  %v331 = vld [vmem:[%s1 + $0x918] sm:$0xff]
  %v332 = vld [vmem:[%s1 + $0x920] sm:$0xff]
  %v333 = vld [vmem:[%s1 + $0x928] sm:$0xff]
  %v334 = vld [vmem:[%s1 + $0x930] sm:$0xff]
  %v335 = vld [vmem:[%s1 + $0x938] sm:$0xff]
  %v336 = vld [vmem:[%s1 + $0x940] sm:$0xff]
  %v337 = vld [vmem:[%s1 + $0x948] sm:$0xff]
  %v338 = vld [vmem:[%s1 + $0x950] sm:$0xff]
  %v339 = vld [vmem:[%s1 + $0x958] sm:$0xff]
  %v340 = vld [vmem:[%s1 + $0x960] sm:$0xff]
  %v341 = vld [vmem:[%s1 + $0x968] sm:$0xff]
  %v342 = vld [vmem:[%s1 + $0x970] sm:$0xff]
  %v343 = vld [vmem:[%s1 + $0x978] sm:$0xff]
  %v344 = vld [vmem:[%s1 + $0x980] sm:$0xff]
  %v345 = vld [vmem:[%s1 + $0x988] sm:$0xff]
  %v346 = vld [vmem:[%s1 + $0x990] sm:$0xff]
  %v347 = vld [vmem:[%s1 + $0x998] sm:$0xff]
  %v348 = vld [vmem:[%s1 + $0x9a0] sm:$0xff]
  %v349 = vld [vmem:[%s1 + $0x9a8] sm:$0xff]
  %v350 = vld [vmem:[%s1 + $0x9b0] sm:$0xff]
  %v351 = vld [vmem:[%s1 + $0x9b8] sm:$0xff]
  %v352 = vld [vmem:[%s1 + $0x9c0] sm:$0xff]
  %v353 = vld [vmem:[%s1 + $0x9c8] sm:$0xff]
  %v354 = vld [vmem:[%s1 + $0x9d0] sm:$0xff]
  %v355 = vld [vmem:[%s1 + $0x9d8] sm:$0xff]
  %v356 = vld [vmem:[%s1 + $0x9e0] sm:$0xff]
  %v357 = vld [vmem:[%s1 + $0x9e8] sm:$0xff]
  %v358 = vld [vmem:[%s1 + $0x9f0] sm:$0xff]
  %v359 = vld [vmem:[%s1 + $0x9f8] sm:$0xff]
  %v360 = vld [vmem:[%s1 + $0xa00] sm:$0xff]
  %v361 = vld [vmem:[%s1 + $0xa08] sm:$0xff]
  %v362 = vld [vmem:[%s1 + $0xa10] sm:$0xff]
  %v363 = vld [vmem:[%s1 + $0xa18] sm:$0xff]
  %v364 = vld [vmem:[%s1 + $0xa20] sm:$0xff]
  %v365 = vld [vmem:[%s1 + $0xa28] sm:$0xff]
  %v366 = vld [vmem:[%s1 + $0xa30] sm:$0xff]
  %v367 = vld [vmem:[%s1 + $0xa38] sm:$0xff]
  %v368 = vld [vmem:[%s1 + $0xa40] sm:$0xff]
  %v369 = vld [vmem:[%s1 + $0xa48] sm:$0xff]
  %v370 = vld [vmem:[%s1 + $0xa50] sm:$0xff]
  %v371 = vld [vmem:[%s1 + $0xa58] sm:$0xff]
  %v372 = vld [vmem:[%s1 + $0xa60] sm:$0xff]
  %v373 = vld [vmem:[%s1 + $0xa68] sm:$0xff]
  %v374 = vld [vmem:[%s1 + $0xa70] sm:$0xff]
  %v375 = vld [vmem:[%s1 + $0xa78] sm:$0xff]
  %v376 = vld [vmem:[%s1 + $0xa80] sm:$0xff]
  %v377 = vld [vmem:[%s1 + $0xa88] sm:$0xff]
  %v378 = vld [vmem:[%s1 + $0xa90] sm:$0xff]
  %v379 = vld [vmem:[%s1 + $0xa98] sm:$0xff]
  %v380 = vld [vmem:[%s1 + $0xaa0] sm:$0xff]
  %v381 = vld [vmem:[%s1 + $0xaa8] sm:$0xff]
  %v382 = vld [vmem:[%s1 + $0xab0] sm:$0xff]
  %v383 = vld [vmem:[%s1 + $0xab8] sm:$0xff]
  %v384 = vld [vmem:[%s1 + $0xac0] sm:$0xff]
  %v385 = vld [vmem:[%s1 + $0xac8] sm:$0xff]
  %v386 = vld [vmem:[%s1 + $0xad0] sm:$0xff]
  %v387 = vld [vmem:[%s1 + $0xad8] sm:$0xff]
  %v388 = vld [vmem:[%s1 + $0xae0] sm:$0xff]
  %v389 = vld [vmem:[%s1 + $0xae8] sm:$0xff]
  %v390 = vld [vmem:[%s1 + $0xaf0] sm:$0xff]
  %v391 = vld [vmem:[%s1 + $0xaf8] sm:$0xff]
  %v392 = vld [vmem:[%s1 + $0xb00] sm:$0xff]
  %v393 = vld [vmem:[%s1 + $0xb08] sm:$0xff]
  %v394 = vld [vmem:[%s1 + $0xb10] sm:$0xff]
  %v395 = vld [vmem:[%s1 + $0xb18] sm:$0xff]
  %v396 = vld [vmem:[%s1 + $0xb20] sm:$0xff]
  %v397 = vld [vmem:[%s1 + $0xb28] sm:$0xff]
  %v398 = vld [vmem:[%s1 + $0xb30] sm:$0xff]
  %v399 = vld [vmem:[%s1 + $0xb38] sm:$0xff]
  %v400 = vld [vmem:[%s1 + $0xb40] sm:$0xff]
  %v401 = vld [vmem:[%s1 + $0xb48] sm:$0xff]
  %v402 = vld [vmem:[%s1 + $0xb50] sm:$0xff]
  %v403 = vld [vmem:[%s1 + $0xb58] sm:$0xff]
  %v404 = vld [vmem:[%s1 + $0xb60] sm:$0xff]
  %v405 = vld [vmem:[%s1 + $0xb68] sm:$0xff]
  %v406 = vld [vmem:[%s1 + $0xb70] sm:$0xff]
  %v407 = vld [vmem:[%s1 + $0xb78] sm:$0xff]
  %v408 = vld [vmem:[%s1 + $0xb80] sm:$0xff]
  %v409 = vld [vmem:[%s1 + $0xb88] sm:$0xff]
  %v410 = vld [vmem:[%s1 + $0xb90] sm:$0xff]
  %v411 = vld [vmem:[%s1 + $0xb98] sm:$0xff]
  %v412 = vld [vmem:[%s1 + $0xba0] sm:$0xff]
  %v413 = vld [vmem:[%s1 + $0xba8] sm:$0xff]
  %v414 = vld [vmem:[%s1 + $0xbb0] sm:$0xff]
  %v415 = vld [vmem:[%s1 + $0xbb8] sm:$0xff]
  %v416 = vld [vmem:[%s1 + $0xbc0] sm:$0xff]
  %v417 = vld [vmem:[%s1 + $0xbc8] sm:$0xff]
  %v418 = vld [vmem:[%s1 + $0xbd0] sm:$0xff]
  %v419 = vld [vmem:[%s1 + $0xbd8] sm:$0xff]
  %v420 = vld [vmem:[%s1 + $0xbe0] sm:$0xff]
  %v421 = vld [vmem:[%s1 + $0xbe8] sm:$0xff]
  %v422 = vld [vmem:[%s1 + $0xbf0] sm:$0xff]
  %v423 = vld [vmem:[%s1 + $0xbf8] sm:$0xff]
  %v424 = vld [vmem:[%s1 + $0xc00] sm:$0xff]
  %v425 = vld [vmem:[%s1 + $0xc08] sm:$0xff]
  %v426 = vld [vmem:[%s1 + $0xc10] sm:$0xff]
  %v427 = vld [vmem:[%s1 + $0xc18] sm:$0xff]
  %v428 = vld [vmem:[%s1 + $0xc20] sm:$0xff]
  %v429 = vld [vmem:[%s1 + $0xc28] sm:$0xff]
  %v430 = vld [vmem:[%s1 + $0xc30] sm:$0xff]
  %v431 = vld [vmem:[%s1 + $0xc38] sm:$0xff]
  %v432 = vld [vmem:[%s1 + $0xc40] sm:$0xff]
  %v433 = vld [vmem:[%s1 + $0xc48] sm:$0xff]
  %v434 = vld [vmem:[%s1 + $0xc50] sm:$0xff]
  %v435 = vld [vmem:[%s1 + $0xc58] sm:$0xff]
  %v436 = vld [vmem:[%s1 + $0xc60] sm:$0xff]
  %v437 = vld [vmem:[%s1 + $0xc68] sm:$0xff]
  %v438 = vld [vmem:[%s1 + $0xc70] sm:$0xff]
  %v439 = vld [vmem:[%s1 + $0xc78] sm:$0xff]
  %v440 = vld [vmem:[%s1 + $0xc80] sm:$0xff]
  %v441 = vld [vmem:[%s1 + $0xc88] sm:$0xff]
  %v442 = vld [vmem:[%s1 + $0xc90] sm:$0xff]
  %v443 = vld [vmem:[%s1 + $0xc98] sm:$0xff]
  %v444 = vld [vmem:[%s1 + $0xca0] sm:$0xff]
  %v445 = vld [vmem:[%s1 + $0xca8] sm:$0xff]
  %v446 = vld [vmem:[%s1 + $0xcb0] sm:$0xff]
  %v447 = vld [vmem:[%s1 + $0xcb8] sm:$0xff]
  %v448 = vld [vmem:[%s1 + $0xcc0] sm:$0xff]
  %v449 = vld [vmem:[%s1 + $0xcc8] sm:$0xff]
  %v450 = vld [vmem:[%s1 + $0xcd0] sm:$0xff]
  %v451 = vld [vmem:[%s1 + $0xcd8] sm:$0xff]
  %v452 = vld [vmem:[%s1 + $0xce0] sm:$0xff]
  %v453 = vld [vmem:[%s1 + $0xce8] sm:$0xff]
  %v454 = vld [vmem:[%s1 + $0xcf0] sm:$0xff]
  %v455 = vld [vmem:[%s1 + $0xcf8] sm:$0xff]
  %v456 = vld [vmem:[%s1 + $0xd00] sm:$0xff]
  %v457 = vld [vmem:[%s1 + $0xd08] sm:$0xff]
  %v458 = vld [vmem:[%s1 + $0xd10] sm:$0xff]
  %v459 = vld [vmem:[%s1 + $0xd18] sm:$0xff]
  %v460 = vld [vmem:[%s1 + $0xd20] sm:$0xff]
  %v461 = vld [vmem:[%s1 + $0xd28] sm:$0xff]
  %v462 = vld [vmem:[%s1 + $0xd30] sm:$0xff]
  %v463 = vld [vmem:[%s1 + $0xd38] sm:$0xff]
  %v464 = vld [vmem:[%s1 + $0xd40] sm:$0xff]
  %v465 = vld [vmem:[%s1 + $0xd48] sm:$0xff]
  %v466 = vld [vmem:[%s1 + $0xd50] sm:$0xff]
  %v467 = vld [vmem:[%s1 + $0xd58] sm:$0xff]
  %v468 = vld [vmem:[%s1 + $0xd60] sm:$0xff]
  %v469 = vld [vmem:[%s1 + $0xd68] sm:$0xff]
  %v470 = vld [vmem:[%s1 + $0xd70] sm:$0xff]
  %v471 = vld [vmem:[%s1 + $0xd78] sm:$0xff]
  %v472 = vld [vmem:[%s1 + $0xd80] sm:$0xff]
  %v473 = vld [vmem:[%s1 + $0xd88] sm:$0xff]
  %v474 = vld [vmem:[%s1 + $0xd90] sm:$0xff]
  %v475 = vld [vmem:[%s1 + $0xd98] sm:$0xff]
  %v476 = vld [vmem:[%s1 + $0xda0] sm:$0xff]
  %v477 = vld [vmem:[%s1 + $0xda8] sm:$0xff]
  %v478 = vld [vmem:[%s1 + $0xdb0] sm:$0xff]
  %v479 = vld [vmem:[%s1 + $0xdb8] sm:$0xff]
  %v480 = vld [vmem:[%s1 + $0xdc0] sm:$0xff]
  %v481 = vld [vmem:[%s1 + $0xdc8] sm:$0xff]
  %v482 = vld [vmem:[%s1 + $0xdd0] sm:$0xff]
  %v483 = vld [vmem:[%s1 + $0xdd8] sm:$0xff]
  %v484 = vld [vmem:[%s1 + $0xde0] sm:$0xff]
  %v485 = vld [vmem:[%s1 + $0xde8] sm:$0xff]
  %v486 = vld [vmem:[%s1 + $0xdf0] sm:$0xff]
  %v487 = vld [vmem:[%s1 + $0xdf8] sm:$0xff]
  %v488 = vld [vmem:[%s1 + $0xe00] sm:$0xff]
  %v489 = vld [vmem:[%s1 + $0xe08] sm:$0xff]
  %v490 = vld [vmem:[%s1 + $0xe10] sm:$0xff]
  %v491 = vld [vmem:[%s1 + $0xe18] sm:$0xff]
  %v492 = vld [vmem:[%s1 + $0xe20] sm:$0xff]
  %v493 = vld [vmem:[%s1 + $0xe28] sm:$0xff]
  %v494 = vld [vmem:[%s1 + $0xe30] sm:$0xff]
  %v495 = vld [vmem:[%s1 + $0xe38] sm:$0xff]
  %v496 = vld [vmem:[%s1 + $0xe40] sm:$0xff]
  %v497 = vld [vmem:[%s1 + $0xe48] sm:$0xff]
  %v498 = vld [vmem:[%s1 + $0xe50] sm:$0xff]
  %v499 = vld [vmem:[%s1 + $0xe58] sm:$0xff]
  %v500 = vld [vmem:[%s1 + $0xe60] sm:$0xff]
  %v501 = vld [vmem:[%s1 + $0xe68] sm:$0xff]
  %v502 = vld [vmem:[%s1 + $0xe70] sm:$0xff]
  %v503 = vld [vmem:[%s1 + $0xe78] sm:$0xff]
  %v504 = vld [vmem:[%s1 + $0xe80] sm:$0xff]
  %v505 = vld [vmem:[%s1 + $0xe88] sm:$0xff]
  %v506 = vld [vmem:[%s1 + $0xe90] sm:$0xff]
  %v507 = vld [vmem:[%s1 + $0xe98] sm:$0xff]
  %v508 = vld [vmem:[%s1 + $0xea0] sm:$0xff]
  %v509 = vld [vmem:[%s1 + $0xea8] sm:$0xff]
  %v510 = vld [vmem:[%s1 + $0xeb0] sm:$0xff]
  %v511 = vld [vmem:[%s1 + $0xeb8] sm:$0xff]
  %v512 = vld [vmem:[%s1 + $0xec0] sm:$0xff]
  %v513 = vld [vmem:[%s1 + $0xec8] sm:$0xff]
  %v514 = vld [vmem:[%s1 + $0xed0] sm:$0xff]
  %v515 = vld [vmem:[%s1 + $0xed8] sm:$0xff]
  %v516 = vld [vmem:[%s1 + $0xee0] sm:$0xff]
  %v517 = vld [vmem:[%s1 + $0xee8] sm:$0xff]
  %v518 = vld [vmem:[%s1 + $0xef0] sm:$0xff]
  %v519 = vld [vmem:[%s1 + $0xef8] sm:$0xff]
  %v520 = vld [vmem:[%s1 + $0xf00] sm:$0xff]
  %v521 = vld [vmem:[%s1 + $0xf08] sm:$0xff]
  %v522 = vld [vmem:[%s1 + $0xf10] sm:$0xff]
  %v523 = vld [vmem:[%s1 + $0xf18] sm:$0xff]
  %v524 = vld [vmem:[%s1 + $0xf20] sm:$0xff]
  %v525 = vld [vmem:[%s1 + $0xf28] sm:$0xff]
  %v526 = vld [vmem:[%s1 + $0xf30] sm:$0xff]
  %v527 = vld [vmem:[%s1 + $0xf38] sm:$0xff]
  %v528 = vld [vmem:[%s1 + $0xf40] sm:$0xff]
  %v529 = vld [vmem:[%s1 + $0xf48] sm:$0xff]
  %v530 = vld [vmem:[%s1 + $0xf50] sm:$0xff]
  %v531 = vld [vmem:[%s1 + $0xf58] sm:$0xff]
  %v532 = vld [vmem:[%s1 + $0xf60] sm:$0xff]
  %v533 = vld [vmem:[%s1 + $0xf68] sm:$0xff]
  %v534 = vld [vmem:[%s1 + $0xf70] sm:$0xff]
  %v535 = vld [vmem:[%s1 + $0xf78] sm:$0xff]
  %v536 = vld [vmem:[%s1 + $0xf80] sm:$0xff]
  %v537 = vld [vmem:[%s1 + $0xf88] sm:$0xff]
  %v538 = vld [vmem:[%s1 + $0xf90] sm:$0xff]
  %v539 = vld [vmem:[%s1 + $0xf98] sm:$0xff]
  %v540 = vld [vmem:[%s1 + $0xfa0] sm:$0xff]
  %v541 = vld [vmem:[%s1 + $0xfa8] sm:$0xff]
  %v542 = vld [vmem:[%s1 + $0xfb0] sm:$0xff]
  %v543 = vld [vmem:[%s1 + $0xfb8] sm:$0xff]
  %v544 = vld [vmem:[%s1 + $0xfc0] sm:$0xff]
  %v545 = vld [vmem:[%s1 + $0xfc8] sm:$0xff]
  %v546 = vld [vmem:[%s1 + $0xfd0] sm:$0xff]
  %v547 = vld [vmem:[%s1 + $0xfd8] sm:$0xff]
  %v548 = vld [vmem:[%s1 + $0xfe0] sm:$0xff]
  %v549 = vld [vmem:[%s1 + $0xfe8] sm:$0xff]
  %v550 = vld [vmem:[%s1 + $0xff0] sm:$0xff]
  %v551 = vld [vmem:[%s1 + $0xff8] sm:$0xff]
  %v552 = vld [vmem:[%s1 + $0x1000] sm:$0xff]
  %v553 = vld [vmem:[%s1 + $0x1008] sm:$0xff]
  %v554 = vld [vmem:[%s1 + $0x1010] sm:$0xff]
  %v555 = vld [vmem:[%s1 + $0x1018] sm:$0xff]
  %v556 = vld [vmem:[%s1 + $0x1020] sm:$0xff]
  %v557 = vld [vmem:[%s1 + $0x1028] sm:$0xff]
  %v558 = vld [vmem:[%s1 + $0x1030] sm:$0xff]
  %v559 = vld [vmem:[%s1 + $0x1038] sm:$0xff]
  %v560 = vld [vmem:[%s1 + $0x1040] sm:$0xff]
  %v561 = vld [vmem:[%s1 + $0x1048] sm:$0xff]
  %v562 = vld [vmem:[%s1 + $0x1050] sm:$0xff]
  %v563 = vld [vmem:[%s1 + $0x1058] sm:$0xff]
  %v564 = vld [vmem:[%s1 + $0x1060] sm:$0xff]
  %v565 = vld [vmem:[%s1 + $0x1068] sm:$0xff]
  %v566 = vld [vmem:[%s1 + $0x1070] sm:$0xff]
  %v567 = vld [vmem:[%s1 + $0x1078] sm:$0xff]
  %v568 = vld [vmem:[%s1 + $0x1080] sm:$0xff]
  %v569 = vld [vmem:[%s1 + $0x1088] sm:$0xff]
  %v570 = vld [vmem:[%s1 + $0x1090] sm:$0xff]
  %v571 = vld [vmem:[%s1 + $0x1098] sm:$0xff]
  %v572 = vld [vmem:[%s1 + $0x10a0] sm:$0xff]
  %v573 = vld [vmem:[%s1 + $0x10a8] sm:$0xff]
  %v574 = vld [vmem:[%s1 + $0x10b0] sm:$0xff]
  %v575 = vld [vmem:[%s1 + $0x10b8] sm:$0xff]
  %v576 = vld [vmem:[%s1 + $0x10c0] sm:$0xff]
  %v577 = vld [vmem:[%s1 + $0x10c8] sm:$0xff]
  %v578 = vld [vmem:[%s1 + $0x10d0] sm:$0xff]
  %v579 = vld [vmem:[%s1 + $0x10d8] sm:$0xff]
  %v580 = vld [vmem:[%s1 + $0x10e0] sm:$0xff]
  %v581 = vld [vmem:[%s1 + $0x10e8] sm:$0xff]
  %v582 = vld [vmem:[%s1 + $0x10f0] sm:$0xff]
  %v583 = vld [vmem:[%s1 + $0x10f8] sm:$0xff]
  %v584 = vld [vmem:[%s1 + $0x1100] sm:$0xff]
  %v585 = vld [vmem:[%s1 + $0x1108] sm:$0xff]
  %v586 = vld [vmem:[%s1 + $0x1110] sm:$0xff]
  %v587 = vld [vmem:[%s1 + $0x1118] sm:$0xff]
  %v588 = vld [vmem:[%s1 + $0x1120] sm:$0xff]
  %v589 = vld [vmem:[%s1 + $0x1128] sm:$0xff]
  %v590 = vld [vmem:[%s1 + $0x1130] sm:$0xff]
  %v591 = vld [vmem:[%s1 + $0x1138] sm:$0xff]
  %v592 = vld [vmem:[%s1 + $0x1140] sm:$0xff]
  %v593 = vld [vmem:[%s1 + $0x1148] sm:$0xff]
  %v594 = vld [vmem:[%s1 + $0x1150] sm:$0xff]
  %v595 = vld [vmem:[%s1 + $0x1158] sm:$0xff]
  %v596 = vld [vmem:[%s1 + $0x1160] sm:$0xff]
  %v597 = vld [vmem:[%s1 + $0x1168] sm:$0xff]
  %v598 = vld [vmem:[%s1 + $0x1170] sm:$0xff]
  %v599 = vld [vmem:[%s1 + $0x1178] sm:$0xff]
  %v600 = vld [vmem:[%s1 + $0x1180] sm:$0xff]
  %v601 = vld [vmem:[%s1 + $0x1188] sm:$0xff]
  %v602 = vld [vmem:[%s1 + $0x1190] sm:$0xff]
  %v603 = vld [vmem:[%s1 + $0x1198] sm:$0xff]
  %v604 = vld [vmem:[%s1 + $0x11a0] sm:$0xff]
  %v605 = vld [vmem:[%s1 + $0x11a8] sm:$0xff]
  %v606 = vld [vmem:[%s1 + $0x11b0] sm:$0xff]
  %v607 = vld [vmem:[%s1 + $0x11b8] sm:$0xff]
  %v608 = vld [vmem:[%s1 + $0x11c0] sm:$0xff]
  %v609 = vld [vmem:[%s1 + $0x11c8] sm:$0xff]
  %v610 = vld [vmem:[%s1 + $0x11d0] sm:$0xff]
  %v611 = vld [vmem:[%s1 + $0x11d8] sm:$0xff]
  %v612 = vld [vmem:[%s1 + $0x11e0] sm:$0xff]
  %v613 = vld [vmem:[%s1 + $0x11e8] sm:$0xff]
  %v614 = vld [vmem:[%s1 + $0x11f0] sm:$0xff]
  %v615 = vld [vmem:[%s1 + $0x11f8] sm:$0xff]
  %v616 = vld [vmem:[%s1 + $0x1200] sm:$0xff]
  %v617 = vld [vmem:[%s1 + $0x1208] sm:$0xff]
  %v618 = vld [vmem:[%s1 + $0x1210] sm:$0xff]
  %v619 = vld [vmem:[%s1 + $0x1218] sm:$0xff]
  %v620 = vld [vmem:[%s1 + $0x1220] sm:$0xff]
  %v621 = vld [vmem:[%s1 + $0x1228] sm:$0xff]
  %v622 = vld [vmem:[%s1 + $0x1230] sm:$0xff]
  %v623 = vld [vmem:[%s1 + $0x1238] sm:$0xff]
  %v624 = vld [vmem:[%s1 + $0x1240] sm:$0xff]
  %v625 = vld [vmem:[%s1 + $0x1248] sm:$0xff]
  %v626 = vld [vmem:[%s1 + $0x1250] sm:$0xff]
  %v627 = vld [vmem:[%s1 + $0x1258] sm:$0xff]
  %v628 = vld [vmem:[%s1 + $0x1260] sm:$0xff]
  %v629 = vld [vmem:[%s1 + $0x1268] sm:$0xff]
  %v630 = vld [vmem:[%s1 + $0x1270] sm:$0xff]
  %v631 = vld [vmem:[%s1 + $0x1278] sm:$0xff]
  %v632 = vld [vmem:[%s1 + $0x1280] sm:$0xff]
  %v633 = vld [vmem:[%s1 + $0x1288] sm:$0xff]
  %v634 = vld [vmem:[%s1 + $0x1290] sm:$0xff]
  %v635 = vld [vmem:[%s1 + $0x1298] sm:$0xff]
  %v636 = vld [vmem:[%s1 + $0x12a0] sm:$0xff]
  %v637 = vld [vmem:[%s1 + $0x12a8] sm:$0xff]
  %v638 = vld [vmem:[%s1 + $0x12b0] sm:$0xff]
  %v639 = vld [vmem:[%s1 + $0x12b8] sm:$0xff]
  %v640 = vld [vmem:[%s1 + $0x12c0] sm:$0xff]
  %v641 = vld [vmem:[%s1 + $0x12c8] sm:$0xff]
  %v642 = vld [vmem:[%s1 + $0x12d0] sm:$0xff]
  %v643 = vld [vmem:[%s1 + $0x12d8] sm:$0xff]
  %v644 = vld [vmem:[%s1 + $0x12e0] sm:$0xff]
  %v645 = vld [vmem:[%s1 + $0x12e8] sm:$0xff]
  %v646 = vld [vmem:[%s1 + $0x12f0] sm:$0xff]
  %v647 = vld [vmem:[%s1 + $0x12f8] sm:$0xff]
  %v648 = vld [vmem:[%s1 + $0x1300] sm:$0xff]
  %v649 = vld [vmem:[%s1 + $0x1308] sm:$0xff]
  %v650 = vld [vmem:[%s1 + $0x1310] sm:$0xff]
  %v651 = vld [vmem:[%s1 + $0x1318] sm:$0xff]
  %v652 = vld [vmem:[%s1 + $0x1320] sm:$0xff]
  %v653 = vld [vmem:[%s1 + $0x1328] sm:$0xff]
  %v654 = vld [vmem:[%s1 + $0x1330] sm:$0xff]
  %v655 = vld [vmem:[%s1 + $0x1338] sm:$0xff]
  %v656 = vld [vmem:[%s1 + $0x1340] sm:$0xff]
  %v657 = vld [vmem:[%s1 + $0x1348] sm:$0xff]
  %v658 = vld [vmem:[%s1 + $0x1350] sm:$0xff]
  %v659 = vld [vmem:[%s1 + $0x1358] sm:$0xff]
  %v660 = vld [vmem:[%s1 + $0x1360] sm:$0xff]
  %v661 = vld [vmem:[%s1 + $0x1368] sm:$0xff]
  %v662 = vld [vmem:[%s1 + $0x1370] sm:$0xff]
  %v663 = vld [vmem:[%s1 + $0x1378] sm:$0xff]
  %v664 = vld [vmem:[%s1 + $0x1380] sm:$0xff]
  %v665 = vld [vmem:[%s1 + $0x1388] sm:$0xff]
  %v666 = vld [vmem:[%s1 + $0x1390] sm:$0xff]
  %v667 = vld [vmem:[%s1 + $0x1398] sm:$0xff]
  %v668 = vld [vmem:[%s1 + $0x13a0] sm:$0xff]
  %v669 = vld [vmem:[%s1 + $0x13a8] sm:$0xff]
  %v670 = vld [vmem:[%s1 + $0x13b0] sm:$0xff]
  %v671 = vld [vmem:[%s1 + $0x13b8] sm:$0xff]
  %v672 = vld [vmem:[%s1 + $0x13c0] sm:$0xff]
  %v673 = vld [vmem:[%s1 + $0x13c8] sm:$0xff]
  %v674 = vld [vmem:[%s1 + $0x13d0] sm:$0xff]
  %v675 = vld [vmem:[%s1 + $0x13d8] sm:$0xff]
  %v676 = vld [vmem:[%s1 + $0x13e0] sm:$0xff]
  %v677 = vld [vmem:[%s1 + $0x13e8] sm:$0xff]
  %v678 = vld [vmem:[%s1 + $0x13f0] sm:$0xff]
  %v679 = vld [vmem:[%s1 + $0x13f8] sm:$0xff]
  %v680 = vld [vmem:[%s1 + $0x1400] sm:$0xff]
  %v681 = vld [vmem:[%s1 + $0x1408] sm:$0xff]
  %v682 = vld [vmem:[%s1 + $0x1410] sm:$0xff]
  %v683 = vld [vmem:[%s1 + $0x1418] sm:$0xff]
  %v684 = vld [vmem:[%s1 + $0x1420] sm:$0xff]
  %v685 = vld [vmem:[%s1 + $0x1428] sm:$0xff]
  %v686 = vld [vmem:[%s1 + $0x1430] sm:$0xff]
  %v687 = vld [vmem:[%s1 + $0x1438] sm:$0xff]
  %v688 = vld [vmem:[%s1 + $0x1440] sm:$0xff]
  %v689 = vld [vmem:[%s1 + $0x1448] sm:$0xff]
  %v690 = vld [vmem:[%s1 + $0x1450] sm:$0xff]
  %v691 = vld [vmem:[%s1 + $0x1458] sm:$0xff]
  %v692 = vld [vmem:[%s1 + $0x1460] sm:$0xff]
  %v693 = vld [vmem:[%s1 + $0x1468] sm:$0xff]
  %v694 = vld [vmem:[%s1 + $0x1470] sm:$0xff]
  %v695 = vld [vmem:[%s1 + $0x1478] sm:$0xff]
  %v696 = vld [vmem:[%s1 + $0x1480] sm:$0xff]
  %v697 = vld [vmem:[%s1 + $0x1488] sm:$0xff]
  %v698 = vld [vmem:[%s1 + $0x1490] sm:$0xff]
  %v699 = vld [vmem:[%s1 + $0x1498] sm:$0xff]
  %v700 = vld [vmem:[%s1 + $0x14a0] sm:$0xff]
  %v701 = vld [vmem:[%s1 + $0x14a8] sm:$0xff]
  %v702 = vld [vmem:[%s1 + $0x14b0] sm:$0xff]
  %v703 = vld [vmem:[%s1 + $0x14b8] sm:$0xff]
  %v704 = vld [vmem:[%s1 + $0x14c0] sm:$0xff]
  %v705 = vld [vmem:[%s1 + $0x14c8] sm:$0xff]
  %v706 = vld [vmem:[%s1 + $0x14d0] sm:$0xff]
  %v707 = vld [vmem:[%s1 + $0x14d8] sm:$0xff]
  %v708 = vld [vmem:[%s1 + $0x14e0] sm:$0xff]
  %v709 = vld [vmem:[%s1 + $0x14e8] sm:$0xff]
  %v710 = vld [vmem:[%s1 + $0x14f0] sm:$0xff]
  %v711 = vld [vmem:[%s1 + $0x14f8] sm:$0xff]
  %v712 = vld [vmem:[%s1 + $0x1500] sm:$0xff]
  %v713 = vld [vmem:[%s1 + $0x1508] sm:$0xff]
  %v714 = vld [vmem:[%s1 + $0x1510] sm:$0xff]
  %v715 = vld [vmem:[%s1 + $0x1518] sm:$0xff]
  %v716 = vld [vmem:[%s1 + $0x1520] sm:$0xff]
  %v717 = vld [vmem:[%s1 + $0x1528] sm:$0xff]
  %v718 = vld [vmem:[%s1 + $0x1530] sm:$0xff]
  %v719 = vld [vmem:[%s1 + $0x1538] sm:$0xff]
  %v720 = vld [vmem:[%s1 + $0x1540] sm:$0xff]
  %v721 = vld [vmem:[%s1 + $0x1548] sm:$0xff]
  %v722 = vld [vmem:[%s1 + $0x1550] sm:$0xff]
  %v723 = vld [vmem:[%s1 + $0x1558] sm:$0xff]
  %v724 = vld [vmem:[%s1 + $0x1560] sm:$0xff]
  %v725 = vld [vmem:[%s1 + $0x1568] sm:$0xff]
  %v726 = vld [vmem:[%s1 + $0x1570] sm:$0xff]
  %v727 = vld [vmem:[%s1 + $0x1578] sm:$0xff]
  %v728 = vld [vmem:[%s1 + $0x1580] sm:$0xff]
  %v729 = vld [vmem:[%s1 + $0x1588] sm:$0xff]
  %v730 = vld [vmem:[%s1 + $0x1590] sm:$0xff]
  %v731 = vld [vmem:[%s1 + $0x1598] sm:$0xff]
  %v732 = vld [vmem:[%s1 + $0x15a0] sm:$0xff]
  %v733 = vld [vmem:[%s1 + $0x15a8] sm:$0xff]
  %v734 = vld [vmem:[%s1 + $0x15b0] sm:$0xff]
  %v735 = vld [vmem:[%s1 + $0x15b8] sm:$0xff]
  %v736 = vld [vmem:[%s1 + $0x15c0] sm:$0xff]
  %v737 = vld [vmem:[%s1 + $0x15c8] sm:$0xff]
  %v738 = vld [vmem:[%s1 + $0x15d0] sm:$0xff]
  %v739 = vld [vmem:[%s1 + $0x15d8] sm:$0xff]
  %v740 = vld [vmem:[%s1 + $0x15e0] sm:$0xff]
  %v741 = vld [vmem:[%s1 + $0x15e8] sm:$0xff]
  %v742 = vld [vmem:[%s1 + $0x15f0] sm:$0xff]
  %v743 = vld [vmem:[%s1 + $0x15f8] sm:$0xff]
  %v744 = vld [vmem:[%s1 + $0x1600] sm:$0xff]
  %v745 = vld [vmem:[%s1 + $0x1608] sm:$0xff]
  %v746 = vld [vmem:[%s1 + $0x1610] sm:$0xff]
  %v747 = vld [vmem:[%s1 + $0x1618] sm:$0xff]
  %v748 = vld [vmem:[%s1 + $0x1620] sm:$0xff]
  %v749 = vld [vmem:[%s1 + $0x1628] sm:$0xff]
  %v750 = vld [vmem:[%s1 + $0x1630] sm:$0xff]
  %v751 = vld [vmem:[%s1 + $0x1638] sm:$0xff]
  %v752 = vld [vmem:[%s1 + $0x1640] sm:$0xff]
  %v753 = vld [vmem:[%s1 + $0x1648] sm:$0xff]
  %v754 = vld [vmem:[%s1 + $0x1650] sm:$0xff]
  %v755 = vld [vmem:[%s1 + $0x1658] sm:$0xff]
  %v756 = vld [vmem:[%s1 + $0x1660] sm:$0xff]
  %v757 = vld [vmem:[%s1 + $0x1668] sm:$0xff]
  %v758 = vld [vmem:[%s1 + $0x1670] sm:$0xff]
  %v759 = vld [vmem:[%s1 + $0x1678] sm:$0xff]
  %v760 = vld [vmem:[%s1 + $0x1680] sm:$0xff]
  %v761 = vld [vmem:[%s1 + $0x1688] sm:$0xff]
  %v762 = vld [vmem:[%s1 + $0x1690] sm:$0xff]
  %v763 = vld [vmem:[%s1 + $0x1698] sm:$0xff]
  %v764 = vld [vmem:[%s1 + $0x16a0] sm:$0xff]
  %v765 = vld [vmem:[%s1 + $0x16a8] sm:$0xff]
  %v766 = vld [vmem:[%s1 + $0x16b0] sm:$0xff]
  %v767 = vld [vmem:[%s1 + $0x16b8] sm:$0xff]
  %v768 = vld [vmem:[%s1 + $0x16c0] sm:$0xff]
  %v769 = vld [vmem:[%s1 + $0x16c8] sm:$0xff]
  %v770 = vld [vmem:[%s1 + $0x16d0] sm:$0xff]
  %v771 = vld [vmem:[%s1 + $0x16d8] sm:$0xff]
  %v772 = vld [vmem:[%s1 + $0x16e0] sm:$0xff]
  %v773 = vld [vmem:[%s1 + $0x16e8] sm:$0xff]
  %v774 = vld [vmem:[%s1 + $0x16f0] sm:$0xff]
  %v775 = vld [vmem:[%s1 + $0x16f8] sm:$0xff]
  %v776 = vld [vmem:[%s1 + $0x1700] sm:$0xff]
  %v777 = vld [vmem:[%s1 + $0x1708] sm:$0xff]
  %v778 = vld [vmem:[%s1 + $0x1710] sm:$0xff]
  %v779 = vld [vmem:[%s1 + $0x1718] sm:$0xff]
  %v780 = vld [vmem:[%s1 + $0x1720] sm:$0xff]
  %v781 = vld [vmem:[%s1 + $0x1728] sm:$0xff]
  %v782 = vld [vmem:[%s1 + $0x1730] sm:$0xff]
  %v783 = vld [vmem:[%s1 + $0x1738] sm:$0xff]
  %v784 = vld [vmem:[%s1 + $0x1740] sm:$0xff]
  %v785 = vld [vmem:[%s1 + $0x1748] sm:$0xff]
  %v786 = vld [vmem:[%s1 + $0x1750] sm:$0xff]
  %v787 = vld [vmem:[%s1 + $0x1758] sm:$0xff]
  %v788 = vld [vmem:[%s1 + $0x1760] sm:$0xff]
  %v789 = vld [vmem:[%s1 + $0x1768] sm:$0xff]
  %v790 = vld [vmem:[%s1 + $0x1770] sm:$0xff]
  %v791 = vld [vmem:[%s1 + $0x1778] sm:$0xff]
  %v792 = vld [vmem:[%s1 + $0x1780] sm:$0xff]
  %v793 = vld [vmem:[%s1 + $0x1788] sm:$0xff]
  %v794 = vld [vmem:[%s1 + $0x1790] sm:$0xff]
  %v795 = vld [vmem:[%s1 + $0x1798] sm:$0xff]
  %v796 = vld [vmem:[%s1 + $0x17a0] sm:$0xff]
  %v797 = vld [vmem:[%s1 + $0x17a8] sm:$0xff]
  %v798 = vld [vmem:[%s1 + $0x17b0] sm:$0xff]
  %v799 = vld [vmem:[%s1 + $0x17b8] sm:$0xff]
  %v800 = vld [vmem:[%s1 + $0x17c0] sm:$0xff]
  %v801 = vld [vmem:[%s1 + $0x17c8] sm:$0xff]
  %v802 = vld [vmem:[%s1 + $0x17d0] sm:$0xff]
  %v803 = vld [vmem:[%s1 + $0x17d8] sm:$0xff]
  %v804 = vld [vmem:[%s1 + $0x17e0] sm:$0xff]
  %v805 = vld [vmem:[%s1 + $0x17e8] sm:$0xff]
  %v806 = vld [vmem:[%s1 + $0x17f0] sm:$0xff]
  %v807 = vld [vmem:[%s1 + $0x17f8] sm:$0xff]
  %v808 = vld [vmem:[%s1 + $0x1800] sm:$0xff]
  %v809 = vld [vmem:[%s1 + $0x1808] sm:$0xff]
  %v810 = vld [vmem:[%s1 + $0x1810] sm:$0xff]
  %v811 = vld [vmem:[%s1 + $0x1818] sm:$0xff]
  %v812 = vld [vmem:[%s1 + $0x1820] sm:$0xff]
  %v813 = vld [vmem:[%s1 + $0x1828] sm:$0xff]
  %v814 = vld [vmem:[%s1 + $0x1830] sm:$0xff]
  %v815 = vld [vmem:[%s1 + $0x1838] sm:$0xff]
  %v816 = vld [vmem:[%s1 + $0x1840] sm:$0xff]
  %v817 = vld [vmem:[%s1 + $0x1848] sm:$0xff]
  %v818 = vld [vmem:[%s1 + $0x1850] sm:$0xff]
  %v819 = vld [vmem:[%s1 + $0x1858] sm:$0xff]
  %v820 = vld [vmem:[%s1 + $0x1860] sm:$0xff]
  %v821 = vld [vmem:[%s1 + $0x1868] sm:$0xff]
  %v822 = vld [vmem:[%s1 + $0x1870] sm:$0xff]
  %v823 = vld [vmem:[%s1 + $0x1878] sm:$0xff]
  %v824 = vld [vmem:[%s2] sm:$0x3]
  %v826 = vlaneseq
  %v827 = vshrl.u32 %v826, 7
  %v828 = vsub.s32 0, %v827
  %v829 = vrot.slane %v824, %v828
  %v830 = vlaneseq
  %v831 = vshrl.u32 %v830, 7
  %v832 = vsub.s32 1, %v831
  %v833 = vrot.slane %v824, %v832
  %v861 = vunpack.c.l.b16 %v15
  %v862 = vunpack.c.h.b16 %v15
  %v863 = vunpack.c.l.b16 %v16
  %v864 = vunpack.c.h.b16 %v16
  %v865 = vunpack.c.l.b16 %v17
  %v866 = vunpack.c.h.b16 %v17
  %v867 = vunpack.c.l.b16 %v18
  %v868 = vunpack.c.h.b16 %v18
  %v869 = vunpack.c.l.b16 %v19
  %v870 = vunpack.c.h.b16 %v19
  %v871 = vunpack.c.l.b16 %v20
  %v872 = vunpack.c.h.b16 %v20
  %v873 = vunpack.c.l.b16 %v21
  %v874 = vunpack.c.h.b16 %v21
  %v875 = vunpack.c.l.b16 %v22
  %v876 = vunpack.c.h.b16 %v22
  %v877 = vunpack.c.l.b16 %v23
  %v878 = vunpack.c.h.b16 %v23
  %v879 = vunpack.c.l.b16 %v24
  %v880 = vunpack.c.h.b16 %v24
  %v881 = vunpack.c.l.b16 %v25
  %v882 = vunpack.c.h.b16 %v25
  %v883 = vunpack.c.l.b16 %v26
  %v884 = vunpack.c.h.b16 %v26
  %v885 = vunpack.c.l.b16 %v27
  %v886 = vunpack.c.h.b16 %v27
  %v887 = vunpack.c.l.b16 %v28
  %v888 = vunpack.c.h.b16 %v28
  %v889 = vunpack.c.l.b16 %v29
  %v890 = vunpack.c.h.b16 %v29
  %v891 = vunpack.c.l.b16 %v30
  %v892 = vunpack.c.h.b16 %v30
  %v893 = vunpack.c.l.b16 %v31
  %v894 = vunpack.c.h.b16 %v31
  %v895 = vunpack.c.l.b16 %v32
  %v896 = vunpack.c.h.b16 %v32
  %v897 = vunpack.c.l.b16 %v33
  %v898 = vunpack.c.h.b16 %v33
  %v899 = vunpack.c.l.b16 %v34
  %v900 = vunpack.c.h.b16 %v34
  %v901 = vunpack.c.l.b16 %v35
  %v902 = vunpack.c.h.b16 %v35
  %v903 = vunpack.c.l.b16 %v36
  %v904 = vunpack.c.h.b16 %v36
  %v905 = vunpack.c.l.b16 %v37
  %v906 = vunpack.c.h.b16 %v37
  %v907 = vunpack.c.l.b16 %v38
  %v908 = vunpack.c.h.b16 %v38
  %v909 = vunpack.c.l.b16 %v39
  %v910 = vpack.c.b16 %v861, %v861
  %v911 = vpack.c.b16 %v862, %v862
  %v912 = vpack.c.b16 %v863, %v863
  %v913 = vpack.c.b16 %v864, %v864
  %v914 = vpack.c.b16 %v865, %v865
  %v915 = vpack.c.b16 %v866, %v866
  %v916 = vpack.c.b16 %v867, %v867
  %v917 = vpack.c.b16 %v868, %v868
  %v918 = vpack.c.b16 %v869, %v869
  %v919 = vpack.c.b16 %v870, %v870
  %v920 = vpack.c.b16 %v871, %v871
  %v921 = vpack.c.b16 %v872, %v872
  %v922 = vpack.c.b16 %v873, %v873
  %v923 = vpack.c.b16 %v874, %v874
  %v924 = vpack.c.b16 %v875, %v875
  %v925 = vpack.c.b16 %v876, %v876
  %v926 = vpack.c.b16 %v877, %v877
  %v927 = vpack.c.b16 %v878, %v878
  %v928 = vpack.c.b16 %v879, %v879
  %v929 = vpack.c.b16 %v880, %v880
  %v930 = vpack.c.b16 %v881, %v881
  %v931 = vpack.c.b16 %v882, %v882
  %v932 = vpack.c.b16 %v883, %v883
  %v933 = vpack.c.b16 %v884, %v884
  %v934 = vpack.c.b16 %v885, %v885
  %v935 = vpack.c.b16 %v886, %v886
  %v936 = vpack.c.b16 %v887, %v887
  %v937 = vpack.c.b16 %v888, %v888
  %v938 = vpack.c.b16 %v889, %v889
  %v939 = vpack.c.b16 %v890, %v890
  %v940 = vpack.c.b16 %v891, %v891
  %v941 = vpack.c.b16 %v892, %v892
  %v942 = vpack.c.b16 %v893, %v893
  %v943 = vpack.c.b16 %v894, %v894
  %v944 = vpack.c.b16 %v895, %v895
  %v945 = vpack.c.b16 %v896, %v896
  %v946 = vpack.c.b16 %v897, %v897
  %v947 = vpack.c.b16 %v898, %v898
  %v948 = vpack.c.b16 %v899, %v899
  %v949 = vpack.c.b16 %v900, %v900
  %v950 = vpack.c.b16 %v901, %v901
  %v951 = vpack.c.b16 %v902, %v902
  %v952 = vpack.c.b16 %v903, %v903
  %v953 = vpack.c.b16 %v904, %v904
  %v954 = vpack.c.b16 %v905, %v905
  %v955 = vpack.c.b16 %v906, %v906
  %v956 = vpack.c.b16 %v907, %v907
  %v957 = vpack.c.b16 %v908, %v908
  %v958 = vpack.c.b16 %v909, %v909
  %v1792 = vunpack.c.l.b16 %v40
  %v1793 = vunpack.c.h.b16 %v40
  %v1794 = vunpack.c.l.b16 %v41
  %v1795 = vunpack.c.h.b16 %v41
  %v1796 = vunpack.c.l.b16 %v42
  %v1797 = vunpack.c.h.b16 %v42
  %v1798 = vunpack.c.l.b16 %v43
  %v1799 = vunpack.c.h.b16 %v43
  %v1800 = vunpack.c.l.b16 %v44
  %v1801 = vunpack.c.h.b16 %v44
  %v1802 = vunpack.c.l.b16 %v45
  %v1803 = vunpack.c.h.b16 %v45
  %v1804 = vunpack.c.l.b16 %v46
  %v1805 = vunpack.c.h.b16 %v46
  %v1806 = vunpack.c.l.b16 %v47
  %v1807 = vunpack.c.h.b16 %v47
  %v1808 = vunpack.c.l.b16 %v48
  %v1809 = vunpack.c.h.b16 %v48
  %v1810 = vunpack.c.l.b16 %v49
  %v1811 = vunpack.c.h.b16 %v49
  %v1812 = vunpack.c.l.b16 %v50
  %v1813 = vunpack.c.h.b16 %v50
  %v1814 = vunpack.c.l.b16 %v51
  %v1815 = vunpack.c.h.b16 %v51
  %v1816 = vunpack.c.l.b16 %v52
  %v1817 = vunpack.c.h.b16 %v52
  %v1818 = vunpack.c.l.b16 %v53
  %v1819 = vunpack.c.h.b16 %v53
  %v1820 = vunpack.c.l.b16 %v54
  %v1821 = vunpack.c.h.b16 %v54
  %v1822 = vunpack.c.l.b16 %v55
  %v1823 = vunpack.c.h.b16 %v55
  %v1824 = vunpack.c.l.b16 %v56
  %v1825 = vunpack.c.h.b16 %v56
  %v1826 = vunpack.c.l.b16 %v57
  %v1827 = vunpack.c.h.b16 %v57
  %v1828 = vunpack.c.l.b16 %v58
  %v1829 = vunpack.c.h.b16 %v58
  %v1830 = vunpack.c.l.b16 %v59
  %v1831 = vunpack.c.h.b16 %v59
  %v1832 = vunpack.c.l.b16 %v60
  %v1833 = vunpack.c.h.b16 %v60
  %v1834 = vunpack.c.l.b16 %v61
  %v1835 = vunpack.c.h.b16 %v61
  %v1836 = vunpack.c.l.b16 %v62
  %v1837 = vunpack.c.h.b16 %v62
  %v1838 = vunpack.c.l.b16 %v63
  %v1839 = vunpack.c.h.b16 %v63
  %v1840 = vunpack.c.l.b16 %v64
  %v1841 = vunpack.c.h.b16 %v64
  %v1842 = vunpack.c.l.b16 %v65
  %v1843 = vunpack.c.h.b16 %v65
  %v1844 = vunpack.c.l.b16 %v66
  %v1845 = vunpack.c.h.b16 %v66
  %v1846 = vunpack.c.l.b16 %v67
  %v1847 = vunpack.c.h.b16 %v67
  %v1848 = vunpack.c.l.b16 %v68
  %v1849 = vunpack.c.h.b16 %v68
  %v1850 = vunpack.c.l.b16 %v69
  %v1851 = vunpack.c.h.b16 %v69
  %v1852 = vunpack.c.l.b16 %v70
  %v1853 = vunpack.c.h.b16 %v70
  %v1854 = vunpack.c.l.b16 %v71
  %v1855 = vunpack.c.h.b16 %v71
  %v1856 = vunpack.c.l.b16 %v72
  %v1857 = vunpack.c.h.b16 %v72
  %v1858 = vunpack.c.l.b16 %v73
  %v1859 = vunpack.c.h.b16 %v73
  %v1860 = vunpack.c.l.b16 %v74
  %v1861 = vunpack.c.h.b16 %v74
  %v1862 = vunpack.c.l.b16 %v75
  %v1863 = vunpack.c.h.b16 %v75
  %v1864 = vunpack.c.l.b16 %v76
  %v1865 = vunpack.c.h.b16 %v76
  %v1866 = vunpack.c.l.b16 %v77
  %v1867 = vunpack.c.h.b16 %v77
  %v1868 = vunpack.c.l.b16 %v78
  %v1869 = vunpack.c.h.b16 %v78
  %v1870 = vunpack.c.l.b16 %v79
  %v1871 = vunpack.c.h.b16 %v79
  %v1872 = vunpack.c.l.b16 %v80
  %v1873 = vunpack.c.h.b16 %v80
  %v1874 = vunpack.c.l.b16 %v81
  %v1875 = vunpack.c.h.b16 %v81
  %v1876 = vunpack.c.l.b16 %v82
  %v1877 = vunpack.c.h.b16 %v82
  %v1878 = vunpack.c.l.b16 %v83
  %v1879 = vunpack.c.h.b16 %v83
  %v1880 = vunpack.c.l.b16 %v84
  %v1881 = vunpack.c.h.b16 %v84
  %v1882 = vunpack.c.l.b16 %v85
  %v1883 = vunpack.c.h.b16 %v85
  %v1884 = vunpack.c.l.b16 %v86
  %v1885 = vunpack.c.h.b16 %v86
  %v1886 = vunpack.c.l.b16 %v87
  %v1887 = vunpack.c.h.b16 %v87
  %v1888 = vunpack.c.l.b16 %v88
  %v1889 = vunpack.c.h.b16 %v88
  %v1890 = vunpack.c.l.b16 %v89
  %v1891 = vunpack.c.h.b16 %v89
  %v1892 = vunpack.c.l.b16 %v90
  %v1893 = vunpack.c.h.b16 %v90
  %v1894 = vunpack.c.l.b16 %v91
  %v1895 = vunpack.c.h.b16 %v91
  %v1896 = vunpack.c.l.b16 %v92
  %v1897 = vunpack.c.h.b16 %v92
  %v1898 = vunpack.c.l.b16 %v93
  %v1899 = vunpack.c.h.b16 %v93
  %v1900 = vunpack.c.l.b16 %v94
  %v1901 = vunpack.c.h.b16 %v94
  %v1902 = vunpack.c.l.b16 %v95
  %v1903 = vunpack.c.h.b16 %v95
  %v1904 = vunpack.c.l.b16 %v96
  %v1905 = vunpack.c.h.b16 %v96
  %v1906 = vunpack.c.l.b16 %v97
  %v1907 = vunpack.c.h.b16 %v97
  %v1908 = vunpack.c.l.b16 %v98
  %v1909 = vunpack.c.h.b16 %v98
  %v1910 = vunpack.c.l.b16 %v99
  %v1911 = vunpack.c.h.b16 %v99
  %v1912 = vunpack.c.l.b16 %v100
  %v1913 = vunpack.c.h.b16 %v100
  %v1914 = vunpack.c.l.b16 %v101
  %v1915 = vunpack.c.h.b16 %v101
  %v1916 = vunpack.c.l.b16 %v102
  %v1917 = vunpack.c.h.b16 %v102
  %v1918 = vunpack.c.l.b16 %v103
  %v1919 = vunpack.c.h.b16 %v103
  %v1920 = vunpack.c.l.b16 %v104
  %v1921 = vunpack.c.h.b16 %v104
  %v1922 = vunpack.c.l.b16 %v105
  %v1923 = vunpack.c.h.b16 %v105
  %v1924 = vunpack.c.l.b16 %v106
  %v1925 = vunpack.c.h.b16 %v106
  %v1926 = vunpack.c.l.b16 %v107
  %v1927 = vunpack.c.h.b16 %v107
  %v1928 = vunpack.c.l.b16 %v108
  %v1929 = vunpack.c.h.b16 %v108
  %v1930 = vunpack.c.l.b16 %v109
  %v1931 = vunpack.c.h.b16 %v109
  %v1932 = vunpack.c.l.b16 %v110
  %v1933 = vunpack.c.h.b16 %v110
  %v1934 = vunpack.c.l.b16 %v111
  %v1935 = vunpack.c.h.b16 %v111
  %v1936 = vunpack.c.l.b16 %v112
  %v1937 = vunpack.c.h.b16 %v112
  %v1938 = vunpack.c.l.b16 %v113
  %v1939 = vunpack.c.h.b16 %v113
  %v1940 = vunpack.c.l.b16 %v114
  %v1941 = vunpack.c.h.b16 %v114
  %v1942 = vunpack.c.l.b16 %v115
  %v1943 = vunpack.c.h.b16 %v115
  %v1944 = vunpack.c.l.b16 %v116
  %v1945 = vunpack.c.h.b16 %v116
  %v1946 = vunpack.c.l.b16 %v117
  %v1947 = vunpack.c.h.b16 %v117
  %v1948 = vunpack.c.l.b16 %v118
  %v1949 = vunpack.c.h.b16 %v118
  %v1950 = vunpack.c.l.b16 %v119
  %v1951 = vunpack.c.h.b16 %v119
  %v1952 = vunpack.c.l.b16 %v120
  %v1953 = vunpack.c.h.b16 %v120
  %v1954 = vunpack.c.l.b16 %v121
  %v1955 = vunpack.c.h.b16 %v121
  %v1956 = vunpack.c.l.b16 %v122
  %v1957 = vunpack.c.h.b16 %v122
  %v1958 = vunpack.c.l.b16 %v123
  %v1959 = vunpack.c.h.b16 %v123
  %v1960 = vunpack.c.l.b16 %v124
  %v1961 = vunpack.c.h.b16 %v124
  %v1962 = vunpack.c.l.b16 %v125
  %v1963 = vunpack.c.h.b16 %v125
  %v1964 = vunpack.c.l.b16 %v126
  %v1965 = vunpack.c.h.b16 %v126
  %v1966 = vunpack.c.l.b16 %v127
  %v1967 = vunpack.c.h.b16 %v127
  %v1968 = vunpack.c.l.b16 %v128
  %v1969 = vunpack.c.h.b16 %v128
  %v1970 = vunpack.c.l.b16 %v129
  %v1971 = vunpack.c.h.b16 %v129
  %v1972 = vunpack.c.l.b16 %v130
  %v1973 = vunpack.c.h.b16 %v130
  %v1974 = vunpack.c.l.b16 %v131
  %v1975 = vunpack.c.h.b16 %v131
  %v1976 = vunpack.c.l.b16 %v132
  %v1977 = vunpack.c.h.b16 %v132
  %v1978 = vunpack.c.l.b16 %v133
  %v1979 = vunpack.c.h.b16 %v133
  %v1980 = vunpack.c.l.b16 %v134
  %v1981 = vunpack.c.h.b16 %v134
  %v1982 = vunpack.c.l.b16 %v135
  %v1983 = vunpack.c.h.b16 %v135
  %v1984 = vunpack.c.l.b16 %v136
  %v1985 = vunpack.c.h.b16 %v136
  %v1986 = vunpack.c.l.b16 %v137
  %v1987 = vunpack.c.h.b16 %v137
  %v1988 = vunpack.c.l.b16 %v138
  %v1989 = vunpack.c.h.b16 %v138
  %v1990 = vunpack.c.l.b16 %v139
  %v1991 = vunpack.c.h.b16 %v139
  %v1992 = vunpack.c.l.b16 %v140
  %v1993 = vunpack.c.h.b16 %v140
  %v1994 = vunpack.c.l.b16 %v141
  %v1995 = vunpack.c.h.b16 %v141
  %v1996 = vunpack.c.l.b16 %v142
  %v1997 = vunpack.c.h.b16 %v142
  %v1998 = vunpack.c.l.b16 %v143
  %v1999 = vunpack.c.h.b16 %v143
  %v2000 = vunpack.c.l.b16 %v144
  %v2001 = vunpack.c.h.b16 %v144
  %v2002 = vunpack.c.l.b16 %v145
  %v2003 = vunpack.c.h.b16 %v145
  %v2004 = vunpack.c.l.b16 %v146
  %v2005 = vunpack.c.h.b16 %v146
  %v2006 = vunpack.c.l.b16 %v147
  %v2007 = vunpack.c.h.b16 %v147
  %v2008 = vunpack.c.l.b16 %v148
  %v2009 = vunpack.c.h.b16 %v148
  %v2010 = vunpack.c.l.b16 %v149
  %v2011 = vunpack.c.h.b16 %v149
  %v2012 = vunpack.c.l.b16 %v150
  %v2013 = vunpack.c.h.b16 %v150
  %v2014 = vunpack.c.l.b16 %v151
  %v2015 = vunpack.c.h.b16 %v151
  %v2016 = vunpack.c.l.b16 %v152
  %v2017 = vunpack.c.h.b16 %v152
  %v2018 = vunpack.c.l.b16 %v153
  %v2019 = vunpack.c.h.b16 %v153
  %v2020 = vunpack.c.l.b16 %v154
  %v2021 = vunpack.c.h.b16 %v154
  %v2022 = vunpack.c.l.b16 %v155
  %v2023 = vunpack.c.h.b16 %v155
  %v2024 = vunpack.c.l.b16 %v156
  %v2025 = vunpack.c.h.b16 %v156
  %v2026 = vunpack.c.l.b16 %v157
  %v2027 = vunpack.c.h.b16 %v157
  %v2028 = vunpack.c.l.b16 %v158
  %v2029 = vunpack.c.h.b16 %v158
  %v2030 = vunpack.c.l.b16 %v159
  %v2031 = vunpack.c.h.b16 %v159
  %v2032 = vunpack.c.l.b16 %v160
  %v2033 = vunpack.c.h.b16 %v160
  %v2034 = vunpack.c.l.b16 %v161
  %v2035 = vunpack.c.h.b16 %v161
  %v2036 = vunpack.c.l.b16 %v162
  %v2037 = vunpack.c.h.b16 %v162
  %v2038 = vunpack.c.l.b16 %v163
  %v2039 = vunpack.c.h.b16 %v163
  %v2040 = vunpack.c.l.b16 %v164
  %v2041 = vunpack.c.h.b16 %v164
  %v2042 = vunpack.c.l.b16 %v165
  %v2043 = vunpack.c.h.b16 %v165
  %v2044 = vunpack.c.l.b16 %v166
  %v2045 = vunpack.c.h.b16 %v166
  %v2046 = vunpack.c.l.b16 %v167
  %v2047 = vunpack.c.h.b16 %v167
  %v2048 = vunpack.c.l.b16 %v168
  %v2049 = vunpack.c.h.b16 %v168
  %v2050 = vunpack.c.l.b16 %v169
  %v2051 = vunpack.c.h.b16 %v169
  %v2052 = vunpack.c.l.b16 %v170
  %v2053 = vunpack.c.h.b16 %v170
  %v2054 = vunpack.c.l.b16 %v171
  %v2055 = vunpack.c.h.b16 %v171
  %v2056 = vunpack.c.l.b16 %v172
  %v2057 = vunpack.c.h.b16 %v172
  %v2058 = vunpack.c.l.b16 %v173
  %v2059 = vunpack.c.h.b16 %v173
  %v2060 = vunpack.c.l.b16 %v174
  %v2061 = vunpack.c.h.b16 %v174
  %v2062 = vunpack.c.l.b16 %v175
  %v2063 = vunpack.c.h.b16 %v175
  %v2064 = vunpack.c.l.b16 %v176
  %v2065 = vunpack.c.h.b16 %v176
  %v2066 = vunpack.c.l.b16 %v177
  %v2067 = vunpack.c.h.b16 %v177
  %v2068 = vunpack.c.l.b16 %v178
  %v2069 = vunpack.c.h.b16 %v178
  %v2070 = vunpack.c.l.b16 %v179
  %v2071 = vunpack.c.h.b16 %v179
  %v2072 = vunpack.c.l.b16 %v180
  %v2073 = vunpack.c.h.b16 %v180
  %v2074 = vunpack.c.l.b16 %v181
  %v2075 = vunpack.c.h.b16 %v181
  %v2076 = vunpack.c.l.b16 %v182
  %v2077 = vunpack.c.h.b16 %v182
  %v2078 = vunpack.c.l.b16 %v183
  %v2079 = vunpack.c.h.b16 %v183
  %v2080 = vunpack.c.l.b16 %v184
  %v2081 = vunpack.c.h.b16 %v184
  %v2082 = vunpack.c.l.b16 %v185
  %v2083 = vunpack.c.h.b16 %v185
  %v2084 = vunpack.c.l.b16 %v186
  %v2085 = vunpack.c.h.b16 %v186
  %v2086 = vunpack.c.l.b16 %v187
  %v2087 = vunpack.c.h.b16 %v187
  %v2088 = vunpack.c.l.b16 %v188
  %v2089 = vunpack.c.h.b16 %v188
  %v2090 = vunpack.c.l.b16 %v189
  %v2091 = vunpack.c.h.b16 %v189
  %v2092 = vunpack.c.l.b16 %v190
  %v2093 = vunpack.c.h.b16 %v190
  %v2094 = vunpack.c.l.b16 %v191
  %v2095 = vunpack.c.h.b16 %v191
  %v2096 = vunpack.c.l.b16 %v192
  %v2097 = vunpack.c.h.b16 %v192
  %v2098 = vunpack.c.l.b16 %v193
  %v2099 = vunpack.c.h.b16 %v193
  %v2100 = vunpack.c.l.b16 %v194
  %v2101 = vunpack.c.h.b16 %v194
  %v2102 = vunpack.c.l.b16 %v195
  %v2103 = vunpack.c.h.b16 %v195
  %v2104 = vunpack.c.l.b16 %v196
  %v2105 = vunpack.c.h.b16 %v196
  %v2106 = vunpack.c.l.b16 %v197
  %v2107 = vunpack.c.h.b16 %v197
  %v2108 = vunpack.c.l.b16 %v198
  %v2109 = vunpack.c.h.b16 %v198
  %v2110 = vunpack.c.l.b16 %v199
  %v2111 = vunpack.c.h.b16 %v199
  %v2112 = vunpack.c.l.b16 %v200
  %v2113 = vunpack.c.h.b16 %v200
  %v2114 = vunpack.c.l.b16 %v201
  %v2115 = vunpack.c.h.b16 %v201
  %v2116 = vunpack.c.l.b16 %v202
  %v2117 = vunpack.c.h.b16 %v202
  %v2118 = vunpack.c.l.b16 %v203
  %v2119 = vunpack.c.h.b16 %v203
  %v2120 = vunpack.c.l.b16 %v204
  %v2121 = vunpack.c.h.b16 %v204
  %v2122 = vunpack.c.l.b16 %v205
  %v2123 = vunpack.c.h.b16 %v205
  %v2124 = vunpack.c.l.b16 %v206
  %v2125 = vunpack.c.h.b16 %v206
  %v2126 = vunpack.c.l.b16 %v207
  %v2127 = vunpack.c.h.b16 %v207
  %v2128 = vunpack.c.l.b16 %v208
  %v2129 = vunpack.c.h.b16 %v208
  %v2130 = vunpack.c.l.b16 %v209
  %v2131 = vunpack.c.h.b16 %v209
  %v2132 = vunpack.c.l.b16 %v210
  %v2133 = vunpack.c.h.b16 %v210
  %v2134 = vunpack.c.l.b16 %v211
  %v2135 = vunpack.c.h.b16 %v211
  %v2136 = vunpack.c.l.b16 %v212
  %v2137 = vunpack.c.h.b16 %v212
  %v2138 = vunpack.c.l.b16 %v213
  %v2139 = vunpack.c.h.b16 %v213
  %v2140 = vunpack.c.l.b16 %v214
  %v2141 = vunpack.c.h.b16 %v214
  %v2142 = vunpack.c.l.b16 %v215
  %v2143 = vunpack.c.h.b16 %v215
  %v2144 = vunpack.c.l.b16 %v216
  %v2145 = vunpack.c.h.b16 %v216
  %v2146 = vunpack.c.l.b16 %v217
  %v2147 = vunpack.c.h.b16 %v217
  %v2148 = vunpack.c.l.b16 %v218
  %v2149 = vunpack.c.h.b16 %v218
  %v2150 = vunpack.c.l.b16 %v219
  %v2151 = vunpack.c.h.b16 %v219
  %v2152 = vunpack.c.l.b16 %v220
  %v2153 = vunpack.c.h.b16 %v220
  %v2154 = vunpack.c.l.b16 %v221
  %v2155 = vunpack.c.h.b16 %v221
  %v2156 = vunpack.c.l.b16 %v222
  %v2157 = vunpack.c.h.b16 %v222
  %v2158 = vunpack.c.l.b16 %v223
  %v2159 = vunpack.c.h.b16 %v223
  %v2160 = vunpack.c.l.b16 %v224
  %v2161 = vunpack.c.h.b16 %v224
  %v2162 = vunpack.c.l.b16 %v225
  %v2163 = vunpack.c.h.b16 %v225
  %v2164 = vunpack.c.l.b16 %v226
  %v2165 = vunpack.c.h.b16 %v226
  %v2166 = vunpack.c.l.b16 %v227
  %v2167 = vunpack.c.h.b16 %v227
  %v2168 = vunpack.c.l.b16 %v228
  %v2169 = vunpack.c.h.b16 %v228
  %v2170 = vunpack.c.l.b16 %v229
  %v2171 = vunpack.c.h.b16 %v229
  %v2172 = vunpack.c.l.b16 %v230
  %v2173 = vunpack.c.h.b16 %v230
  %v2174 = vunpack.c.l.b16 %v231
  %v2175 = vunpack.c.h.b16 %v231
  %v2176 = vunpack.c.l.b16 %v232
  %v2177 = vunpack.c.h.b16 %v232
  %v2178 = vunpack.c.l.b16 %v233
  %v2179 = vunpack.c.h.b16 %v233
  %v2180 = vunpack.c.l.b16 %v234
  %v2181 = vunpack.c.h.b16 %v234
  %v2182 = vunpack.c.l.b16 %v235
  %v2183 = vunpack.c.h.b16 %v235
  %v2184 = vunpack.c.l.b16 %v236
  %v2185 = vunpack.c.h.b16 %v236
  %v2186 = vunpack.c.l.b16 %v237
  %v2187 = vunpack.c.h.b16 %v237
  %v2188 = vunpack.c.l.b16 %v238
  %v2189 = vunpack.c.h.b16 %v238
  %v2190 = vunpack.c.l.b16 %v239
  %v2191 = vunpack.c.h.b16 %v239
  %v2192 = vunpack.c.l.b16 %v240
  %v2193 = vunpack.c.h.b16 %v240
  %v2194 = vunpack.c.l.b16 %v241
  %v2195 = vunpack.c.h.b16 %v241
  %v2196 = vunpack.c.l.b16 %v242
  %v2197 = vunpack.c.h.b16 %v242
  %v2198 = vunpack.c.l.b16 %v243
  %v2199 = vunpack.c.h.b16 %v243
  %v2200 = vunpack.c.l.b16 %v244
  %v2201 = vunpack.c.h.b16 %v244
  %v2202 = vunpack.c.l.b16 %v245
  %v2203 = vunpack.c.h.b16 %v245
  %v2204 = vunpack.c.l.b16 %v246
  %v2205 = vunpack.c.h.b16 %v246
  %v2206 = vunpack.c.l.b16 %v247
  %v2207 = vunpack.c.h.b16 %v247
  %v2208 = vunpack.c.l.b16 %v248
  %v2209 = vunpack.c.h.b16 %v248
  %v2210 = vunpack.c.l.b16 %v249
  %v2211 = vunpack.c.h.b16 %v249
  %v2212 = vunpack.c.l.b16 %v250
  %v2213 = vunpack.c.h.b16 %v250
  %v2214 = vunpack.c.l.b16 %v251
  %v2215 = vunpack.c.h.b16 %v251
  %v2216 = vunpack.c.l.b16 %v252
  %v2217 = vunpack.c.h.b16 %v252
  %v2218 = vunpack.c.l.b16 %v253
  %v2219 = vunpack.c.h.b16 %v253
  %v2220 = vunpack.c.l.b16 %v254
  %v2221 = vunpack.c.h.b16 %v254
  %v2222 = vunpack.c.l.b16 %v255
  %v2223 = vunpack.c.h.b16 %v255
  %v2224 = vunpack.c.l.b16 %v256
  %v2225 = vunpack.c.h.b16 %v256
  %v2226 = vunpack.c.l.b16 %v257
  %v2227 = vunpack.c.h.b16 %v257
  %v2228 = vunpack.c.l.b16 %v258
  %v2229 = vunpack.c.h.b16 %v258
  %v2230 = vunpack.c.l.b16 %v259
  %v2231 = vunpack.c.h.b16 %v259
  %v2232 = vunpack.c.l.b16 %v260
  %v2233 = vunpack.c.h.b16 %v260
  %v2234 = vunpack.c.l.b16 %v261
  %v2235 = vunpack.c.h.b16 %v261
  %v2236 = vunpack.c.l.b16 %v262
  %v2237 = vunpack.c.h.b16 %v262
  %v2238 = vunpack.c.l.b16 %v263
  %v2239 = vunpack.c.h.b16 %v263
  %v2240 = vunpack.c.l.b16 %v264
  %v2241 = vunpack.c.h.b16 %v264
  %v2242 = vunpack.c.l.b16 %v265
  %v2243 = vunpack.c.h.b16 %v265
  %v2244 = vunpack.c.l.b16 %v266
  %v2245 = vunpack.c.h.b16 %v266
  %v2246 = vunpack.c.l.b16 %v267
  %v2247 = vunpack.c.h.b16 %v267
  %v2248 = vunpack.c.l.b16 %v268
  %v2249 = vunpack.c.h.b16 %v268
  %v2250 = vunpack.c.l.b16 %v269
  %v2251 = vunpack.c.h.b16 %v269
  %v2252 = vunpack.c.l.b16 %v270
  %v2253 = vunpack.c.h.b16 %v270
  %v2254 = vunpack.c.l.b16 %v271
  %v2255 = vunpack.c.h.b16 %v271
  %v2256 = vunpack.c.l.b16 %v272
  %v2257 = vunpack.c.h.b16 %v272
  %v2258 = vunpack.c.l.b16 %v273
  %v2259 = vunpack.c.h.b16 %v273
  %v2260 = vunpack.c.l.b16 %v274
  %v2261 = vunpack.c.h.b16 %v274
  %v2262 = vunpack.c.l.b16 %v275
  %v2263 = vunpack.c.h.b16 %v275
  %v2264 = vunpack.c.l.b16 %v276
  %v2265 = vunpack.c.h.b16 %v276
  %v2266 = vunpack.c.l.b16 %v277
  %v2267 = vunpack.c.h.b16 %v277
  %v2268 = vunpack.c.l.b16 %v278
  %v2269 = vunpack.c.h.b16 %v278
  %v2270 = vunpack.c.l.b16 %v279
  %v2271 = vunpack.c.h.b16 %v279
  %v2272 = vunpack.c.l.b16 %v280
  %v2273 = vunpack.c.h.b16 %v280
  %v2274 = vunpack.c.l.b16 %v281
  %v2275 = vunpack.c.h.b16 %v281
  %v2276 = vunpack.c.l.b16 %v282
  %v2277 = vunpack.c.h.b16 %v282
  %v2278 = vunpack.c.l.b16 %v283
  %v2279 = vunpack.c.h.b16 %v283
  %v2280 = vunpack.c.l.b16 %v284
  %v2281 = vunpack.c.h.b16 %v284
  %v2282 = vunpack.c.l.b16 %v285
  %v2283 = vunpack.c.h.b16 %v285
  %v2284 = vunpack.c.l.b16 %v286
  %v2285 = vunpack.c.h.b16 %v286
  %v2286 = vunpack.c.l.b16 %v287
  %v2287 = vunpack.c.h.b16 %v287
  %v2288 = vunpack.c.l.b16 %v288
  %v2289 = vunpack.c.h.b16 %v288
  %v2290 = vunpack.c.l.b16 %v289
  %v2291 = vunpack.c.h.b16 %v289
  %v2292 = vunpack.c.l.b16 %v290
  %v2293 = vunpack.c.h.b16 %v290
  %v2294 = vunpack.c.l.b16 %v291
  %v2295 = vunpack.c.h.b16 %v291
  %v2296 = vunpack.c.l.b16 %v292
  %v2297 = vunpack.c.h.b16 %v292
  %v2298 = vunpack.c.l.b16 %v293
  %v2299 = vunpack.c.h.b16 %v293
  %v2300 = vunpack.c.l.b16 %v294
  %v2301 = vunpack.c.h.b16 %v294
  %v2302 = vunpack.c.l.b16 %v295
  %v2303 = vunpack.c.h.b16 %v295
  %v2304 = vunpack.c.l.b16 %v296
  %v2305 = vunpack.c.h.b16 %v296
  %v2306 = vunpack.c.l.b16 %v297
  %v2307 = vunpack.c.h.b16 %v297
  %v2308 = vunpack.c.l.b16 %v298
  %v2309 = vunpack.c.h.b16 %v298
  %v2310 = vunpack.c.l.b16 %v299
  %v2311 = vunpack.c.h.b16 %v299
  %v2312 = vunpack.c.l.b16 %v300
  %v2313 = vunpack.c.h.b16 %v300
  %v2314 = vunpack.c.l.b16 %v301
  %v2315 = vunpack.c.h.b16 %v301
  %v2316 = vunpack.c.l.b16 %v302
  %v2317 = vunpack.c.h.b16 %v302
  %v2318 = vunpack.c.l.b16 %v303
  %v2319 = vunpack.c.h.b16 %v303
  %v2320 = vunpack.c.l.b16 %v304
  %v2321 = vunpack.c.h.b16 %v304
  %v2322 = vunpack.c.l.b16 %v305
  %v2323 = vunpack.c.h.b16 %v305
  %v2324 = vunpack.c.l.b16 %v306
  %v2325 = vunpack.c.h.b16 %v306
  %v2326 = vunpack.c.l.b16 %v307
  %v2327 = vunpack.c.h.b16 %v307
  %v2328 = vunpack.c.l.b16 %v308
  %v2329 = vunpack.c.h.b16 %v308
  %v2330 = vunpack.c.l.b16 %v309
  %v2331 = vunpack.c.h.b16 %v309
  %v2332 = vunpack.c.l.b16 %v310
  %v2333 = vunpack.c.h.b16 %v310
  %v2334 = vunpack.c.l.b16 %v311
  %v2335 = vunpack.c.h.b16 %v311
  %v2336 = vunpack.c.l.b16 %v312
  %v2337 = vunpack.c.h.b16 %v312
  %v2338 = vunpack.c.l.b16 %v313
  %v2339 = vunpack.c.h.b16 %v313
  %v2340 = vunpack.c.l.b16 %v314
  %v2341 = vunpack.c.h.b16 %v314
  %v2342 = vunpack.c.l.b16 %v315
  %v2343 = vunpack.c.h.b16 %v315
  %v2344 = vunpack.c.l.b16 %v316
  %v2345 = vunpack.c.h.b16 %v316
  %v2346 = vunpack.c.l.b16 %v317
  %v2347 = vunpack.c.h.b16 %v317
  %v2348 = vunpack.c.l.b16 %v318
  %v2349 = vunpack.c.h.b16 %v318
  %v2350 = vunpack.c.l.b16 %v319
  %v2351 = vunpack.c.h.b16 %v319
  %v2352 = vunpack.c.l.b16 %v320
  %v2353 = vunpack.c.h.b16 %v320
  %v2354 = vunpack.c.l.b16 %v321
  %v2355 = vunpack.c.h.b16 %v321
  %v2356 = vunpack.c.l.b16 %v322
  %v2357 = vunpack.c.h.b16 %v322
  %v2358 = vunpack.c.l.b16 %v323
  %v2359 = vunpack.c.h.b16 %v323
  %v2360 = vunpack.c.l.b16 %v324
  %v2361 = vunpack.c.h.b16 %v324
  %v2362 = vunpack.c.l.b16 %v325
  %v2363 = vunpack.c.h.b16 %v325
  %v2364 = vunpack.c.l.b16 %v326
  %v2365 = vunpack.c.h.b16 %v326
  %v2366 = vunpack.c.l.b16 %v327
  %v2367 = vunpack.c.h.b16 %v327
  %v2368 = vunpack.c.l.b16 %v328
  %v2369 = vunpack.c.h.b16 %v328
  %v2370 = vunpack.c.l.b16 %v329
  %v2371 = vunpack.c.h.b16 %v329
  %v2372 = vunpack.c.l.b16 %v330
  %v2373 = vunpack.c.h.b16 %v330
  %v2374 = vunpack.c.l.b16 %v331
  %v2375 = vunpack.c.h.b16 %v331
  %v2376 = vunpack.c.l.b16 %v332
  %v2377 = vunpack.c.h.b16 %v332
  %v2378 = vunpack.c.l.b16 %v333
  %v2379 = vunpack.c.h.b16 %v333
  %v2380 = vunpack.c.l.b16 %v334
  %v2381 = vunpack.c.h.b16 %v334
  %v2382 = vunpack.c.l.b16 %v335
  %v2383 = vunpack.c.h.b16 %v335
  %v2384 = vunpack.c.l.b16 %v336
  %v2385 = vunpack.c.h.b16 %v336
  %v2386 = vunpack.c.l.b16 %v337
  %v2387 = vunpack.c.h.b16 %v337
  %v2388 = vunpack.c.l.b16 %v338
  %v2389 = vunpack.c.h.b16 %v338
  %v2390 = vunpack.c.l.b16 %v339
  %v2391 = vunpack.c.h.b16 %v339
  %v2392 = vunpack.c.l.b16 %v340
  %v2393 = vunpack.c.h.b16 %v340
  %v2394 = vunpack.c.l.b16 %v341
  %v2395 = vunpack.c.h.b16 %v341
  %v2396 = vunpack.c.l.b16 %v342
  %v2397 = vunpack.c.h.b16 %v342
  %v2398 = vunpack.c.l.b16 %v343
  %v2399 = vunpack.c.h.b16 %v343
  %v2400 = vunpack.c.l.b16 %v344
  %v2401 = vunpack.c.h.b16 %v344
  %v2402 = vunpack.c.l.b16 %v345
  %v2403 = vunpack.c.h.b16 %v345
  %v2404 = vunpack.c.l.b16 %v346
  %v2405 = vunpack.c.h.b16 %v346
  %v2406 = vunpack.c.l.b16 %v347
  %v2407 = vunpack.c.h.b16 %v347
  %v2408 = vunpack.c.l.b16 %v348
  %v2409 = vunpack.c.h.b16 %v348
  %v2410 = vunpack.c.l.b16 %v349
  %v2411 = vunpack.c.h.b16 %v349
  %v2412 = vunpack.c.l.b16 %v350
  %v2413 = vunpack.c.h.b16 %v350
  %v2414 = vunpack.c.l.b16 %v351
  %v2415 = vunpack.c.h.b16 %v351
  %v2416 = vunpack.c.l.b16 %v352
  %v2417 = vunpack.c.h.b16 %v352
  %v2418 = vunpack.c.l.b16 %v353
  %v2419 = vunpack.c.h.b16 %v353
  %v2420 = vunpack.c.l.b16 %v354
  %v2421 = vunpack.c.h.b16 %v354
  %v2422 = vunpack.c.l.b16 %v355
  %v2423 = vunpack.c.h.b16 %v355
  %v2424 = vunpack.c.l.b16 %v356
  %v2425 = vunpack.c.h.b16 %v356
  %v2426 = vunpack.c.l.b16 %v357
  %v2427 = vunpack.c.h.b16 %v357
  %v2428 = vunpack.c.l.b16 %v358
  %v2429 = vunpack.c.h.b16 %v358
  %v2430 = vunpack.c.l.b16 %v359
  %v2431 = vunpack.c.h.b16 %v359
  %v2432 = vunpack.c.l.b16 %v360
  %v2433 = vunpack.c.h.b16 %v360
  %v2434 = vunpack.c.l.b16 %v361
  %v2435 = vunpack.c.h.b16 %v361
  %v2436 = vunpack.c.l.b16 %v362
  %v2437 = vunpack.c.h.b16 %v362
  %v2438 = vunpack.c.l.b16 %v363
  %v2439 = vunpack.c.h.b16 %v363
  %v2440 = vunpack.c.l.b16 %v364
  %v2441 = vunpack.c.h.b16 %v364
  %v2442 = vunpack.c.l.b16 %v365
  %v2443 = vunpack.c.h.b16 %v365
  %v2444 = vunpack.c.l.b16 %v366
  %v2445 = vunpack.c.h.b16 %v366
  %v2446 = vunpack.c.l.b16 %v367
  %v2447 = vunpack.c.h.b16 %v367
  %v2448 = vunpack.c.l.b16 %v368
  %v2449 = vunpack.c.h.b16 %v368
  %v2450 = vunpack.c.l.b16 %v369
  %v2451 = vunpack.c.h.b16 %v369
  %v2452 = vunpack.c.l.b16 %v370
  %v2453 = vunpack.c.h.b16 %v370
  %v2454 = vunpack.c.l.b16 %v371
  %v2455 = vunpack.c.h.b16 %v371
  %v2456 = vunpack.c.l.b16 %v372
  %v2457 = vunpack.c.h.b16 %v372
  %v2458 = vunpack.c.l.b16 %v373
  %v2459 = vunpack.c.h.b16 %v373
  %v2460 = vunpack.c.l.b16 %v374
  %v2461 = vunpack.c.h.b16 %v374
  %v2462 = vunpack.c.l.b16 %v375
  %v2463 = vunpack.c.h.b16 %v375
  %v2464 = vunpack.c.l.b16 %v376
  %v2465 = vunpack.c.h.b16 %v376
  %v2466 = vunpack.c.l.b16 %v377
  %v2467 = vunpack.c.h.b16 %v377
  %v2468 = vunpack.c.l.b16 %v378
  %v2469 = vunpack.c.h.b16 %v378
  %v2470 = vunpack.c.l.b16 %v379
  %v2471 = vunpack.c.h.b16 %v379
  %v2472 = vunpack.c.l.b16 %v380
  %v2473 = vunpack.c.h.b16 %v380
  %v2474 = vunpack.c.l.b16 %v381
  %v2475 = vunpack.c.h.b16 %v381
  %v2476 = vunpack.c.l.b16 %v382
  %v2477 = vunpack.c.h.b16 %v382
  %v2478 = vunpack.c.l.b16 %v383
  %v2479 = vunpack.c.h.b16 %v383
  %v2480 = vunpack.c.l.b16 %v384
  %v2481 = vunpack.c.h.b16 %v384
  %v2482 = vunpack.c.l.b16 %v385
  %v2483 = vunpack.c.h.b16 %v385
  %v2484 = vunpack.c.l.b16 %v386
  %v2485 = vunpack.c.h.b16 %v386
  %v2486 = vunpack.c.l.b16 %v387
  %v2487 = vunpack.c.h.b16 %v387
  %v2488 = vunpack.c.l.b16 %v388
  %v2489 = vunpack.c.h.b16 %v388
  %v2490 = vunpack.c.l.b16 %v389
  %v2491 = vunpack.c.h.b16 %v389
  %v2492 = vunpack.c.l.b16 %v390
  %v2493 = vunpack.c.h.b16 %v390
  %v2494 = vunpack.c.l.b16 %v391
  %v2495 = vunpack.c.h.b16 %v391
  %v2496 = vunpack.c.l.b16 %v392
  %v2497 = vunpack.c.h.b16 %v392
  %v2498 = vunpack.c.l.b16 %v393
  %v2499 = vunpack.c.h.b16 %v393
  %v2500 = vunpack.c.l.b16 %v394
  %v2501 = vunpack.c.h.b16 %v394
  %v2502 = vunpack.c.l.b16 %v395
  %v2503 = vunpack.c.h.b16 %v395
  %v2504 = vunpack.c.l.b16 %v396
  %v2505 = vunpack.c.h.b16 %v396
  %v2506 = vunpack.c.l.b16 %v397
  %v2507 = vunpack.c.h.b16 %v397
  %v2508 = vunpack.c.l.b16 %v398
  %v2509 = vunpack.c.h.b16 %v398
  %v2510 = vunpack.c.l.b16 %v399
  %v2511 = vunpack.c.h.b16 %v399
  %v2512 = vunpack.c.l.b16 %v400
  %v2513 = vunpack.c.h.b16 %v400
  %v2514 = vunpack.c.l.b16 %v401
  %v2515 = vunpack.c.h.b16 %v401
  %v2516 = vunpack.c.l.b16 %v402
  %v2517 = vunpack.c.h.b16 %v402
  %v2518 = vunpack.c.l.b16 %v403
  %v2519 = vunpack.c.h.b16 %v403
  %v2520 = vunpack.c.l.b16 %v404
  %v2521 = vunpack.c.h.b16 %v404
  %v2522 = vunpack.c.l.b16 %v405
  %v2523 = vunpack.c.h.b16 %v405
  %v2524 = vunpack.c.l.b16 %v406
  %v2525 = vunpack.c.h.b16 %v406
  %v2526 = vunpack.c.l.b16 %v407
  %v2527 = vunpack.c.h.b16 %v407
  %v2528 = vunpack.c.l.b16 %v408
  %v2529 = vunpack.c.h.b16 %v408
  %v2530 = vunpack.c.l.b16 %v409
  %v2531 = vunpack.c.h.b16 %v409
  %v2532 = vunpack.c.l.b16 %v410
  %v2533 = vunpack.c.h.b16 %v410
  %v2534 = vunpack.c.l.b16 %v411
  %v2535 = vunpack.c.h.b16 %v411
  %v2536 = vunpack.c.l.b16 %v412
  %v2537 = vunpack.c.h.b16 %v412
  %v2538 = vunpack.c.l.b16 %v413
  %v2539 = vunpack.c.h.b16 %v413
  %v2540 = vunpack.c.l.b16 %v414
  %v2541 = vunpack.c.h.b16 %v414
  %v2542 = vunpack.c.l.b16 %v415
  %v2543 = vunpack.c.h.b16 %v415
  %v2544 = vunpack.c.l.b16 %v416
  %v2545 = vunpack.c.h.b16 %v416
  %v2546 = vunpack.c.l.b16 %v417
  %v2547 = vunpack.c.h.b16 %v417
  %v2548 = vunpack.c.l.b16 %v418
  %v2549 = vunpack.c.h.b16 %v418
  %v2550 = vunpack.c.l.b16 %v419
  %v2551 = vunpack.c.h.b16 %v419
  %v2552 = vunpack.c.l.b16 %v420
  %v2553 = vunpack.c.h.b16 %v420
  %v2554 = vunpack.c.l.b16 %v421
  %v2555 = vunpack.c.h.b16 %v421
  %v2556 = vunpack.c.l.b16 %v422
  %v2557 = vunpack.c.h.b16 %v422
  %v2558 = vunpack.c.l.b16 %v423
  %v2559 = vunpack.c.h.b16 %v423
  %v2560 = vunpack.c.l.b16 %v424
  %v2561 = vunpack.c.h.b16 %v424
  %v2562 = vunpack.c.l.b16 %v425
  %v2563 = vunpack.c.h.b16 %v425
  %v2564 = vunpack.c.l.b16 %v426
  %v2565 = vunpack.c.h.b16 %v426
  %v2566 = vunpack.c.l.b16 %v427
  %v2567 = vunpack.c.h.b16 %v427
  %v2568 = vunpack.c.l.b16 %v428
  %v2569 = vunpack.c.h.b16 %v428
  %v2570 = vunpack.c.l.b16 %v429
  %v2571 = vunpack.c.h.b16 %v429
  %v2572 = vunpack.c.l.b16 %v430
  %v2573 = vunpack.c.h.b16 %v430
  %v2574 = vunpack.c.l.b16 %v431
  %v2575 = vunpack.c.h.b16 %v431
  %v2576 = vunpack.c.l.b16 %v432
  %v2577 = vunpack.c.h.b16 %v432
  %v2578 = vunpack.c.l.b16 %v433
  %v2579 = vunpack.c.h.b16 %v433
  %v2580 = vunpack.c.l.b16 %v434
  %v2581 = vunpack.c.h.b16 %v434
  %v2582 = vunpack.c.l.b16 %v435
  %v2583 = vunpack.c.h.b16 %v435
  %v2584 = vunpack.c.l.b16 %v436
  %v2585 = vunpack.c.h.b16 %v436
  %v2586 = vunpack.c.l.b16 %v437
  %v2587 = vunpack.c.h.b16 %v437
  %v2588 = vunpack.c.l.b16 %v438
  %v2589 = vunpack.c.h.b16 %v438
  %v2590 = vunpack.c.l.b16 %v439
  %v2591 = vunpack.c.h.b16 %v439
  %v2592 = vunpack.c.l.b16 %v440
  %v2593 = vunpack.c.h.b16 %v440
  %v2594 = vunpack.c.l.b16 %v441
  %v2595 = vunpack.c.h.b16 %v441
  %v2596 = vunpack.c.l.b16 %v442
  %v2597 = vunpack.c.h.b16 %v442
  %v2598 = vunpack.c.l.b16 %v443
  %v2599 = vunpack.c.h.b16 %v443
  %v2600 = vunpack.c.l.b16 %v444
  %v2601 = vunpack.c.h.b16 %v444
  %v2602 = vunpack.c.l.b16 %v445
  %v2603 = vunpack.c.h.b16 %v445
  %v2604 = vunpack.c.l.b16 %v446
  %v2605 = vunpack.c.h.b16 %v446
  %v2606 = vunpack.c.l.b16 %v447
  %v2607 = vunpack.c.h.b16 %v447
  %v2608 = vunpack.c.l.b16 %v448
  %v2609 = vunpack.c.h.b16 %v448
  %v2610 = vunpack.c.l.b16 %v449
  %v2611 = vunpack.c.h.b16 %v449
  %v2612 = vunpack.c.l.b16 %v450
  %v2613 = vunpack.c.h.b16 %v450
  %v2614 = vunpack.c.l.b16 %v451
  %v2615 = vunpack.c.h.b16 %v451
  %v2616 = vunpack.c.l.b16 %v452
  %v2617 = vunpack.c.h.b16 %v452
  %v2618 = vunpack.c.l.b16 %v453
  %v2619 = vunpack.c.h.b16 %v453
  %v2620 = vunpack.c.l.b16 %v454
  %v2621 = vunpack.c.h.b16 %v454
  %v2622 = vunpack.c.l.b16 %v455
  %v2623 = vunpack.c.h.b16 %v455
  %v2624 = vunpack.c.l.b16 %v456
  %v2625 = vunpack.c.h.b16 %v456
  %v2626 = vunpack.c.l.b16 %v457
  %v2627 = vunpack.c.h.b16 %v457
  %v2628 = vunpack.c.l.b16 %v458
  %v2629 = vunpack.c.h.b16 %v458
  %v2630 = vunpack.c.l.b16 %v459
  %v2631 = vunpack.c.h.b16 %v459
  %v2632 = vunpack.c.l.b16 %v460
  %v2633 = vunpack.c.h.b16 %v460
  %v2634 = vunpack.c.l.b16 %v461
  %v2635 = vunpack.c.h.b16 %v461
  %v2636 = vunpack.c.l.b16 %v462
  %v2637 = vunpack.c.h.b16 %v462
  %v2638 = vunpack.c.l.b16 %v463
  %v2639 = vunpack.c.h.b16 %v463
  %v2640 = vunpack.c.l.b16 %v464
  %v2641 = vunpack.c.h.b16 %v464
  %v2642 = vunpack.c.l.b16 %v465
  %v2643 = vunpack.c.h.b16 %v465
  %v2644 = vunpack.c.l.b16 %v466
  %v2645 = vunpack.c.h.b16 %v466
  %v2646 = vunpack.c.l.b16 %v467
  %v2647 = vunpack.c.h.b16 %v467
  %v2648 = vunpack.c.l.b16 %v468
  %v2649 = vunpack.c.h.b16 %v468
  %v2650 = vunpack.c.l.b16 %v469
  %v2651 = vunpack.c.h.b16 %v469
  %v2652 = vunpack.c.l.b16 %v470
  %v2653 = vunpack.c.h.b16 %v470
  %v2654 = vunpack.c.l.b16 %v471
  %v2655 = vunpack.c.h.b16 %v471
  %v2656 = vunpack.c.l.b16 %v472
  %v2657 = vunpack.c.h.b16 %v472
  %v2658 = vunpack.c.l.b16 %v473
  %v2659 = vunpack.c.h.b16 %v473
  %v2660 = vunpack.c.l.b16 %v474
  %v2661 = vunpack.c.h.b16 %v474
  %v2662 = vunpack.c.l.b16 %v475
  %v2663 = vunpack.c.h.b16 %v475
  %v2664 = vunpack.c.l.b16 %v476
  %v2665 = vunpack.c.h.b16 %v476
  %v2666 = vunpack.c.l.b16 %v477
  %v2667 = vunpack.c.h.b16 %v477
  %v2668 = vunpack.c.l.b16 %v478
  %v2669 = vunpack.c.h.b16 %v478
  %v2670 = vunpack.c.l.b16 %v479
  %v2671 = vunpack.c.h.b16 %v479
  %v2672 = vunpack.c.l.b16 %v480
  %v2673 = vunpack.c.h.b16 %v480
  %v2674 = vunpack.c.l.b16 %v481
  %v2675 = vunpack.c.h.b16 %v481
  %v2676 = vunpack.c.l.b16 %v482
  %v2677 = vunpack.c.h.b16 %v482
  %v2678 = vunpack.c.l.b16 %v483
  %v2679 = vunpack.c.h.b16 %v483
  %v2680 = vunpack.c.l.b16 %v484
  %v2681 = vunpack.c.h.b16 %v484
  %v2682 = vunpack.c.l.b16 %v485
  %v2683 = vunpack.c.h.b16 %v485
  %v2684 = vunpack.c.l.b16 %v486
  %v2685 = vunpack.c.h.b16 %v486
  %v2686 = vunpack.c.l.b16 %v487
  %v2687 = vunpack.c.h.b16 %v487
  %v2688 = vunpack.c.l.b16 %v488
  %v2689 = vunpack.c.h.b16 %v488
  %v2690 = vunpack.c.l.b16 %v489
  %v2691 = vunpack.c.h.b16 %v489
  %v2692 = vunpack.c.l.b16 %v490
  %v2693 = vunpack.c.h.b16 %v490
  %v2694 = vunpack.c.l.b16 %v491
  %v2695 = vunpack.c.h.b16 %v491
  %v2696 = vunpack.c.l.b16 %v492
  %v2697 = vunpack.c.h.b16 %v492
  %v2698 = vunpack.c.l.b16 %v493
  %v2699 = vunpack.c.h.b16 %v493
  %v2700 = vunpack.c.l.b16 %v494
  %v2701 = vunpack.c.h.b16 %v494
  %v2702 = vunpack.c.l.b16 %v495
  %v2703 = vunpack.c.h.b16 %v495
  %v2704 = vunpack.c.l.b16 %v496
  %v2705 = vunpack.c.h.b16 %v496
  %v2706 = vunpack.c.l.b16 %v497
  %v2707 = vunpack.c.h.b16 %v497
  %v2708 = vunpack.c.l.b16 %v498
  %v2709 = vunpack.c.h.b16 %v498
  %v2710 = vunpack.c.l.b16 %v499
  %v2711 = vunpack.c.h.b16 %v499
  %v2712 = vunpack.c.l.b16 %v500
  %v2713 = vunpack.c.h.b16 %v500
  %v2714 = vunpack.c.l.b16 %v501
  %v2715 = vunpack.c.h.b16 %v501
  %v2716 = vunpack.c.l.b16 %v502
  %v2717 = vunpack.c.h.b16 %v502
  %v2718 = vunpack.c.l.b16 %v503
  %v2719 = vunpack.c.h.b16 %v503
  %v2720 = vunpack.c.l.b16 %v504
  %v2721 = vunpack.c.h.b16 %v504
  %v2722 = vunpack.c.l.b16 %v505
  %v2723 = vunpack.c.h.b16 %v505
  %v2724 = vunpack.c.l.b16 %v506
  %v2725 = vunpack.c.h.b16 %v506
  %v2726 = vunpack.c.l.b16 %v507
  %v2727 = vunpack.c.h.b16 %v507
  %v2728 = vunpack.c.l.b16 %v508
  %v2729 = vunpack.c.h.b16 %v508
  %v2730 = vunpack.c.l.b16 %v509
  %v2731 = vunpack.c.h.b16 %v509
  %v2732 = vunpack.c.l.b16 %v510
  %v2733 = vunpack.c.h.b16 %v510
  %v2734 = vunpack.c.l.b16 %v511
  %v2735 = vunpack.c.h.b16 %v511
  %v2736 = vunpack.c.l.b16 %v512
  %v2737 = vunpack.c.h.b16 %v512
  %v2738 = vunpack.c.l.b16 %v513
  %v2739 = vunpack.c.h.b16 %v513
  %v2740 = vunpack.c.l.b16 %v514
  %v2741 = vunpack.c.h.b16 %v514
  %v2742 = vunpack.c.l.b16 %v515
  %v2743 = vunpack.c.h.b16 %v515
  %v2744 = vunpack.c.l.b16 %v516
  %v2745 = vunpack.c.h.b16 %v516
  %v2746 = vunpack.c.l.b16 %v517
  %v2747 = vunpack.c.h.b16 %v517
  %v2748 = vunpack.c.l.b16 %v518
  %v2749 = vunpack.c.h.b16 %v518
  %v2750 = vunpack.c.l.b16 %v519
  %v2751 = vunpack.c.h.b16 %v519
  %v2752 = vunpack.c.l.b16 %v520
  %v2753 = vunpack.c.h.b16 %v520
  %v2754 = vunpack.c.l.b16 %v521
  %v2755 = vunpack.c.h.b16 %v521
  %v2756 = vunpack.c.l.b16 %v522
  %v2757 = vunpack.c.h.b16 %v522
  %v2758 = vunpack.c.l.b16 %v523
  %v2759 = vunpack.c.h.b16 %v523
  %v2760 = vunpack.c.l.b16 %v524
  %v2761 = vunpack.c.h.b16 %v524
  %v2762 = vunpack.c.l.b16 %v525
  %v2763 = vunpack.c.h.b16 %v525
  %v2764 = vunpack.c.l.b16 %v526
  %v2765 = vunpack.c.h.b16 %v526
  %v2766 = vunpack.c.l.b16 %v527
  %v2767 = vunpack.c.h.b16 %v527
  %v2768 = vunpack.c.l.b16 %v528
  %v2769 = vunpack.c.h.b16 %v528
  %v2770 = vunpack.c.l.b16 %v529
  %v2771 = vunpack.c.h.b16 %v529
  %v2772 = vunpack.c.l.b16 %v530
  %v2773 = vunpack.c.h.b16 %v530
  %v2774 = vunpack.c.l.b16 %v531
  %v2775 = vunpack.c.h.b16 %v531
  %v2776 = vunpack.c.l.b16 %v532
  %v2777 = vunpack.c.h.b16 %v532
  %v2778 = vunpack.c.l.b16 %v533
  %v2779 = vunpack.c.h.b16 %v533
  %v2780 = vunpack.c.l.b16 %v534
  %v2781 = vunpack.c.h.b16 %v534
  %v2782 = vunpack.c.l.b16 %v535
  %v2783 = vunpack.c.h.b16 %v535
  %v2784 = vunpack.c.l.b16 %v536
  %v2785 = vunpack.c.h.b16 %v536
  %v2786 = vunpack.c.l.b16 %v537
  %v2787 = vunpack.c.h.b16 %v537
  %v2788 = vunpack.c.l.b16 %v538
  %v2789 = vunpack.c.h.b16 %v538
  %v2790 = vunpack.c.l.b16 %v539
  %v2791 = vunpack.c.h.b16 %v539
  %v2792 = vunpack.c.l.b16 %v540
  %v2793 = vunpack.c.h.b16 %v540
  %v2794 = vunpack.c.l.b16 %v541
  %v2795 = vunpack.c.h.b16 %v541
  %v2796 = vunpack.c.l.b16 %v542
  %v2797 = vunpack.c.h.b16 %v542
  %v2798 = vunpack.c.l.b16 %v543
  %v2799 = vunpack.c.h.b16 %v543
  %v2800 = vunpack.c.l.b16 %v544
  %v2801 = vunpack.c.h.b16 %v544
  %v2802 = vunpack.c.l.b16 %v545
  %v2803 = vunpack.c.h.b16 %v545
  %v2804 = vunpack.c.l.b16 %v546
  %v2805 = vunpack.c.h.b16 %v546
  %v2806 = vunpack.c.l.b16 %v547
  %v2807 = vunpack.c.h.b16 %v547
  %v2808 = vunpack.c.l.b16 %v548
  %v2809 = vunpack.c.h.b16 %v548
  %v2810 = vunpack.c.l.b16 %v549
  %v2811 = vunpack.c.h.b16 %v549
  %v2812 = vunpack.c.l.b16 %v550
  %v2813 = vunpack.c.h.b16 %v550
  %v2814 = vunpack.c.l.b16 %v551
  %v2815 = vunpack.c.h.b16 %v551
  %v2816 = vunpack.c.l.b16 %v552
  %v2817 = vunpack.c.h.b16 %v552
  %v2818 = vunpack.c.l.b16 %v553
  %v2819 = vunpack.c.h.b16 %v553
  %v2820 = vunpack.c.l.b16 %v554
  %v2821 = vunpack.c.h.b16 %v554
  %v2822 = vunpack.c.l.b16 %v555
  %v2823 = vunpack.c.h.b16 %v555
  %v2824 = vunpack.c.l.b16 %v556
  %v2825 = vunpack.c.h.b16 %v556
  %v2826 = vunpack.c.l.b16 %v557
  %v2827 = vunpack.c.h.b16 %v557
  %v2828 = vunpack.c.l.b16 %v558
  %v2829 = vunpack.c.h.b16 %v558
  %v2830 = vunpack.c.l.b16 %v559
  %v2831 = vunpack.c.h.b16 %v559
  %v2832 = vunpack.c.l.b16 %v560
  %v2833 = vunpack.c.h.b16 %v560
  %v2834 = vunpack.c.l.b16 %v561
  %v2835 = vunpack.c.h.b16 %v561
  %v2836 = vunpack.c.l.b16 %v562
  %v2837 = vunpack.c.h.b16 %v562
  %v2838 = vunpack.c.l.b16 %v563
  %v2839 = vunpack.c.h.b16 %v563
  %v2840 = vunpack.c.l.b16 %v564
  %v2841 = vunpack.c.h.b16 %v564
  %v2842 = vunpack.c.l.b16 %v565
  %v2843 = vunpack.c.h.b16 %v565
  %v2844 = vunpack.c.l.b16 %v566
  %v2845 = vunpack.c.h.b16 %v566
  %v2846 = vunpack.c.l.b16 %v567
  %v2847 = vunpack.c.h.b16 %v567
  %v2848 = vunpack.c.l.b16 %v568
  %v2849 = vunpack.c.h.b16 %v568
  %v2850 = vunpack.c.l.b16 %v569
  %v2851 = vunpack.c.h.b16 %v569
  %v2852 = vunpack.c.l.b16 %v570
  %v2853 = vunpack.c.h.b16 %v570
  %v2854 = vunpack.c.l.b16 %v571
  %v2855 = vunpack.c.h.b16 %v571
  %v2856 = vunpack.c.l.b16 %v572
  %v2857 = vunpack.c.h.b16 %v572
  %v2858 = vunpack.c.l.b16 %v573
  %v2859 = vunpack.c.h.b16 %v573
  %v2860 = vunpack.c.l.b16 %v574
  %v2861 = vunpack.c.h.b16 %v574
  %v2862 = vunpack.c.l.b16 %v575
  %v2863 = vunpack.c.h.b16 %v575
  %v2864 = vunpack.c.l.b16 %v576
  %v2865 = vunpack.c.h.b16 %v576
  %v2866 = vunpack.c.l.b16 %v577
  %v2867 = vunpack.c.h.b16 %v577
  %v2868 = vunpack.c.l.b16 %v578
  %v2869 = vunpack.c.h.b16 %v578
  %v2870 = vunpack.c.l.b16 %v579
  %v2871 = vunpack.c.h.b16 %v579
  %v2872 = vunpack.c.l.b16 %v580
  %v2873 = vunpack.c.h.b16 %v580
  %v2874 = vunpack.c.l.b16 %v581
  %v2875 = vunpack.c.h.b16 %v581
  %v2876 = vunpack.c.l.b16 %v582
  %v2877 = vunpack.c.h.b16 %v582
  %v2878 = vunpack.c.l.b16 %v583
  %v2879 = vunpack.c.h.b16 %v583
  %v2880 = vunpack.c.l.b16 %v584
  %v2881 = vunpack.c.h.b16 %v584
  %v2882 = vunpack.c.l.b16 %v585
  %v2883 = vunpack.c.h.b16 %v585
  %v2884 = vunpack.c.l.b16 %v586
  %v2885 = vunpack.c.h.b16 %v586
  %v2886 = vunpack.c.l.b16 %v587
  %v2887 = vunpack.c.h.b16 %v587
  %v2888 = vunpack.c.l.b16 %v588
  %v2889 = vunpack.c.h.b16 %v588
  %v2890 = vunpack.c.l.b16 %v589
  %v2891 = vunpack.c.h.b16 %v589
  %v2892 = vunpack.c.l.b16 %v590
  %v2893 = vunpack.c.h.b16 %v590
  %v2894 = vunpack.c.l.b16 %v591
  %v2895 = vunpack.c.h.b16 %v591
  %v2896 = vunpack.c.l.b16 %v592
  %v2897 = vunpack.c.h.b16 %v592
  %v2898 = vunpack.c.l.b16 %v593
  %v2899 = vunpack.c.h.b16 %v593
  %v2900 = vunpack.c.l.b16 %v594
  %v2901 = vunpack.c.h.b16 %v594
  %v2902 = vunpack.c.l.b16 %v595
  %v2903 = vunpack.c.h.b16 %v595
  %v2904 = vunpack.c.l.b16 %v596
  %v2905 = vunpack.c.h.b16 %v596
  %v2906 = vunpack.c.l.b16 %v597
  %v2907 = vunpack.c.h.b16 %v597
  %v2908 = vunpack.c.l.b16 %v598
  %v2909 = vunpack.c.h.b16 %v598
  %v2910 = vunpack.c.l.b16 %v599
  %v2911 = vunpack.c.h.b16 %v599
  %v2912 = vunpack.c.l.b16 %v600
  %v2913 = vunpack.c.h.b16 %v600
  %v2914 = vunpack.c.l.b16 %v601
  %v2915 = vunpack.c.h.b16 %v601
  %v2916 = vunpack.c.l.b16 %v602
  %v2917 = vunpack.c.h.b16 %v602
  %v2918 = vunpack.c.l.b16 %v603
  %v2919 = vunpack.c.h.b16 %v603
  %v2920 = vunpack.c.l.b16 %v604
  %v2921 = vunpack.c.h.b16 %v604
  %v2922 = vunpack.c.l.b16 %v605
  %v2923 = vunpack.c.h.b16 %v605
  %v2924 = vunpack.c.l.b16 %v606
  %v2925 = vunpack.c.h.b16 %v606
  %v2926 = vunpack.c.l.b16 %v607
  %v2927 = vunpack.c.h.b16 %v607
  %v2928 = vunpack.c.l.b16 %v608
  %v2929 = vunpack.c.h.b16 %v608
  %v2930 = vunpack.c.l.b16 %v609
  %v2931 = vunpack.c.h.b16 %v609
  %v2932 = vunpack.c.l.b16 %v610
  %v2933 = vunpack.c.h.b16 %v610
  %v2934 = vunpack.c.l.b16 %v611
  %v2935 = vunpack.c.h.b16 %v611
  %v2936 = vunpack.c.l.b16 %v612
  %v2937 = vunpack.c.h.b16 %v612
  %v2938 = vunpack.c.l.b16 %v613
  %v2939 = vunpack.c.h.b16 %v613
  %v2940 = vunpack.c.l.b16 %v614
  %v2941 = vunpack.c.h.b16 %v614
  %v2942 = vunpack.c.l.b16 %v615
  %v2943 = vunpack.c.h.b16 %v615
  %v2944 = vunpack.c.l.b16 %v616
  %v2945 = vunpack.c.h.b16 %v616
  %v2946 = vunpack.c.l.b16 %v617
  %v2947 = vunpack.c.h.b16 %v617
  %v2948 = vunpack.c.l.b16 %v618
  %v2949 = vunpack.c.h.b16 %v618
  %v2950 = vunpack.c.l.b16 %v619
  %v2951 = vunpack.c.h.b16 %v619
  %v2952 = vunpack.c.l.b16 %v620
  %v2953 = vunpack.c.h.b16 %v620
  %v2954 = vunpack.c.l.b16 %v621
  %v2955 = vunpack.c.h.b16 %v621
  %v2956 = vunpack.c.l.b16 %v622
  %v2957 = vunpack.c.h.b16 %v622
  %v2958 = vunpack.c.l.b16 %v623
  %v2959 = vunpack.c.h.b16 %v623
  %v2960 = vunpack.c.l.b16 %v624
  %v2961 = vunpack.c.h.b16 %v624
  %v2962 = vunpack.c.l.b16 %v625
  %v2963 = vunpack.c.h.b16 %v625
  %v2964 = vunpack.c.l.b16 %v626
  %v2965 = vunpack.c.h.b16 %v626
  %v2966 = vunpack.c.l.b16 %v627
  %v2967 = vunpack.c.h.b16 %v627
  %v2968 = vunpack.c.l.b16 %v628
  %v2969 = vunpack.c.h.b16 %v628
  %v2970 = vunpack.c.l.b16 %v629
  %v2971 = vunpack.c.h.b16 %v629
  %v2972 = vunpack.c.l.b16 %v630
  %v2973 = vunpack.c.h.b16 %v630
  %v2974 = vunpack.c.l.b16 %v631
  %v2975 = vunpack.c.h.b16 %v631
  %v2976 = vunpack.c.l.b16 %v632
  %v2977 = vunpack.c.h.b16 %v632
  %v2978 = vunpack.c.l.b16 %v633
  %v2979 = vunpack.c.h.b16 %v633
  %v2980 = vunpack.c.l.b16 %v634
  %v2981 = vunpack.c.h.b16 %v634
  %v2982 = vunpack.c.l.b16 %v635
  %v2983 = vunpack.c.h.b16 %v635
  %v2984 = vunpack.c.l.b16 %v636
  %v2985 = vunpack.c.h.b16 %v636
  %v2986 = vunpack.c.l.b16 %v637
  %v2987 = vunpack.c.h.b16 %v637
  %v2988 = vunpack.c.l.b16 %v638
  %v2989 = vunpack.c.h.b16 %v638
  %v2990 = vunpack.c.l.b16 %v639
  %v2991 = vunpack.c.h.b16 %v639
  %v2992 = vunpack.c.l.b16 %v640
  %v2993 = vunpack.c.h.b16 %v640
  %v2994 = vunpack.c.l.b16 %v641
  %v2995 = vunpack.c.h.b16 %v641
  %v2996 = vunpack.c.l.b16 %v642
  %v2997 = vunpack.c.h.b16 %v642
  %v2998 = vunpack.c.l.b16 %v643
  %v2999 = vunpack.c.h.b16 %v643
  %v3000 = vunpack.c.l.b16 %v644
  %v3001 = vunpack.c.h.b16 %v644
  %v3002 = vunpack.c.l.b16 %v645
  %v3003 = vunpack.c.h.b16 %v645
  %v3004 = vunpack.c.l.b16 %v646
  %v3005 = vunpack.c.h.b16 %v646
  %v3006 = vunpack.c.l.b16 %v647
  %v3007 = vunpack.c.h.b16 %v647
  %v3008 = vunpack.c.l.b16 %v648
  %v3009 = vunpack.c.h.b16 %v648
  %v3010 = vunpack.c.l.b16 %v649
  %v3011 = vunpack.c.h.b16 %v649
  %v3012 = vunpack.c.l.b16 %v650
  %v3013 = vunpack.c.h.b16 %v650
  %v3014 = vunpack.c.l.b16 %v651
  %v3015 = vunpack.c.h.b16 %v651
  %v3016 = vunpack.c.l.b16 %v652
  %v3017 = vunpack.c.h.b16 %v652
  %v3018 = vunpack.c.l.b16 %v653
  %v3019 = vunpack.c.h.b16 %v653
  %v3020 = vunpack.c.l.b16 %v654
  %v3021 = vunpack.c.h.b16 %v654
  %v3022 = vunpack.c.l.b16 %v655
  %v3023 = vunpack.c.h.b16 %v655
  %v3024 = vunpack.c.l.b16 %v656
  %v3025 = vunpack.c.h.b16 %v656
  %v3026 = vunpack.c.l.b16 %v657
  %v3027 = vunpack.c.h.b16 %v657
  %v3028 = vunpack.c.l.b16 %v658
  %v3029 = vunpack.c.h.b16 %v658
  %v3030 = vunpack.c.l.b16 %v659
  %v3031 = vunpack.c.h.b16 %v659
  %v3032 = vunpack.c.l.b16 %v660
  %v3033 = vunpack.c.h.b16 %v660
  %v3034 = vunpack.c.l.b16 %v661
  %v3035 = vunpack.c.h.b16 %v661
  %v3036 = vunpack.c.l.b16 %v662
  %v3037 = vunpack.c.h.b16 %v662
  %v3038 = vunpack.c.l.b16 %v663
  %v3039 = vunpack.c.h.b16 %v663
  %v3040 = vunpack.c.l.b16 %v664
  %v3041 = vunpack.c.h.b16 %v664
  %v3042 = vunpack.c.l.b16 %v665
  %v3043 = vunpack.c.h.b16 %v665
  %v3044 = vunpack.c.l.b16 %v666
  %v3045 = vunpack.c.h.b16 %v666
  %v3046 = vunpack.c.l.b16 %v667
  %v3047 = vunpack.c.h.b16 %v667
  %v3048 = vunpack.c.l.b16 %v668
  %v3049 = vunpack.c.h.b16 %v668
  %v3050 = vunpack.c.l.b16 %v669
  %v3051 = vunpack.c.h.b16 %v669
  %v3052 = vunpack.c.l.b16 %v670
  %v3053 = vunpack.c.h.b16 %v670
  %v3054 = vunpack.c.l.b16 %v671
  %v3055 = vunpack.c.h.b16 %v671
  %v3056 = vunpack.c.l.b16 %v672
  %v3057 = vunpack.c.h.b16 %v672
  %v3058 = vunpack.c.l.b16 %v673
  %v3059 = vunpack.c.h.b16 %v673
  %v3060 = vunpack.c.l.b16 %v674
  %v3061 = vunpack.c.h.b16 %v674
  %v3062 = vunpack.c.l.b16 %v675
  %v3063 = vunpack.c.h.b16 %v675
  %v3064 = vunpack.c.l.b16 %v676
  %v3065 = vunpack.c.h.b16 %v676
  %v3066 = vunpack.c.l.b16 %v677
  %v3067 = vunpack.c.h.b16 %v677
  %v3068 = vunpack.c.l.b16 %v678
  %v3069 = vunpack.c.h.b16 %v678
  %v3070 = vunpack.c.l.b16 %v679
  %v3071 = vunpack.c.h.b16 %v679
  %v3072 = vunpack.c.l.b16 %v680
  %v3073 = vunpack.c.h.b16 %v680
  %v3074 = vunpack.c.l.b16 %v681
  %v3075 = vunpack.c.h.b16 %v681
  %v3076 = vunpack.c.l.b16 %v682
  %v3077 = vunpack.c.h.b16 %v682
  %v3078 = vunpack.c.l.b16 %v683
  %v3079 = vunpack.c.h.b16 %v683
  %v3080 = vunpack.c.l.b16 %v684
  %v3081 = vunpack.c.h.b16 %v684
  %v3082 = vunpack.c.l.b16 %v685
  %v3083 = vunpack.c.h.b16 %v685
  %v3084 = vunpack.c.l.b16 %v686
  %v3085 = vunpack.c.h.b16 %v686
  %v3086 = vunpack.c.l.b16 %v687
  %v3087 = vunpack.c.h.b16 %v687
  %v3088 = vunpack.c.l.b16 %v688
  %v3089 = vunpack.c.h.b16 %v688
  %v3090 = vunpack.c.l.b16 %v689
  %v3091 = vunpack.c.h.b16 %v689
  %v3092 = vunpack.c.l.b16 %v690
  %v3093 = vunpack.c.h.b16 %v690
  %v3094 = vunpack.c.l.b16 %v691
  %v3095 = vunpack.c.h.b16 %v691
  %v3096 = vunpack.c.l.b16 %v692
  %v3097 = vunpack.c.h.b16 %v692
  %v3098 = vunpack.c.l.b16 %v693
  %v3099 = vunpack.c.h.b16 %v693
  %v3100 = vunpack.c.l.b16 %v694
  %v3101 = vunpack.c.h.b16 %v694
  %v3102 = vunpack.c.l.b16 %v695
  %v3103 = vunpack.c.h.b16 %v695
  %v3104 = vunpack.c.l.b16 %v696
  %v3105 = vunpack.c.h.b16 %v696
  %v3106 = vunpack.c.l.b16 %v697
  %v3107 = vunpack.c.h.b16 %v697
  %v3108 = vunpack.c.l.b16 %v698
  %v3109 = vunpack.c.h.b16 %v698
  %v3110 = vunpack.c.l.b16 %v699
  %v3111 = vunpack.c.h.b16 %v699
  %v3112 = vunpack.c.l.b16 %v700
  %v3113 = vunpack.c.h.b16 %v700
  %v3114 = vunpack.c.l.b16 %v701
  %v3115 = vunpack.c.h.b16 %v701
  %v3116 = vunpack.c.l.b16 %v702
  %v3117 = vunpack.c.h.b16 %v702
  %v3118 = vunpack.c.l.b16 %v703
  %v3119 = vunpack.c.h.b16 %v703
  %v3120 = vunpack.c.l.b16 %v704
  %v3121 = vunpack.c.h.b16 %v704
  %v3122 = vunpack.c.l.b16 %v705
  %v3123 = vunpack.c.h.b16 %v705
  %v3124 = vunpack.c.l.b16 %v706
  %v3125 = vunpack.c.h.b16 %v706
  %v3126 = vunpack.c.l.b16 %v707
  %v3127 = vunpack.c.h.b16 %v707
  %v3128 = vunpack.c.l.b16 %v708
  %v3129 = vunpack.c.h.b16 %v708
  %v3130 = vunpack.c.l.b16 %v709
  %v3131 = vunpack.c.h.b16 %v709
  %v3132 = vunpack.c.l.b16 %v710
  %v3133 = vunpack.c.h.b16 %v710
  %v3134 = vunpack.c.l.b16 %v711
  %v3135 = vunpack.c.h.b16 %v711
  %v3136 = vunpack.c.l.b16 %v712
  %v3137 = vunpack.c.h.b16 %v712
  %v3138 = vunpack.c.l.b16 %v713
  %v3139 = vunpack.c.h.b16 %v713
  %v3140 = vunpack.c.l.b16 %v714
  %v3141 = vunpack.c.h.b16 %v714
  %v3142 = vunpack.c.l.b16 %v715
  %v3143 = vunpack.c.h.b16 %v715
  %v3144 = vunpack.c.l.b16 %v716
  %v3145 = vunpack.c.h.b16 %v716
  %v3146 = vunpack.c.l.b16 %v717
  %v3147 = vunpack.c.h.b16 %v717
  %v3148 = vunpack.c.l.b16 %v718
  %v3149 = vunpack.c.h.b16 %v718
  %v3150 = vunpack.c.l.b16 %v719
  %v3151 = vunpack.c.h.b16 %v719
  %v3152 = vunpack.c.l.b16 %v720
  %v3153 = vunpack.c.h.b16 %v720
  %v3154 = vunpack.c.l.b16 %v721
  %v3155 = vunpack.c.h.b16 %v721
  %v3156 = vunpack.c.l.b16 %v722
  %v3157 = vunpack.c.h.b16 %v722
  %v3158 = vunpack.c.l.b16 %v723
  %v3159 = vunpack.c.h.b16 %v723
  %v3160 = vunpack.c.l.b16 %v724
  %v3161 = vunpack.c.h.b16 %v724
  %v3162 = vunpack.c.l.b16 %v725
  %v3163 = vunpack.c.h.b16 %v725
  %v3164 = vunpack.c.l.b16 %v726
  %v3165 = vunpack.c.h.b16 %v726
  %v3166 = vunpack.c.l.b16 %v727
  %v3167 = vunpack.c.h.b16 %v727
  %v3168 = vunpack.c.l.b16 %v728
  %v3169 = vunpack.c.h.b16 %v728
  %v3170 = vunpack.c.l.b16 %v729
  %v3171 = vunpack.c.h.b16 %v729
  %v3172 = vunpack.c.l.b16 %v730
  %v3173 = vunpack.c.h.b16 %v730
  %v3174 = vunpack.c.l.b16 %v731
  %v3175 = vunpack.c.h.b16 %v731
  %v3176 = vunpack.c.l.b16 %v732
  %v3177 = vunpack.c.h.b16 %v732
  %v3178 = vunpack.c.l.b16 %v733
  %v3179 = vunpack.c.h.b16 %v733
  %v3180 = vunpack.c.l.b16 %v734
  %v3181 = vunpack.c.h.b16 %v734
  %v3182 = vunpack.c.l.b16 %v735
  %v3183 = vunpack.c.h.b16 %v735
  %v3184 = vunpack.c.l.b16 %v736
  %v3185 = vunpack.c.h.b16 %v736
  %v3186 = vunpack.c.l.b16 %v737
  %v3187 = vunpack.c.h.b16 %v737
  %v3188 = vunpack.c.l.b16 %v738
  %v3189 = vunpack.c.h.b16 %v738
  %v3190 = vunpack.c.l.b16 %v739
  %v3191 = vunpack.c.h.b16 %v739
  %v3192 = vunpack.c.l.b16 %v740
  %v3193 = vunpack.c.h.b16 %v740
  %v3194 = vunpack.c.l.b16 %v741
  %v3195 = vunpack.c.h.b16 %v741
  %v3196 = vunpack.c.l.b16 %v742
  %v3197 = vunpack.c.h.b16 %v742
  %v3198 = vunpack.c.l.b16 %v743
  %v3199 = vunpack.c.h.b16 %v743
  %v3200 = vunpack.c.l.b16 %v744
  %v3201 = vunpack.c.h.b16 %v744
  %v3202 = vunpack.c.l.b16 %v745
  %v3203 = vunpack.c.h.b16 %v745
  %v3204 = vunpack.c.l.b16 %v746
  %v3205 = vunpack.c.h.b16 %v746
  %v3206 = vunpack.c.l.b16 %v747
  %v3207 = vunpack.c.h.b16 %v747
  %v3208 = vunpack.c.l.b16 %v748
  %v3209 = vunpack.c.h.b16 %v748
  %v3210 = vunpack.c.l.b16 %v749
  %v3211 = vunpack.c.h.b16 %v749
  %v3212 = vunpack.c.l.b16 %v750
  %v3213 = vunpack.c.h.b16 %v750
  %v3214 = vunpack.c.l.b16 %v751
  %v3215 = vunpack.c.h.b16 %v751
  %v3216 = vunpack.c.l.b16 %v752
  %v3217 = vunpack.c.h.b16 %v752
  %v3218 = vunpack.c.l.b16 %v753
  %v3219 = vunpack.c.h.b16 %v753
  %v3220 = vunpack.c.l.b16 %v754
  %v3221 = vunpack.c.h.b16 %v754
  %v3222 = vunpack.c.l.b16 %v755
  %v3223 = vunpack.c.h.b16 %v755
  %v3224 = vunpack.c.l.b16 %v756
  %v3225 = vunpack.c.h.b16 %v756
  %v3226 = vunpack.c.l.b16 %v757
  %v3227 = vunpack.c.h.b16 %v757
  %v3228 = vunpack.c.l.b16 %v758
  %v3229 = vunpack.c.h.b16 %v758
  %v3230 = vunpack.c.l.b16 %v759
  %v3231 = vunpack.c.h.b16 %v759
  %v3232 = vunpack.c.l.b16 %v760
  %v3233 = vunpack.c.h.b16 %v760
  %v3234 = vunpack.c.l.b16 %v761
  %v3235 = vunpack.c.h.b16 %v761
  %v3236 = vunpack.c.l.b16 %v762
  %v3237 = vunpack.c.h.b16 %v762
  %v3238 = vunpack.c.l.b16 %v763
  %v3239 = vunpack.c.h.b16 %v763
  %v3240 = vunpack.c.l.b16 %v764
  %v3241 = vunpack.c.h.b16 %v764
  %v3242 = vunpack.c.l.b16 %v765
  %v3243 = vunpack.c.h.b16 %v765
  %v3244 = vunpack.c.l.b16 %v766
  %v3245 = vunpack.c.h.b16 %v766
  %v3246 = vunpack.c.l.b16 %v767
  %v3247 = vunpack.c.h.b16 %v767
  %v3248 = vunpack.c.l.b16 %v768
  %v3249 = vunpack.c.h.b16 %v768
  %v3250 = vunpack.c.l.b16 %v769
  %v3251 = vunpack.c.h.b16 %v769
  %v3252 = vunpack.c.l.b16 %v770
  %v3253 = vunpack.c.h.b16 %v770
  %v3254 = vunpack.c.l.b16 %v771
  %v3255 = vunpack.c.h.b16 %v771
  %v3256 = vunpack.c.l.b16 %v772
  %v3257 = vunpack.c.h.b16 %v772
  %v3258 = vunpack.c.l.b16 %v773
  %v3259 = vunpack.c.h.b16 %v773
  %v3260 = vunpack.c.l.b16 %v774
  %v3261 = vunpack.c.h.b16 %v774
  %v3262 = vunpack.c.l.b16 %v775
  %v3263 = vunpack.c.h.b16 %v775
  %v3264 = vunpack.c.l.b16 %v776
  %v3265 = vunpack.c.h.b16 %v776
  %v3266 = vunpack.c.l.b16 %v777
  %v3267 = vunpack.c.h.b16 %v777
  %v3268 = vunpack.c.l.b16 %v778
  %v3269 = vunpack.c.h.b16 %v778
  %v3270 = vunpack.c.l.b16 %v779
  %v3271 = vunpack.c.h.b16 %v779
  %v3272 = vunpack.c.l.b16 %v780
  %v3273 = vunpack.c.h.b16 %v780
  %v3274 = vunpack.c.l.b16 %v781
  %v3275 = vunpack.c.h.b16 %v781
  %v3276 = vunpack.c.l.b16 %v782
  %v3277 = vunpack.c.h.b16 %v782
  %v3278 = vunpack.c.l.b16 %v783
  %v3279 = vunpack.c.h.b16 %v783
  %v3280 = vunpack.c.l.b16 %v784
  %v3281 = vunpack.c.h.b16 %v784
  %v3282 = vunpack.c.l.b16 %v785
  %v3283 = vunpack.c.h.b16 %v785
  %v3284 = vunpack.c.l.b16 %v786
  %v3285 = vunpack.c.h.b16 %v786
  %v3286 = vunpack.c.l.b16 %v787
  %v3287 = vunpack.c.h.b16 %v787
  %v3288 = vunpack.c.l.b16 %v788
  %v3289 = vunpack.c.h.b16 %v788
  %v3290 = vunpack.c.l.b16 %v789
  %v3291 = vunpack.c.h.b16 %v789
  %v3292 = vunpack.c.l.b16 %v790
  %v3293 = vunpack.c.h.b16 %v790
  %v3294 = vunpack.c.l.b16 %v791
  %v3295 = vunpack.c.h.b16 %v791
  %v3296 = vunpack.c.l.b16 %v792
  %v3297 = vunpack.c.h.b16 %v792
  %v3298 = vunpack.c.l.b16 %v793
  %v3299 = vunpack.c.h.b16 %v793
  %v3300 = vunpack.c.l.b16 %v794
  %v3301 = vunpack.c.h.b16 %v794
  %v3302 = vunpack.c.l.b16 %v795
  %v3303 = vunpack.c.h.b16 %v795
  %v3304 = vunpack.c.l.b16 %v796
  %v3305 = vunpack.c.h.b16 %v796
  %v3306 = vunpack.c.l.b16 %v797
  %v3307 = vunpack.c.h.b16 %v797
  %v3308 = vunpack.c.l.b16 %v798
  %v3309 = vunpack.c.h.b16 %v798
  %v3310 = vunpack.c.l.b16 %v799
  %v3311 = vunpack.c.h.b16 %v799
  %v3312 = vunpack.c.l.b16 %v800
  %v3313 = vunpack.c.h.b16 %v800
  %v3314 = vunpack.c.l.b16 %v801
  %v3315 = vunpack.c.h.b16 %v801
  %v3316 = vunpack.c.l.b16 %v802
  %v3317 = vunpack.c.h.b16 %v802
  %v3318 = vunpack.c.l.b16 %v803
  %v3319 = vunpack.c.h.b16 %v803
  %v3320 = vunpack.c.l.b16 %v804
  %v3321 = vunpack.c.h.b16 %v804
  %v3322 = vunpack.c.l.b16 %v805
  %v3323 = vunpack.c.h.b16 %v805
  %v3324 = vunpack.c.l.b16 %v806
  %v3325 = vunpack.c.h.b16 %v806
  %v3326 = vunpack.c.l.b16 %v807
  %v3327 = vunpack.c.h.b16 %v807
  %v3328 = vunpack.c.l.b16 %v808
  %v3329 = vunpack.c.h.b16 %v808
  %v3330 = vunpack.c.l.b16 %v809
  %v3331 = vunpack.c.h.b16 %v809
  %v3332 = vunpack.c.l.b16 %v810
  %v3333 = vunpack.c.h.b16 %v810
  %v3334 = vunpack.c.l.b16 %v811
  %v3335 = vunpack.c.h.b16 %v811
  %v3336 = vunpack.c.l.b16 %v812
  %v3337 = vunpack.c.h.b16 %v812
  %v3338 = vunpack.c.l.b16 %v813
  %v3339 = vunpack.c.h.b16 %v813
  %v3340 = vunpack.c.l.b16 %v814
  %v3341 = vunpack.c.h.b16 %v814
  %v3342 = vunpack.c.l.b16 %v815
  %v3343 = vunpack.c.h.b16 %v815
  %v3344 = vunpack.c.l.b16 %v816
  %v3345 = vunpack.c.h.b16 %v816
  %v3346 = vunpack.c.l.b16 %v817
  %v3347 = vunpack.c.h.b16 %v817
  %v3348 = vunpack.c.l.b16 %v818
  %v3349 = vunpack.c.h.b16 %v818
  %v3350 = vunpack.c.l.b16 %v819
  %v3351 = vunpack.c.h.b16 %v819
  %v3352 = vunpack.c.l.b16 %v820
  %v3353 = vunpack.c.h.b16 %v820
  %v3354 = vunpack.c.l.b16 %v821
  %v3355 = vunpack.c.h.b16 %v821
  %v3356 = vunpack.c.l.b16 %v822
  %v3357 = vunpack.c.h.b16 %v822
  %v3358 = vunpack.c.l.b16 %v823
  %v3359 = vunpack.c.h.b16 %v823
  %v3360 = vpack.c.b16 %v1794, %v1792
  %v3361 = vpack.c.b16 %v1795, %v1793
  %v3362 = vpack.c.b16 %v1798, %v1796
  %v3363 = vpack.c.b16 %v1799, %v1797
  %v3364 = vpack.c.b16 %v1802, %v1800
  %v3365 = vpack.c.b16 %v1803, %v1801
  %v3366 = vpack.c.b16 %v1806, %v1804
  %v3367 = vpack.c.b16 %v1807, %v1805
  %v3368 = vpack.c.b16 %v1810, %v1808
  %v3369 = vpack.c.b16 %v1811, %v1809
  %v3370 = vpack.c.b16 %v1814, %v1812
  %v3371 = vpack.c.b16 %v1815, %v1813
  %v3372 = vpack.c.b16 %v1818, %v1816
  %v3373 = vpack.c.b16 %v1819, %v1817
  %v3374 = vpack.c.b16 %v1822, %v1820
  %v3375 = vpack.c.b16 %v1823, %v1821
  %v3376 = vpack.c.b16 %v1826, %v1824
  %v3377 = vpack.c.b16 %v1827, %v1825
  %v3378 = vpack.c.b16 %v1830, %v1828
  %v3379 = vpack.c.b16 %v1831, %v1829
  %v3380 = vpack.c.b16 %v1834, %v1832
  %v3381 = vpack.c.b16 %v1835, %v1833
  %v3382 = vpack.c.b16 %v1838, %v1836
  %v3383 = vpack.c.b16 %v1839, %v1837
  %v3384 = vpack.c.b16 %v1842, %v1840
  %v3385 = vpack.c.b16 %v1843, %v1841
  %v3386 = vpack.c.b16 %v1846, %v1844
  %v3387 = vpack.c.b16 %v1847, %v1845
  %v3388 = vpack.c.b16 %v1850, %v1848
  %v3389 = vpack.c.b16 %v1851, %v1849
  %v3390 = vpack.c.b16 %v1854, %v1852
  %v3391 = vpack.c.b16 %v1855, %v1853
  %v3392 = vpack.c.b16 %v1858, %v1856
  %v3393 = vpack.c.b16 %v1859, %v1857
  %v3394 = vpack.c.b16 %v1862, %v1860
  %v3395 = vpack.c.b16 %v1863, %v1861
  %v3396 = vpack.c.b16 %v1866, %v1864
  %v3397 = vpack.c.b16 %v1867, %v1865
  %v3398 = vpack.c.b16 %v1870, %v1868
  %v3399 = vpack.c.b16 %v1871, %v1869
  %v3400 = vpack.c.b16 %v1874, %v1872
  %v3401 = vpack.c.b16 %v1875, %v1873
  %v3402 = vpack.c.b16 %v1878, %v1876
  %v3403 = vpack.c.b16 %v1879, %v1877
  %v3404 = vpack.c.b16 %v1882, %v1880
  %v3405 = vpack.c.b16 %v1883, %v1881
  %v3406 = vpack.c.b16 %v1886, %v1884
  %v3407 = vpack.c.b16 %v1887, %v1885
  %v3408 = vpack.c.b16 %v1890, %v1888
  %v3409 = vpack.c.b16 %v1891, %v1889
  %v3410 = vpack.c.b16 %v1894, %v1892
  %v3411 = vpack.c.b16 %v1895, %v1893
  %v3412 = vpack.c.b16 %v1898, %v1896
  %v3413 = vpack.c.b16 %v1899, %v1897
  %v3414 = vpack.c.b16 %v1902, %v1900
  %v3415 = vpack.c.b16 %v1903, %v1901
  %v3416 = vpack.c.b16 %v1906, %v1904
  %v3417 = vpack.c.b16 %v1907, %v1905
  %v3418 = vpack.c.b16 %v1910, %v1908
  %v3419 = vpack.c.b16 %v1911, %v1909
  %v3420 = vpack.c.b16 %v1914, %v1912
  %v3421 = vpack.c.b16 %v1915, %v1913
  %v3422 = vpack.c.b16 %v1918, %v1916
  %v3423 = vpack.c.b16 %v1919, %v1917
  %v3424 = vpack.c.b16 %v1922, %v1920
  %v3425 = vpack.c.b16 %v1923, %v1921
  %v3426 = vpack.c.b16 %v1926, %v1924
  %v3427 = vpack.c.b16 %v1927, %v1925
  %v3428 = vpack.c.b16 %v1930, %v1928
  %v3429 = vpack.c.b16 %v1931, %v1929
  %v3430 = vpack.c.b16 %v1934, %v1932
  %v3431 = vpack.c.b16 %v1935, %v1933
  %v3432 = vpack.c.b16 %v1938, %v1936
  %v3433 = vpack.c.b16 %v1939, %v1937
  %v3434 = vpack.c.b16 %v1942, %v1940
  %v3435 = vpack.c.b16 %v1943, %v1941
  %v3436 = vpack.c.b16 %v1946, %v1944
  %v3437 = vpack.c.b16 %v1947, %v1945
  %v3438 = vpack.c.b16 %v1950, %v1948
  %v3439 = vpack.c.b16 %v1951, %v1949
  %v3440 = vpack.c.b16 %v1954, %v1952
  %v3441 = vpack.c.b16 %v1955, %v1953
  %v3442 = vpack.c.b16 %v1958, %v1956
  %v3443 = vpack.c.b16 %v1959, %v1957
  %v3444 = vpack.c.b16 %v1962, %v1960
  %v3445 = vpack.c.b16 %v1963, %v1961
  %v3446 = vpack.c.b16 %v1966, %v1964
  %v3447 = vpack.c.b16 %v1967, %v1965
  %v3448 = vpack.c.b16 %v1970, %v1968
  %v3449 = vpack.c.b16 %v1971, %v1969
  %v3450 = vpack.c.b16 %v1974, %v1972
  %v3451 = vpack.c.b16 %v1975, %v1973
  %v3452 = vpack.c.b16 %v1978, %v1976
  %v3453 = vpack.c.b16 %v1979, %v1977
  %v3454 = vpack.c.b16 %v1982, %v1980
  %v3455 = vpack.c.b16 %v1983, %v1981
  %v3456 = vpack.c.b16 %v1986, %v1984
  %v3457 = vpack.c.b16 %v1987, %v1985
  %v3458 = vpack.c.b16 %v1990, %v1988
  %v3459 = vpack.c.b16 %v1991, %v1989
  %v3460 = vpack.c.b16 %v1994, %v1992
  %v3461 = vpack.c.b16 %v1995, %v1993
  %v3462 = vpack.c.b16 %v1998, %v1996
  %v3463 = vpack.c.b16 %v1999, %v1997
  %v3464 = vpack.c.b16 %v2002, %v2000
  %v3465 = vpack.c.b16 %v2003, %v2001
  %v3466 = vpack.c.b16 %v2006, %v2004
  %v3467 = vpack.c.b16 %v2007, %v2005
  %v3468 = vpack.c.b16 %v2010, %v2008
  %v3469 = vpack.c.b16 %v2011, %v2009
  %v3470 = vpack.c.b16 %v2014, %v2012
  %v3471 = vpack.c.b16 %v2015, %v2013
  %v3472 = vpack.c.b16 %v2018, %v2016
  %v3473 = vpack.c.b16 %v2019, %v2017
  %v3474 = vpack.c.b16 %v2022, %v2020
  %v3475 = vpack.c.b16 %v2023, %v2021
  %v3476 = vpack.c.b16 %v2026, %v2024
  %v3477 = vpack.c.b16 %v2027, %v2025
  %v3478 = vpack.c.b16 %v2030, %v2028
  %v3479 = vpack.c.b16 %v2031, %v2029
  %v3480 = vpack.c.b16 %v2034, %v2032
  %v3481 = vpack.c.b16 %v2035, %v2033
  %v3482 = vpack.c.b16 %v2038, %v2036
  %v3483 = vpack.c.b16 %v2039, %v2037
  %v3484 = vpack.c.b16 %v2042, %v2040
  %v3485 = vpack.c.b16 %v2043, %v2041
  %v3486 = vpack.c.b16 %v2046, %v2044
  %v3487 = vpack.c.b16 %v2047, %v2045
  %v3488 = vpack.c.b16 %v2050, %v2048
  %v3489 = vpack.c.b16 %v2051, %v2049
  %v3490 = vpack.c.b16 %v2054, %v2052
  %v3491 = vpack.c.b16 %v2055, %v2053
  %v3492 = vpack.c.b16 %v2058, %v2056
  %v3493 = vpack.c.b16 %v2059, %v2057
  %v3494 = vpack.c.b16 %v2062, %v2060
  %v3495 = vpack.c.b16 %v2063, %v2061
  %v3496 = vpack.c.b16 %v2066, %v2064
  %v3497 = vpack.c.b16 %v2067, %v2065
  %v3498 = vpack.c.b16 %v2070, %v2068
  %v3499 = vpack.c.b16 %v2071, %v2069
  %v3500 = vpack.c.b16 %v2074, %v2072
  %v3501 = vpack.c.b16 %v2075, %v2073
  %v3502 = vpack.c.b16 %v2078, %v2076
  %v3503 = vpack.c.b16 %v2079, %v2077
  %v3504 = vpack.c.b16 %v2082, %v2080
  %v3505 = vpack.c.b16 %v2083, %v2081
  %v3506 = vpack.c.b16 %v2086, %v2084
  %v3507 = vpack.c.b16 %v2087, %v2085
  %v3508 = vpack.c.b16 %v2090, %v2088
  %v3509 = vpack.c.b16 %v2091, %v2089
  %v3510 = vpack.c.b16 %v2094, %v2092
  %v3511 = vpack.c.b16 %v2095, %v2093
  %v3512 = vpack.c.b16 %v2098, %v2096
  %v3513 = vpack.c.b16 %v2099, %v2097
  %v3514 = vpack.c.b16 %v2102, %v2100
  %v3515 = vpack.c.b16 %v2103, %v2101
  %v3516 = vpack.c.b16 %v2106, %v2104
  %v3517 = vpack.c.b16 %v2107, %v2105
  %v3518 = vpack.c.b16 %v2110, %v2108
  %v3519 = vpack.c.b16 %v2111, %v2109
  %v3520 = vpack.c.b16 %v2114, %v2112
  %v3521 = vpack.c.b16 %v2115, %v2113
  %v3522 = vpack.c.b16 %v2118, %v2116
  %v3523 = vpack.c.b16 %v2119, %v2117
  %v3524 = vpack.c.b16 %v2122, %v2120
  %v3525 = vpack.c.b16 %v2123, %v2121
  %v3526 = vpack.c.b16 %v2126, %v2124
  %v3527 = vpack.c.b16 %v2127, %v2125
  %v3528 = vpack.c.b16 %v2130, %v2128
  %v3529 = vpack.c.b16 %v2131, %v2129
  %v3530 = vpack.c.b16 %v2134, %v2132
  %v3531 = vpack.c.b16 %v2135, %v2133
  %v3532 = vpack.c.b16 %v2138, %v2136
  %v3533 = vpack.c.b16 %v2139, %v2137
  %v3534 = vpack.c.b16 %v2142, %v2140
  %v3535 = vpack.c.b16 %v2143, %v2141
  %v3536 = vpack.c.b16 %v2146, %v2144
  %v3537 = vpack.c.b16 %v2147, %v2145
  %v3538 = vpack.c.b16 %v2150, %v2148
  %v3539 = vpack.c.b16 %v2151, %v2149
  %v3540 = vpack.c.b16 %v2154, %v2152
  %v3541 = vpack.c.b16 %v2155, %v2153
  %v3542 = vpack.c.b16 %v2158, %v2156
  %v3543 = vpack.c.b16 %v2159, %v2157
  %v3544 = vpack.c.b16 %v2162, %v2160
  %v3545 = vpack.c.b16 %v2163, %v2161
  %v3546 = vpack.c.b16 %v2166, %v2164
  %v3547 = vpack.c.b16 %v2167, %v2165
  %v3548 = vpack.c.b16 %v2170, %v2168
  %v3549 = vpack.c.b16 %v2171, %v2169
  %v3550 = vpack.c.b16 %v2174, %v2172
  %v3551 = vpack.c.b16 %v2175, %v2173
  %v3552 = vpack.c.b16 %v2178, %v2176
  %v3553 = vpack.c.b16 %v2179, %v2177
  %v3554 = vpack.c.b16 %v2182, %v2180
  %v3555 = vpack.c.b16 %v2183, %v2181
  %v3556 = vpack.c.b16 %v2186, %v2184
  %v3557 = vpack.c.b16 %v2187, %v2185
  %v3558 = vpack.c.b16 %v2190, %v2188
  %v3559 = vpack.c.b16 %v2191, %v2189
  %v3560 = vpack.c.b16 %v2194, %v2192
  %v3561 = vpack.c.b16 %v2195, %v2193
  %v3562 = vpack.c.b16 %v2198, %v2196
  %v3563 = vpack.c.b16 %v2199, %v2197
  %v3564 = vpack.c.b16 %v2202, %v2200
  %v3565 = vpack.c.b16 %v2203, %v2201
  %v3566 = vpack.c.b16 %v2206, %v2204
  %v3567 = vpack.c.b16 %v2207, %v2205
  %v3568 = vpack.c.b16 %v2210, %v2208
  %v3569 = vpack.c.b16 %v2211, %v2209
  %v3570 = vpack.c.b16 %v2214, %v2212
  %v3571 = vpack.c.b16 %v2215, %v2213
  %v3572 = vpack.c.b16 %v2218, %v2216
  %v3573 = vpack.c.b16 %v2219, %v2217
  %v3574 = vpack.c.b16 %v2222, %v2220
  %v3575 = vpack.c.b16 %v2223, %v2221
  %v3576 = vpack.c.b16 %v2226, %v2224
  %v3577 = vpack.c.b16 %v2227, %v2225
  %v3578 = vpack.c.b16 %v2230, %v2228
  %v3579 = vpack.c.b16 %v2231, %v2229
  %v3580 = vpack.c.b16 %v2234, %v2232
  %v3581 = vpack.c.b16 %v2235, %v2233
  %v3582 = vpack.c.b16 %v2238, %v2236
  %v3583 = vpack.c.b16 %v2239, %v2237
  %v3584 = vpack.c.b16 %v2242, %v2240
  %v3585 = vpack.c.b16 %v2243, %v2241
  %v3586 = vpack.c.b16 %v2246, %v2244
  %v3587 = vpack.c.b16 %v2247, %v2245
  %v3588 = vpack.c.b16 %v2250, %v2248
  %v3589 = vpack.c.b16 %v2251, %v2249
  %v3590 = vpack.c.b16 %v2254, %v2252
  %v3591 = vpack.c.b16 %v2255, %v2253
  %v3592 = vpack.c.b16 %v2258, %v2256
  %v3593 = vpack.c.b16 %v2259, %v2257
  %v3594 = vpack.c.b16 %v2262, %v2260
  %v3595 = vpack.c.b16 %v2263, %v2261
  %v3596 = vpack.c.b16 %v2266, %v2264
  %v3597 = vpack.c.b16 %v2267, %v2265
  %v3598 = vpack.c.b16 %v2270, %v2268
  %v3599 = vpack.c.b16 %v2271, %v2269
  %v3600 = vpack.c.b16 %v2274, %v2272
  %v3601 = vpack.c.b16 %v2275, %v2273
  %v3602 = vpack.c.b16 %v2278, %v2276
  %v3603 = vpack.c.b16 %v2279, %v2277
  %v3604 = vpack.c.b16 %v2282, %v2280
  %v3605 = vpack.c.b16 %v2283, %v2281
  %v3606 = vpack.c.b16 %v2286, %v2284
  %v3607 = vpack.c.b16 %v2287, %v2285
  %v3608 = vpack.c.b16 %v2290, %v2288
  %v3609 = vpack.c.b16 %v2291, %v2289
  %v3610 = vpack.c.b16 %v2294, %v2292
  %v3611 = vpack.c.b16 %v2295, %v2293
  %v3612 = vpack.c.b16 %v2298, %v2296
  %v3613 = vpack.c.b16 %v2299, %v2297
  %v3614 = vpack.c.b16 %v2302, %v2300
  %v3615 = vpack.c.b16 %v2303, %v2301
  %v3616 = vpack.c.b16 %v2306, %v2304
  %v3617 = vpack.c.b16 %v2307, %v2305
  %v3618 = vpack.c.b16 %v2310, %v2308
  %v3619 = vpack.c.b16 %v2311, %v2309
  %v3620 = vpack.c.b16 %v2314, %v2312
  %v3621 = vpack.c.b16 %v2315, %v2313
  %v3622 = vpack.c.b16 %v2318, %v2316
  %v3623 = vpack.c.b16 %v2319, %v2317
  %v3624 = vpack.c.b16 %v2322, %v2320
  %v3625 = vpack.c.b16 %v2323, %v2321
  %v3626 = vpack.c.b16 %v2326, %v2324
  %v3627 = vpack.c.b16 %v2327, %v2325
  %v3628 = vpack.c.b16 %v2330, %v2328
  %v3629 = vpack.c.b16 %v2331, %v2329
  %v3630 = vpack.c.b16 %v2334, %v2332
  %v3631 = vpack.c.b16 %v2335, %v2333
  %v3632 = vpack.c.b16 %v2338, %v2336
  %v3633 = vpack.c.b16 %v2339, %v2337
  %v3634 = vpack.c.b16 %v2342, %v2340
  %v3635 = vpack.c.b16 %v2343, %v2341
  %v3636 = vpack.c.b16 %v2346, %v2344
  %v3637 = vpack.c.b16 %v2347, %v2345
  %v3638 = vpack.c.b16 %v2350, %v2348
  %v3639 = vpack.c.b16 %v2351, %v2349
  %v3640 = vpack.c.b16 %v2354, %v2352
  %v3641 = vpack.c.b16 %v2355, %v2353
  %v3642 = vpack.c.b16 %v2358, %v2356
  %v3643 = vpack.c.b16 %v2359, %v2357
  %v3644 = vpack.c.b16 %v2362, %v2360
  %v3645 = vpack.c.b16 %v2363, %v2361
  %v3646 = vpack.c.b16 %v2366, %v2364
  %v3647 = vpack.c.b16 %v2367, %v2365
  %v3648 = vpack.c.b16 %v2370, %v2368
  %v3649 = vpack.c.b16 %v2371, %v2369
  %v3650 = vpack.c.b16 %v2374, %v2372
  %v3651 = vpack.c.b16 %v2375, %v2373
  %v3652 = vpack.c.b16 %v2378, %v2376
  %v3653 = vpack.c.b16 %v2379, %v2377
  %v3654 = vpack.c.b16 %v2382, %v2380
  %v3655 = vpack.c.b16 %v2383, %v2381
  %v3656 = vpack.c.b16 %v2386, %v2384
  %v3657 = vpack.c.b16 %v2387, %v2385
  %v3658 = vpack.c.b16 %v2390, %v2388
  %v3659 = vpack.c.b16 %v2391, %v2389
  %v3660 = vpack.c.b16 %v2394, %v2392
  %v3661 = vpack.c.b16 %v2395, %v2393
  %v3662 = vpack.c.b16 %v2398, %v2396
  %v3663 = vpack.c.b16 %v2399, %v2397
  %v3664 = vpack.c.b16 %v2402, %v2400
  %v3665 = vpack.c.b16 %v2403, %v2401
  %v3666 = vpack.c.b16 %v2406, %v2404
  %v3667 = vpack.c.b16 %v2407, %v2405
  %v3668 = vpack.c.b16 %v2410, %v2408
  %v3669 = vpack.c.b16 %v2411, %v2409
  %v3670 = vpack.c.b16 %v2414, %v2412
  %v3671 = vpack.c.b16 %v2415, %v2413
  %v3672 = vpack.c.b16 %v2418, %v2416
  %v3673 = vpack.c.b16 %v2419, %v2417
  %v3674 = vpack.c.b16 %v2422, %v2420
  %v3675 = vpack.c.b16 %v2423, %v2421
  %v3676 = vpack.c.b16 %v2426, %v2424
  %v3677 = vpack.c.b16 %v2427, %v2425
  %v3678 = vpack.c.b16 %v2430, %v2428
  %v3679 = vpack.c.b16 %v2431, %v2429
  %v3680 = vpack.c.b16 %v2434, %v2432
  %v3681 = vpack.c.b16 %v2435, %v2433
  %v3682 = vpack.c.b16 %v2438, %v2436
  %v3683 = vpack.c.b16 %v2439, %v2437
  %v3684 = vpack.c.b16 %v2442, %v2440
  %v3685 = vpack.c.b16 %v2443, %v2441
  %v3686 = vpack.c.b16 %v2446, %v2444
  %v3687 = vpack.c.b16 %v2447, %v2445
  %v3688 = vpack.c.b16 %v2450, %v2448
  %v3689 = vpack.c.b16 %v2451, %v2449
  %v3690 = vpack.c.b16 %v2454, %v2452
  %v3691 = vpack.c.b16 %v2455, %v2453
  %v3692 = vpack.c.b16 %v2458, %v2456
  %v3693 = vpack.c.b16 %v2459, %v2457
  %v3694 = vpack.c.b16 %v2462, %v2460
  %v3695 = vpack.c.b16 %v2463, %v2461
  %v3696 = vpack.c.b16 %v2466, %v2464
  %v3697 = vpack.c.b16 %v2467, %v2465
  %v3698 = vpack.c.b16 %v2470, %v2468
  %v3699 = vpack.c.b16 %v2471, %v2469
  %v3700 = vpack.c.b16 %v2474, %v2472
  %v3701 = vpack.c.b16 %v2475, %v2473
  %v3702 = vpack.c.b16 %v2478, %v2476
  %v3703 = vpack.c.b16 %v2479, %v2477
  %v3704 = vpack.c.b16 %v2482, %v2480
  %v3705 = vpack.c.b16 %v2483, %v2481
  %v3706 = vpack.c.b16 %v2486, %v2484
  %v3707 = vpack.c.b16 %v2487, %v2485
  %v3708 = vpack.c.b16 %v2490, %v2488
  %v3709 = vpack.c.b16 %v2491, %v2489
  %v3710 = vpack.c.b16 %v2494, %v2492
  %v3711 = vpack.c.b16 %v2495, %v2493
  %v3712 = vpack.c.b16 %v2498, %v2496
  %v3713 = vpack.c.b16 %v2499, %v2497
  %v3714 = vpack.c.b16 %v2502, %v2500
  %v3715 = vpack.c.b16 %v2503, %v2501
  %v3716 = vpack.c.b16 %v2506, %v2504
  %v3717 = vpack.c.b16 %v2507, %v2505
  %v3718 = vpack.c.b16 %v2510, %v2508
  %v3719 = vpack.c.b16 %v2511, %v2509
  %v3720 = vpack.c.b16 %v2514, %v2512
  %v3721 = vpack.c.b16 %v2515, %v2513
  %v3722 = vpack.c.b16 %v2518, %v2516
  %v3723 = vpack.c.b16 %v2519, %v2517
  %v3724 = vpack.c.b16 %v2522, %v2520
  %v3725 = vpack.c.b16 %v2523, %v2521
  %v3726 = vpack.c.b16 %v2526, %v2524
  %v3727 = vpack.c.b16 %v2527, %v2525
  %v3728 = vpack.c.b16 %v2530, %v2528
  %v3729 = vpack.c.b16 %v2531, %v2529
  %v3730 = vpack.c.b16 %v2534, %v2532
  %v3731 = vpack.c.b16 %v2535, %v2533
  %v3732 = vpack.c.b16 %v2538, %v2536
  %v3733 = vpack.c.b16 %v2539, %v2537
  %v3734 = vpack.c.b16 %v2542, %v2540
  %v3735 = vpack.c.b16 %v2543, %v2541
  %v3736 = vpack.c.b16 %v2546, %v2544
  %v3737 = vpack.c.b16 %v2547, %v2545
  %v3738 = vpack.c.b16 %v2550, %v2548
  %v3739 = vpack.c.b16 %v2551, %v2549
  %v3740 = vpack.c.b16 %v2554, %v2552
  %v3741 = vpack.c.b16 %v2555, %v2553
  %v3742 = vpack.c.b16 %v2558, %v2556
  %v3743 = vpack.c.b16 %v2559, %v2557
  %v3744 = vpack.c.b16 %v2562, %v2560
  %v3745 = vpack.c.b16 %v2563, %v2561
  %v3746 = vpack.c.b16 %v2566, %v2564
  %v3747 = vpack.c.b16 %v2567, %v2565
  %v3748 = vpack.c.b16 %v2570, %v2568
  %v3749 = vpack.c.b16 %v2571, %v2569
  %v3750 = vpack.c.b16 %v2574, %v2572
  %v3751 = vpack.c.b16 %v2575, %v2573
  %v3752 = vpack.c.b16 %v2578, %v2576
  %v3753 = vpack.c.b16 %v2579, %v2577
  %v3754 = vpack.c.b16 %v2582, %v2580
  %v3755 = vpack.c.b16 %v2583, %v2581
  %v3756 = vpack.c.b16 %v2586, %v2584
  %v3757 = vpack.c.b16 %v2587, %v2585
  %v3758 = vpack.c.b16 %v2590, %v2588
  %v3759 = vpack.c.b16 %v2591, %v2589
  %v3760 = vpack.c.b16 %v2594, %v2592
  %v3761 = vpack.c.b16 %v2595, %v2593
  %v3762 = vpack.c.b16 %v2598, %v2596
  %v3763 = vpack.c.b16 %v2599, %v2597
  %v3764 = vpack.c.b16 %v2602, %v2600
  %v3765 = vpack.c.b16 %v2603, %v2601
  %v3766 = vpack.c.b16 %v2606, %v2604
  %v3767 = vpack.c.b16 %v2607, %v2605
  %v3768 = vpack.c.b16 %v2610, %v2608
  %v3769 = vpack.c.b16 %v2611, %v2609
  %v3770 = vpack.c.b16 %v2614, %v2612
  %v3771 = vpack.c.b16 %v2615, %v2613
  %v3772 = vpack.c.b16 %v2618, %v2616
  %v3773 = vpack.c.b16 %v2619, %v2617
  %v3774 = vpack.c.b16 %v2622, %v2620
  %v3775 = vpack.c.b16 %v2623, %v2621
  %v3776 = vpack.c.b16 %v2626, %v2624
  %v3777 = vpack.c.b16 %v2627, %v2625
  %v3778 = vpack.c.b16 %v2630, %v2628
  %v3779 = vpack.c.b16 %v2631, %v2629
  %v3780 = vpack.c.b16 %v2634, %v2632
  %v3781 = vpack.c.b16 %v2635, %v2633
  %v3782 = vpack.c.b16 %v2638, %v2636
  %v3783 = vpack.c.b16 %v2639, %v2637
  %v3784 = vpack.c.b16 %v2642, %v2640
  %v3785 = vpack.c.b16 %v2643, %v2641
  %v3786 = vpack.c.b16 %v2646, %v2644
  %v3787 = vpack.c.b16 %v2647, %v2645
  %v3788 = vpack.c.b16 %v2650, %v2648
  %v3789 = vpack.c.b16 %v2651, %v2649
  %v3790 = vpack.c.b16 %v2654, %v2652
  %v3791 = vpack.c.b16 %v2655, %v2653
  %v3792 = vpack.c.b16 %v2658, %v2656
  %v3793 = vpack.c.b16 %v2659, %v2657
  %v3794 = vpack.c.b16 %v2662, %v2660
  %v3795 = vpack.c.b16 %v2663, %v2661
  %v3796 = vpack.c.b16 %v2666, %v2664
  %v3797 = vpack.c.b16 %v2667, %v2665
  %v3798 = vpack.c.b16 %v2670, %v2668
  %v3799 = vpack.c.b16 %v2671, %v2669
  %v3800 = vpack.c.b16 %v2674, %v2672
  %v3801 = vpack.c.b16 %v2675, %v2673
  %v3802 = vpack.c.b16 %v2678, %v2676
  %v3803 = vpack.c.b16 %v2679, %v2677
  %v3804 = vpack.c.b16 %v2682, %v2680
  %v3805 = vpack.c.b16 %v2683, %v2681
  %v3806 = vpack.c.b16 %v2686, %v2684
  %v3807 = vpack.c.b16 %v2687, %v2685
  %v3808 = vpack.c.b16 %v2690, %v2688
  %v3809 = vpack.c.b16 %v2691, %v2689
  %v3810 = vpack.c.b16 %v2694, %v2692
  %v3811 = vpack.c.b16 %v2695, %v2693
  %v3812 = vpack.c.b16 %v2698, %v2696
  %v3813 = vpack.c.b16 %v2699, %v2697
  %v3814 = vpack.c.b16 %v2702, %v2700
  %v3815 = vpack.c.b16 %v2703, %v2701
  %v3816 = vpack.c.b16 %v2706, %v2704
  %v3817 = vpack.c.b16 %v2707, %v2705
  %v3818 = vpack.c.b16 %v2710, %v2708
  %v3819 = vpack.c.b16 %v2711, %v2709
  %v3820 = vpack.c.b16 %v2714, %v2712
  %v3821 = vpack.c.b16 %v2715, %v2713
  %v3822 = vpack.c.b16 %v2718, %v2716
  %v3823 = vpack.c.b16 %v2719, %v2717
  %v3824 = vpack.c.b16 %v2722, %v2720
  %v3825 = vpack.c.b16 %v2723, %v2721
  %v3826 = vpack.c.b16 %v2726, %v2724
  %v3827 = vpack.c.b16 %v2727, %v2725
  %v3828 = vpack.c.b16 %v2730, %v2728
  %v3829 = vpack.c.b16 %v2731, %v2729
  %v3830 = vpack.c.b16 %v2734, %v2732
  %v3831 = vpack.c.b16 %v2735, %v2733
  %v3832 = vpack.c.b16 %v2738, %v2736
  %v3833 = vpack.c.b16 %v2739, %v2737
  %v3834 = vpack.c.b16 %v2742, %v2740
  %v3835 = vpack.c.b16 %v2743, %v2741
  %v3836 = vpack.c.b16 %v2746, %v2744
  %v3837 = vpack.c.b16 %v2747, %v2745
  %v3838 = vpack.c.b16 %v2750, %v2748
  %v3839 = vpack.c.b16 %v2751, %v2749
  %v3840 = vpack.c.b16 %v2754, %v2752
  %v3841 = vpack.c.b16 %v2755, %v2753
  %v3842 = vpack.c.b16 %v2758, %v2756
  %v3843 = vpack.c.b16 %v2759, %v2757
  %v3844 = vpack.c.b16 %v2762, %v2760
  %v3845 = vpack.c.b16 %v2763, %v2761
  %v3846 = vpack.c.b16 %v2766, %v2764
  %v3847 = vpack.c.b16 %v2767, %v2765
  %v3848 = vpack.c.b16 %v2770, %v2768
  %v3849 = vpack.c.b16 %v2771, %v2769
  %v3850 = vpack.c.b16 %v2774, %v2772
  %v3851 = vpack.c.b16 %v2775, %v2773
  %v3852 = vpack.c.b16 %v2778, %v2776
  %v3853 = vpack.c.b16 %v2779, %v2777
  %v3854 = vpack.c.b16 %v2782, %v2780
  %v3855 = vpack.c.b16 %v2783, %v2781
  %v3856 = vpack.c.b16 %v2786, %v2784
  %v3857 = vpack.c.b16 %v2787, %v2785
  %v3858 = vpack.c.b16 %v2790, %v2788
  %v3859 = vpack.c.b16 %v2791, %v2789
  %v3860 = vpack.c.b16 %v2794, %v2792
  %v3861 = vpack.c.b16 %v2795, %v2793
  %v3862 = vpack.c.b16 %v2798, %v2796
  %v3863 = vpack.c.b16 %v2799, %v2797
  %v3864 = vpack.c.b16 %v2802, %v2800
  %v3865 = vpack.c.b16 %v2803, %v2801
  %v3866 = vpack.c.b16 %v2806, %v2804
  %v3867 = vpack.c.b16 %v2807, %v2805
  %v3868 = vpack.c.b16 %v2810, %v2808
  %v3869 = vpack.c.b16 %v2811, %v2809
  %v3870 = vpack.c.b16 %v2814, %v2812
  %v3871 = vpack.c.b16 %v2815, %v2813
  %v3872 = vpack.c.b16 %v2818, %v2816
  %v3873 = vpack.c.b16 %v2819, %v2817
  %v3874 = vpack.c.b16 %v2822, %v2820
  %v3875 = vpack.c.b16 %v2823, %v2821
  %v3876 = vpack.c.b16 %v2826, %v2824
  %v3877 = vpack.c.b16 %v2827, %v2825
  %v3878 = vpack.c.b16 %v2830, %v2828
  %v3879 = vpack.c.b16 %v2831, %v2829
  %v3880 = vpack.c.b16 %v2834, %v2832
  %v3881 = vpack.c.b16 %v2835, %v2833
  %v3882 = vpack.c.b16 %v2838, %v2836
  %v3883 = vpack.c.b16 %v2839, %v2837
  %v3884 = vpack.c.b16 %v2842, %v2840
  %v3885 = vpack.c.b16 %v2843, %v2841
  %v3886 = vpack.c.b16 %v2846, %v2844
  %v3887 = vpack.c.b16 %v2847, %v2845
  %v3888 = vpack.c.b16 %v2850, %v2848
  %v3889 = vpack.c.b16 %v2851, %v2849
  %v3890 = vpack.c.b16 %v2854, %v2852
  %v3891 = vpack.c.b16 %v2855, %v2853
  %v3892 = vpack.c.b16 %v2858, %v2856
  %v3893 = vpack.c.b16 %v2859, %v2857
  %v3894 = vpack.c.b16 %v2862, %v2860
  %v3895 = vpack.c.b16 %v2863, %v2861
  %v3896 = vpack.c.b16 %v2866, %v2864
  %v3897 = vpack.c.b16 %v2867, %v2865
  %v3898 = vpack.c.b16 %v2870, %v2868
  %v3899 = vpack.c.b16 %v2871, %v2869
  %v3900 = vpack.c.b16 %v2874, %v2872
  %v3901 = vpack.c.b16 %v2875, %v2873
  %v3902 = vpack.c.b16 %v2878, %v2876
  %v3903 = vpack.c.b16 %v2879, %v2877
  %v3904 = vpack.c.b16 %v2882, %v2880
  %v3905 = vpack.c.b16 %v2883, %v2881
  %v3906 = vpack.c.b16 %v2886, %v2884
  %v3907 = vpack.c.b16 %v2887, %v2885
  %v3908 = vpack.c.b16 %v2890, %v2888
  %v3909 = vpack.c.b16 %v2891, %v2889
  %v3910 = vpack.c.b16 %v2894, %v2892
  %v3911 = vpack.c.b16 %v2895, %v2893
  %v3912 = vpack.c.b16 %v2898, %v2896
  %v3913 = vpack.c.b16 %v2899, %v2897
  %v3914 = vpack.c.b16 %v2902, %v2900
  %v3915 = vpack.c.b16 %v2903, %v2901
  %v3916 = vpack.c.b16 %v2906, %v2904
  %v3917 = vpack.c.b16 %v2907, %v2905
  %v3918 = vpack.c.b16 %v2910, %v2908
  %v3919 = vpack.c.b16 %v2911, %v2909
  %v3920 = vpack.c.b16 %v2914, %v2912
  %v3921 = vpack.c.b16 %v2915, %v2913
  %v3922 = vpack.c.b16 %v2918, %v2916
  %v3923 = vpack.c.b16 %v2919, %v2917
  %v3924 = vpack.c.b16 %v2922, %v2920
  %v3925 = vpack.c.b16 %v2923, %v2921
  %v3926 = vpack.c.b16 %v2926, %v2924
  %v3927 = vpack.c.b16 %v2927, %v2925
  %v3928 = vpack.c.b16 %v2930, %v2928
  %v3929 = vpack.c.b16 %v2931, %v2929
  %v3930 = vpack.c.b16 %v2934, %v2932
  %v3931 = vpack.c.b16 %v2935, %v2933
  %v3932 = vpack.c.b16 %v2938, %v2936
  %v3933 = vpack.c.b16 %v2939, %v2937
  %v3934 = vpack.c.b16 %v2942, %v2940
  %v3935 = vpack.c.b16 %v2943, %v2941
  %v3936 = vpack.c.b16 %v2946, %v2944
  %v3937 = vpack.c.b16 %v2947, %v2945
  %v3938 = vpack.c.b16 %v2950, %v2948
  %v3939 = vpack.c.b16 %v2951, %v2949
  %v3940 = vpack.c.b16 %v2954, %v2952
  %v3941 = vpack.c.b16 %v2955, %v2953
  %v3942 = vpack.c.b16 %v2958, %v2956
  %v3943 = vpack.c.b16 %v2959, %v2957
  %v3944 = vpack.c.b16 %v2962, %v2960
  %v3945 = vpack.c.b16 %v2963, %v2961
  %v3946 = vpack.c.b16 %v2966, %v2964
  %v3947 = vpack.c.b16 %v2967, %v2965
  %v3948 = vpack.c.b16 %v2970, %v2968
  %v3949 = vpack.c.b16 %v2971, %v2969
  %v3950 = vpack.c.b16 %v2974, %v2972
  %v3951 = vpack.c.b16 %v2975, %v2973
  %v3952 = vpack.c.b16 %v2978, %v2976
  %v3953 = vpack.c.b16 %v2979, %v2977
  %v3954 = vpack.c.b16 %v2982, %v2980
  %v3955 = vpack.c.b16 %v2983, %v2981
  %v3956 = vpack.c.b16 %v2986, %v2984
  %v3957 = vpack.c.b16 %v2987, %v2985
  %v3958 = vpack.c.b16 %v2990, %v2988
  %v3959 = vpack.c.b16 %v2991, %v2989
  %v3960 = vpack.c.b16 %v2994, %v2992
  %v3961 = vpack.c.b16 %v2995, %v2993
  %v3962 = vpack.c.b16 %v2998, %v2996
  %v3963 = vpack.c.b16 %v2999, %v2997
  %v3964 = vpack.c.b16 %v3002, %v3000
  %v3965 = vpack.c.b16 %v3003, %v3001
  %v3966 = vpack.c.b16 %v3006, %v3004
  %v3967 = vpack.c.b16 %v3007, %v3005
  %v3968 = vpack.c.b16 %v3010, %v3008
  %v3969 = vpack.c.b16 %v3011, %v3009
  %v3970 = vpack.c.b16 %v3014, %v3012
  %v3971 = vpack.c.b16 %v3015, %v3013
  %v3972 = vpack.c.b16 %v3018, %v3016
  %v3973 = vpack.c.b16 %v3019, %v3017
  %v3974 = vpack.c.b16 %v3022, %v3020
  %v3975 = vpack.c.b16 %v3023, %v3021
  %v3976 = vpack.c.b16 %v3026, %v3024
  %v3977 = vpack.c.b16 %v3027, %v3025
  %v3978 = vpack.c.b16 %v3030, %v3028
  %v3979 = vpack.c.b16 %v3031, %v3029
  %v3980 = vpack.c.b16 %v3034, %v3032
  %v3981 = vpack.c.b16 %v3035, %v3033
  %v3982 = vpack.c.b16 %v3038, %v3036
  %v3983 = vpack.c.b16 %v3039, %v3037
  %v3984 = vpack.c.b16 %v3042, %v3040
  %v3985 = vpack.c.b16 %v3043, %v3041
  %v3986 = vpack.c.b16 %v3046, %v3044
  %v3987 = vpack.c.b16 %v3047, %v3045
  %v3988 = vpack.c.b16 %v3050, %v3048
  %v3989 = vpack.c.b16 %v3051, %v3049
  %v3990 = vpack.c.b16 %v3054, %v3052
  %v3991 = vpack.c.b16 %v3055, %v3053
  %v3992 = vpack.c.b16 %v3058, %v3056
  %v3993 = vpack.c.b16 %v3059, %v3057
  %v3994 = vpack.c.b16 %v3062, %v3060
  %v3995 = vpack.c.b16 %v3063, %v3061
  %v3996 = vpack.c.b16 %v3066, %v3064
  %v3997 = vpack.c.b16 %v3067, %v3065
  %v3998 = vpack.c.b16 %v3070, %v3068
  %v3999 = vpack.c.b16 %v3071, %v3069
  %v4000 = vpack.c.b16 %v3074, %v3072
  %v4001 = vpack.c.b16 %v3075, %v3073
  %v4002 = vpack.c.b16 %v3078, %v3076
  %v4003 = vpack.c.b16 %v3079, %v3077
  %v4004 = vpack.c.b16 %v3082, %v3080
  %v4005 = vpack.c.b16 %v3083, %v3081
  %v4006 = vpack.c.b16 %v3086, %v3084
  %v4007 = vpack.c.b16 %v3087, %v3085
  %v4008 = vpack.c.b16 %v3090, %v3088
  %v4009 = vpack.c.b16 %v3091, %v3089
  %v4010 = vpack.c.b16 %v3094, %v3092
  %v4011 = vpack.c.b16 %v3095, %v3093
  %v4012 = vpack.c.b16 %v3098, %v3096
  %v4013 = vpack.c.b16 %v3099, %v3097
  %v4014 = vpack.c.b16 %v3102, %v3100
  %v4015 = vpack.c.b16 %v3103, %v3101
  %v4016 = vpack.c.b16 %v3106, %v3104
  %v4017 = vpack.c.b16 %v3107, %v3105
  %v4018 = vpack.c.b16 %v3110, %v3108
  %v4019 = vpack.c.b16 %v3111, %v3109
  %v4020 = vpack.c.b16 %v3114, %v3112
  %v4021 = vpack.c.b16 %v3115, %v3113
  %v4022 = vpack.c.b16 %v3118, %v3116
  %v4023 = vpack.c.b16 %v3119, %v3117
  %v4024 = vpack.c.b16 %v3122, %v3120
  %v4025 = vpack.c.b16 %v3123, %v3121
  %v4026 = vpack.c.b16 %v3126, %v3124
  %v4027 = vpack.c.b16 %v3127, %v3125
  %v4028 = vpack.c.b16 %v3130, %v3128
  %v4029 = vpack.c.b16 %v3131, %v3129
  %v4030 = vpack.c.b16 %v3134, %v3132
  %v4031 = vpack.c.b16 %v3135, %v3133
  %v4032 = vpack.c.b16 %v3138, %v3136
  %v4033 = vpack.c.b16 %v3139, %v3137
  %v4034 = vpack.c.b16 %v3142, %v3140
  %v4035 = vpack.c.b16 %v3143, %v3141
  %v4036 = vpack.c.b16 %v3146, %v3144
  %v4037 = vpack.c.b16 %v3147, %v3145
  %v4038 = vpack.c.b16 %v3150, %v3148
  %v4039 = vpack.c.b16 %v3151, %v3149
  %v4040 = vpack.c.b16 %v3154, %v3152
  %v4041 = vpack.c.b16 %v3155, %v3153
  %v4042 = vpack.c.b16 %v3158, %v3156
  %v4043 = vpack.c.b16 %v3159, %v3157
  %v4044 = vpack.c.b16 %v3162, %v3160
  %v4045 = vpack.c.b16 %v3163, %v3161
  %v4046 = vpack.c.b16 %v3166, %v3164
  %v4047 = vpack.c.b16 %v3167, %v3165
  %v4048 = vpack.c.b16 %v3170, %v3168
  %v4049 = vpack.c.b16 %v3171, %v3169
  %v4050 = vpack.c.b16 %v3174, %v3172
  %v4051 = vpack.c.b16 %v3175, %v3173
  %v4052 = vpack.c.b16 %v3178, %v3176
  %v4053 = vpack.c.b16 %v3179, %v3177
  %v4054 = vpack.c.b16 %v3182, %v3180
  %v4055 = vpack.c.b16 %v3183, %v3181
  %v4056 = vpack.c.b16 %v3186, %v3184
  %v4057 = vpack.c.b16 %v3187, %v3185
  %v4058 = vpack.c.b16 %v3190, %v3188
  %v4059 = vpack.c.b16 %v3191, %v3189
  %v4060 = vpack.c.b16 %v3194, %v3192
  %v4061 = vpack.c.b16 %v3195, %v3193
  %v4062 = vpack.c.b16 %v3198, %v3196
  %v4063 = vpack.c.b16 %v3199, %v3197
  %v4064 = vpack.c.b16 %v3202, %v3200
  %v4065 = vpack.c.b16 %v3203, %v3201
  %v4066 = vpack.c.b16 %v3206, %v3204
  %v4067 = vpack.c.b16 %v3207, %v3205
  %v4068 = vpack.c.b16 %v3210, %v3208
  %v4069 = vpack.c.b16 %v3211, %v3209
  %v4070 = vpack.c.b16 %v3214, %v3212
  %v4071 = vpack.c.b16 %v3215, %v3213
  %v4072 = vpack.c.b16 %v3218, %v3216
  %v4073 = vpack.c.b16 %v3219, %v3217
  %v4074 = vpack.c.b16 %v3222, %v3220
  %v4075 = vpack.c.b16 %v3223, %v3221
  %v4076 = vpack.c.b16 %v3226, %v3224
  %v4077 = vpack.c.b16 %v3227, %v3225
  %v4078 = vpack.c.b16 %v3230, %v3228
  %v4079 = vpack.c.b16 %v3231, %v3229
  %v4080 = vpack.c.b16 %v3234, %v3232
  %v4081 = vpack.c.b16 %v3235, %v3233
  %v4082 = vpack.c.b16 %v3238, %v3236
  %v4083 = vpack.c.b16 %v3239, %v3237
  %v4084 = vpack.c.b16 %v3242, %v3240
  %v4085 = vpack.c.b16 %v3243, %v3241
  %v4086 = vpack.c.b16 %v3246, %v3244
  %v4087 = vpack.c.b16 %v3247, %v3245
  %v4088 = vpack.c.b16 %v3250, %v3248
  %v4089 = vpack.c.b16 %v3251, %v3249
  %v4090 = vpack.c.b16 %v3254, %v3252
  %v4091 = vpack.c.b16 %v3255, %v3253
  %v4092 = vpack.c.b16 %v3258, %v3256
  %v4093 = vpack.c.b16 %v3259, %v3257
  %v4094 = vpack.c.b16 %v3262, %v3260
  %v4095 = vpack.c.b16 %v3263, %v3261
  %v4096 = vpack.c.b16 %v3266, %v3264
  %v4097 = vpack.c.b16 %v3267, %v3265
  %v4098 = vpack.c.b16 %v3270, %v3268
  %v4099 = vpack.c.b16 %v3271, %v3269
  %v4100 = vpack.c.b16 %v3274, %v3272
  %v4101 = vpack.c.b16 %v3275, %v3273
  %v4102 = vpack.c.b16 %v3278, %v3276
  %v4103 = vpack.c.b16 %v3279, %v3277
  %v4104 = vpack.c.b16 %v3282, %v3280
  %v4105 = vpack.c.b16 %v3283, %v3281
  %v4106 = vpack.c.b16 %v3286, %v3284
  %v4107 = vpack.c.b16 %v3287, %v3285
  %v4108 = vpack.c.b16 %v3290, %v3288
  %v4109 = vpack.c.b16 %v3291, %v3289
  %v4110 = vpack.c.b16 %v3294, %v3292
  %v4111 = vpack.c.b16 %v3295, %v3293
  %v4112 = vpack.c.b16 %v3298, %v3296
  %v4113 = vpack.c.b16 %v3299, %v3297
  %v4114 = vpack.c.b16 %v3302, %v3300
  %v4115 = vpack.c.b16 %v3303, %v3301
  %v4116 = vpack.c.b16 %v3306, %v3304
  %v4117 = vpack.c.b16 %v3307, %v3305
  %v4118 = vpack.c.b16 %v3310, %v3308
  %v4119 = vpack.c.b16 %v3311, %v3309
  %v4120 = vpack.c.b16 %v3314, %v3312
  %v4121 = vpack.c.b16 %v3315, %v3313
  %v4122 = vpack.c.b16 %v3318, %v3316
  %v4123 = vpack.c.b16 %v3319, %v3317
  %v4124 = vpack.c.b16 %v3322, %v3320
  %v4125 = vpack.c.b16 %v3323, %v3321
  %v4126 = vpack.c.b16 %v3326, %v3324
  %v4127 = vpack.c.b16 %v3327, %v3325
  %v4128 = vpack.c.b16 %v3330, %v3328
  %v4129 = vpack.c.b16 %v3331, %v3329
  %v4130 = vpack.c.b16 %v3334, %v3332
  %v4131 = vpack.c.b16 %v3335, %v3333
  %v4132 = vpack.c.b16 %v3338, %v3336
  %v4133 = vpack.c.b16 %v3339, %v3337
  %v4134 = vpack.c.b16 %v3342, %v3340
  %v4135 = vpack.c.b16 %v3343, %v3341
  %v4136 = vpack.c.b16 %v3346, %v3344
  %v4137 = vpack.c.b16 %v3347, %v3345
  %v4138 = vpack.c.b16 %v3350, %v3348
  %v4139 = vpack.c.b16 %v3351, %v3349
  %v4140 = vpack.c.b16 %v3354, %v3352
  %v4141 = vpack.c.b16 %v3355, %v3353
  %v4142 = vpack.c.b16 %v3358, %v3356
  %v4143 = vpack.c.b16 %v3359, %v3357
  %4928 = vmatprep.subr.bf16.mxu0 %v3375
  %4929 = vmatpush1.bf16.msra.mxu0 %v3374
  %4930 = vmatprep.subr.bf16.mxu0 %v3373
  %4931 = vmatpush1.bf16.msra.mxu0 %v3372
  %4932 = vmatprep.subr.bf16.mxu0 %v3371
  %4933 = vmatpush1.bf16.msra.mxu0 %v3370
  %4934 = vmatprep.subr.bf16.mxu0 %v3369
  %4935 = vmatpush1.bf16.msra.mxu0 %v3368
  %4936 = vmatprep.subr.bf16.mxu0 %v3367
  %4937 = vmatpush1.bf16.msra.mxu0 %v3366
  %4938 = vmatprep.subr.bf16.mxu0 %v3365
  %4939 = vmatpush1.bf16.msra.mxu0 %v3364
  %4940 = vmatprep.subr.bf16.mxu0 %v3363
  %4941 = vmatpush1.bf16.msra.mxu0 %v3362
  %4942 = vmatprep.subr.bf16.mxu0 %v3361
  %4943 = vmatpush1.bf16.msra.mxu0 %v3360
  %4944 = vmatprep.subr.bf16.mxu0 %v3391
  %4945 = vmatpush2.bf16.msra.mxu0 %v3390
  %4946 = vmatprep.subr.bf16.mxu0 %v3389
  %4947 = vmatpush2.bf16.msra.mxu0 %v3388
  %4948 = vmatprep.subr.bf16.mxu0 %v3387
  %4949 = vmatpush2.bf16.msra.mxu0 %v3386
  %4950 = vmatprep.subr.bf16.mxu0 %v3385
  %4951 = vmatpush2.bf16.msra.mxu0 %v3384
  %4952 = vmatprep.subr.bf16.mxu0 %v3383
  %4953 = vmatpush2.bf16.msra.mxu0 %v3382
  %4954 = vmatprep.subr.bf16.mxu0 %v3381
  %4955 = vmatpush2.bf16.msra.mxu0 %v3380
  %4956 = vmatprep.subr.bf16.mxu0 %v3379
  %4957 = vmatpush2.bf16.msra.mxu0 %v3378
  %4958 = vmatprep.subr.bf16.mxu0 %v3377
  %4959 = vmatpush2.bf16.msra.mxu0 %v3376
  %4960 = vmatprep.mubr.bf16.mxu0 %v911
  %4961 = vmatmul.mubr.bf16.gmra.mxu0 %v910
  %v4962 = vpop.f32.mrf.mxu0
  %v4963 = vadd.f32 %v829, %v4962
  %v4964 = vpop.f32.mrf.mxu0
  %v4965 = vadd.f32 %v833, %v4964
  %v4966 = vpop.f32.mrf.mxu0
  %v4967 = vpop.f32.mrf.mxu0
  %4968 = vdwg.mxu0
  %4969 = vmatprep.subr.bf16.mxu0 %v3407
  %4970 = vmatpush1.bf16.msra.mxu0 %v3406
  %4971 = vmatprep.subr.bf16.mxu0 %v3405
  %4972 = vmatpush1.bf16.msra.mxu0 %v3404
  %4973 = vmatprep.subr.bf16.mxu0 %v3403
  %4974 = vmatpush1.bf16.msra.mxu0 %v3402
  %4975 = vmatprep.subr.bf16.mxu0 %v3401
  %4976 = vmatpush1.bf16.msra.mxu0 %v3400
  %4977 = vmatprep.subr.bf16.mxu0 %v3399
  %4978 = vmatpush1.bf16.msra.mxu0 %v3398
  %4979 = vmatprep.subr.bf16.mxu0 %v3397
  %4980 = vmatpush1.bf16.msra.mxu0 %v3396
  %4981 = vmatprep.subr.bf16.mxu0 %v3395
  %4982 = vmatpush1.bf16.msra.mxu0 %v3394
  %4983 = vmatprep.subr.bf16.mxu0 %v3393
  %4984 = vmatpush1.bf16.msra.mxu0 %v3392
  %4985 = vmatprep.subr.bf16.mxu0 %v3423
  %4986 = vmatpush2.bf16.msra.mxu0 %v3422
  %4987 = vmatprep.subr.bf16.mxu0 %v3421
  %4988 = vmatpush2.bf16.msra.mxu0 %v3420
  %4989 = vmatprep.subr.bf16.mxu0 %v3419
  %4990 = vmatpush2.bf16.msra.mxu0 %v3418
  %4991 = vmatprep.subr.bf16.mxu0 %v3417
  %4992 = vmatpush2.bf16.msra.mxu0 %v3416
  %4993 = vmatprep.subr.bf16.mxu0 %v3415
  %4994 = vmatpush2.bf16.msra.mxu0 %v3414
  %4995 = vmatprep.subr.bf16.mxu0 %v3413
  %4996 = vmatpush2.bf16.msra.mxu0 %v3412
  %4997 = vmatprep.subr.bf16.mxu0 %v3411
  %4998 = vmatpush2.bf16.msra.mxu0 %v3410
  %4999 = vmatprep.subr.bf16.mxu0 %v3409
  %5000 = vmatpush2.bf16.msra.mxu0 %v3408
  %5001 = vmatprep.mubr.bf16.mxu0 %v913
  %5002 = vmatmul.mubr.bf16.gmra.mxu0 %v912
  %v5003 = vpop.f32.mrf.mxu0
  %v5004 = vadd.f32 %v4963, %v5003
  %v5005 = vpop.f32.mrf.mxu0
  %v5006 = vadd.f32 %v4965, %v5005
  %v5007 = vpop.f32.mrf.mxu0
  %v5008 = vpop.f32.mrf.mxu0
  %5009 = vdwg.mxu0
  %5010 = vmatprep.subr.bf16.mxu0 %v3439
  %5011 = vmatpush1.bf16.msra.mxu0 %v3438
  %5012 = vmatprep.subr.bf16.mxu0 %v3437
  %5013 = vmatpush1.bf16.msra.mxu0 %v3436
  %5014 = vmatprep.subr.bf16.mxu0 %v3435
  %5015 = vmatpush1.bf16.msra.mxu0 %v3434
  %5016 = vmatprep.subr.bf16.mxu0 %v3433
  %5017 = vmatpush1.bf16.msra.mxu0 %v3432
  %5018 = vmatprep.subr.bf16.mxu0 %v3431
  %5019 = vmatpush1.bf16.msra.mxu0 %v3430
  %5020 = vmatprep.subr.bf16.mxu0 %v3429
  %5021 = vmatpush1.bf16.msra.mxu0 %v3428
  %5022 = vmatprep.subr.bf16.mxu0 %v3427
  %5023 = vmatpush1.bf16.msra.mxu0 %v3426
  %5024 = vmatprep.subr.bf16.mxu0 %v3425
  %5025 = vmatpush1.bf16.msra.mxu0 %v3424
  %5026 = vmatprep.subr.bf16.mxu0 %v3455
  %5027 = vmatpush2.bf16.msra.mxu0 %v3454
  %5028 = vmatprep.subr.bf16.mxu0 %v3453
  %5029 = vmatpush2.bf16.msra.mxu0 %v3452
  %5030 = vmatprep.subr.bf16.mxu0 %v3451
  %5031 = vmatpush2.bf16.msra.mxu0 %v3450
  %5032 = vmatprep.subr.bf16.mxu0 %v3449
  %5033 = vmatpush2.bf16.msra.mxu0 %v3448
  %5034 = vmatprep.subr.bf16.mxu0 %v3447
  %5035 = vmatpush2.bf16.msra.mxu0 %v3446
  %5036 = vmatprep.subr.bf16.mxu0 %v3445
  %5037 = vmatpush2.bf16.msra.mxu0 %v3444
  %5038 = vmatprep.subr.bf16.mxu0 %v3443
  %5039 = vmatpush2.bf16.msra.mxu0 %v3442
  %5040 = vmatprep.subr.bf16.mxu0 %v3441
  %5041 = vmatpush2.bf16.msra.mxu0 %v3440
  %5042 = vmatprep.mubr.bf16.mxu0 %v915
  %5043 = vmatmul.mubr.bf16.gmra.mxu0 %v914
  %v5044 = vpop.f32.mrf.mxu0
  %v5045 = vadd.f32 %v5004, %v5044
  %v5046 = vpop.f32.mrf.mxu0
  %v5047 = vadd.f32 %v5006, %v5046
  %v5048 = vpop.f32.mrf.mxu0
  %v5049 = vpop.f32.mrf.mxu0
  %5050 = vdwg.mxu0
  %5051 = vmatprep.subr.bf16.mxu0 %v3471
  %5052 = vmatpush1.bf16.msra.mxu0 %v3470
  %5053 = vmatprep.subr.bf16.mxu0 %v3469
  %5054 = vmatpush1.bf16.msra.mxu0 %v3468
  %5055 = vmatprep.subr.bf16.mxu0 %v3467
  %5056 = vmatpush1.bf16.msra.mxu0 %v3466
  %5057 = vmatprep.subr.bf16.mxu0 %v3465
  %5058 = vmatpush1.bf16.msra.mxu0 %v3464
  %5059 = vmatprep.subr.bf16.mxu0 %v3463
  %5060 = vmatpush1.bf16.msra.mxu0 %v3462
  %5061 = vmatprep.subr.bf16.mxu0 %v3461
  %5062 = vmatpush1.bf16.msra.mxu0 %v3460
  %5063 = vmatprep.subr.bf16.mxu0 %v3459
  %5064 = vmatpush1.bf16.msra.mxu0 %v3458
  %5065 = vmatprep.subr.bf16.mxu0 %v3457
  %5066 = vmatpush1.bf16.msra.mxu0 %v3456
  %5067 = vmatprep.subr.bf16.mxu0 %v3487
  %5068 = vmatpush2.bf16.msra.mxu0 %v3486
  %5069 = vmatprep.subr.bf16.mxu0 %v3485
  %5070 = vmatpush2.bf16.msra.mxu0 %v3484
  %5071 = vmatprep.subr.bf16.mxu0 %v3483
  %5072 = vmatpush2.bf16.msra.mxu0 %v3482
  %5073 = vmatprep.subr.bf16.mxu0 %v3481
  %5074 = vmatpush2.bf16.msra.mxu0 %v3480
  %5075 = vmatprep.subr.bf16.mxu0 %v3479
  %5076 = vmatpush2.bf16.msra.mxu0 %v3478
  %5077 = vmatprep.subr.bf16.mxu0 %v3477
  %5078 = vmatpush2.bf16.msra.mxu0 %v3476
  %5079 = vmatprep.subr.bf16.mxu0 %v3475
  %5080 = vmatpush2.bf16.msra.mxu0 %v3474
  %5081 = vmatprep.subr.bf16.mxu0 %v3473
  %5082 = vmatpush2.bf16.msra.mxu0 %v3472
  %5083 = vmatprep.mubr.bf16.mxu0 %v917
  %5084 = vmatmul.mubr.bf16.gmra.mxu0 %v916
  %v5085 = vpop.f32.mrf.mxu0
  %v5086 = vadd.f32 %v5045, %v5085
  %v5087 = vpop.f32.mrf.mxu0
  %v5088 = vadd.f32 %v5047, %v5087
  %v5089 = vpop.f32.mrf.mxu0
  %v5090 = vpop.f32.mrf.mxu0
  %5091 = vdwg.mxu0
  %5092 = vmatprep.subr.bf16.mxu0 %v3503
  %5093 = vmatpush1.bf16.msra.mxu0 %v3502
  %5094 = vmatprep.subr.bf16.mxu0 %v3501
  %5095 = vmatpush1.bf16.msra.mxu0 %v3500
  %5096 = vmatprep.subr.bf16.mxu0 %v3499
  %5097 = vmatpush1.bf16.msra.mxu0 %v3498
  %5098 = vmatprep.subr.bf16.mxu0 %v3497
  %5099 = vmatpush1.bf16.msra.mxu0 %v3496
  %5100 = vmatprep.subr.bf16.mxu0 %v3495
  %5101 = vmatpush1.bf16.msra.mxu0 %v3494
  %5102 = vmatprep.subr.bf16.mxu0 %v3493
  %5103 = vmatpush1.bf16.msra.mxu0 %v3492
  %5104 = vmatprep.subr.bf16.mxu0 %v3491
  %5105 = vmatpush1.bf16.msra.mxu0 %v3490
  %5106 = vmatprep.subr.bf16.mxu0 %v3489
  %5107 = vmatpush1.bf16.msra.mxu0 %v3488
  %5108 = vmatprep.subr.bf16.mxu0 %v3519
  %5109 = vmatpush2.bf16.msra.mxu0 %v3518
  %5110 = vmatprep.subr.bf16.mxu0 %v3517
  %5111 = vmatpush2.bf16.msra.mxu0 %v3516
  %5112 = vmatprep.subr.bf16.mxu0 %v3515
  %5113 = vmatpush2.bf16.msra.mxu0 %v3514
  %5114 = vmatprep.subr.bf16.mxu0 %v3513
  %5115 = vmatpush2.bf16.msra.mxu0 %v3512
  %5116 = vmatprep.subr.bf16.mxu0 %v3511
  %5117 = vmatpush2.bf16.msra.mxu0 %v3510
  %5118 = vmatprep.subr.bf16.mxu0 %v3509
  %5119 = vmatpush2.bf16.msra.mxu0 %v3508
  %5120 = vmatprep.subr.bf16.mxu0 %v3507
  %5121 = vmatpush2.bf16.msra.mxu0 %v3506
  %5122 = vmatprep.subr.bf16.mxu0 %v3505
  %5123 = vmatpush2.bf16.msra.mxu0 %v3504
  %5124 = vmatprep.mubr.bf16.mxu0 %v919
  %5125 = vmatmul.mubr.bf16.gmra.mxu0 %v918
  %v5126 = vpop.f32.mrf.mxu0
  %v5127 = vadd.f32 %v5086, %v5126
  %v5128 = vpop.f32.mrf.mxu0
  %v5129 = vadd.f32 %v5088, %v5128
  %v5130 = vpop.f32.mrf.mxu0
  %v5131 = vpop.f32.mrf.mxu0
  %5132 = vdwg.mxu0
  %5133 = vmatprep.subr.bf16.mxu0 %v3535
  %5134 = vmatpush1.bf16.msra.mxu0 %v3534
  %5135 = vmatprep.subr.bf16.mxu0 %v3533
  %5136 = vmatpush1.bf16.msra.mxu0 %v3532
  %5137 = vmatprep.subr.bf16.mxu0 %v3531
  %5138 = vmatpush1.bf16.msra.mxu0 %v3530
  %5139 = vmatprep.subr.bf16.mxu0 %v3529
  %5140 = vmatpush1.bf16.msra.mxu0 %v3528
  %5141 = vmatprep.subr.bf16.mxu0 %v3527
  %5142 = vmatpush1.bf16.msra.mxu0 %v3526
  %5143 = vmatprep.subr.bf16.mxu0 %v3525
  %5144 = vmatpush1.bf16.msra.mxu0 %v3524
  %5145 = vmatprep.subr.bf16.mxu0 %v3523
  %5146 = vmatpush1.bf16.msra.mxu0 %v3522
  %5147 = vmatprep.subr.bf16.mxu0 %v3521
  %5148 = vmatpush1.bf16.msra.mxu0 %v3520
  %5149 = vmatprep.subr.bf16.mxu0 %v3551
  %5150 = vmatpush2.bf16.msra.mxu0 %v3550
  %5151 = vmatprep.subr.bf16.mxu0 %v3549
  %5152 = vmatpush2.bf16.msra.mxu0 %v3548
  %5153 = vmatprep.subr.bf16.mxu0 %v3547
  %5154 = vmatpush2.bf16.msra.mxu0 %v3546
  %5155 = vmatprep.subr.bf16.mxu0 %v3545
  %5156 = vmatpush2.bf16.msra.mxu0 %v3544
  %5157 = vmatprep.subr.bf16.mxu0 %v3543
  %5158 = vmatpush2.bf16.msra.mxu0 %v3542
  %5159 = vmatprep.subr.bf16.mxu0 %v3541
  %5160 = vmatpush2.bf16.msra.mxu0 %v3540
  %5161 = vmatprep.subr.bf16.mxu0 %v3539
  %5162 = vmatpush2.bf16.msra.mxu0 %v3538
  %5163 = vmatprep.subr.bf16.mxu0 %v3537
  %5164 = vmatpush2.bf16.msra.mxu0 %v3536
  %5165 = vmatprep.mubr.bf16.mxu0 %v921
  %5166 = vmatmul.mubr.bf16.gmra.mxu0 %v920
  %v5167 = vpop.f32.mrf.mxu0
  %v5168 = vadd.f32 %v5127, %v5167
  %v5169 = vpop.f32.mrf.mxu0
  %v5170 = vadd.f32 %v5129, %v5169
  %v5171 = vpop.f32.mrf.mxu0
  %v5172 = vpop.f32.mrf.mxu0
  %5173 = vdwg.mxu0
  %5174 = vmatprep.subr.bf16.mxu0 %v3567
  %5175 = vmatpush1.bf16.msra.mxu0 %v3566
  %5176 = vmatprep.subr.bf16.mxu0 %v3565
  %5177 = vmatpush1.bf16.msra.mxu0 %v3564
  %5178 = vmatprep.subr.bf16.mxu0 %v3563
  %5179 = vmatpush1.bf16.msra.mxu0 %v3562
  %5180 = vmatprep.subr.bf16.mxu0 %v3561
  %5181 = vmatpush1.bf16.msra.mxu0 %v3560
  %5182 = vmatprep.subr.bf16.mxu0 %v3559
  %5183 = vmatpush1.bf16.msra.mxu0 %v3558
  %5184 = vmatprep.subr.bf16.mxu0 %v3557
  %5185 = vmatpush1.bf16.msra.mxu0 %v3556
  %5186 = vmatprep.subr.bf16.mxu0 %v3555
  %5187 = vmatpush1.bf16.msra.mxu0 %v3554
  %5188 = vmatprep.subr.bf16.mxu0 %v3553
  %5189 = vmatpush1.bf16.msra.mxu0 %v3552
  %5190 = vmatprep.subr.bf16.mxu0 %v3583
  %5191 = vmatpush2.bf16.msra.mxu0 %v3582
  %5192 = vmatprep.subr.bf16.mxu0 %v3581
  %5193 = vmatpush2.bf16.msra.mxu0 %v3580
  %5194 = vmatprep.subr.bf16.mxu0 %v3579
  %5195 = vmatpush2.bf16.msra.mxu0 %v3578
  %5196 = vmatprep.subr.bf16.mxu0 %v3577
  %5197 = vmatpush2.bf16.msra.mxu0 %v3576
  %5198 = vmatprep.subr.bf16.mxu0 %v3575
  %5199 = vmatpush2.bf16.msra.mxu0 %v3574
  %5200 = vmatprep.subr.bf16.mxu0 %v3573
  %5201 = vmatpush2.bf16.msra.mxu0 %v3572
  %5202 = vmatprep.subr.bf16.mxu0 %v3571
  %5203 = vmatpush2.bf16.msra.mxu0 %v3570
  %5204 = vmatprep.subr.bf16.mxu0 %v3569
  %5205 = vmatpush2.bf16.msra.mxu0 %v3568
  %5206 = vmatprep.mubr.bf16.mxu0 %v923
  %5207 = vmatmul.mubr.bf16.gmra.mxu0 %v922
  %v5208 = vpop.f32.mrf.mxu0
  %v5209 = vadd.f32 %v5168, %v5208
  %v5210 = vpop.f32.mrf.mxu0
  %v5211 = vadd.f32 %v5170, %v5210
  %v5212 = vpop.f32.mrf.mxu0
  %v5213 = vpop.f32.mrf.mxu0
  %5214 = vdwg.mxu0
  %5215 = vmatprep.subr.bf16.mxu0 %v3599
  %5216 = vmatpush1.bf16.msra.mxu0 %v3598
  %5217 = vmatprep.subr.bf16.mxu0 %v3597
  %5218 = vmatpush1.bf16.msra.mxu0 %v3596
  %5219 = vmatprep.subr.bf16.mxu0 %v3595
  %5220 = vmatpush1.bf16.msra.mxu0 %v3594
  %5221 = vmatprep.subr.bf16.mxu0 %v3593
  %5222 = vmatpush1.bf16.msra.mxu0 %v3592
  %5223 = vmatprep.subr.bf16.mxu0 %v3591
  %5224 = vmatpush1.bf16.msra.mxu0 %v3590
  %5225 = vmatprep.subr.bf16.mxu0 %v3589
  %5226 = vmatpush1.bf16.msra.mxu0 %v3588
  %5227 = vmatprep.subr.bf16.mxu0 %v3587
  %5228 = vmatpush1.bf16.msra.mxu0 %v3586
  %5229 = vmatprep.subr.bf16.mxu0 %v3585
  %5230 = vmatpush1.bf16.msra.mxu0 %v3584
  %5231 = vmatprep.subr.bf16.mxu0 %v3615
  %5232 = vmatpush2.bf16.msra.mxu0 %v3614
  %5233 = vmatprep.subr.bf16.mxu0 %v3613
  %5234 = vmatpush2.bf16.msra.mxu0 %v3612
  %5235 = vmatprep.subr.bf16.mxu0 %v3611
  %5236 = vmatpush2.bf16.msra.mxu0 %v3610
  %5237 = vmatprep.subr.bf16.mxu0 %v3609
  %5238 = vmatpush2.bf16.msra.mxu0 %v3608
  %5239 = vmatprep.subr.bf16.mxu0 %v3607
  %5240 = vmatpush2.bf16.msra.mxu0 %v3606
  %5241 = vmatprep.subr.bf16.mxu0 %v3605
  %5242 = vmatpush2.bf16.msra.mxu0 %v3604
  %5243 = vmatprep.subr.bf16.mxu0 %v3603
  %5244 = vmatpush2.bf16.msra.mxu0 %v3602
  %5245 = vmatprep.subr.bf16.mxu0 %v3601
  %5246 = vmatpush2.bf16.msra.mxu0 %v3600
  %5247 = vmatprep.mubr.bf16.mxu0 %v925
  %5248 = vmatmul.mubr.bf16.gmra.mxu0 %v924
  %v5249 = vpop.f32.mrf.mxu0
  %v5250 = vadd.f32 %v5209, %v5249
  %v5251 = vpop.f32.mrf.mxu0
  %v5252 = vadd.f32 %v5211, %v5251
  %v5253 = vpop.f32.mrf.mxu0
  %v5254 = vpop.f32.mrf.mxu0
  %5255 = vdwg.mxu0
  %5256 = vmatprep.subr.bf16.mxu0 %v3631
  %5257 = vmatpush1.bf16.msra.mxu0 %v3630
  %5258 = vmatprep.subr.bf16.mxu0 %v3629
  %5259 = vmatpush1.bf16.msra.mxu0 %v3628
  %5260 = vmatprep.subr.bf16.mxu0 %v3627
  %5261 = vmatpush1.bf16.msra.mxu0 %v3626
  %5262 = vmatprep.subr.bf16.mxu0 %v3625
  %5263 = vmatpush1.bf16.msra.mxu0 %v3624
  %5264 = vmatprep.subr.bf16.mxu0 %v3623
  %5265 = vmatpush1.bf16.msra.mxu0 %v3622
  %5266 = vmatprep.subr.bf16.mxu0 %v3621
  %5267 = vmatpush1.bf16.msra.mxu0 %v3620
  %5268 = vmatprep.subr.bf16.mxu0 %v3619
  %5269 = vmatpush1.bf16.msra.mxu0 %v3618
  %5270 = vmatprep.subr.bf16.mxu0 %v3617
  %5271 = vmatpush1.bf16.msra.mxu0 %v3616
  %5272 = vmatprep.subr.bf16.mxu0 %v3647
  %5273 = vmatpush2.bf16.msra.mxu0 %v3646
  %5274 = vmatprep.subr.bf16.mxu0 %v3645
  %5275 = vmatpush2.bf16.msra.mxu0 %v3644
  %5276 = vmatprep.subr.bf16.mxu0 %v3643
  %5277 = vmatpush2.bf16.msra.mxu0 %v3642
  %5278 = vmatprep.subr.bf16.mxu0 %v3641
  %5279 = vmatpush2.bf16.msra.mxu0 %v3640
  %5280 = vmatprep.subr.bf16.mxu0 %v3639
  %5281 = vmatpush2.bf16.msra.mxu0 %v3638
  %5282 = vmatprep.subr.bf16.mxu0 %v3637
  %5283 = vmatpush2.bf16.msra.mxu0 %v3636
  %5284 = vmatprep.subr.bf16.mxu0 %v3635
  %5285 = vmatpush2.bf16.msra.mxu0 %v3634
  %5286 = vmatprep.subr.bf16.mxu0 %v3633
  %5287 = vmatpush2.bf16.msra.mxu0 %v3632
  %5288 = vmatprep.mubr.bf16.mxu0 %v927
  %5289 = vmatmul.mubr.bf16.gmra.mxu0 %v926
  %v5290 = vpop.f32.mrf.mxu0
  %v5291 = vadd.f32 %v5250, %v5290
  %v5292 = vpop.f32.mrf.mxu0
  %v5293 = vadd.f32 %v5252, %v5292
  %v5294 = vpop.f32.mrf.mxu0
  %v5295 = vpop.f32.mrf.mxu0
  %5296 = vdwg.mxu0
  %5297 = vmatprep.subr.bf16.mxu0 %v3663
  %5298 = vmatpush1.bf16.msra.mxu0 %v3662
  %5299 = vmatprep.subr.bf16.mxu0 %v3661
  %5300 = vmatpush1.bf16.msra.mxu0 %v3660
  %5301 = vmatprep.subr.bf16.mxu0 %v3659
  %5302 = vmatpush1.bf16.msra.mxu0 %v3658
  %5303 = vmatprep.subr.bf16.mxu0 %v3657
  %5304 = vmatpush1.bf16.msra.mxu0 %v3656
  %5305 = vmatprep.subr.bf16.mxu0 %v3655
  %5306 = vmatpush1.bf16.msra.mxu0 %v3654
  %5307 = vmatprep.subr.bf16.mxu0 %v3653
  %5308 = vmatpush1.bf16.msra.mxu0 %v3652
  %5309 = vmatprep.subr.bf16.mxu0 %v3651
  %5310 = vmatpush1.bf16.msra.mxu0 %v3650
  %5311 = vmatprep.subr.bf16.mxu0 %v3649
  %5312 = vmatpush1.bf16.msra.mxu0 %v3648
  %5313 = vmatprep.subr.bf16.mxu0 %v3679
  %5314 = vmatpush2.bf16.msra.mxu0 %v3678
  %5315 = vmatprep.subr.bf16.mxu0 %v3677
  %5316 = vmatpush2.bf16.msra.mxu0 %v3676
  %5317 = vmatprep.subr.bf16.mxu0 %v3675
  %5318 = vmatpush2.bf16.msra.mxu0 %v3674
  %5319 = vmatprep.subr.bf16.mxu0 %v3673
  %5320 = vmatpush2.bf16.msra.mxu0 %v3672
  %5321 = vmatprep.subr.bf16.mxu0 %v3671
  %5322 = vmatpush2.bf16.msra.mxu0 %v3670
  %5323 = vmatprep.subr.bf16.mxu0 %v3669
  %5324 = vmatpush2.bf16.msra.mxu0 %v3668
  %5325 = vmatprep.subr.bf16.mxu0 %v3667
  %5326 = vmatpush2.bf16.msra.mxu0 %v3666
  %5327 = vmatprep.subr.bf16.mxu0 %v3665
  %5328 = vmatpush2.bf16.msra.mxu0 %v3664
  %5329 = vmatprep.mubr.bf16.mxu0 %v929
  %5330 = vmatmul.mubr.bf16.gmra.mxu0 %v928
  %v5331 = vpop.f32.mrf.mxu0
  %v5332 = vadd.f32 %v5291, %v5331
  %v5333 = vpop.f32.mrf.mxu0
  %v5334 = vadd.f32 %v5293, %v5333
  %v5335 = vpop.f32.mrf.mxu0
  %v5336 = vpop.f32.mrf.mxu0
  %5337 = vdwg.mxu0
  %5338 = vmatprep.subr.bf16.mxu0 %v3695
  %5339 = vmatpush1.bf16.msra.mxu0 %v3694
  %5340 = vmatprep.subr.bf16.mxu0 %v3693
  %5341 = vmatpush1.bf16.msra.mxu0 %v3692
  %5342 = vmatprep.subr.bf16.mxu0 %v3691
  %5343 = vmatpush1.bf16.msra.mxu0 %v3690
  %5344 = vmatprep.subr.bf16.mxu0 %v3689
  %5345 = vmatpush1.bf16.msra.mxu0 %v3688
  %5346 = vmatprep.subr.bf16.mxu0 %v3687
  %5347 = vmatpush1.bf16.msra.mxu0 %v3686
  %5348 = vmatprep.subr.bf16.mxu0 %v3685
  %5349 = vmatpush1.bf16.msra.mxu0 %v3684
  %5350 = vmatprep.subr.bf16.mxu0 %v3683
  %5351 = vmatpush1.bf16.msra.mxu0 %v3682
  %5352 = vmatprep.subr.bf16.mxu0 %v3681
  %5353 = vmatpush1.bf16.msra.mxu0 %v3680
  %5354 = vmatprep.subr.bf16.mxu0 %v3711
  %5355 = vmatpush2.bf16.msra.mxu0 %v3710
  %5356 = vmatprep.subr.bf16.mxu0 %v3709
  %5357 = vmatpush2.bf16.msra.mxu0 %v3708
  %5358 = vmatprep.subr.bf16.mxu0 %v3707
  %5359 = vmatpush2.bf16.msra.mxu0 %v3706
  %5360 = vmatprep.subr.bf16.mxu0 %v3705
  %5361 = vmatpush2.bf16.msra.mxu0 %v3704
  %5362 = vmatprep.subr.bf16.mxu0 %v3703
  %5363 = vmatpush2.bf16.msra.mxu0 %v3702
  %5364 = vmatprep.subr.bf16.mxu0 %v3701
  %5365 = vmatpush2.bf16.msra.mxu0 %v3700
  %5366 = vmatprep.subr.bf16.mxu0 %v3699
  %5367 = vmatpush2.bf16.msra.mxu0 %v3698
  %5368 = vmatprep.subr.bf16.mxu0 %v3697
  %5369 = vmatpush2.bf16.msra.mxu0 %v3696
  %5370 = vmatprep.mubr.bf16.mxu0 %v931
  %5371 = vmatmul.mubr.bf16.gmra.mxu0 %v930
  %v5372 = vpop.f32.mrf.mxu0
  %v5373 = vadd.f32 %v5332, %v5372
  %v5374 = vpop.f32.mrf.mxu0
  %v5375 = vadd.f32 %v5334, %v5374
  %v5376 = vpop.f32.mrf.mxu0
  %v5377 = vpop.f32.mrf.mxu0
  %5378 = vdwg.mxu0
  %5379 = vmatprep.subr.bf16.mxu0 %v3727
  %5380 = vmatpush1.bf16.msra.mxu0 %v3726
  %5381 = vmatprep.subr.bf16.mxu0 %v3725
  %5382 = vmatpush1.bf16.msra.mxu0 %v3724
  %5383 = vmatprep.subr.bf16.mxu0 %v3723
  %5384 = vmatpush1.bf16.msra.mxu0 %v3722
  %5385 = vmatprep.subr.bf16.mxu0 %v3721
  %5386 = vmatpush1.bf16.msra.mxu0 %v3720
  %5387 = vmatprep.subr.bf16.mxu0 %v3719
  %5388 = vmatpush1.bf16.msra.mxu0 %v3718
  %5389 = vmatprep.subr.bf16.mxu0 %v3717
  %5390 = vmatpush1.bf16.msra.mxu0 %v3716
  %5391 = vmatprep.subr.bf16.mxu0 %v3715
  %5392 = vmatpush1.bf16.msra.mxu0 %v3714
  %5393 = vmatprep.subr.bf16.mxu0 %v3713
  %5394 = vmatpush1.bf16.msra.mxu0 %v3712
  %5395 = vmatprep.subr.bf16.mxu0 %v3743
  %5396 = vmatpush2.bf16.msra.mxu0 %v3742
  %5397 = vmatprep.subr.bf16.mxu0 %v3741
  %5398 = vmatpush2.bf16.msra.mxu0 %v3740
  %5399 = vmatprep.subr.bf16.mxu0 %v3739
  %5400 = vmatpush2.bf16.msra.mxu0 %v3738
  %5401 = vmatprep.subr.bf16.mxu0 %v3737
  %5402 = vmatpush2.bf16.msra.mxu0 %v3736
  %5403 = vmatprep.subr.bf16.mxu0 %v3735
  %5404 = vmatpush2.bf16.msra.mxu0 %v3734
  %5405 = vmatprep.subr.bf16.mxu0 %v3733
  %5406 = vmatpush2.bf16.msra.mxu0 %v3732
  %5407 = vmatprep.subr.bf16.mxu0 %v3731
  %5408 = vmatpush2.bf16.msra.mxu0 %v3730
  %5409 = vmatprep.subr.bf16.mxu0 %v3729
  %5410 = vmatpush2.bf16.msra.mxu0 %v3728
  %5411 = vmatprep.mubr.bf16.mxu0 %v933
  %5412 = vmatmul.mubr.bf16.gmra.mxu0 %v932
  %v5413 = vpop.f32.mrf.mxu0
  %v5414 = vadd.f32 %v5373, %v5413
  %v5415 = vpop.f32.mrf.mxu0
  %v5416 = vadd.f32 %v5375, %v5415
  %v5417 = vpop.f32.mrf.mxu0
  %v5418 = vpop.f32.mrf.mxu0
  %5419 = vdwg.mxu0
  %5420 = vmatprep.subr.bf16.mxu0 %v3759
  %5421 = vmatpush1.bf16.msra.mxu0 %v3758
  %5422 = vmatprep.subr.bf16.mxu0 %v3757
  %5423 = vmatpush1.bf16.msra.mxu0 %v3756
  %5424 = vmatprep.subr.bf16.mxu0 %v3755
  %5425 = vmatpush1.bf16.msra.mxu0 %v3754
  %5426 = vmatprep.subr.bf16.mxu0 %v3753
  %5427 = vmatpush1.bf16.msra.mxu0 %v3752
  %5428 = vmatprep.subr.bf16.mxu0 %v3751
  %5429 = vmatpush1.bf16.msra.mxu0 %v3750
  %5430 = vmatprep.subr.bf16.mxu0 %v3749
  %5431 = vmatpush1.bf16.msra.mxu0 %v3748
  %5432 = vmatprep.subr.bf16.mxu0 %v3747
  %5433 = vmatpush1.bf16.msra.mxu0 %v3746
  %5434 = vmatprep.subr.bf16.mxu0 %v3745
  %5435 = vmatpush1.bf16.msra.mxu0 %v3744
  %5436 = vmatprep.subr.bf16.mxu0 %v3775
  %5437 = vmatpush2.bf16.msra.mxu0 %v3774
  %5438 = vmatprep.subr.bf16.mxu0 %v3773
  %5439 = vmatpush2.bf16.msra.mxu0 %v3772
  %5440 = vmatprep.subr.bf16.mxu0 %v3771
  %5441 = vmatpush2.bf16.msra.mxu0 %v3770
  %5442 = vmatprep.subr.bf16.mxu0 %v3769
  %5443 = vmatpush2.bf16.msra.mxu0 %v3768
  %5444 = vmatprep.subr.bf16.mxu0 %v3767
  %5445 = vmatpush2.bf16.msra.mxu0 %v3766
  %5446 = vmatprep.subr.bf16.mxu0 %v3765
  %5447 = vmatpush2.bf16.msra.mxu0 %v3764
  %5448 = vmatprep.subr.bf16.mxu0 %v3763
  %5449 = vmatpush2.bf16.msra.mxu0 %v3762
  %5450 = vmatprep.subr.bf16.mxu0 %v3761
  %5451 = vmatpush2.bf16.msra.mxu0 %v3760
  %5452 = vmatprep.mubr.bf16.mxu0 %v935
  %5453 = vmatmul.mubr.bf16.gmra.mxu0 %v934
  %v5454 = vpop.f32.mrf.mxu0
  %v5455 = vadd.f32 %v5414, %v5454
  %v5456 = vpop.f32.mrf.mxu0
  %v5457 = vadd.f32 %v5416, %v5456
  %v5458 = vpop.f32.mrf.mxu0
  %v5459 = vpop.f32.mrf.mxu0
  %5460 = vdwg.mxu0
  %5461 = vmatprep.subr.bf16.mxu0 %v3791
  %5462 = vmatpush1.bf16.msra.mxu0 %v3790
  %5463 = vmatprep.subr.bf16.mxu0 %v3789
  %5464 = vmatpush1.bf16.msra.mxu0 %v3788
  %5465 = vmatprep.subr.bf16.mxu0 %v3787
  %5466 = vmatpush1.bf16.msra.mxu0 %v3786
  %5467 = vmatprep.subr.bf16.mxu0 %v3785
  %5468 = vmatpush1.bf16.msra.mxu0 %v3784
  %5469 = vmatprep.subr.bf16.mxu0 %v3783
  %5470 = vmatpush1.bf16.msra.mxu0 %v3782
  %5471 = vmatprep.subr.bf16.mxu0 %v3781
  %5472 = vmatpush1.bf16.msra.mxu0 %v3780
  %5473 = vmatprep.subr.bf16.mxu0 %v3779
  %5474 = vmatpush1.bf16.msra.mxu0 %v3778
  %5475 = vmatprep.subr.bf16.mxu0 %v3777
  %5476 = vmatpush1.bf16.msra.mxu0 %v3776
  %5477 = vmatprep.subr.bf16.mxu0 %v3807
  %5478 = vmatpush2.bf16.msra.mxu0 %v3806
  %5479 = vmatprep.subr.bf16.mxu0 %v3805
  %5480 = vmatpush2.bf16.msra.mxu0 %v3804
  %5481 = vmatprep.subr.bf16.mxu0 %v3803
  %5482 = vmatpush2.bf16.msra.mxu0 %v3802
  %5483 = vmatprep.subr.bf16.mxu0 %v3801
  %5484 = vmatpush2.bf16.msra.mxu0 %v3800
  %5485 = vmatprep.subr.bf16.mxu0 %v3799
  %5486 = vmatpush2.bf16.msra.mxu0 %v3798
  %5487 = vmatprep.subr.bf16.mxu0 %v3797
  %5488 = vmatpush2.bf16.msra.mxu0 %v3796
  %5489 = vmatprep.subr.bf16.mxu0 %v3795
  %5490 = vmatpush2.bf16.msra.mxu0 %v3794
  %5491 = vmatprep.subr.bf16.mxu0 %v3793
  %5492 = vmatpush2.bf16.msra.mxu0 %v3792
  %5493 = vmatprep.mubr.bf16.mxu0 %v937
  %5494 = vmatmul.mubr.bf16.gmra.mxu0 %v936
  %v5495 = vpop.f32.mrf.mxu0
  %v5496 = vadd.f32 %v5455, %v5495
  %v5497 = vpop.f32.mrf.mxu0
  %v5498 = vadd.f32 %v5457, %v5497
  %v5499 = vpop.f32.mrf.mxu0
  %v5500 = vpop.f32.mrf.mxu0
  %5501 = vdwg.mxu0
  %5502 = vmatprep.subr.bf16.mxu0 %v3823
  %5503 = vmatpush1.bf16.msra.mxu0 %v3822
  %5504 = vmatprep.subr.bf16.mxu0 %v3821
  %5505 = vmatpush1.bf16.msra.mxu0 %v3820
  %5506 = vmatprep.subr.bf16.mxu0 %v3819
  %5507 = vmatpush1.bf16.msra.mxu0 %v3818
  %5508 = vmatprep.subr.bf16.mxu0 %v3817
  %5509 = vmatpush1.bf16.msra.mxu0 %v3816
  %5510 = vmatprep.subr.bf16.mxu0 %v3815
  %5511 = vmatpush1.bf16.msra.mxu0 %v3814
  %5512 = vmatprep.subr.bf16.mxu0 %v3813
  %5513 = vmatpush1.bf16.msra.mxu0 %v3812
  %5514 = vmatprep.subr.bf16.mxu0 %v3811
  %5515 = vmatpush1.bf16.msra.mxu0 %v3810
  %5516 = vmatprep.subr.bf16.mxu0 %v3809
  %5517 = vmatpush1.bf16.msra.mxu0 %v3808
  %5518 = vmatprep.subr.bf16.mxu0 %v3839
  %5519 = vmatpush2.bf16.msra.mxu0 %v3838
  %5520 = vmatprep.subr.bf16.mxu0 %v3837
  %5521 = vmatpush2.bf16.msra.mxu0 %v3836
  %5522 = vmatprep.subr.bf16.mxu0 %v3835
  %5523 = vmatpush2.bf16.msra.mxu0 %v3834
  %5524 = vmatprep.subr.bf16.mxu0 %v3833
  %5525 = vmatpush2.bf16.msra.mxu0 %v3832
  %5526 = vmatprep.subr.bf16.mxu0 %v3831
  %5527 = vmatpush2.bf16.msra.mxu0 %v3830
  %5528 = vmatprep.subr.bf16.mxu0 %v3829
  %5529 = vmatpush2.bf16.msra.mxu0 %v3828
  %5530 = vmatprep.subr.bf16.mxu0 %v3827
  %5531 = vmatpush2.bf16.msra.mxu0 %v3826
  %5532 = vmatprep.subr.bf16.mxu0 %v3825
  %5533 = vmatpush2.bf16.msra.mxu0 %v3824
  %5534 = vmatprep.mubr.bf16.mxu0 %v939
  %5535 = vmatmul.mubr.bf16.gmra.mxu0 %v938
  %v5536 = vpop.f32.mrf.mxu0
  %v5537 = vadd.f32 %v5496, %v5536
  %v5538 = vpop.f32.mrf.mxu0
  %v5539 = vadd.f32 %v5498, %v5538
  %v5540 = vpop.f32.mrf.mxu0
  %v5541 = vpop.f32.mrf.mxu0
  %5542 = vdwg.mxu0
  %5543 = vmatprep.subr.bf16.mxu0 %v3855
  %5544 = vmatpush1.bf16.msra.mxu0 %v3854
  %5545 = vmatprep.subr.bf16.mxu0 %v3853
  %5546 = vmatpush1.bf16.msra.mxu0 %v3852
  %5547 = vmatprep.subr.bf16.mxu0 %v3851
  %5548 = vmatpush1.bf16.msra.mxu0 %v3850
  %5549 = vmatprep.subr.bf16.mxu0 %v3849
  %5550 = vmatpush1.bf16.msra.mxu0 %v3848
  %5551 = vmatprep.subr.bf16.mxu0 %v3847
  %5552 = vmatpush1.bf16.msra.mxu0 %v3846
  %5553 = vmatprep.subr.bf16.mxu0 %v3845
  %5554 = vmatpush1.bf16.msra.mxu0 %v3844
  %5555 = vmatprep.subr.bf16.mxu0 %v3843
  %5556 = vmatpush1.bf16.msra.mxu0 %v3842
  %5557 = vmatprep.subr.bf16.mxu0 %v3841
  %5558 = vmatpush1.bf16.msra.mxu0 %v3840
  %5559 = vmatprep.subr.bf16.mxu0 %v3871
  %5560 = vmatpush2.bf16.msra.mxu0 %v3870
  %5561 = vmatprep.subr.bf16.mxu0 %v3869
  %5562 = vmatpush2.bf16.msra.mxu0 %v3868
  %5563 = vmatprep.subr.bf16.mxu0 %v3867
  %5564 = vmatpush2.bf16.msra.mxu0 %v3866
  %5565 = vmatprep.subr.bf16.mxu0 %v3865
  %5566 = vmatpush2.bf16.msra.mxu0 %v3864
  %5567 = vmatprep.subr.bf16.mxu0 %v3863
  %5568 = vmatpush2.bf16.msra.mxu0 %v3862
  %5569 = vmatprep.subr.bf16.mxu0 %v3861
  %5570 = vmatpush2.bf16.msra.mxu0 %v3860
  %5571 = vmatprep.subr.bf16.mxu0 %v3859
  %5572 = vmatpush2.bf16.msra.mxu0 %v3858
  %5573 = vmatprep.subr.bf16.mxu0 %v3857
  %5574 = vmatpush2.bf16.msra.mxu0 %v3856
  %5575 = vmatprep.mubr.bf16.mxu0 %v941
  %5576 = vmatmul.mubr.bf16.gmra.mxu0 %v940
  %v5577 = vpop.f32.mrf.mxu0
  %v5578 = vadd.f32 %v5537, %v5577
  %v5579 = vpop.f32.mrf.mxu0
  %v5580 = vadd.f32 %v5539, %v5579
  %v5581 = vpop.f32.mrf.mxu0
  %v5582 = vpop.f32.mrf.mxu0
  %5583 = vdwg.mxu0
  %5584 = vmatprep.subr.bf16.mxu0 %v3887
  %5585 = vmatpush1.bf16.msra.mxu0 %v3886
  %5586 = vmatprep.subr.bf16.mxu0 %v3885
  %5587 = vmatpush1.bf16.msra.mxu0 %v3884
  %5588 = vmatprep.subr.bf16.mxu0 %v3883
  %5589 = vmatpush1.bf16.msra.mxu0 %v3882
  %5590 = vmatprep.subr.bf16.mxu0 %v3881
  %5591 = vmatpush1.bf16.msra.mxu0 %v3880
  %5592 = vmatprep.subr.bf16.mxu0 %v3879
  %5593 = vmatpush1.bf16.msra.mxu0 %v3878
  %5594 = vmatprep.subr.bf16.mxu0 %v3877
  %5595 = vmatpush1.bf16.msra.mxu0 %v3876
  %5596 = vmatprep.subr.bf16.mxu0 %v3875
  %5597 = vmatpush1.bf16.msra.mxu0 %v3874
  %5598 = vmatprep.subr.bf16.mxu0 %v3873
  %5599 = vmatpush1.bf16.msra.mxu0 %v3872
  %5600 = vmatprep.subr.bf16.mxu0 %v3903
  %5601 = vmatpush2.bf16.msra.mxu0 %v3902
  %5602 = vmatprep.subr.bf16.mxu0 %v3901
  %5603 = vmatpush2.bf16.msra.mxu0 %v3900
  %5604 = vmatprep.subr.bf16.mxu0 %v3899
  %5605 = vmatpush2.bf16.msra.mxu0 %v3898
  %5606 = vmatprep.subr.bf16.mxu0 %v3897
  %5607 = vmatpush2.bf16.msra.mxu0 %v3896
  %5608 = vmatprep.subr.bf16.mxu0 %v3895
  %5609 = vmatpush2.bf16.msra.mxu0 %v3894
  %5610 = vmatprep.subr.bf16.mxu0 %v3893
  %5611 = vmatpush2.bf16.msra.mxu0 %v3892
  %5612 = vmatprep.subr.bf16.mxu0 %v3891
  %5613 = vmatpush2.bf16.msra.mxu0 %v3890
  %5614 = vmatprep.subr.bf16.mxu0 %v3889
  %5615 = vmatpush2.bf16.msra.mxu0 %v3888
  %5616 = vmatprep.mubr.bf16.mxu0 %v943
  %5617 = vmatmul.mubr.bf16.gmra.mxu0 %v942
  %v5618 = vpop.f32.mrf.mxu0
  %v5619 = vadd.f32 %v5578, %v5618
  %v5620 = vpop.f32.mrf.mxu0
  %v5621 = vadd.f32 %v5580, %v5620
  %v5622 = vpop.f32.mrf.mxu0
  %v5623 = vpop.f32.mrf.mxu0
  %5624 = vdwg.mxu0
  %5625 = vmatprep.subr.bf16.mxu0 %v3919
  %5626 = vmatpush1.bf16.msra.mxu0 %v3918
  %5627 = vmatprep.subr.bf16.mxu0 %v3917
  %5628 = vmatpush1.bf16.msra.mxu0 %v3916
  %5629 = vmatprep.subr.bf16.mxu0 %v3915
  %5630 = vmatpush1.bf16.msra.mxu0 %v3914
  %5631 = vmatprep.subr.bf16.mxu0 %v3913
  %5632 = vmatpush1.bf16.msra.mxu0 %v3912
  %5633 = vmatprep.subr.bf16.mxu0 %v3911
  %5634 = vmatpush1.bf16.msra.mxu0 %v3910
  %5635 = vmatprep.subr.bf16.mxu0 %v3909
  %5636 = vmatpush1.bf16.msra.mxu0 %v3908
  %5637 = vmatprep.subr.bf16.mxu0 %v3907
  %5638 = vmatpush1.bf16.msra.mxu0 %v3906
  %5639 = vmatprep.subr.bf16.mxu0 %v3905
  %5640 = vmatpush1.bf16.msra.mxu0 %v3904
  %5641 = vmatprep.subr.bf16.mxu0 %v3935
  %5642 = vmatpush2.bf16.msra.mxu0 %v3934
  %5643 = vmatprep.subr.bf16.mxu0 %v3933
  %5644 = vmatpush2.bf16.msra.mxu0 %v3932
  %5645 = vmatprep.subr.bf16.mxu0 %v3931
  %5646 = vmatpush2.bf16.msra.mxu0 %v3930
  %5647 = vmatprep.subr.bf16.mxu0 %v3929
  %5648 = vmatpush2.bf16.msra.mxu0 %v3928
  %5649 = vmatprep.subr.bf16.mxu0 %v3927
  %5650 = vmatpush2.bf16.msra.mxu0 %v3926
  %5651 = vmatprep.subr.bf16.mxu0 %v3925
  %5652 = vmatpush2.bf16.msra.mxu0 %v3924
  %5653 = vmatprep.subr.bf16.mxu0 %v3923
  %5654 = vmatpush2.bf16.msra.mxu0 %v3922
  %5655 = vmatprep.subr.bf16.mxu0 %v3921
  %5656 = vmatpush2.bf16.msra.mxu0 %v3920
  %5657 = vmatprep.mubr.bf16.mxu0 %v945
  %5658 = vmatmul.mubr.bf16.gmra.mxu0 %v944
  %v5659 = vpop.f32.mrf.mxu0
  %v5660 = vadd.f32 %v5619, %v5659
  %v5661 = vpop.f32.mrf.mxu0
  %v5662 = vadd.f32 %v5621, %v5661
  %v5663 = vpop.f32.mrf.mxu0
  %v5664 = vpop.f32.mrf.mxu0
  %5665 = vdwg.mxu0
  %5666 = vmatprep.subr.bf16.mxu0 %v3951
  %5667 = vmatpush1.bf16.msra.mxu0 %v3950
  %5668 = vmatprep.subr.bf16.mxu0 %v3949
  %5669 = vmatpush1.bf16.msra.mxu0 %v3948
  %5670 = vmatprep.subr.bf16.mxu0 %v3947
  %5671 = vmatpush1.bf16.msra.mxu0 %v3946
  %5672 = vmatprep.subr.bf16.mxu0 %v3945
  %5673 = vmatpush1.bf16.msra.mxu0 %v3944
  %5674 = vmatprep.subr.bf16.mxu0 %v3943
  %5675 = vmatpush1.bf16.msra.mxu0 %v3942
  %5676 = vmatprep.subr.bf16.mxu0 %v3941
  %5677 = vmatpush1.bf16.msra.mxu0 %v3940
  %5678 = vmatprep.subr.bf16.mxu0 %v3939
  %5679 = vmatpush1.bf16.msra.mxu0 %v3938
  %5680 = vmatprep.subr.bf16.mxu0 %v3937
  %5681 = vmatpush1.bf16.msra.mxu0 %v3936
  %5682 = vmatprep.subr.bf16.mxu0 %v3967
  %5683 = vmatpush2.bf16.msra.mxu0 %v3966
  %5684 = vmatprep.subr.bf16.mxu0 %v3965
  %5685 = vmatpush2.bf16.msra.mxu0 %v3964
  %5686 = vmatprep.subr.bf16.mxu0 %v3963
  %5687 = vmatpush2.bf16.msra.mxu0 %v3962
  %5688 = vmatprep.subr.bf16.mxu0 %v3961
  %5689 = vmatpush2.bf16.msra.mxu0 %v3960
  %5690 = vmatprep.subr.bf16.mxu0 %v3959
  %5691 = vmatpush2.bf16.msra.mxu0 %v3958
  %5692 = vmatprep.subr.bf16.mxu0 %v3957
  %5693 = vmatpush2.bf16.msra.mxu0 %v3956
  %5694 = vmatprep.subr.bf16.mxu0 %v3955
  %5695 = vmatpush2.bf16.msra.mxu0 %v3954
  %5696 = vmatprep.subr.bf16.mxu0 %v3953
  %5697 = vmatpush2.bf16.msra.mxu0 %v3952
  %5698 = vmatprep.mubr.bf16.mxu0 %v947
  %5699 = vmatmul.mubr.bf16.gmra.mxu0 %v946
  %v5700 = vpop.f32.mrf.mxu0
  %v5701 = vadd.f32 %v5660, %v5700
  %v5702 = vpop.f32.mrf.mxu0
  %v5703 = vadd.f32 %v5662, %v5702
  %v5704 = vpop.f32.mrf.mxu0
  %v5705 = vpop.f32.mrf.mxu0
  %5706 = vdwg.mxu0
  %5707 = vmatprep.subr.bf16.mxu0 %v3983
  %5708 = vmatpush1.bf16.msra.mxu0 %v3982
  %5709 = vmatprep.subr.bf16.mxu0 %v3981
  %5710 = vmatpush1.bf16.msra.mxu0 %v3980
  %5711 = vmatprep.subr.bf16.mxu0 %v3979
  %5712 = vmatpush1.bf16.msra.mxu0 %v3978
  %5713 = vmatprep.subr.bf16.mxu0 %v3977
  %5714 = vmatpush1.bf16.msra.mxu0 %v3976
  %5715 = vmatprep.subr.bf16.mxu0 %v3975
  %5716 = vmatpush1.bf16.msra.mxu0 %v3974
  %5717 = vmatprep.subr.bf16.mxu0 %v3973
  %5718 = vmatpush1.bf16.msra.mxu0 %v3972
  %5719 = vmatprep.subr.bf16.mxu0 %v3971
  %5720 = vmatpush1.bf16.msra.mxu0 %v3970
  %5721 = vmatprep.subr.bf16.mxu0 %v3969
  %5722 = vmatpush1.bf16.msra.mxu0 %v3968
  %5723 = vmatprep.subr.bf16.mxu0 %v3999
  %5724 = vmatpush2.bf16.msra.mxu0 %v3998
  %5725 = vmatprep.subr.bf16.mxu0 %v3997
  %5726 = vmatpush2.bf16.msra.mxu0 %v3996
  %5727 = vmatprep.subr.bf16.mxu0 %v3995
  %5728 = vmatpush2.bf16.msra.mxu0 %v3994
  %5729 = vmatprep.subr.bf16.mxu0 %v3993
  %5730 = vmatpush2.bf16.msra.mxu0 %v3992
  %5731 = vmatprep.subr.bf16.mxu0 %v3991
  %5732 = vmatpush2.bf16.msra.mxu0 %v3990
  %5733 = vmatprep.subr.bf16.mxu0 %v3989
  %5734 = vmatpush2.bf16.msra.mxu0 %v3988
  %5735 = vmatprep.subr.bf16.mxu0 %v3987
  %5736 = vmatpush2.bf16.msra.mxu0 %v3986
  %5737 = vmatprep.subr.bf16.mxu0 %v3985
  %5738 = vmatpush2.bf16.msra.mxu0 %v3984
  %5739 = vmatprep.mubr.bf16.mxu0 %v949
  %5740 = vmatmul.mubr.bf16.gmra.mxu0 %v948
  %v5741 = vpop.f32.mrf.mxu0
  %v5742 = vadd.f32 %v5701, %v5741
  %v5743 = vpop.f32.mrf.mxu0
  %v5744 = vadd.f32 %v5703, %v5743
  %v5745 = vpop.f32.mrf.mxu0
  %v5746 = vpop.f32.mrf.mxu0
  %5747 = vdwg.mxu0
  %5748 = vmatprep.subr.bf16.mxu0 %v4015
  %5749 = vmatpush1.bf16.msra.mxu0 %v4014
  %5750 = vmatprep.subr.bf16.mxu0 %v4013
  %5751 = vmatpush1.bf16.msra.mxu0 %v4012
  %5752 = vmatprep.subr.bf16.mxu0 %v4011
  %5753 = vmatpush1.bf16.msra.mxu0 %v4010
  %5754 = vmatprep.subr.bf16.mxu0 %v4009
  %5755 = vmatpush1.bf16.msra.mxu0 %v4008
  %5756 = vmatprep.subr.bf16.mxu0 %v4007
  %5757 = vmatpush1.bf16.msra.mxu0 %v4006
  %5758 = vmatprep.subr.bf16.mxu0 %v4005
  %5759 = vmatpush1.bf16.msra.mxu0 %v4004
  %5760 = vmatprep.subr.bf16.mxu0 %v4003
  %5761 = vmatpush1.bf16.msra.mxu0 %v4002
  %5762 = vmatprep.subr.bf16.mxu0 %v4001
  %5763 = vmatpush1.bf16.msra.mxu0 %v4000
  %5764 = vmatprep.subr.bf16.mxu0 %v4031
  %5765 = vmatpush2.bf16.msra.mxu0 %v4030
  %5766 = vmatprep.subr.bf16.mxu0 %v4029
  %5767 = vmatpush2.bf16.msra.mxu0 %v4028
  %5768 = vmatprep.subr.bf16.mxu0 %v4027
  %5769 = vmatpush2.bf16.msra.mxu0 %v4026
  %5770 = vmatprep.subr.bf16.mxu0 %v4025
  %5771 = vmatpush2.bf16.msra.mxu0 %v4024
  %5772 = vmatprep.subr.bf16.mxu0 %v4023
  %5773 = vmatpush2.bf16.msra.mxu0 %v4022
  %5774 = vmatprep.subr.bf16.mxu0 %v4021
  %5775 = vmatpush2.bf16.msra.mxu0 %v4020
  %5776 = vmatprep.subr.bf16.mxu0 %v4019
  %5777 = vmatpush2.bf16.msra.mxu0 %v4018
  %5778 = vmatprep.subr.bf16.mxu0 %v4017
  %5779 = vmatpush2.bf16.msra.mxu0 %v4016
  %5780 = vmatprep.mubr.bf16.mxu0 %v951
  %5781 = vmatmul.mubr.bf16.gmra.mxu0 %v950
  %v5782 = vpop.f32.mrf.mxu0
  %v5783 = vadd.f32 %v5742, %v5782
  %v5784 = vpop.f32.mrf.mxu0
  %v5785 = vadd.f32 %v5744, %v5784
  %v5786 = vpop.f32.mrf.mxu0
  %v5787 = vpop.f32.mrf.mxu0
  %5788 = vdwg.mxu0
  %5789 = vmatprep.subr.bf16.mxu0 %v4047
  %5790 = vmatpush1.bf16.msra.mxu0 %v4046
  %5791 = vmatprep.subr.bf16.mxu0 %v4045
  %5792 = vmatpush1.bf16.msra.mxu0 %v4044
  %5793 = vmatprep.subr.bf16.mxu0 %v4043
  %5794 = vmatpush1.bf16.msra.mxu0 %v4042
  %5795 = vmatprep.subr.bf16.mxu0 %v4041
  %5796 = vmatpush1.bf16.msra.mxu0 %v4040
  %5797 = vmatprep.subr.bf16.mxu0 %v4039
  %5798 = vmatpush1.bf16.msra.mxu0 %v4038
  %5799 = vmatprep.subr.bf16.mxu0 %v4037
  %5800 = vmatpush1.bf16.msra.mxu0 %v4036
  %5801 = vmatprep.subr.bf16.mxu0 %v4035
  %5802 = vmatpush1.bf16.msra.mxu0 %v4034
  %5803 = vmatprep.subr.bf16.mxu0 %v4033
  %5804 = vmatpush1.bf16.msra.mxu0 %v4032
  %5805 = vmatprep.subr.bf16.mxu0 %v4063
  %5806 = vmatpush2.bf16.msra.mxu0 %v4062
  %5807 = vmatprep.subr.bf16.mxu0 %v4061
  %5808 = vmatpush2.bf16.msra.mxu0 %v4060
  %5809 = vmatprep.subr.bf16.mxu0 %v4059
  %5810 = vmatpush2.bf16.msra.mxu0 %v4058
  %5811 = vmatprep.subr.bf16.mxu0 %v4057
  %5812 = vmatpush2.bf16.msra.mxu0 %v4056
  %5813 = vmatprep.subr.bf16.mxu0 %v4055
  %5814 = vmatpush2.bf16.msra.mxu0 %v4054
  %5815 = vmatprep.subr.bf16.mxu0 %v4053
  %5816 = vmatpush2.bf16.msra.mxu0 %v4052
  %5817 = vmatprep.subr.bf16.mxu0 %v4051
  %5818 = vmatpush2.bf16.msra.mxu0 %v4050
  %5819 = vmatprep.subr.bf16.mxu0 %v4049
  %5820 = vmatpush2.bf16.msra.mxu0 %v4048
  %5821 = vmatprep.mubr.bf16.mxu0 %v953
  %5822 = vmatmul.mubr.bf16.gmra.mxu0 %v952
  %v5823 = vpop.f32.mrf.mxu0
  %v5824 = vadd.f32 %v5783, %v5823
  %v5825 = vpop.f32.mrf.mxu0
  %v5826 = vadd.f32 %v5785, %v5825
  %v5827 = vpop.f32.mrf.mxu0
  %v5828 = vpop.f32.mrf.mxu0
  %5829 = vdwg.mxu0
  %5830 = vmatprep.subr.bf16.mxu0 %v4079
  %5831 = vmatpush1.bf16.msra.mxu0 %v4078
  %5832 = vmatprep.subr.bf16.mxu0 %v4077
  %5833 = vmatpush1.bf16.msra.mxu0 %v4076
  %5834 = vmatprep.subr.bf16.mxu0 %v4075
  %5835 = vmatpush1.bf16.msra.mxu0 %v4074
  %5836 = vmatprep.subr.bf16.mxu0 %v4073
  %5837 = vmatpush1.bf16.msra.mxu0 %v4072
  %5838 = vmatprep.subr.bf16.mxu0 %v4071
  %5839 = vmatpush1.bf16.msra.mxu0 %v4070
  %5840 = vmatprep.subr.bf16.mxu0 %v4069
  %5841 = vmatpush1.bf16.msra.mxu0 %v4068
  %5842 = vmatprep.subr.bf16.mxu0 %v4067
  %5843 = vmatpush1.bf16.msra.mxu0 %v4066
  %5844 = vmatprep.subr.bf16.mxu0 %v4065
  %5845 = vmatpush1.bf16.msra.mxu0 %v4064
  %5846 = vmatprep.subr.bf16.mxu0 %v4095
  %5847 = vmatpush2.bf16.msra.mxu0 %v4094
  %5848 = vmatprep.subr.bf16.mxu0 %v4093
  %5849 = vmatpush2.bf16.msra.mxu0 %v4092
  %5850 = vmatprep.subr.bf16.mxu0 %v4091
  %5851 = vmatpush2.bf16.msra.mxu0 %v4090
  %5852 = vmatprep.subr.bf16.mxu0 %v4089
  %5853 = vmatpush2.bf16.msra.mxu0 %v4088
  %5854 = vmatprep.subr.bf16.mxu0 %v4087
  %5855 = vmatpush2.bf16.msra.mxu0 %v4086
  %5856 = vmatprep.subr.bf16.mxu0 %v4085
  %5857 = vmatpush2.bf16.msra.mxu0 %v4084
  %5858 = vmatprep.subr.bf16.mxu0 %v4083
  %5859 = vmatpush2.bf16.msra.mxu0 %v4082
  %5860 = vmatprep.subr.bf16.mxu0 %v4081
  %5861 = vmatpush2.bf16.msra.mxu0 %v4080
  %5862 = vmatprep.mubr.bf16.mxu0 %v955
  %5863 = vmatmul.mubr.bf16.gmra.mxu0 %v954
  %v5864 = vpop.f32.mrf.mxu0
  %v5865 = vadd.f32 %v5824, %v5864
  %v5866 = vpop.f32.mrf.mxu0
  %v5867 = vadd.f32 %v5826, %v5866
  %v5868 = vpop.f32.mrf.mxu0
  %v5869 = vpop.f32.mrf.mxu0
  %5870 = vdwg.mxu0
  %5871 = vmatprep.subr.bf16.mxu0 %v4111
  %5872 = vmatpush1.bf16.msra.mxu0 %v4110
  %5873 = vmatprep.subr.bf16.mxu0 %v4109
  %5874 = vmatpush1.bf16.msra.mxu0 %v4108
  %5875 = vmatprep.subr.bf16.mxu0 %v4107
  %5876 = vmatpush1.bf16.msra.mxu0 %v4106
  %5877 = vmatprep.subr.bf16.mxu0 %v4105
  %5878 = vmatpush1.bf16.msra.mxu0 %v4104
  %5879 = vmatprep.subr.bf16.mxu0 %v4103
  %5880 = vmatpush1.bf16.msra.mxu0 %v4102
  %5881 = vmatprep.subr.bf16.mxu0 %v4101
  %5882 = vmatpush1.bf16.msra.mxu0 %v4100
  %5883 = vmatprep.subr.bf16.mxu0 %v4099
  %5884 = vmatpush1.bf16.msra.mxu0 %v4098
  %5885 = vmatprep.subr.bf16.mxu0 %v4097
  %5886 = vmatpush1.bf16.msra.mxu0 %v4096
  %5887 = vmatprep.subr.bf16.mxu0 %v4127
  %5888 = vmatpush2.bf16.msra.mxu0 %v4126
  %5889 = vmatprep.subr.bf16.mxu0 %v4125
  %5890 = vmatpush2.bf16.msra.mxu0 %v4124
  %5891 = vmatprep.subr.bf16.mxu0 %v4123
  %5892 = vmatpush2.bf16.msra.mxu0 %v4122
  %5893 = vmatprep.subr.bf16.mxu0 %v4121
  %5894 = vmatpush2.bf16.msra.mxu0 %v4120
  %5895 = vmatprep.subr.bf16.mxu0 %v4119
  %5896 = vmatpush2.bf16.msra.mxu0 %v4118
  %5897 = vmatprep.subr.bf16.mxu0 %v4117
  %5898 = vmatpush2.bf16.msra.mxu0 %v4116
  %5899 = vmatprep.subr.bf16.mxu0 %v4115
  %5900 = vmatpush2.bf16.msra.mxu0 %v4114
  %5901 = vmatprep.subr.bf16.mxu0 %v4113
  %5902 = vmatpush2.bf16.msra.mxu0 %v4112
  %5903 = vmatprep.mubr.bf16.mxu0 %v957
  %5904 = vmatmul.mubr.bf16.gmra.mxu0 %v956
  %v5905 = vpop.f32.mrf.mxu0
  %v5906 = vadd.f32 %v5865, %v5905
  %v5907 = vpop.f32.mrf.mxu0
  %v5908 = vadd.f32 %v5867, %v5907
  %v5909 = vpop.f32.mrf.mxu0
  %v5910 = vpop.f32.mrf.mxu0
  %5911 = vdwg.mxu0
  %5912 = vmatprep.subr.bf16.mxu0 %v4143
  %5913 = vmatpush1.bf16.msra.mxu0 %v4142
  %5914 = vmatprep.subr.bf16.mxu0 %v4141
  %5915 = vmatpush1.bf16.msra.mxu0 %v4140
  %5916 = vmatprep.subr.bf16.mxu0 %v4139
  %5917 = vmatpush1.bf16.msra.mxu0 %v4138
  %5918 = vmatprep.subr.bf16.mxu0 %v4137
  %5919 = vmatpush1.bf16.msra.mxu0 %v4136
  %5920 = vmatprep.subr.bf16.mxu0 %v4135
  %5921 = vmatpush1.bf16.msra.mxu0 %v4134
  %5922 = vmatprep.subr.bf16.mxu0 %v4133
  %5923 = vmatpush1.bf16.msra.mxu0 %v4132
  %5924 = vmatprep.subr.bf16.mxu0 %v4131
  %5925 = vmatpush1.bf16.msra.mxu0 %v4130
  %5926 = vmatprep.subr.bf16.mxu0 %v4129
  %5927 = vmatpush1.bf16.msra.mxu0 %v4128
  %5928 = vmatprep.subr.bf16.mxu0 0
  %5929 = vmatpush2.bf16.msra.mxu0 0
  %5930 = vmatprep.subr.bf16.mxu0 0
  %5931 = vmatpush2.bf16.msra.mxu0 0
  %5932 = vmatprep.subr.bf16.mxu0 0
  %5933 = vmatpush2.bf16.msra.mxu0 0
  %5934 = vmatprep.subr.bf16.mxu0 0
  %5935 = vmatpush2.bf16.msra.mxu0 0
  %5936 = vmatprep.subr.bf16.mxu0 0
  %5937 = vmatpush2.bf16.msra.mxu0 0
  %5938 = vmatprep.subr.bf16.mxu0 0
  %5939 = vmatpush2.bf16.msra.mxu0 0
  %5940 = vmatprep.subr.bf16.mxu0 0
  %5941 = vmatpush2.bf16.msra.mxu0 0
  %5942 = vmatprep.subr.bf16.mxu0 0
  %5943 = vmatpush2.bf16.msra.mxu0 0
  %5944 = vmatprep.mubr.bf16.mxu0 0
  %5945 = vmatmul.mubr.bf16.gmra.mxu0 %v958
  %v5946 = vpop.f32.mrf.mxu0
  %v5947 = vadd.f32 %v5906, %v5946
  %v5948 = vpop.f32.mrf.mxu0
  %v5949 = vadd.f32 %v5908, %v5948
  %v5950 = vpop.f32.mrf.mxu0
  %v5951 = vpop.f32.mrf.mxu0
  %5952 = vdwg.mxu0
  %5953 = vst [vmem:[%s3] sm:$0x3f] %v5947
  %5954 = vst [vmem:[%s3 + $0x8] sm:$0x3f] %v5949
  // Predicated region
  $region14: #{conv_attention_lstm_forward.4} parent=0 // pred_check
    _
  $region15: #{conv_attention_lstm_forward.4} parent=0 // pred_check_branch
    %5956 = sbr.rel (0) target = $region17
  $region16: #{conv_attention_lstm_forward.4} parent=0 // pred_region
    _
  $region17: #{conv_attention_lstm_forward.4} parent=0 // pred_fallthru
    _
  // Predicated region
  $region18: #{conv_attention_lstm_forward.4} parent=0 // pred_check
    _
  $region19: #{conv_attention_lstm_forward.4} parent=0 // pred_check_branch
    %5958 = sbr.rel (0) target = $region21
  $region20: #{conv_attention_lstm_forward.4} parent=0 // pred_region
    _
  $region21: #{conv_attention_lstm_forward.4} parent=0 // pred_fallthru
    _

// kernel: conv_attention_lstm_forward.5
$region0: #{conv_attention_lstm_forward.5}
  #allocation0 [shape = 'u32[]', space=smem, size = 0x4, offset = 0x4, fixed_abs, tag = 'smem constant byte address 0x4 - core index']
  #allocation1 [shape = 'u32[144,128]{1,0:T(1,128)}', space=vmem, size = 0x12000, scoped, tag = 'internal scratch']
  #allocation2 [shape = 'f32[2,512]{1,0:T(2,128)}', space=vmem, size = 0x1000, scoped, tag = 'scratch operand']
  #allocation3 [shape = 'f32[2,16,16]{2,1,0:T(8,128)}', space=vmem, size = 0x4000, scoped, tag = 'scratch operand']
  %s0 = inlined_call_operand.vmem [shape: f32[2,256], index: 0, kind: input, shape index: {}]
  %s1 = inlined_call_operand.vmem [shape: f32[3,2,16,16], index: 1, kind: input, shape index: {}]
  %s2 = inlined_call_operand.vmem [shape: bf16[512,1024], index: 2, kind: input, shape index: {}]
  %s3 = inlined_call_operand.vmem [shape: f32[1,1024], index: 3, kind: input, shape index: {}]
  %s4 = inlined_call_operand.vmem [shape: bf16[256,256], index: 4, kind: input, shape index: {}]
  %s5 = inlined_call_operand.vmem [shape: f32[1,256], index: 5, kind: input, shape index: {}]
  %s6 = inlined_call_operand.hbm [shape: f32[2,256], index: 6, kind: output, shape index: {}]
  %s7 = sld [smem:[#allocation0]]
  $region41: #{conv_attention_lstm_forward.5} parent=0
    _
  %s9 = ssub.s32 1, %s7
  %s10 = scalar_select 0, %s9, %s7
  $region1: #{conv_attention_lstm_forward.5} parent=0
    #allocation4 [shape = 'u8[2048]{0}', space=vmem, size = 0x800, scoped, tag = 'output window, operand 0, single buffered']
    #allocation5 [shape = 's32[1]{0}', space=sflag, size = 0x4, scoped, tag = 'scoped memory for conv_attention_lstm_forward.5']
    %11 = vsyncpa [#allocation5], 0
    // Predicated region
    $region2: #{conv_attention_lstm_forward.5} parent=1 // pred_check
      _
    $region3: #{conv_attention_lstm_forward.5} parent=1 // pred_check_branch
      %13 = sbr.rel (0) target = $region5
    $region4: #{conv_attention_lstm_forward.5} parent=1 // pred_region
      _
    $region5: #{conv_attention_lstm_forward.5} parent=1 // pred_fallthru
      _
    // Predicated region
    $region6: #{conv_attention_lstm_forward.5} parent=1 // pred_check
      _
    $region7: #{conv_attention_lstm_forward.5} parent=1 // pred_check_branch
      %15 = sbr.rel (0) target = $region9
    $region8: #{conv_attention_lstm_forward.5} parent=1 // pred_region
      _
    $region9: #{conv_attention_lstm_forward.5} parent=1 // pred_fallthru
      _
    // Predicated region
    $region10: #{conv_attention_lstm_forward.5} parent=1 // pred_check
      _
    $region11: #{conv_attention_lstm_forward.5} parent=1 // pred_check_branch
      %17 = sbr.rel (0) target = $region13
    $region12: #{conv_attention_lstm_forward.5} parent=1 // pred_region
      _
    $region13: #{conv_attention_lstm_forward.5} parent=1 // pred_fallthru
      _
    // Predicated region
    $region14: #{conv_attention_lstm_forward.5} parent=1 // pred_check
      _
    $region15: #{conv_attention_lstm_forward.5} parent=1 // pred_check_branch
      %19 = sbr.rel (0) target = $region17
    $region16: #{conv_attention_lstm_forward.5} parent=1 // pred_region
      _
    $region17: #{conv_attention_lstm_forward.5} parent=1 // pred_fallthru
      _
    // Predicated region
    $region18: #{conv_attention_lstm_forward.5} parent=1 // pred_check
      _
    $region19: #{conv_attention_lstm_forward.5} parent=1 // pred_check_branch
      %21 = sbr.rel (0) target = $region21
    $region20: #{conv_attention_lstm_forward.5} parent=1 // pred_region
      _
    $region21: #{conv_attention_lstm_forward.5} parent=1 // pred_fallthru
      _
    // Predicated region
    $region22: #{conv_attention_lstm_forward.5} parent=1 // pred_check
      _
    $region23: #{conv_attention_lstm_forward.5} parent=1 // pred_check_branch
      %23 = sbr.rel (0) target = $region25
    $region24: #{conv_attention_lstm_forward.5} parent=1 // pred_region
      _
    $region25: #{conv_attention_lstm_forward.5} parent=1 // pred_fallthru
      _
    %v24 = vld [vmem:[%s0] sm:$0xf]
    %25 = vst [vmem:[#allocation2] sm:$0xf] %v24
    %26 = vst [vmem:[#allocation2 + $0x4] sm:$0xf] 0.0
    %v27 = vld [vmem:[#allocation2] sm:$0xff]
    %v29 = vcombine.high %v27, %v27
    %v31 = vunpack.c.l.s4 1983009808
    %v32 = vunpack.c.0.s8 %v31
    %v33 = vlaneseq
    %v34 = vshrl.u32 %v33, 7
    %v35 = vsub.s32 %v32, %v34
    %v36 = vrot.slane %v27, %v35
    %v38 = vunpack.c.l.s4 1983009808
    %v39 = vunpack.c.0.s8 %v38
    %v40 = vlaneseq
    %v41 = vshrl.u32 %v40, 7
    %v42 = vsub.s32 %v39, %v41
    %v43 = vrot.slane %v29, %v42
    %v44 = vcombine.high %v36, %v36
    %v45 = vcombine.high %v43, %v43
    %v50 = vpack.c.bf16 %v36, %v36
    %v51 = vpack.c.bf16 %v44, %v44
    %v52 = vpack.c.bf16 %v43, %v43
    %v53 = vpack.c.bf16 %v45, %v45
    %v54 = vld [vmem:[%s2] sm:$0xff]
    %v55 = vld [vmem:[%s2 + $0x8] sm:$0xff]
    %v56 = vld [vmem:[%s2 + $0x10] sm:$0xff]
    %v57 = vld [vmem:[%s2 + $0x18] sm:$0xff]
    %v58 = vld [vmem:[%s2 + $0x20] sm:$0xff]
    %v59 = vld [vmem:[%s2 + $0x28] sm:$0xff]
    %v60 = vld [vmem:[%s2 + $0x30] sm:$0xff]
    %v61 = vld [vmem:[%s2 + $0x38] sm:$0xff]
    %v62 = vld [vmem:[%s2 + $0x40] sm:$0xff]
    %v63 = vld [vmem:[%s2 + $0x48] sm:$0xff]
    %v64 = vld [vmem:[%s2 + $0x50] sm:$0xff]
    %v65 = vld [vmem:[%s2 + $0x58] sm:$0xff]
    %v66 = vld [vmem:[%s2 + $0x60] sm:$0xff]
    %v67 = vld [vmem:[%s2 + $0x68] sm:$0xff]
    %v68 = vld [vmem:[%s2 + $0x70] sm:$0xff]
    %v69 = vld [vmem:[%s2 + $0x78] sm:$0xff]
    %v70 = vld [vmem:[%s2 + $0x80] sm:$0xff]
    %v71 = vld [vmem:[%s2 + $0x88] sm:$0xff]
    %v72 = vld [vmem:[%s2 + $0x90] sm:$0xff]
    %v73 = vld [vmem:[%s2 + $0x98] sm:$0xff]
    %v74 = vld [vmem:[%s2 + $0xa0] sm:$0xff]
    %v75 = vld [vmem:[%s2 + $0xa8] sm:$0xff]
    %v76 = vld [vmem:[%s2 + $0xb0] sm:$0xff]
    %v77 = vld [vmem:[%s2 + $0xb8] sm:$0xff]
    %v78 = vld [vmem:[%s2 + $0xc0] sm:$0xff]
    %v79 = vld [vmem:[%s2 + $0xc8] sm:$0xff]
    %v80 = vld [vmem:[%s2 + $0xd0] sm:$0xff]
    %v81 = vld [vmem:[%s2 + $0xd8] sm:$0xff]
    %v82 = vld [vmem:[%s2 + $0xe0] sm:$0xff]
    %v83 = vld [vmem:[%s2 + $0xe8] sm:$0xff]
    %v84 = vld [vmem:[%s2 + $0xf0] sm:$0xff]
    %v85 = vld [vmem:[%s2 + $0xf8] sm:$0xff]
    %v86 = vld [vmem:[%s2 + $0x100] sm:$0xff]
    %v87 = vld [vmem:[%s2 + $0x108] sm:$0xff]
    %v88 = vld [vmem:[%s2 + $0x110] sm:$0xff]
    %v89 = vld [vmem:[%s2 + $0x118] sm:$0xff]
    %v90 = vld [vmem:[%s2 + $0x120] sm:$0xff]
    %v91 = vld [vmem:[%s2 + $0x128] sm:$0xff]
    %v92 = vld [vmem:[%s2 + $0x130] sm:$0xff]
    %v93 = vld [vmem:[%s2 + $0x138] sm:$0xff]
    %v94 = vld [vmem:[%s2 + $0x140] sm:$0xff]
    %v95 = vld [vmem:[%s2 + $0x148] sm:$0xff]
    %v96 = vld [vmem:[%s2 + $0x150] sm:$0xff]
    %v97 = vld [vmem:[%s2 + $0x158] sm:$0xff]
    %v98 = vld [vmem:[%s2 + $0x160] sm:$0xff]
    %v99 = vld [vmem:[%s2 + $0x168] sm:$0xff]
    %v100 = vld [vmem:[%s2 + $0x170] sm:$0xff]
    %v101 = vld [vmem:[%s2 + $0x178] sm:$0xff]
    %v102 = vld [vmem:[%s2 + $0x180] sm:$0xff]
    %v103 = vld [vmem:[%s2 + $0x188] sm:$0xff]
    %v104 = vld [vmem:[%s2 + $0x190] sm:$0xff]
    %v105 = vld [vmem:[%s2 + $0x198] sm:$0xff]
    %v106 = vld [vmem:[%s2 + $0x1a0] sm:$0xff]
    %v107 = vld [vmem:[%s2 + $0x1a8] sm:$0xff]
    %v108 = vld [vmem:[%s2 + $0x1b0] sm:$0xff]
    %v109 = vld [vmem:[%s2 + $0x1b8] sm:$0xff]
    %v110 = vld [vmem:[%s2 + $0x1c0] sm:$0xff]
    %v111 = vld [vmem:[%s2 + $0x1c8] sm:$0xff]
    %v112 = vld [vmem:[%s2 + $0x1d0] sm:$0xff]
    %v113 = vld [vmem:[%s2 + $0x1d8] sm:$0xff]
    %v114 = vld [vmem:[%s2 + $0x1e0] sm:$0xff]
    %v115 = vld [vmem:[%s2 + $0x1e8] sm:$0xff]
    %v116 = vld [vmem:[%s2 + $0x1f0] sm:$0xff]
    %v117 = vld [vmem:[%s2 + $0x1f8] sm:$0xff]
    %v118 = vld [vmem:[%s2 + $0x200] sm:$0xff]
    %v119 = vld [vmem:[%s2 + $0x208] sm:$0xff]
    %v120 = vld [vmem:[%s2 + $0x210] sm:$0xff]
    %v121 = vld [vmem:[%s2 + $0x218] sm:$0xff]
    %v122 = vld [vmem:[%s2 + $0x220] sm:$0xff]
    %v123 = vld [vmem:[%s2 + $0x228] sm:$0xff]
    %v124 = vld [vmem:[%s2 + $0x230] sm:$0xff]
    %v125 = vld [vmem:[%s2 + $0x238] sm:$0xff]
    %v126 = vld [vmem:[%s2 + $0x240] sm:$0xff]
    %v127 = vld [vmem:[%s2 + $0x248] sm:$0xff]
    %v128 = vld [vmem:[%s2 + $0x250] sm:$0xff]
    %v129 = vld [vmem:[%s2 + $0x258] sm:$0xff]
    %v130 = vld [vmem:[%s2 + $0x260] sm:$0xff]
    %v131 = vld [vmem:[%s2 + $0x268] sm:$0xff]
    %v132 = vld [vmem:[%s2 + $0x270] sm:$0xff]
    %v133 = vld [vmem:[%s2 + $0x278] sm:$0xff]
    %v134 = vld [vmem:[%s2 + $0x280] sm:$0xff]
    %v135 = vld [vmem:[%s2 + $0x288] sm:$0xff]
    %v136 = vld [vmem:[%s2 + $0x290] sm:$0xff]
    %v137 = vld [vmem:[%s2 + $0x298] sm:$0xff]
    %v138 = vld [vmem:[%s2 + $0x2a0] sm:$0xff]
    %v139 = vld [vmem:[%s2 + $0x2a8] sm:$0xff]
    %v140 = vld [vmem:[%s2 + $0x2b0] sm:$0xff]
    %v141 = vld [vmem:[%s2 + $0x2b8] sm:$0xff]
    %v142 = vld [vmem:[%s2 + $0x2c0] sm:$0xff]
    %v143 = vld [vmem:[%s2 + $0x2c8] sm:$0xff]
    %v144 = vld [vmem:[%s2 + $0x2d0] sm:$0xff]
    %v145 = vld [vmem:[%s2 + $0x2d8] sm:$0xff]
    %v146 = vld [vmem:[%s2 + $0x2e0] sm:$0xff]
    %v147 = vld [vmem:[%s2 + $0x2e8] sm:$0xff]
    %v148 = vld [vmem:[%s2 + $0x2f0] sm:$0xff]
    %v149 = vld [vmem:[%s2 + $0x2f8] sm:$0xff]
    %v150 = vld [vmem:[%s2 + $0x300] sm:$0xff]
    %v151 = vld [vmem:[%s2 + $0x308] sm:$0xff]
    %v152 = vld [vmem:[%s2 + $0x310] sm:$0xff]
    %v153 = vld [vmem:[%s2 + $0x318] sm:$0xff]
    %v154 = vld [vmem:[%s2 + $0x320] sm:$0xff]
    %v155 = vld [vmem:[%s2 + $0x328] sm:$0xff]
    %v156 = vld [vmem:[%s2 + $0x330] sm:$0xff]
    %v157 = vld [vmem:[%s2 + $0x338] sm:$0xff]
    %v158 = vld [vmem:[%s2 + $0x340] sm:$0xff]
    %v159 = vld [vmem:[%s2 + $0x348] sm:$0xff]
    %v160 = vld [vmem:[%s2 + $0x350] sm:$0xff]
    %v161 = vld [vmem:[%s2 + $0x358] sm:$0xff]
    %v162 = vld [vmem:[%s2 + $0x360] sm:$0xff]
    %v163 = vld [vmem:[%s2 + $0x368] sm:$0xff]
    %v164 = vld [vmem:[%s2 + $0x370] sm:$0xff]
    %v165 = vld [vmem:[%s2 + $0x378] sm:$0xff]
    %v166 = vld [vmem:[%s2 + $0x380] sm:$0xff]
    %v167 = vld [vmem:[%s2 + $0x388] sm:$0xff]
    %v168 = vld [vmem:[%s2 + $0x390] sm:$0xff]
    %v169 = vld [vmem:[%s2 + $0x398] sm:$0xff]
    %v170 = vld [vmem:[%s2 + $0x3a0] sm:$0xff]
    %v171 = vld [vmem:[%s2 + $0x3a8] sm:$0xff]
    %v172 = vld [vmem:[%s2 + $0x3b0] sm:$0xff]
    %v173 = vld [vmem:[%s2 + $0x3b8] sm:$0xff]
    %v174 = vld [vmem:[%s2 + $0x3c0] sm:$0xff]
    %v175 = vld [vmem:[%s2 + $0x3c8] sm:$0xff]
    %v176 = vld [vmem:[%s2 + $0x3d0] sm:$0xff]
    %v177 = vld [vmem:[%s2 + $0x3d8] sm:$0xff]
    %v178 = vld [vmem:[%s2 + $0x3e0] sm:$0xff]
    %v179 = vld [vmem:[%s2 + $0x3e8] sm:$0xff]
    %v180 = vld [vmem:[%s2 + $0x3f0] sm:$0xff]
    %v181 = vld [vmem:[%s2 + $0x3f8] sm:$0xff]
    %v182 = vld [vmem:[%s2 + $0x400] sm:$0xff]
    %v183 = vld [vmem:[%s2 + $0x408] sm:$0xff]
    %v184 = vld [vmem:[%s2 + $0x410] sm:$0xff]
    %v185 = vld [vmem:[%s2 + $0x418] sm:$0xff]
    %v186 = vld [vmem:[%s2 + $0x420] sm:$0xff]
    %v187 = vld [vmem:[%s2 + $0x428] sm:$0xff]
    %v188 = vld [vmem:[%s2 + $0x430] sm:$0xff]
    %v189 = vld [vmem:[%s2 + $0x438] sm:$0xff]
    %v190 = vld [vmem:[%s2 + $0x440] sm:$0xff]
    %v191 = vld [vmem:[%s2 + $0x448] sm:$0xff]
    %v192 = vld [vmem:[%s2 + $0x450] sm:$0xff]
    %v193 = vld [vmem:[%s2 + $0x458] sm:$0xff]
    %v194 = vld [vmem:[%s2 + $0x460] sm:$0xff]
    %v195 = vld [vmem:[%s2 + $0x468] sm:$0xff]
    %v196 = vld [vmem:[%s2 + $0x470] sm:$0xff]
    %v197 = vld [vmem:[%s2 + $0x478] sm:$0xff]
    %v198 = vld [vmem:[%s2 + $0x480] sm:$0xff]
    %v199 = vld [vmem:[%s2 + $0x488] sm:$0xff]
    %v200 = vld [vmem:[%s2 + $0x490] sm:$0xff]
    %v201 = vld [vmem:[%s2 + $0x498] sm:$0xff]
    %v202 = vld [vmem:[%s2 + $0x4a0] sm:$0xff]
    %v203 = vld [vmem:[%s2 + $0x4a8] sm:$0xff]
    %v204 = vld [vmem:[%s2 + $0x4b0] sm:$0xff]
    %v205 = vld [vmem:[%s2 + $0x4b8] sm:$0xff]
    %v206 = vld [vmem:[%s2 + $0x4c0] sm:$0xff]
    %v207 = vld [vmem:[%s2 + $0x4c8] sm:$0xff]
    %v208 = vld [vmem:[%s2 + $0x4d0] sm:$0xff]
    %v209 = vld [vmem:[%s2 + $0x4d8] sm:$0xff]
    %v210 = vld [vmem:[%s2 + $0x4e0] sm:$0xff]
    %v211 = vld [vmem:[%s2 + $0x4e8] sm:$0xff]
    %v212 = vld [vmem:[%s2 + $0x4f0] sm:$0xff]
    %v213 = vld [vmem:[%s2 + $0x4f8] sm:$0xff]
    %v214 = vld [vmem:[%s2 + $0x500] sm:$0xff]
    %v215 = vld [vmem:[%s2 + $0x508] sm:$0xff]
    %v216 = vld [vmem:[%s2 + $0x510] sm:$0xff]
    %v217 = vld [vmem:[%s2 + $0x518] sm:$0xff]
    %v218 = vld [vmem:[%s2 + $0x520] sm:$0xff]
    %v219 = vld [vmem:[%s2 + $0x528] sm:$0xff]
    %v220 = vld [vmem:[%s2 + $0x530] sm:$0xff]
    %v221 = vld [vmem:[%s2 + $0x538] sm:$0xff]
    %v222 = vld [vmem:[%s2 + $0x540] sm:$0xff]
    %v223 = vld [vmem:[%s2 + $0x548] sm:$0xff]
    %v224 = vld [vmem:[%s2 + $0x550] sm:$0xff]
    %v225 = vld [vmem:[%s2 + $0x558] sm:$0xff]
    %v226 = vld [vmem:[%s2 + $0x560] sm:$0xff]
    %v227 = vld [vmem:[%s2 + $0x568] sm:$0xff]
    %v228 = vld [vmem:[%s2 + $0x570] sm:$0xff]
    %v229 = vld [vmem:[%s2 + $0x578] sm:$0xff]
    %v230 = vld [vmem:[%s2 + $0x580] sm:$0xff]
    %v231 = vld [vmem:[%s2 + $0x588] sm:$0xff]
    %v232 = vld [vmem:[%s2 + $0x590] sm:$0xff]
    %v233 = vld [vmem:[%s2 + $0x598] sm:$0xff]
    %v234 = vld [vmem:[%s2 + $0x5a0] sm:$0xff]
    %v235 = vld [vmem:[%s2 + $0x5a8] sm:$0xff]
    %v236 = vld [vmem:[%s2 + $0x5b0] sm:$0xff]
    %v237 = vld [vmem:[%s2 + $0x5b8] sm:$0xff]
    %v238 = vld [vmem:[%s2 + $0x5c0] sm:$0xff]
    %v239 = vld [vmem:[%s2 + $0x5c8] sm:$0xff]
    %v240 = vld [vmem:[%s2 + $0x5d0] sm:$0xff]
    %v241 = vld [vmem:[%s2 + $0x5d8] sm:$0xff]
    %v242 = vld [vmem:[%s2 + $0x5e0] sm:$0xff]
    %v243 = vld [vmem:[%s2 + $0x5e8] sm:$0xff]
    %v244 = vld [vmem:[%s2 + $0x5f0] sm:$0xff]
    %v245 = vld [vmem:[%s2 + $0x5f8] sm:$0xff]
    %v246 = vld [vmem:[%s2 + $0x600] sm:$0xff]
    %v247 = vld [vmem:[%s2 + $0x608] sm:$0xff]
    %v248 = vld [vmem:[%s2 + $0x610] sm:$0xff]
    %v249 = vld [vmem:[%s2 + $0x618] sm:$0xff]
    %v250 = vld [vmem:[%s2 + $0x620] sm:$0xff]
    %v251 = vld [vmem:[%s2 + $0x628] sm:$0xff]
    %v252 = vld [vmem:[%s2 + $0x630] sm:$0xff]
    %v253 = vld [vmem:[%s2 + $0x638] sm:$0xff]
    %v254 = vld [vmem:[%s2 + $0x640] sm:$0xff]
    %v255 = vld [vmem:[%s2 + $0x648] sm:$0xff]
    %v256 = vld [vmem:[%s2 + $0x650] sm:$0xff]
    %v257 = vld [vmem:[%s2 + $0x658] sm:$0xff]
    %v258 = vld [vmem:[%s2 + $0x660] sm:$0xff]
    %v259 = vld [vmem:[%s2 + $0x668] sm:$0xff]
    %v260 = vld [vmem:[%s2 + $0x670] sm:$0xff]
    %v261 = vld [vmem:[%s2 + $0x678] sm:$0xff]
    %v262 = vld [vmem:[%s2 + $0x680] sm:$0xff]
    %v263 = vld [vmem:[%s2 + $0x688] sm:$0xff]
    %v264 = vld [vmem:[%s2 + $0x690] sm:$0xff]
    %v265 = vld [vmem:[%s2 + $0x698] sm:$0xff]
    %v266 = vld [vmem:[%s2 + $0x6a0] sm:$0xff]
    %v267 = vld [vmem:[%s2 + $0x6a8] sm:$0xff]
    %v268 = vld [vmem:[%s2 + $0x6b0] sm:$0xff]
    %v269 = vld [vmem:[%s2 + $0x6b8] sm:$0xff]
    %v270 = vld [vmem:[%s2 + $0x6c0] sm:$0xff]
    %v271 = vld [vmem:[%s2 + $0x6c8] sm:$0xff]
    %v272 = vld [vmem:[%s2 + $0x6d0] sm:$0xff]
    %v273 = vld [vmem:[%s2 + $0x6d8] sm:$0xff]
    %v274 = vld [vmem:[%s2 + $0x6e0] sm:$0xff]
    %v275 = vld [vmem:[%s2 + $0x6e8] sm:$0xff]
    %v276 = vld [vmem:[%s2 + $0x6f0] sm:$0xff]
    %v277 = vld [vmem:[%s2 + $0x6f8] sm:$0xff]
    %v278 = vld [vmem:[%s2 + $0x700] sm:$0xff]
    %v279 = vld [vmem:[%s2 + $0x708] sm:$0xff]
    %v280 = vld [vmem:[%s2 + $0x710] sm:$0xff]
    %v281 = vld [vmem:[%s2 + $0x718] sm:$0xff]
    %v282 = vld [vmem:[%s2 + $0x720] sm:$0xff]
    %v283 = vld [vmem:[%s2 + $0x728] sm:$0xff]
    %v284 = vld [vmem:[%s2 + $0x730] sm:$0xff]
    %v285 = vld [vmem:[%s2 + $0x738] sm:$0xff]
    %v286 = vld [vmem:[%s2 + $0x740] sm:$0xff]
    %v287 = vld [vmem:[%s2 + $0x748] sm:$0xff]
    %v288 = vld [vmem:[%s2 + $0x750] sm:$0xff]
    %v289 = vld [vmem:[%s2 + $0x758] sm:$0xff]
    %v290 = vld [vmem:[%s2 + $0x760] sm:$0xff]
    %v291 = vld [vmem:[%s2 + $0x768] sm:$0xff]
    %v292 = vld [vmem:[%s2 + $0x770] sm:$0xff]
    %v293 = vld [vmem:[%s2 + $0x778] sm:$0xff]
    %v294 = vld [vmem:[%s2 + $0x780] sm:$0xff]
    %v295 = vld [vmem:[%s2 + $0x788] sm:$0xff]
    %v296 = vld [vmem:[%s2 + $0x790] sm:$0xff]
    %v297 = vld [vmem:[%s2 + $0x798] sm:$0xff]
    %v298 = vld [vmem:[%s2 + $0x7a0] sm:$0xff]
    %v299 = vld [vmem:[%s2 + $0x7a8] sm:$0xff]
    %v300 = vld [vmem:[%s2 + $0x7b0] sm:$0xff]
    %v301 = vld [vmem:[%s2 + $0x7b8] sm:$0xff]
    %v302 = vld [vmem:[%s2 + $0x7c0] sm:$0xff]
    %v303 = vld [vmem:[%s2 + $0x7c8] sm:$0xff]
    %v304 = vld [vmem:[%s2 + $0x7d0] sm:$0xff]
    %v305 = vld [vmem:[%s2 + $0x7d8] sm:$0xff]
    %v306 = vld [vmem:[%s2 + $0x7e0] sm:$0xff]
    %v307 = vld [vmem:[%s2 + $0x7e8] sm:$0xff]
    %v308 = vld [vmem:[%s2 + $0x7f0] sm:$0xff]
    %v309 = vld [vmem:[%s2 + $0x7f8] sm:$0xff]
    %v310 = vld [vmem:[%s3] sm:$0xff]
    %v312 = vlaneseq
    %v313 = vshrl.u32 %v312, 7
    %v314 = vsub.s32 0, %v313
    %v315 = vrot.slane %v310, %v314
    %v316 = vlaneseq
    %v317 = vshrl.u32 %v316, 7
    %v318 = vsub.s32 1, %v317
    %v319 = vrot.slane %v310, %v318
    %v320 = vlaneseq
    %v321 = vshrl.u32 %v320, 7
    %v322 = vsub.s32 2, %v321
    %v323 = vrot.slane %v310, %v322
    %v324 = vlaneseq
    %v325 = vshrl.u32 %v324, 7
    %v326 = vsub.s32 3, %v325
    %v327 = vrot.slane %v310, %v326
    %v328 = vlaneseq
    %v329 = vshrl.u32 %v328, 7
    %v330 = vsub.s32 4, %v329
    %v331 = vrot.slane %v310, %v330
    %v332 = vlaneseq
    %v333 = vshrl.u32 %v332, 7
    %v334 = vsub.s32 5, %v333
    %v335 = vrot.slane %v310, %v334
    %v336 = vlaneseq
    %v337 = vshrl.u32 %v336, 7
    %v338 = vsub.s32 6, %v337
    %v339 = vrot.slane %v310, %v338
    %v340 = vlaneseq
    %v341 = vshrl.u32 %v340, 7
    %v342 = vsub.s32 7, %v341
    %v343 = vrot.slane %v310, %v342
    %v608 = vunpack.c.l.b16 %v54
    %v609 = vunpack.c.h.b16 %v54
    %v610 = vunpack.c.l.b16 %v55
    %v611 = vunpack.c.h.b16 %v55
    %v612 = vunpack.c.l.b16 %v56
    %v613 = vunpack.c.h.b16 %v56
    %v614 = vunpack.c.l.b16 %v57
    %v615 = vunpack.c.h.b16 %v57
    %v616 = vunpack.c.l.b16 %v58
    %v617 = vunpack.c.h.b16 %v58
    %v618 = vunpack.c.l.b16 %v59
    %v619 = vunpack.c.h.b16 %v59
    %v620 = vunpack.c.l.b16 %v60
    %v621 = vunpack.c.h.b16 %v60
    %v622 = vunpack.c.l.b16 %v61
    %v623 = vunpack.c.h.b16 %v61
    %v624 = vunpack.c.l.b16 %v62
    %v625 = vunpack.c.h.b16 %v62
    %v626 = vunpack.c.l.b16 %v63
    %v627 = vunpack.c.h.b16 %v63
    %v628 = vunpack.c.l.b16 %v64
    %v629 = vunpack.c.h.b16 %v64
    %v630 = vunpack.c.l.b16 %v65
    %v631 = vunpack.c.h.b16 %v65
    %v632 = vunpack.c.l.b16 %v66
    %v633 = vunpack.c.h.b16 %v66
    %v634 = vunpack.c.l.b16 %v67
    %v635 = vunpack.c.h.b16 %v67
    %v636 = vunpack.c.l.b16 %v68
    %v637 = vunpack.c.h.b16 %v68
    %v638 = vunpack.c.l.b16 %v69
    %v639 = vunpack.c.h.b16 %v69
    %v640 = vunpack.c.l.b16 %v70
    %v641 = vunpack.c.h.b16 %v70
    %v642 = vunpack.c.l.b16 %v71
    %v643 = vunpack.c.h.b16 %v71
    %v644 = vunpack.c.l.b16 %v72
    %v645 = vunpack.c.h.b16 %v72
    %v646 = vunpack.c.l.b16 %v73
    %v647 = vunpack.c.h.b16 %v73
    %v648 = vunpack.c.l.b16 %v74
    %v649 = vunpack.c.h.b16 %v74
    %v650 = vunpack.c.l.b16 %v75
    %v651 = vunpack.c.h.b16 %v75
    %v652 = vunpack.c.l.b16 %v76
    %v653 = vunpack.c.h.b16 %v76
    %v654 = vunpack.c.l.b16 %v77
    %v655 = vunpack.c.h.b16 %v77
    %v656 = vunpack.c.l.b16 %v78
    %v657 = vunpack.c.h.b16 %v78
    %v658 = vunpack.c.l.b16 %v79
    %v659 = vunpack.c.h.b16 %v79
    %v660 = vunpack.c.l.b16 %v80
    %v661 = vunpack.c.h.b16 %v80
    %v662 = vunpack.c.l.b16 %v81
    %v663 = vunpack.c.h.b16 %v81
    %v664 = vunpack.c.l.b16 %v82
    %v665 = vunpack.c.h.b16 %v82
    %v666 = vunpack.c.l.b16 %v83
    %v667 = vunpack.c.h.b16 %v83
    %v668 = vunpack.c.l.b16 %v84
    %v669 = vunpack.c.h.b16 %v84
    %v670 = vunpack.c.l.b16 %v85
    %v671 = vunpack.c.h.b16 %v85
    %v672 = vunpack.c.l.b16 %v86
    %v673 = vunpack.c.h.b16 %v86
    %v674 = vunpack.c.l.b16 %v87
    %v675 = vunpack.c.h.b16 %v87
    %v676 = vunpack.c.l.b16 %v88
    %v677 = vunpack.c.h.b16 %v88
    %v678 = vunpack.c.l.b16 %v89
    %v679 = vunpack.c.h.b16 %v89
    %v680 = vunpack.c.l.b16 %v90
    %v681 = vunpack.c.h.b16 %v90
    %v682 = vunpack.c.l.b16 %v91
    %v683 = vunpack.c.h.b16 %v91
    %v684 = vunpack.c.l.b16 %v92
    %v685 = vunpack.c.h.b16 %v92
    %v686 = vunpack.c.l.b16 %v93
    %v687 = vunpack.c.h.b16 %v93
    %v688 = vunpack.c.l.b16 %v94
    %v689 = vunpack.c.h.b16 %v94
    %v690 = vunpack.c.l.b16 %v95
    %v691 = vunpack.c.h.b16 %v95
    %v692 = vunpack.c.l.b16 %v96
    %v693 = vunpack.c.h.b16 %v96
    %v694 = vunpack.c.l.b16 %v97
    %v695 = vunpack.c.h.b16 %v97
    %v696 = vunpack.c.l.b16 %v98
    %v697 = vunpack.c.h.b16 %v98
    %v698 = vunpack.c.l.b16 %v99
    %v699 = vunpack.c.h.b16 %v99
    %v700 = vunpack.c.l.b16 %v100
    %v701 = vunpack.c.h.b16 %v100
    %v702 = vunpack.c.l.b16 %v101
    %v703 = vunpack.c.h.b16 %v101
    %v704 = vunpack.c.l.b16 %v102
    %v705 = vunpack.c.h.b16 %v102
    %v706 = vunpack.c.l.b16 %v103
    %v707 = vunpack.c.h.b16 %v103
    %v708 = vunpack.c.l.b16 %v104
    %v709 = vunpack.c.h.b16 %v104
    %v710 = vunpack.c.l.b16 %v105
    %v711 = vunpack.c.h.b16 %v105
    %v712 = vunpack.c.l.b16 %v106
    %v713 = vunpack.c.h.b16 %v106
    %v714 = vunpack.c.l.b16 %v107
    %v715 = vunpack.c.h.b16 %v107
    %v716 = vunpack.c.l.b16 %v108
    %v717 = vunpack.c.h.b16 %v108
    %v718 = vunpack.c.l.b16 %v109
    %v719 = vunpack.c.h.b16 %v109
    %v720 = vunpack.c.l.b16 %v110
    %v721 = vunpack.c.h.b16 %v110
    %v722 = vunpack.c.l.b16 %v111
    %v723 = vunpack.c.h.b16 %v111
    %v724 = vunpack.c.l.b16 %v112
    %v725 = vunpack.c.h.b16 %v112
    %v726 = vunpack.c.l.b16 %v113
    %v727 = vunpack.c.h.b16 %v113
    %v728 = vunpack.c.l.b16 %v114
    %v729 = vunpack.c.h.b16 %v114
    %v730 = vunpack.c.l.b16 %v115
    %v731 = vunpack.c.h.b16 %v115
    %v732 = vunpack.c.l.b16 %v116
    %v733 = vunpack.c.h.b16 %v116
    %v734 = vunpack.c.l.b16 %v117
    %v735 = vunpack.c.h.b16 %v117
    %v736 = vunpack.c.l.b16 %v118
    %v737 = vunpack.c.h.b16 %v118
    %v738 = vunpack.c.l.b16 %v119
    %v739 = vunpack.c.h.b16 %v119
    %v740 = vunpack.c.l.b16 %v120
    %v741 = vunpack.c.h.b16 %v120
    %v742 = vunpack.c.l.b16 %v121
    %v743 = vunpack.c.h.b16 %v121
    %v744 = vunpack.c.l.b16 %v122
    %v745 = vunpack.c.h.b16 %v122
    %v746 = vunpack.c.l.b16 %v123
    %v747 = vunpack.c.h.b16 %v123
    %v748 = vunpack.c.l.b16 %v124
    %v749 = vunpack.c.h.b16 %v124
    %v750 = vunpack.c.l.b16 %v125
    %v751 = vunpack.c.h.b16 %v125
    %v752 = vunpack.c.l.b16 %v126
    %v753 = vunpack.c.h.b16 %v126
    %v754 = vunpack.c.l.b16 %v127
    %v755 = vunpack.c.h.b16 %v127
    %v756 = vunpack.c.l.b16 %v128
    %v757 = vunpack.c.h.b16 %v128
    %v758 = vunpack.c.l.b16 %v129
    %v759 = vunpack.c.h.b16 %v129
    %v760 = vunpack.c.l.b16 %v130
    %v761 = vunpack.c.h.b16 %v130
    %v762 = vunpack.c.l.b16 %v131
    %v763 = vunpack.c.h.b16 %v131
    %v764 = vunpack.c.l.b16 %v132
    %v765 = vunpack.c.h.b16 %v132
    %v766 = vunpack.c.l.b16 %v133
    %v767 = vunpack.c.h.b16 %v133
    %v768 = vunpack.c.l.b16 %v134
    %v769 = vunpack.c.h.b16 %v134
    %v770 = vunpack.c.l.b16 %v135
    %v771 = vunpack.c.h.b16 %v135
    %v772 = vunpack.c.l.b16 %v136
    %v773 = vunpack.c.h.b16 %v136
    %v774 = vunpack.c.l.b16 %v137
    %v775 = vunpack.c.h.b16 %v137
    %v776 = vunpack.c.l.b16 %v138
    %v777 = vunpack.c.h.b16 %v138
    %v778 = vunpack.c.l.b16 %v139
    %v779 = vunpack.c.h.b16 %v139
    %v780 = vunpack.c.l.b16 %v140
    %v781 = vunpack.c.h.b16 %v140
    %v782 = vunpack.c.l.b16 %v141
    %v783 = vunpack.c.h.b16 %v141
    %v784 = vunpack.c.l.b16 %v142
    %v785 = vunpack.c.h.b16 %v142
    %v786 = vunpack.c.l.b16 %v143
    %v787 = vunpack.c.h.b16 %v143
    %v788 = vunpack.c.l.b16 %v144
    %v789 = vunpack.c.h.b16 %v144
    %v790 = vunpack.c.l.b16 %v145
    %v791 = vunpack.c.h.b16 %v145
    %v792 = vunpack.c.l.b16 %v146
    %v793 = vunpack.c.h.b16 %v146
    %v794 = vunpack.c.l.b16 %v147
    %v795 = vunpack.c.h.b16 %v147
    %v796 = vunpack.c.l.b16 %v148
    %v797 = vunpack.c.h.b16 %v148
    %v798 = vunpack.c.l.b16 %v149
    %v799 = vunpack.c.h.b16 %v149
    %v800 = vunpack.c.l.b16 %v150
    %v801 = vunpack.c.h.b16 %v150
    %v802 = vunpack.c.l.b16 %v151
    %v803 = vunpack.c.h.b16 %v151
    %v804 = vunpack.c.l.b16 %v152
    %v805 = vunpack.c.h.b16 %v152
    %v806 = vunpack.c.l.b16 %v153
    %v807 = vunpack.c.h.b16 %v153
    %v808 = vunpack.c.l.b16 %v154
    %v809 = vunpack.c.h.b16 %v154
    %v810 = vunpack.c.l.b16 %v155
    %v811 = vunpack.c.h.b16 %v155
    %v812 = vunpack.c.l.b16 %v156
    %v813 = vunpack.c.h.b16 %v156
    %v814 = vunpack.c.l.b16 %v157
    %v815 = vunpack.c.h.b16 %v157
    %v816 = vunpack.c.l.b16 %v158
    %v817 = vunpack.c.h.b16 %v158
    %v818 = vunpack.c.l.b16 %v159
    %v819 = vunpack.c.h.b16 %v159
    %v820 = vunpack.c.l.b16 %v160
    %v821 = vunpack.c.h.b16 %v160
    %v822 = vunpack.c.l.b16 %v161
    %v823 = vunpack.c.h.b16 %v161
    %v824 = vunpack.c.l.b16 %v162
    %v825 = vunpack.c.h.b16 %v162
    %v826 = vunpack.c.l.b16 %v163
    %v827 = vunpack.c.h.b16 %v163
    %v828 = vunpack.c.l.b16 %v164
    %v829 = vunpack.c.h.b16 %v164
    %v830 = vunpack.c.l.b16 %v165
    %v831 = vunpack.c.h.b16 %v165
    %v832 = vunpack.c.l.b16 %v166
    %v833 = vunpack.c.h.b16 %v166
    %v834 = vunpack.c.l.b16 %v167
    %v835 = vunpack.c.h.b16 %v167
    %v836 = vunpack.c.l.b16 %v168
    %v837 = vunpack.c.h.b16 %v168
    %v838 = vunpack.c.l.b16 %v169
    %v839 = vunpack.c.h.b16 %v169
    %v840 = vunpack.c.l.b16 %v170
    %v841 = vunpack.c.h.b16 %v170
    %v842 = vunpack.c.l.b16 %v171
    %v843 = vunpack.c.h.b16 %v171
    %v844 = vunpack.c.l.b16 %v172
    %v845 = vunpack.c.h.b16 %v172
    %v846 = vunpack.c.l.b16 %v173
    %v847 = vunpack.c.h.b16 %v173
    %v848 = vunpack.c.l.b16 %v174
    %v849 = vunpack.c.h.b16 %v174
    %v850 = vunpack.c.l.b16 %v175
    %v851 = vunpack.c.h.b16 %v175
    %v852 = vunpack.c.l.b16 %v176
    %v853 = vunpack.c.h.b16 %v176
    %v854 = vunpack.c.l.b16 %v177
    %v855 = vunpack.c.h.b16 %v177
    %v856 = vunpack.c.l.b16 %v178
    %v857 = vunpack.c.h.b16 %v178
    %v858 = vunpack.c.l.b16 %v179
    %v859 = vunpack.c.h.b16 %v179
    %v860 = vunpack.c.l.b16 %v180
    %v861 = vunpack.c.h.b16 %v180
    %v862 = vunpack.c.l.b16 %v181
    %v863 = vunpack.c.h.b16 %v181
    %v864 = vunpack.c.l.b16 %v182
    %v865 = vunpack.c.h.b16 %v182
    %v866 = vunpack.c.l.b16 %v183
    %v867 = vunpack.c.h.b16 %v183
    %v868 = vunpack.c.l.b16 %v184
    %v869 = vunpack.c.h.b16 %v184
    %v870 = vunpack.c.l.b16 %v185
    %v871 = vunpack.c.h.b16 %v185
    %v872 = vunpack.c.l.b16 %v186
    %v873 = vunpack.c.h.b16 %v186
    %v874 = vunpack.c.l.b16 %v187
    %v875 = vunpack.c.h.b16 %v187
    %v876 = vunpack.c.l.b16 %v188
    %v877 = vunpack.c.h.b16 %v188
    %v878 = vunpack.c.l.b16 %v189
    %v879 = vunpack.c.h.b16 %v189
    %v880 = vunpack.c.l.b16 %v190
    %v881 = vunpack.c.h.b16 %v190
    %v882 = vunpack.c.l.b16 %v191
    %v883 = vunpack.c.h.b16 %v191
    %v884 = vunpack.c.l.b16 %v192
    %v885 = vunpack.c.h.b16 %v192
    %v886 = vunpack.c.l.b16 %v193
    %v887 = vunpack.c.h.b16 %v193
    %v888 = vunpack.c.l.b16 %v194
    %v889 = vunpack.c.h.b16 %v194
    %v890 = vunpack.c.l.b16 %v195
    %v891 = vunpack.c.h.b16 %v195
    %v892 = vunpack.c.l.b16 %v196
    %v893 = vunpack.c.h.b16 %v196
    %v894 = vunpack.c.l.b16 %v197
    %v895 = vunpack.c.h.b16 %v197
    %v896 = vunpack.c.l.b16 %v198
    %v897 = vunpack.c.h.b16 %v198
    %v898 = vunpack.c.l.b16 %v199
    %v899 = vunpack.c.h.b16 %v199
    %v900 = vunpack.c.l.b16 %v200
    %v901 = vunpack.c.h.b16 %v200
    %v902 = vunpack.c.l.b16 %v201
    %v903 = vunpack.c.h.b16 %v201
    %v904 = vunpack.c.l.b16 %v202
    %v905 = vunpack.c.h.b16 %v202
    %v906 = vunpack.c.l.b16 %v203
    %v907 = vunpack.c.h.b16 %v203
    %v908 = vunpack.c.l.b16 %v204
    %v909 = vunpack.c.h.b16 %v204
    %v910 = vunpack.c.l.b16 %v205
    %v911 = vunpack.c.h.b16 %v205
    %v912 = vunpack.c.l.b16 %v206
    %v913 = vunpack.c.h.b16 %v206
    %v914 = vunpack.c.l.b16 %v207
    %v915 = vunpack.c.h.b16 %v207
    %v916 = vunpack.c.l.b16 %v208
    %v917 = vunpack.c.h.b16 %v208
    %v918 = vunpack.c.l.b16 %v209
    %v919 = vunpack.c.h.b16 %v209
    %v920 = vunpack.c.l.b16 %v210
    %v921 = vunpack.c.h.b16 %v210
    %v922 = vunpack.c.l.b16 %v211
    %v923 = vunpack.c.h.b16 %v211
    %v924 = vunpack.c.l.b16 %v212
    %v925 = vunpack.c.h.b16 %v212
    %v926 = vunpack.c.l.b16 %v213
    %v927 = vunpack.c.h.b16 %v213
    %v928 = vunpack.c.l.b16 %v214
    %v929 = vunpack.c.h.b16 %v214
    %v930 = vunpack.c.l.b16 %v215
    %v931 = vunpack.c.h.b16 %v215
    %v932 = vunpack.c.l.b16 %v216
    %v933 = vunpack.c.h.b16 %v216
    %v934 = vunpack.c.l.b16 %v217
    %v935 = vunpack.c.h.b16 %v217
    %v936 = vunpack.c.l.b16 %v218
    %v937 = vunpack.c.h.b16 %v218
    %v938 = vunpack.c.l.b16 %v219
    %v939 = vunpack.c.h.b16 %v219
    %v940 = vunpack.c.l.b16 %v220
    %v941 = vunpack.c.h.b16 %v220
    %v942 = vunpack.c.l.b16 %v221
    %v943 = vunpack.c.h.b16 %v221
    %v944 = vunpack.c.l.b16 %v222
    %v945 = vunpack.c.h.b16 %v222
    %v946 = vunpack.c.l.b16 %v223
    %v947 = vunpack.c.h.b16 %v223
    %v948 = vunpack.c.l.b16 %v224
    %v949 = vunpack.c.h.b16 %v224
    %v950 = vunpack.c.l.b16 %v225
    %v951 = vunpack.c.h.b16 %v225
    %v952 = vunpack.c.l.b16 %v226
    %v953 = vunpack.c.h.b16 %v226
    %v954 = vunpack.c.l.b16 %v227
    %v955 = vunpack.c.h.b16 %v227
    %v956 = vunpack.c.l.b16 %v228
    %v957 = vunpack.c.h.b16 %v228
    %v958 = vunpack.c.l.b16 %v229
    %v959 = vunpack.c.h.b16 %v229
    %v960 = vunpack.c.l.b16 %v230
    %v961 = vunpack.c.h.b16 %v230
    %v962 = vunpack.c.l.b16 %v231
    %v963 = vunpack.c.h.b16 %v231
    %v964 = vunpack.c.l.b16 %v232
    %v965 = vunpack.c.h.b16 %v232
    %v966 = vunpack.c.l.b16 %v233
    %v967 = vunpack.c.h.b16 %v233
    %v968 = vunpack.c.l.b16 %v234
    %v969 = vunpack.c.h.b16 %v234
    %v970 = vunpack.c.l.b16 %v235
    %v971 = vunpack.c.h.b16 %v235
    %v972 = vunpack.c.l.b16 %v236
    %v973 = vunpack.c.h.b16 %v236
    %v974 = vunpack.c.l.b16 %v237
    %v975 = vunpack.c.h.b16 %v237
    %v976 = vunpack.c.l.b16 %v238
    %v977 = vunpack.c.h.b16 %v238
    %v978 = vunpack.c.l.b16 %v239
    %v979 = vunpack.c.h.b16 %v239
    %v980 = vunpack.c.l.b16 %v240
    %v981 = vunpack.c.h.b16 %v240
    %v982 = vunpack.c.l.b16 %v241
    %v983 = vunpack.c.h.b16 %v241
    %v984 = vunpack.c.l.b16 %v242
    %v985 = vunpack.c.h.b16 %v242
    %v986 = vunpack.c.l.b16 %v243
    %v987 = vunpack.c.h.b16 %v243
    %v988 = vunpack.c.l.b16 %v244
    %v989 = vunpack.c.h.b16 %v244
    %v990 = vunpack.c.l.b16 %v245
    %v991 = vunpack.c.h.b16 %v245
    %v992 = vunpack.c.l.b16 %v246
    %v993 = vunpack.c.h.b16 %v246
    %v994 = vunpack.c.l.b16 %v247
    %v995 = vunpack.c.h.b16 %v247
    %v996 = vunpack.c.l.b16 %v248
    %v997 = vunpack.c.h.b16 %v248
    %v998 = vunpack.c.l.b16 %v249
    %v999 = vunpack.c.h.b16 %v249
    %v1000 = vunpack.c.l.b16 %v250
    %v1001 = vunpack.c.h.b16 %v250
    %v1002 = vunpack.c.l.b16 %v251
    %v1003 = vunpack.c.h.b16 %v251
    %v1004 = vunpack.c.l.b16 %v252
    %v1005 = vunpack.c.h.b16 %v252
    %v1006 = vunpack.c.l.b16 %v253
    %v1007 = vunpack.c.h.b16 %v253
    %v1008 = vunpack.c.l.b16 %v254
    %v1009 = vunpack.c.h.b16 %v254
    %v1010 = vunpack.c.l.b16 %v255
    %v1011 = vunpack.c.h.b16 %v255
    %v1012 = vunpack.c.l.b16 %v256
    %v1013 = vunpack.c.h.b16 %v256
    %v1014 = vunpack.c.l.b16 %v257
    %v1015 = vunpack.c.h.b16 %v257
    %v1016 = vunpack.c.l.b16 %v258
    %v1017 = vunpack.c.h.b16 %v258
    %v1018 = vunpack.c.l.b16 %v259
    %v1019 = vunpack.c.h.b16 %v259
    %v1020 = vunpack.c.l.b16 %v260
    %v1021 = vunpack.c.h.b16 %v260
    %v1022 = vunpack.c.l.b16 %v261
    %v1023 = vunpack.c.h.b16 %v261
    %v1024 = vunpack.c.l.b16 %v262
    %v1025 = vunpack.c.h.b16 %v262
    %v1026 = vunpack.c.l.b16 %v263
    %v1027 = vunpack.c.h.b16 %v263
    %v1028 = vunpack.c.l.b16 %v264
    %v1029 = vunpack.c.h.b16 %v264
    %v1030 = vunpack.c.l.b16 %v265
    %v1031 = vunpack.c.h.b16 %v265
    %v1032 = vunpack.c.l.b16 %v266
    %v1033 = vunpack.c.h.b16 %v266
    %v1034 = vunpack.c.l.b16 %v267
    %v1035 = vunpack.c.h.b16 %v267
    %v1036 = vunpack.c.l.b16 %v268
    %v1037 = vunpack.c.h.b16 %v268
    %v1038 = vunpack.c.l.b16 %v269
    %v1039 = vunpack.c.h.b16 %v269
    %v1040 = vunpack.c.l.b16 %v270
    %v1041 = vunpack.c.h.b16 %v270
    %v1042 = vunpack.c.l.b16 %v271
    %v1043 = vunpack.c.h.b16 %v271
    %v1044 = vunpack.c.l.b16 %v272
    %v1045 = vunpack.c.h.b16 %v272
    %v1046 = vunpack.c.l.b16 %v273
    %v1047 = vunpack.c.h.b16 %v273
    %v1048 = vunpack.c.l.b16 %v274
    %v1049 = vunpack.c.h.b16 %v274
    %v1050 = vunpack.c.l.b16 %v275
    %v1051 = vunpack.c.h.b16 %v275
    %v1052 = vunpack.c.l.b16 %v276
    %v1053 = vunpack.c.h.b16 %v276
    %v1054 = vunpack.c.l.b16 %v277
    %v1055 = vunpack.c.h.b16 %v277
    %v1056 = vunpack.c.l.b16 %v278
    %v1057 = vunpack.c.h.b16 %v278
    %v1058 = vunpack.c.l.b16 %v279
    %v1059 = vunpack.c.h.b16 %v279
    %v1060 = vunpack.c.l.b16 %v280
    %v1061 = vunpack.c.h.b16 %v280
    %v1062 = vunpack.c.l.b16 %v281
    %v1063 = vunpack.c.h.b16 %v281
    %v1064 = vunpack.c.l.b16 %v282
    %v1065 = vunpack.c.h.b16 %v282
    %v1066 = vunpack.c.l.b16 %v283
    %v1067 = vunpack.c.h.b16 %v283
    %v1068 = vunpack.c.l.b16 %v284
    %v1069 = vunpack.c.h.b16 %v284
    %v1070 = vunpack.c.l.b16 %v285
    %v1071 = vunpack.c.h.b16 %v285
    %v1072 = vunpack.c.l.b16 %v286
    %v1073 = vunpack.c.h.b16 %v286
    %v1074 = vunpack.c.l.b16 %v287
    %v1075 = vunpack.c.h.b16 %v287
    %v1076 = vunpack.c.l.b16 %v288
    %v1077 = vunpack.c.h.b16 %v288
    %v1078 = vunpack.c.l.b16 %v289
    %v1079 = vunpack.c.h.b16 %v289
    %v1080 = vunpack.c.l.b16 %v290
    %v1081 = vunpack.c.h.b16 %v290
    %v1082 = vunpack.c.l.b16 %v291
    %v1083 = vunpack.c.h.b16 %v291
    %v1084 = vunpack.c.l.b16 %v292
    %v1085 = vunpack.c.h.b16 %v292
    %v1086 = vunpack.c.l.b16 %v293
    %v1087 = vunpack.c.h.b16 %v293
    %v1088 = vunpack.c.l.b16 %v294
    %v1089 = vunpack.c.h.b16 %v294
    %v1090 = vunpack.c.l.b16 %v295
    %v1091 = vunpack.c.h.b16 %v295
    %v1092 = vunpack.c.l.b16 %v296
    %v1093 = vunpack.c.h.b16 %v296
    %v1094 = vunpack.c.l.b16 %v297
    %v1095 = vunpack.c.h.b16 %v297
    %v1096 = vunpack.c.l.b16 %v298
    %v1097 = vunpack.c.h.b16 %v298
    %v1098 = vunpack.c.l.b16 %v299
    %v1099 = vunpack.c.h.b16 %v299
    %v1100 = vunpack.c.l.b16 %v300
    %v1101 = vunpack.c.h.b16 %v300
    %v1102 = vunpack.c.l.b16 %v301
    %v1103 = vunpack.c.h.b16 %v301
    %v1104 = vunpack.c.l.b16 %v302
    %v1105 = vunpack.c.h.b16 %v302
    %v1106 = vunpack.c.l.b16 %v303
    %v1107 = vunpack.c.h.b16 %v303
    %v1108 = vunpack.c.l.b16 %v304
    %v1109 = vunpack.c.h.b16 %v304
    %v1110 = vunpack.c.l.b16 %v305
    %v1111 = vunpack.c.h.b16 %v305
    %v1112 = vunpack.c.l.b16 %v306
    %v1113 = vunpack.c.h.b16 %v306
    %v1114 = vunpack.c.l.b16 %v307
    %v1115 = vunpack.c.h.b16 %v307
    %v1116 = vunpack.c.l.b16 %v308
    %v1117 = vunpack.c.h.b16 %v308
    %v1118 = vunpack.c.l.b16 %v309
    %v1119 = vunpack.c.h.b16 %v309
    %v1120 = vpack.c.b16 %v616, %v608
    %v1121 = vpack.c.b16 %v617, %v609
    %v1122 = vpack.c.b16 %v618, %v610
    %v1123 = vpack.c.b16 %v619, %v611
    %v1124 = vpack.c.b16 %v620, %v612
    %v1125 = vpack.c.b16 %v621, %v613
    %v1126 = vpack.c.b16 %v622, %v614
    %v1127 = vpack.c.b16 %v623, %v615
    %v1128 = vpack.c.b16 %v632, %v624
    %v1129 = vpack.c.b16 %v633, %v625
    %v1130 = vpack.c.b16 %v634, %v626
    %v1131 = vpack.c.b16 %v635, %v627
    %v1132 = vpack.c.b16 %v636, %v628
    %v1133 = vpack.c.b16 %v637, %v629
    %v1134 = vpack.c.b16 %v638, %v630
    %v1135 = vpack.c.b16 %v639, %v631
    %v1136 = vpack.c.b16 %v648, %v640
    %v1137 = vpack.c.b16 %v649, %v641
    %v1138 = vpack.c.b16 %v650, %v642
    %v1139 = vpack.c.b16 %v651, %v643
    %v1140 = vpack.c.b16 %v652, %v644
    %v1141 = vpack.c.b16 %v653, %v645
    %v1142 = vpack.c.b16 %v654, %v646
    %v1143 = vpack.c.b16 %v655, %v647
    %v1144 = vpack.c.b16 %v664, %v656
    %v1145 = vpack.c.b16 %v665, %v657
    %v1146 = vpack.c.b16 %v666, %v658
    %v1147 = vpack.c.b16 %v667, %v659
    %v1148 = vpack.c.b16 %v668, %v660
    %v1149 = vpack.c.b16 %v669, %v661
    %v1150 = vpack.c.b16 %v670, %v662
    %v1151 = vpack.c.b16 %v671, %v663
    %v1152 = vpack.c.b16 %v680, %v672
    %v1153 = vpack.c.b16 %v681, %v673
    %v1154 = vpack.c.b16 %v682, %v674
    %v1155 = vpack.c.b16 %v683, %v675
    %v1156 = vpack.c.b16 %v684, %v676
    %v1157 = vpack.c.b16 %v685, %v677
    %v1158 = vpack.c.b16 %v686, %v678
    %v1159 = vpack.c.b16 %v687, %v679
    %v1160 = vpack.c.b16 %v696, %v688
    %v1161 = vpack.c.b16 %v697, %v689
    %v1162 = vpack.c.b16 %v698, %v690
    %v1163 = vpack.c.b16 %v699, %v691
    %v1164 = vpack.c.b16 %v700, %v692
    %v1165 = vpack.c.b16 %v701, %v693
    %v1166 = vpack.c.b16 %v702, %v694
    %v1167 = vpack.c.b16 %v703, %v695
    %v1168 = vpack.c.b16 %v712, %v704
    %v1169 = vpack.c.b16 %v713, %v705
    %v1170 = vpack.c.b16 %v714, %v706
    %v1171 = vpack.c.b16 %v715, %v707
    %v1172 = vpack.c.b16 %v716, %v708
    %v1173 = vpack.c.b16 %v717, %v709
    %v1174 = vpack.c.b16 %v718, %v710
    %v1175 = vpack.c.b16 %v719, %v711
    %v1176 = vpack.c.b16 %v728, %v720
    %v1177 = vpack.c.b16 %v729, %v721
    %v1178 = vpack.c.b16 %v730, %v722
    %v1179 = vpack.c.b16 %v731, %v723
    %v1180 = vpack.c.b16 %v732, %v724
    %v1181 = vpack.c.b16 %v733, %v725
    %v1182 = vpack.c.b16 %v734, %v726
    %v1183 = vpack.c.b16 %v735, %v727
    %v1184 = vpack.c.b16 %v744, %v736
    %v1185 = vpack.c.b16 %v745, %v737
    %v1186 = vpack.c.b16 %v746, %v738
    %v1187 = vpack.c.b16 %v747, %v739
    %v1188 = vpack.c.b16 %v748, %v740
    %v1189 = vpack.c.b16 %v749, %v741
    %v1190 = vpack.c.b16 %v750, %v742
    %v1191 = vpack.c.b16 %v751, %v743
    %v1192 = vpack.c.b16 %v760, %v752
    %v1193 = vpack.c.b16 %v761, %v753
    %v1194 = vpack.c.b16 %v762, %v754
    %v1195 = vpack.c.b16 %v763, %v755
    %v1196 = vpack.c.b16 %v764, %v756
    %v1197 = vpack.c.b16 %v765, %v757
    %v1198 = vpack.c.b16 %v766, %v758
    %v1199 = vpack.c.b16 %v767, %v759
    %v1200 = vpack.c.b16 %v776, %v768
    %v1201 = vpack.c.b16 %v777, %v769
    %v1202 = vpack.c.b16 %v778, %v770
    %v1203 = vpack.c.b16 %v779, %v771
    %v1204 = vpack.c.b16 %v780, %v772
    %v1205 = vpack.c.b16 %v781, %v773
    %v1206 = vpack.c.b16 %v782, %v774
    %v1207 = vpack.c.b16 %v783, %v775
    %v1208 = vpack.c.b16 %v792, %v784
    %v1209 = vpack.c.b16 %v793, %v785
    %v1210 = vpack.c.b16 %v794, %v786
    %v1211 = vpack.c.b16 %v795, %v787
    %v1212 = vpack.c.b16 %v796, %v788
    %v1213 = vpack.c.b16 %v797, %v789
    %v1214 = vpack.c.b16 %v798, %v790
    %v1215 = vpack.c.b16 %v799, %v791
    %v1216 = vpack.c.b16 %v808, %v800
    %v1217 = vpack.c.b16 %v809, %v801
    %v1218 = vpack.c.b16 %v810, %v802
    %v1219 = vpack.c.b16 %v811, %v803
    %v1220 = vpack.c.b16 %v812, %v804
    %v1221 = vpack.c.b16 %v813, %v805
    %v1222 = vpack.c.b16 %v814, %v806
    %v1223 = vpack.c.b16 %v815, %v807
    %v1224 = vpack.c.b16 %v824, %v816
    %v1225 = vpack.c.b16 %v825, %v817
    %v1226 = vpack.c.b16 %v826, %v818
    %v1227 = vpack.c.b16 %v827, %v819
    %v1228 = vpack.c.b16 %v828, %v820
    %v1229 = vpack.c.b16 %v829, %v821
    %v1230 = vpack.c.b16 %v830, %v822
    %v1231 = vpack.c.b16 %v831, %v823
    %v1232 = vpack.c.b16 %v840, %v832
    %v1233 = vpack.c.b16 %v841, %v833
    %v1234 = vpack.c.b16 %v842, %v834
    %v1235 = vpack.c.b16 %v843, %v835
    %v1236 = vpack.c.b16 %v844, %v836
    %v1237 = vpack.c.b16 %v845, %v837
    %v1238 = vpack.c.b16 %v846, %v838
    %v1239 = vpack.c.b16 %v847, %v839
    %v1240 = vpack.c.b16 %v856, %v848
    %v1241 = vpack.c.b16 %v857, %v849
    %v1242 = vpack.c.b16 %v858, %v850
    %v1243 = vpack.c.b16 %v859, %v851
    %v1244 = vpack.c.b16 %v860, %v852
    %v1245 = vpack.c.b16 %v861, %v853
    %v1246 = vpack.c.b16 %v862, %v854
    %v1247 = vpack.c.b16 %v863, %v855
    %v1248 = vpack.c.b16 %v872, %v864
    %v1249 = vpack.c.b16 %v873, %v865
    %v1250 = vpack.c.b16 %v874, %v866
    %v1251 = vpack.c.b16 %v875, %v867
    %v1252 = vpack.c.b16 %v876, %v868
    %v1253 = vpack.c.b16 %v877, %v869
    %v1254 = vpack.c.b16 %v878, %v870
    %v1255 = vpack.c.b16 %v879, %v871
    %v1256 = vpack.c.b16 %v888, %v880
    %v1257 = vpack.c.b16 %v889, %v881
    %v1258 = vpack.c.b16 %v890, %v882
    %v1259 = vpack.c.b16 %v891, %v883
    %v1260 = vpack.c.b16 %v892, %v884
    %v1261 = vpack.c.b16 %v893, %v885
    %v1262 = vpack.c.b16 %v894, %v886
    %v1263 = vpack.c.b16 %v895, %v887
    %v1264 = vpack.c.b16 %v904, %v896
    %v1265 = vpack.c.b16 %v905, %v897
    %v1266 = vpack.c.b16 %v906, %v898
    %v1267 = vpack.c.b16 %v907, %v899
    %v1268 = vpack.c.b16 %v908, %v900
    %v1269 = vpack.c.b16 %v909, %v901
    %v1270 = vpack.c.b16 %v910, %v902
    %v1271 = vpack.c.b16 %v911, %v903
    %v1272 = vpack.c.b16 %v920, %v912
    %v1273 = vpack.c.b16 %v921, %v913
    %v1274 = vpack.c.b16 %v922, %v914
    %v1275 = vpack.c.b16 %v923, %v915
    %v1276 = vpack.c.b16 %v924, %v916
    %v1277 = vpack.c.b16 %v925, %v917
    %v1278 = vpack.c.b16 %v926, %v918
    %v1279 = vpack.c.b16 %v927, %v919
    %v1280 = vpack.c.b16 %v936, %v928
    %v1281 = vpack.c.b16 %v937, %v929
    %v1282 = vpack.c.b16 %v938, %v930
    %v1283 = vpack.c.b16 %v939, %v931
    %v1284 = vpack.c.b16 %v940, %v932
    %v1285 = vpack.c.b16 %v941, %v933
    %v1286 = vpack.c.b16 %v942, %v934
    %v1287 = vpack.c.b16 %v943, %v935
    %v1288 = vpack.c.b16 %v952, %v944
    %v1289 = vpack.c.b16 %v953, %v945
    %v1290 = vpack.c.b16 %v954, %v946
    %v1291 = vpack.c.b16 %v955, %v947
    %v1292 = vpack.c.b16 %v956, %v948
    %v1293 = vpack.c.b16 %v957, %v949
    %v1294 = vpack.c.b16 %v958, %v950
    %v1295 = vpack.c.b16 %v959, %v951
    %v1296 = vpack.c.b16 %v968, %v960
    %v1297 = vpack.c.b16 %v969, %v961
    %v1298 = vpack.c.b16 %v970, %v962
    %v1299 = vpack.c.b16 %v971, %v963
    %v1300 = vpack.c.b16 %v972, %v964
    %v1301 = vpack.c.b16 %v973, %v965
    %v1302 = vpack.c.b16 %v974, %v966
    %v1303 = vpack.c.b16 %v975, %v967
    %v1304 = vpack.c.b16 %v984, %v976
    %v1305 = vpack.c.b16 %v985, %v977
    %v1306 = vpack.c.b16 %v986, %v978
    %v1307 = vpack.c.b16 %v987, %v979
    %v1308 = vpack.c.b16 %v988, %v980
    %v1309 = vpack.c.b16 %v989, %v981
    %v1310 = vpack.c.b16 %v990, %v982
    %v1311 = vpack.c.b16 %v991, %v983
    %v1312 = vpack.c.b16 %v1000, %v992
    %v1313 = vpack.c.b16 %v1001, %v993
    %v1314 = vpack.c.b16 %v1002, %v994
    %v1315 = vpack.c.b16 %v1003, %v995
    %v1316 = vpack.c.b16 %v1004, %v996
    %v1317 = vpack.c.b16 %v1005, %v997
    %v1318 = vpack.c.b16 %v1006, %v998
    %v1319 = vpack.c.b16 %v1007, %v999
    %v1320 = vpack.c.b16 %v1016, %v1008
    %v1321 = vpack.c.b16 %v1017, %v1009
    %v1322 = vpack.c.b16 %v1018, %v1010
    %v1323 = vpack.c.b16 %v1019, %v1011
    %v1324 = vpack.c.b16 %v1020, %v1012
    %v1325 = vpack.c.b16 %v1021, %v1013
    %v1326 = vpack.c.b16 %v1022, %v1014
    %v1327 = vpack.c.b16 %v1023, %v1015
    %v1328 = vpack.c.b16 %v1032, %v1024
    %v1329 = vpack.c.b16 %v1033, %v1025
    %v1330 = vpack.c.b16 %v1034, %v1026
    %v1331 = vpack.c.b16 %v1035, %v1027
    %v1332 = vpack.c.b16 %v1036, %v1028
    %v1333 = vpack.c.b16 %v1037, %v1029
    %v1334 = vpack.c.b16 %v1038, %v1030
    %v1335 = vpack.c.b16 %v1039, %v1031
    %v1336 = vpack.c.b16 %v1048, %v1040
    %v1337 = vpack.c.b16 %v1049, %v1041
    %v1338 = vpack.c.b16 %v1050, %v1042
    %v1339 = vpack.c.b16 %v1051, %v1043
    %v1340 = vpack.c.b16 %v1052, %v1044
    %v1341 = vpack.c.b16 %v1053, %v1045
    %v1342 = vpack.c.b16 %v1054, %v1046
    %v1343 = vpack.c.b16 %v1055, %v1047
    %v1344 = vpack.c.b16 %v1064, %v1056
    %v1345 = vpack.c.b16 %v1065, %v1057
    %v1346 = vpack.c.b16 %v1066, %v1058
    %v1347 = vpack.c.b16 %v1067, %v1059
    %v1348 = vpack.c.b16 %v1068, %v1060
    %v1349 = vpack.c.b16 %v1069, %v1061
    %v1350 = vpack.c.b16 %v1070, %v1062
    %v1351 = vpack.c.b16 %v1071, %v1063
    %v1352 = vpack.c.b16 %v1080, %v1072
    %v1353 = vpack.c.b16 %v1081, %v1073
    %v1354 = vpack.c.b16 %v1082, %v1074
    %v1355 = vpack.c.b16 %v1083, %v1075
    %v1356 = vpack.c.b16 %v1084, %v1076
    %v1357 = vpack.c.b16 %v1085, %v1077
    %v1358 = vpack.c.b16 %v1086, %v1078
    %v1359 = vpack.c.b16 %v1087, %v1079
    %v1360 = vpack.c.b16 %v1096, %v1088
    %v1361 = vpack.c.b16 %v1097, %v1089
    %v1362 = vpack.c.b16 %v1098, %v1090
    %v1363 = vpack.c.b16 %v1099, %v1091
    %v1364 = vpack.c.b16 %v1100, %v1092
    %v1365 = vpack.c.b16 %v1101, %v1093
    %v1366 = vpack.c.b16 %v1102, %v1094
    %v1367 = vpack.c.b16 %v1103, %v1095
    %v1368 = vpack.c.b16 %v1112, %v1104
    %v1369 = vpack.c.b16 %v1113, %v1105
    %v1370 = vpack.c.b16 %v1114, %v1106
    %v1371 = vpack.c.b16 %v1115, %v1107
    %v1372 = vpack.c.b16 %v1116, %v1108
    %v1373 = vpack.c.b16 %v1117, %v1109
    %v1374 = vpack.c.b16 %v1118, %v1110
    %v1375 = vpack.c.b16 %v1119, %v1111
    %1632 = vmatprep.subr.bf16.mxu0 %v1177
    %1633 = vmatpush1.bf16.msra.mxu0 %v1176
    %1634 = vmatprep.subr.bf16.mxu0 %v1169
    %1635 = vmatpush1.bf16.msra.mxu0 %v1168
    %1636 = vmatprep.subr.bf16.mxu0 %v1161
    %1637 = vmatpush1.bf16.msra.mxu0 %v1160
    %1638 = vmatprep.subr.bf16.mxu0 %v1153
    %1639 = vmatpush1.bf16.msra.mxu0 %v1152
    %1640 = vmatprep.subr.bf16.mxu0 %v1145
    %1641 = vmatpush1.bf16.msra.mxu0 %v1144
    %1642 = vmatprep.subr.bf16.mxu0 %v1137
    %1643 = vmatpush1.bf16.msra.mxu0 %v1136
    %1644 = vmatprep.subr.bf16.mxu0 %v1129
    %1645 = vmatpush1.bf16.msra.mxu0 %v1128
    %1646 = vmatprep.subr.bf16.mxu0 %v1121
    %1647 = vmatpush1.bf16.msra.mxu0 %v1120
    %1648 = vmatprep.subr.bf16.mxu0 %v1241
    %1649 = vmatpush2.bf16.msra.mxu0 %v1240
    %1650 = vmatprep.subr.bf16.mxu0 %v1233
    %1651 = vmatpush2.bf16.msra.mxu0 %v1232
    %1652 = vmatprep.subr.bf16.mxu0 %v1225
    %1653 = vmatpush2.bf16.msra.mxu0 %v1224
    %1654 = vmatprep.subr.bf16.mxu0 %v1217
    %1655 = vmatpush2.bf16.msra.mxu0 %v1216
    %1656 = vmatprep.subr.bf16.mxu0 %v1209
    %1657 = vmatpush2.bf16.msra.mxu0 %v1208
    %1658 = vmatprep.subr.bf16.mxu0 %v1201
    %1659 = vmatpush2.bf16.msra.mxu0 %v1200
    %1660 = vmatprep.subr.bf16.mxu0 %v1193
    %1661 = vmatpush2.bf16.msra.mxu0 %v1192
    %1662 = vmatprep.subr.bf16.mxu0 %v1185
    %1663 = vmatpush2.bf16.msra.mxu0 %v1184
    %1664 = vmatprep.mubr.bf16.mxu0 %v51
    %1665 = vmatmul.mubr.bf16.gmra.mxu0 %v50
    %v1666 = vpop.f32.mrf.mxu0
    %v1667 = vadd.f32 %v315, %v1666
    %v1668 = vpop.f32.mrf.mxu0
    %v1669 = vadd.f32 %v319, %v1668
    %v1670 = vpop.f32.mrf.mxu0
    %v1671 = vpop.f32.mrf.mxu0
    %1672 = vdwg.mxu0
    %1673 = vmatprep.subr.bf16.mxu0 %v1305
    %1674 = vmatpush1.bf16.msra.mxu0 %v1304
    %1675 = vmatprep.subr.bf16.mxu0 %v1297
    %1676 = vmatpush1.bf16.msra.mxu0 %v1296
    %1677 = vmatprep.subr.bf16.mxu0 %v1289
    %1678 = vmatpush1.bf16.msra.mxu0 %v1288
    %1679 = vmatprep.subr.bf16.mxu0 %v1281
    %1680 = vmatpush1.bf16.msra.mxu0 %v1280
    %1681 = vmatprep.subr.bf16.mxu0 %v1273
    %1682 = vmatpush1.bf16.msra.mxu0 %v1272
    %1683 = vmatprep.subr.bf16.mxu0 %v1265
    %1684 = vmatpush1.bf16.msra.mxu0 %v1264
    %1685 = vmatprep.subr.bf16.mxu0 %v1257
    %1686 = vmatpush1.bf16.msra.mxu0 %v1256
    %1687 = vmatprep.subr.bf16.mxu0 %v1249
    %1688 = vmatpush1.bf16.msra.mxu0 %v1248
    %1689 = vmatprep.subr.bf16.mxu0 %v1369
    %1690 = vmatpush2.bf16.msra.mxu0 %v1368
    %1691 = vmatprep.subr.bf16.mxu0 %v1361
    %1692 = vmatpush2.bf16.msra.mxu0 %v1360
    %1693 = vmatprep.subr.bf16.mxu0 %v1353
    %1694 = vmatpush2.bf16.msra.mxu0 %v1352
    %1695 = vmatprep.subr.bf16.mxu0 %v1345
    %1696 = vmatpush2.bf16.msra.mxu0 %v1344
    %1697 = vmatprep.subr.bf16.mxu0 %v1337
    %1698 = vmatpush2.bf16.msra.mxu0 %v1336
    %1699 = vmatprep.subr.bf16.mxu0 %v1329
    %1700 = vmatpush2.bf16.msra.mxu0 %v1328
    %1701 = vmatprep.subr.bf16.mxu0 %v1321
    %1702 = vmatpush2.bf16.msra.mxu0 %v1320
    %1703 = vmatprep.subr.bf16.mxu0 %v1313
    %1704 = vmatpush2.bf16.msra.mxu0 %v1312
    %1705 = vmatprep.mubr.bf16.mxu0 %v53
    %1706 = vmatmul.mubr.bf16.gmra.mxu0 %v52
    %v1707 = vpop.f32.mrf.mxu0
    %v1708 = vadd.f32 %v1667, %v1707
    %v1709 = vpop.f32.mrf.mxu0
    %v1710 = vadd.f32 %v1669, %v1709
    %v1711 = vpop.f32.mrf.mxu0
    %v1712 = vpop.f32.mrf.mxu0
    %1713 = vdwg.mxu0
    %1714 = vmatprep.subr.bf16.mxu0 %v1179
    %1715 = vmatpush1.bf16.msra.mxu0 %v1178
    %1716 = vmatprep.subr.bf16.mxu0 %v1171
    %1717 = vmatpush1.bf16.msra.mxu0 %v1170
    %1718 = vmatprep.subr.bf16.mxu0 %v1163
    %1719 = vmatpush1.bf16.msra.mxu0 %v1162
    %1720 = vmatprep.subr.bf16.mxu0 %v1155
    %1721 = vmatpush1.bf16.msra.mxu0 %v1154
    %1722 = vmatprep.subr.bf16.mxu0 %v1147
    %1723 = vmatpush1.bf16.msra.mxu0 %v1146
    %1724 = vmatprep.subr.bf16.mxu0 %v1139
    %1725 = vmatpush1.bf16.msra.mxu0 %v1138
    %1726 = vmatprep.subr.bf16.mxu0 %v1131
    %1727 = vmatpush1.bf16.msra.mxu0 %v1130
    %1728 = vmatprep.subr.bf16.mxu0 %v1123
    %1729 = vmatpush1.bf16.msra.mxu0 %v1122
    %1730 = vmatprep.subr.bf16.mxu0 %v1243
    %1731 = vmatpush2.bf16.msra.mxu0 %v1242
    %1732 = vmatprep.subr.bf16.mxu0 %v1235
    %1733 = vmatpush2.bf16.msra.mxu0 %v1234
    %1734 = vmatprep.subr.bf16.mxu0 %v1227
    %1735 = vmatpush2.bf16.msra.mxu0 %v1226
    %1736 = vmatprep.subr.bf16.mxu0 %v1219
    %1737 = vmatpush2.bf16.msra.mxu0 %v1218
    %1738 = vmatprep.subr.bf16.mxu0 %v1211
    %1739 = vmatpush2.bf16.msra.mxu0 %v1210
    %1740 = vmatprep.subr.bf16.mxu0 %v1203
    %1741 = vmatpush2.bf16.msra.mxu0 %v1202
    %1742 = vmatprep.subr.bf16.mxu0 %v1195
    %1743 = vmatpush2.bf16.msra.mxu0 %v1194
    %1744 = vmatprep.subr.bf16.mxu0 %v1187
    %1745 = vmatpush2.bf16.msra.mxu0 %v1186
    %1746 = vmatprep.mubr.bf16.mxu0 %v51
    %1747 = vmatmul.mubr.bf16.gmra.mxu0 %v50
    %v1748 = vpop.f32.mrf.mxu0
    %v1749 = vadd.f32 %v323, %v1748
    %v1750 = vpop.f32.mrf.mxu0
    %v1751 = vadd.f32 %v327, %v1750
    %v1752 = vpop.f32.mrf.mxu0
    %v1753 = vpop.f32.mrf.mxu0
    %1754 = vdwg.mxu0
    %1755 = vmatprep.subr.bf16.mxu0 %v1307
    %1756 = vmatpush1.bf16.msra.mxu0 %v1306
    %1757 = vmatprep.subr.bf16.mxu0 %v1299
    %1758 = vmatpush1.bf16.msra.mxu0 %v1298
    %1759 = vmatprep.subr.bf16.mxu0 %v1291
    %1760 = vmatpush1.bf16.msra.mxu0 %v1290
    %1761 = vmatprep.subr.bf16.mxu0 %v1283
    %1762 = vmatpush1.bf16.msra.mxu0 %v1282
    %1763 = vmatprep.subr.bf16.mxu0 %v1275
    %1764 = vmatpush1.bf16.msra.mxu0 %v1274
    %1765 = vmatprep.subr.bf16.mxu0 %v1267
    %1766 = vmatpush1.bf16.msra.mxu0 %v1266
    %1767 = vmatprep.subr.bf16.mxu0 %v1259
    %1768 = vmatpush1.bf16.msra.mxu0 %v1258
    %1769 = vmatprep.subr.bf16.mxu0 %v1251
    %1770 = vmatpush1.bf16.msra.mxu0 %v1250
    %1771 = vmatprep.subr.bf16.mxu0 %v1371
    %1772 = vmatpush2.bf16.msra.mxu0 %v1370
    %1773 = vmatprep.subr.bf16.mxu0 %v1363
    %1774 = vmatpush2.bf16.msra.mxu0 %v1362
    %1775 = vmatprep.subr.bf16.mxu0 %v1355
    %1776 = vmatpush2.bf16.msra.mxu0 %v1354
    %1777 = vmatprep.subr.bf16.mxu0 %v1347
    %1778 = vmatpush2.bf16.msra.mxu0 %v1346
    %1779 = vmatprep.subr.bf16.mxu0 %v1339
    %1780 = vmatpush2.bf16.msra.mxu0 %v1338
    %1781 = vmatprep.subr.bf16.mxu0 %v1331
    %1782 = vmatpush2.bf16.msra.mxu0 %v1330
    %1783 = vmatprep.subr.bf16.mxu0 %v1323
    %1784 = vmatpush2.bf16.msra.mxu0 %v1322
    %1785 = vmatprep.subr.bf16.mxu0 %v1315
    %1786 = vmatpush2.bf16.msra.mxu0 %v1314
    %1787 = vmatprep.mubr.bf16.mxu0 %v53
    %1788 = vmatmul.mubr.bf16.gmra.mxu0 %v52
    %v1789 = vpop.f32.mrf.mxu0
    %v1790 = vadd.f32 %v1749, %v1789
    %v1791 = vpop.f32.mrf.mxu0
    %v1792 = vadd.f32 %v1751, %v1791
    %v1793 = vpop.f32.mrf.mxu0
    %v1794 = vpop.f32.mrf.mxu0
    %1795 = vdwg.mxu0
    %1796 = vmatprep.subr.bf16.mxu0 %v1181
    %1797 = vmatpush1.bf16.msra.mxu0 %v1180
    %1798 = vmatprep.subr.bf16.mxu0 %v1173
    %1799 = vmatpush1.bf16.msra.mxu0 %v1172
    %1800 = vmatprep.subr.bf16.mxu0 %v1165
    %1801 = vmatpush1.bf16.msra.mxu0 %v1164
    %1802 = vmatprep.subr.bf16.mxu0 %v1157
    %1803 = vmatpush1.bf16.msra.mxu0 %v1156
    %1804 = vmatprep.subr.bf16.mxu0 %v1149
    %1805 = vmatpush1.bf16.msra.mxu0 %v1148
    %1806 = vmatprep.subr.bf16.mxu0 %v1141
    %1807 = vmatpush1.bf16.msra.mxu0 %v1140
    %1808 = vmatprep.subr.bf16.mxu0 %v1133
    %1809 = vmatpush1.bf16.msra.mxu0 %v1132
    %1810 = vmatprep.subr.bf16.mxu0 %v1125
    %1811 = vmatpush1.bf16.msra.mxu0 %v1124
    %1812 = vmatprep.subr.bf16.mxu0 %v1245
    %1813 = vmatpush2.bf16.msra.mxu0 %v1244
    %1814 = vmatprep.subr.bf16.mxu0 %v1237
    %1815 = vmatpush2.bf16.msra.mxu0 %v1236
    %1816 = vmatprep.subr.bf16.mxu0 %v1229
    %1817 = vmatpush2.bf16.msra.mxu0 %v1228
    %1818 = vmatprep.subr.bf16.mxu0 %v1221
    %1819 = vmatpush2.bf16.msra.mxu0 %v1220
    %1820 = vmatprep.subr.bf16.mxu0 %v1213
    %1821 = vmatpush2.bf16.msra.mxu0 %v1212
    %1822 = vmatprep.subr.bf16.mxu0 %v1205
    %1823 = vmatpush2.bf16.msra.mxu0 %v1204
    %1824 = vmatprep.subr.bf16.mxu0 %v1197
    %1825 = vmatpush2.bf16.msra.mxu0 %v1196
    %1826 = vmatprep.subr.bf16.mxu0 %v1189
    %1827 = vmatpush2.bf16.msra.mxu0 %v1188
    %1828 = vmatprep.mubr.bf16.mxu0 %v51
    %1829 = vmatmul.mubr.bf16.gmra.mxu0 %v50
    %v1830 = vpop.f32.mrf.mxu0
    %v1831 = vadd.f32 %v331, %v1830
    %v1832 = vpop.f32.mrf.mxu0
    %v1833 = vadd.f32 %v335, %v1832
    %v1834 = vpop.f32.mrf.mxu0
    %v1835 = vpop.f32.mrf.mxu0
    %1836 = vdwg.mxu0
    %1837 = vmatprep.subr.bf16.mxu0 %v1309
    %1838 = vmatpush1.bf16.msra.mxu0 %v1308
    %1839 = vmatprep.subr.bf16.mxu0 %v1301
    %1840 = vmatpush1.bf16.msra.mxu0 %v1300
    %1841 = vmatprep.subr.bf16.mxu0 %v1293
    %1842 = vmatpush1.bf16.msra.mxu0 %v1292
    %1843 = vmatprep.subr.bf16.mxu0 %v1285
    %1844 = vmatpush1.bf16.msra.mxu0 %v1284
    %1845 = vmatprep.subr.bf16.mxu0 %v1277
    %1846 = vmatpush1.bf16.msra.mxu0 %v1276
    %1847 = vmatprep.subr.bf16.mxu0 %v1269
    %1848 = vmatpush1.bf16.msra.mxu0 %v1268
    %1849 = vmatprep.subr.bf16.mxu0 %v1261
    %1850 = vmatpush1.bf16.msra.mxu0 %v1260
    %1851 = vmatprep.subr.bf16.mxu0 %v1253
    %1852 = vmatpush1.bf16.msra.mxu0 %v1252
    %1853 = vmatprep.subr.bf16.mxu0 %v1373
    %1854 = vmatpush2.bf16.msra.mxu0 %v1372
    %1855 = vmatprep.subr.bf16.mxu0 %v1365
    %1856 = vmatpush2.bf16.msra.mxu0 %v1364
    %1857 = vmatprep.subr.bf16.mxu0 %v1357
    %1858 = vmatpush2.bf16.msra.mxu0 %v1356
    %1859 = vmatprep.subr.bf16.mxu0 %v1349
    %1860 = vmatpush2.bf16.msra.mxu0 %v1348
    %1861 = vmatprep.subr.bf16.mxu0 %v1341
    %1862 = vmatpush2.bf16.msra.mxu0 %v1340
    %1863 = vmatprep.subr.bf16.mxu0 %v1333
    %1864 = vmatpush2.bf16.msra.mxu0 %v1332
    %1865 = vmatprep.subr.bf16.mxu0 %v1325
    %1866 = vmatpush2.bf16.msra.mxu0 %v1324
    %1867 = vmatprep.subr.bf16.mxu0 %v1317
    %1868 = vmatpush2.bf16.msra.mxu0 %v1316
    %1869 = vmatprep.mubr.bf16.mxu0 %v53
    %1870 = vmatmul.mubr.bf16.gmra.mxu0 %v52
    %v1871 = vpop.f32.mrf.mxu0
    %v1872 = vadd.f32 %v1831, %v1871
    %v1873 = vpop.f32.mrf.mxu0
    %v1874 = vadd.f32 %v1833, %v1873
    %v1875 = vpop.f32.mrf.mxu0
    %v1876 = vpop.f32.mrf.mxu0
    %1877 = vdwg.mxu0
    %1878 = vmatprep.subr.bf16.mxu0 %v1183
    %1879 = vmatpush1.bf16.msra.mxu0 %v1182
    %1880 = vmatprep.subr.bf16.mxu0 %v1175
    %1881 = vmatpush1.bf16.msra.mxu0 %v1174
    %1882 = vmatprep.subr.bf16.mxu0 %v1167
    %1883 = vmatpush1.bf16.msra.mxu0 %v1166
    %1884 = vmatprep.subr.bf16.mxu0 %v1159
    %1885 = vmatpush1.bf16.msra.mxu0 %v1158
    %1886 = vmatprep.subr.bf16.mxu0 %v1151
    %1887 = vmatpush1.bf16.msra.mxu0 %v1150
    %1888 = vmatprep.subr.bf16.mxu0 %v1143
    %1889 = vmatpush1.bf16.msra.mxu0 %v1142
    %1890 = vmatprep.subr.bf16.mxu0 %v1135
    %1891 = vmatpush1.bf16.msra.mxu0 %v1134
    %1892 = vmatprep.subr.bf16.mxu0 %v1127
    %1893 = vmatpush1.bf16.msra.mxu0 %v1126
    %1894 = vmatprep.subr.bf16.mxu0 %v1247
    %1895 = vmatpush2.bf16.msra.mxu0 %v1246
    %1896 = vmatprep.subr.bf16.mxu0 %v1239
    %1897 = vmatpush2.bf16.msra.mxu0 %v1238
    %1898 = vmatprep.subr.bf16.mxu0 %v1231
    %1899 = vmatpush2.bf16.msra.mxu0 %v1230
    %1900 = vmatprep.subr.bf16.mxu0 %v1223
    %1901 = vmatpush2.bf16.msra.mxu0 %v1222
    %1902 = vmatprep.subr.bf16.mxu0 %v1215
    %1903 = vmatpush2.bf16.msra.mxu0 %v1214
    %1904 = vmatprep.subr.bf16.mxu0 %v1207
    %1905 = vmatpush2.bf16.msra.mxu0 %v1206
    %1906 = vmatprep.subr.bf16.mxu0 %v1199
    %1907 = vmatpush2.bf16.msra.mxu0 %v1198
    %1908 = vmatprep.subr.bf16.mxu0 %v1191
    %1909 = vmatpush2.bf16.msra.mxu0 %v1190
    %1910 = vmatprep.mubr.bf16.mxu0 %v51
    %1911 = vmatmul.mubr.bf16.gmra.mxu0 %v50
    %v1912 = vpop.f32.mrf.mxu0
    %v1913 = vadd.f32 %v339, %v1912
    %v1914 = vpop.f32.mrf.mxu0
    %v1915 = vadd.f32 %v343, %v1914
    %v1916 = vpop.f32.mrf.mxu0
    %v1917 = vpop.f32.mrf.mxu0
    %1918 = vdwg.mxu0
    %1919 = vmatprep.subr.bf16.mxu0 %v1311
    %1920 = vmatpush1.bf16.msra.mxu0 %v1310
    %1921 = vmatprep.subr.bf16.mxu0 %v1303
    %1922 = vmatpush1.bf16.msra.mxu0 %v1302
    %1923 = vmatprep.subr.bf16.mxu0 %v1295
    %1924 = vmatpush1.bf16.msra.mxu0 %v1294
    %1925 = vmatprep.subr.bf16.mxu0 %v1287
    %1926 = vmatpush1.bf16.msra.mxu0 %v1286
    %1927 = vmatprep.subr.bf16.mxu0 %v1279
    %1928 = vmatpush1.bf16.msra.mxu0 %v1278
    %1929 = vmatprep.subr.bf16.mxu0 %v1271
    %1930 = vmatpush1.bf16.msra.mxu0 %v1270
    %1931 = vmatprep.subr.bf16.mxu0 %v1263
    %1932 = vmatpush1.bf16.msra.mxu0 %v1262
    %1933 = vmatprep.subr.bf16.mxu0 %v1255
    %1934 = vmatpush1.bf16.msra.mxu0 %v1254
    %1935 = vmatprep.subr.bf16.mxu0 %v1375
    %1936 = vmatpush2.bf16.msra.mxu0 %v1374
    %1937 = vmatprep.subr.bf16.mxu0 %v1367
    %1938 = vmatpush2.bf16.msra.mxu0 %v1366
    %1939 = vmatprep.subr.bf16.mxu0 %v1359
    %1940 = vmatpush2.bf16.msra.mxu0 %v1358
    %1941 = vmatprep.subr.bf16.mxu0 %v1351
    %1942 = vmatpush2.bf16.msra.mxu0 %v1350
    %1943 = vmatprep.subr.bf16.mxu0 %v1343
    %1944 = vmatpush2.bf16.msra.mxu0 %v1342
    %1945 = vmatprep.subr.bf16.mxu0 %v1335
    %1946 = vmatpush2.bf16.msra.mxu0 %v1334
    %1947 = vmatprep.subr.bf16.mxu0 %v1327
    %1948 = vmatpush2.bf16.msra.mxu0 %v1326
    %1949 = vmatprep.subr.bf16.mxu0 %v1319
    %1950 = vmatpush2.bf16.msra.mxu0 %v1318
    %1951 = vmatprep.mubr.bf16.mxu0 %v53
    %1952 = vmatmul.mubr.bf16.gmra.mxu0 %v52
    %v1953 = vpop.f32.mrf.mxu0
    %v1954 = vadd.f32 %v1913, %v1953
    %v1955 = vpop.f32.mrf.mxu0
    %v1956 = vadd.f32 %v1915, %v1955
    %v1957 = vpop.f32.mrf.mxu0
    %v1958 = vpop.f32.mrf.mxu0
    %1959 = vdwg.mxu0
    %v1960 = vxor.u32 %v1708, 2147483648
    %v1961 = vxor.u32 %v1710, 2147483648
    %v1962 = vmul.f32 %v1960, 1.442695
    %v1963 = vpow.pop %v1962
    %v1964 = vmul.f32 %v1961, 1.442695
    %v1965 = vpow.pop %v1964
    %v1966 = vadd.f32 %v1963, 1.0
    %v1967 = vadd.f32 %v1965, 1.0
    %v1968 = vrcp.pop %v1966
    %v1969 = vmul.f32 1.0, %v1968
    %v1970 = vrcp.pop %v1967
    %v1971 = vmul.f32 1.0, %v1970
    %v1972 = vxor.u32 %v1790, 2147483648
    %v1973 = vxor.u32 %v1792, 2147483648
    %v1974 = vmul.f32 %v1972, 1.442695
    %v1975 = vpow.pop %v1974
    %v1976 = vmul.f32 %v1973, 1.442695
    %v1977 = vpow.pop %v1976
    %v1978 = vadd.f32 %v1975, 1.0
    %v1979 = vadd.f32 %v1977, 1.0
    %v1980 = vrcp.pop %v1978
    %v1981 = vmul.f32 1.0, %v1980
    %v1982 = vrcp.pop %v1979
    %v1983 = vmul.f32 1.0, %v1982
    %v1984 = vtanh.pop %v1872
    %v1985 = vtanh.pop %v1874
    %v1986 = vxor.u32 %v1954, 2147483648
    %v1987 = vxor.u32 %v1956, 2147483648
    %v1988 = vmul.f32 %v1986, 1.442695
    %v1989 = vpow.pop %v1988
    %v1990 = vmul.f32 %v1987, 1.442695
    %v1991 = vpow.pop %v1990
    %v1992 = vadd.f32 %v1989, 1.0
    %v1993 = vadd.f32 %v1991, 1.0
    %v1994 = vrcp.pop %v1992
    %v1995 = vmul.f32 1.0, %v1994
    %v1996 = vrcp.pop %v1993
    %v1997 = vmul.f32 1.0, %v1996
    %v1998 = vmul.f32 %v1981, 0.0
    %v1999 = vmul.f32 %v1983, 0.0
    %v2000 = vmul.f32 %v1969, %v1984
    %v2001 = vmul.f32 %v1971, %v1985
    %v2002 = vadd.f32 %v1998, %v2000
    %v2003 = vadd.f32 %v1999, %v2001
    %v2004 = vtanh.pop %v2002
    %v2005 = vtanh.pop %v2003
    %v2006 = vmul.f32 %v1995, %v2004
    %v2007 = vmul.f32 %v1997, %v2005
    loop: start=1, step=1, limit=3
    $region26: #{conv_attention_lstm_forward.5} parent=1 // loop_pre_header
      _
    $region27: #{conv_attention_lstm_forward.5} parent=1 // loop_header
      %s2009 = sphi 1, %s2013
      %p2010 = scmp.ge.s32.totalorder %s2009, 3
      %v2014 = vphi %v2006, %v4929
      %v2015 = vphi %v2007, %v4930
      %v2016 = vphi %v2002, %v4925
      %v2017 = vphi %v2003, %v4926
    $region28: #{conv_attention_lstm_forward.5} parent=1 // loop_header_branch
      %2012 = sbr.rel (%p2010) target = $region32
    $region29: #{conv_attention_lstm_forward.5} parent=1 // loop_body
      %s2018 = smul.u32 %s2009, 32
      %s2019 = scalar_lea.vmem %s1, %s2018
      %v2020 = vld [vmem:[%s2019] sm:$0xff]
      %v2021 = vld [vmem:[%s2019 + $0x8] sm:$0xff]
      %v2022 = vld [vmem:[%s2019 + $0x10] sm:$0xff]
      %v2023 = vld [vmem:[%s2019 + $0x18] sm:$0xff]
      %v2026 = vunpack.c.l.s4 1966171168
      %v2027 = vunpack.c.0.s8 %v2026
      %v2028 = vlaneseq
      %v2029 = vshrl.u32 %v2028, 7
      %v2030 = vsub.s32 %v2027, %v2029
      %v2031 = vrot.slane %v2014, %v2030
      %v2032 = vcombine.high %v2031, %v2031
      %v2034 = vunpack.c.l.s4 1966171168
      %v2035 = vunpack.c.0.s8 %v2034
      %v2036 = vlaneseq
      %v2037 = vshrl.u32 %v2036, 7
      %v2038 = vsub.s32 %v2035, %v2037
      %v2039 = vrot.slane %v2031, %v2038
      %v2041 = vunpack.c.l.s4 1966171168
      %v2042 = vunpack.c.0.s8 %v2041
      %v2043 = vlaneseq
      %v2044 = vshrl.u32 %v2043, 7
      %v2045 = vsub.s32 %v2042, %v2044
      %v2046 = vrot.slane %v2032, %v2045
      %vm2049 = vcmask 122880
      %2050 = vst.msk [vmem:[#allocation3] sm:$0x1] %vm2049, %v2039
      %2051 = vst.msk [vmem:[#allocation3 + $0x10] sm:$0x1] %vm2049, %v2046
      %v2052 = vlaneseq
      %v2053 = vshrl.u32 %v2052, 7
      %v2054 = vsub.s32 0, %v2053
      %v2055 = vrot.slane %v2039, %v2054
      %v2056 = vlaneseq
      %v2057 = vshrl.u32 %v2056, 7
      %v2058 = vsub.s32 0, %v2057
      %v2059 = vrot.slane %v2046, %v2058
      %2060 = vrot.lane.b32.xlu0 %v2055, 112
      %v2061 = vpop.permute.xlu0 %2060
      %2062 = vrot.lane.b32.xlu0 %v2059, 112
      %v2063 = vpop.permute.xlu0 %2062
      %2066 = vst.msk [vmem:[#allocation3 + $0x1] sm:$0x1] %vm2049, %v2061
      %2067 = vst.msk [vmem:[#allocation3 + $0x11] sm:$0x1] %vm2049, %v2063
      %2068 = vrot.lane.b32.xlu0 %v2055, 96
      %v2069 = vpop.permute.xlu0 %2068
      %2070 = vrot.lane.b32.xlu0 %v2059, 96
      %v2071 = vpop.permute.xlu0 %2070
      %2074 = vst.msk [vmem:[#allocation3 + $0x2] sm:$0x1] %vm2049, %v2069
      %2075 = vst.msk [vmem:[#allocation3 + $0x12] sm:$0x1] %vm2049, %v2071
      %2076 = vrot.lane.b32.xlu0 %v2055, 80
      %v2077 = vpop.permute.xlu0 %2076
      %2078 = vrot.lane.b32.xlu0 %v2059, 80
      %v2079 = vpop.permute.xlu0 %2078
      %2082 = vst.msk [vmem:[#allocation3 + $0x3] sm:$0x1] %vm2049, %v2077
      %2083 = vst.msk [vmem:[#allocation3 + $0x13] sm:$0x1] %vm2049, %v2079
      %2084 = vrot.lane.b32.xlu0 %v2055, 64
      %v2085 = vpop.permute.xlu0 %2084
      %2086 = vrot.lane.b32.xlu0 %v2059, 64
      %v2087 = vpop.permute.xlu0 %2086
      %2090 = vst.msk [vmem:[#allocation3 + $0x4] sm:$0x1] %vm2049, %v2085
      %2091 = vst.msk [vmem:[#allocation3 + $0x14] sm:$0x1] %vm2049, %v2087
      %2092 = vrot.lane.b32.xlu0 %v2055, 48
      %v2093 = vpop.permute.xlu0 %2092
      %2094 = vrot.lane.b32.xlu0 %v2059, 48
      %v2095 = vpop.permute.xlu0 %2094
      %2098 = vst.msk [vmem:[#allocation3 + $0x5] sm:$0x1] %vm2049, %v2093
      %2099 = vst.msk [vmem:[#allocation3 + $0x15] sm:$0x1] %vm2049, %v2095
      %2100 = vrot.lane.b32.xlu0 %v2055, 32
      %v2101 = vpop.permute.xlu0 %2100
      %2102 = vrot.lane.b32.xlu0 %v2059, 32
      %v2103 = vpop.permute.xlu0 %2102
      %2106 = vst.msk [vmem:[#allocation3 + $0x6] sm:$0x1] %vm2049, %v2101
      %2107 = vst.msk [vmem:[#allocation3 + $0x16] sm:$0x1] %vm2049, %v2103
      %2108 = vrot.lane.b32.xlu0 %v2055, 16
      %v2109 = vpop.permute.xlu0 %2108
      %2110 = vrot.lane.b32.xlu0 %v2059, 16
      %v2111 = vpop.permute.xlu0 %2110
      %2114 = vst.msk [vmem:[#allocation3 + $0x7] sm:$0x1] %vm2049, %v2109
      %2115 = vst.msk [vmem:[#allocation3 + $0x17] sm:$0x1] %vm2049, %v2111
      %v2118 = vunpack.c.l.s4 1966171168
      %v2119 = vunpack.c.0.s8 %v2118
      %v2120 = vlaneseq
      %v2121 = vshrl.u32 %v2120, 7
      %v2122 = vsub.s32 %v2119, %v2121
      %v2123 = vrot.slane %v2015, %v2122
      %v2124 = vcombine.high %v2123, %v2123
      %v2126 = vunpack.c.l.s4 1966171168
      %v2127 = vunpack.c.0.s8 %v2126
      %v2128 = vlaneseq
      %v2129 = vshrl.u32 %v2128, 7
      %v2130 = vsub.s32 %v2127, %v2129
      %v2131 = vrot.slane %v2123, %v2130
      %v2133 = vunpack.c.l.s4 1966171168
      %v2134 = vunpack.c.0.s8 %v2133
      %v2135 = vlaneseq
      %v2136 = vshrl.u32 %v2135, 7
      %v2137 = vsub.s32 %v2134, %v2136
      %v2138 = vrot.slane %v2124, %v2137
      %2141 = vst.msk [vmem:[#allocation3 + $0x8] sm:$0x1] %vm2049, %v2131
      %2142 = vst.msk [vmem:[#allocation3 + $0x18] sm:$0x1] %vm2049, %v2138
      %v2143 = vlaneseq
      %v2144 = vshrl.u32 %v2143, 7
      %v2145 = vsub.s32 0, %v2144
      %v2146 = vrot.slane %v2131, %v2145
      %v2147 = vlaneseq
      %v2148 = vshrl.u32 %v2147, 7
      %v2149 = vsub.s32 0, %v2148
      %v2150 = vrot.slane %v2138, %v2149
      %2151 = vrot.lane.b32.xlu0 %v2146, 112
      %v2152 = vpop.permute.xlu0 %2151
      %2153 = vrot.lane.b32.xlu0 %v2150, 112
      %v2154 = vpop.permute.xlu0 %2153
      %2157 = vst.msk [vmem:[#allocation3 + $0x9] sm:$0x1] %vm2049, %v2152
      %2158 = vst.msk [vmem:[#allocation3 + $0x19] sm:$0x1] %vm2049, %v2154
      %2159 = vrot.lane.b32.xlu0 %v2146, 96
      %v2160 = vpop.permute.xlu0 %2159
      %2161 = vrot.lane.b32.xlu0 %v2150, 96
      %v2162 = vpop.permute.xlu0 %2161
      %2165 = vst.msk [vmem:[#allocation3 + $0xa] sm:$0x1] %vm2049, %v2160
      %2166 = vst.msk [vmem:[#allocation3 + $0x1a] sm:$0x1] %vm2049, %v2162
      %2167 = vrot.lane.b32.xlu0 %v2146, 80
      %v2168 = vpop.permute.xlu0 %2167
      %2169 = vrot.lane.b32.xlu0 %v2150, 80
      %v2170 = vpop.permute.xlu0 %2169
      %2173 = vst.msk [vmem:[#allocation3 + $0xb] sm:$0x1] %vm2049, %v2168
      %2174 = vst.msk [vmem:[#allocation3 + $0x1b] sm:$0x1] %vm2049, %v2170
      %2175 = vrot.lane.b32.xlu0 %v2146, 64
      %v2176 = vpop.permute.xlu0 %2175
      %2177 = vrot.lane.b32.xlu0 %v2150, 64
      %v2178 = vpop.permute.xlu0 %2177
      %2181 = vst.msk [vmem:[#allocation3 + $0xc] sm:$0x1] %vm2049, %v2176
      %2182 = vst.msk [vmem:[#allocation3 + $0x1c] sm:$0x1] %vm2049, %v2178
      %2183 = vrot.lane.b32.xlu0 %v2146, 48
      %v2184 = vpop.permute.xlu0 %2183
      %2185 = vrot.lane.b32.xlu0 %v2150, 48
      %v2186 = vpop.permute.xlu0 %2185
      %2189 = vst.msk [vmem:[#allocation3 + $0xd] sm:$0x1] %vm2049, %v2184
      %2190 = vst.msk [vmem:[#allocation3 + $0x1d] sm:$0x1] %vm2049, %v2186
      %2191 = vrot.lane.b32.xlu0 %v2146, 32
      %v2192 = vpop.permute.xlu0 %2191
      %2193 = vrot.lane.b32.xlu0 %v2150, 32
      %v2194 = vpop.permute.xlu0 %2193
      %2197 = vst.msk [vmem:[#allocation3 + $0xe] sm:$0x1] %vm2049, %v2192
      %2198 = vst.msk [vmem:[#allocation3 + $0x1e] sm:$0x1] %vm2049, %v2194
      %2199 = vrot.lane.b32.xlu0 %v2146, 16
      %v2200 = vpop.permute.xlu0 %2199
      %2201 = vrot.lane.b32.xlu0 %v2150, 16
      %v2202 = vpop.permute.xlu0 %2201
      %2205 = vst.msk [vmem:[#allocation3 + $0xf] sm:$0x1] %vm2049, %v2200
      %2206 = vst.msk [vmem:[#allocation3 + $0x1f] sm:$0x1] %vm2049, %v2202
      %v2207 = vld [vmem:[#allocation3] sm:$0xff]
      %v2208 = vld [vmem:[#allocation3 + $0x8] sm:$0xff]
      %v2209 = vld [vmem:[#allocation3 + $0x10] sm:$0xff]
      %v2210 = vld [vmem:[#allocation3 + $0x18] sm:$0xff]
      %vm2211 = vcmask 130048
      %v2213 = vsel %vm2211, %v2020, 0
      %v2216 = vsel %vm2211, %v2021, 0
      %v2219 = vsel %vm2211, %v2207, 0
      %v2222 = vsel %vm2211, %v2208, 0
      %2224 = vmatprep.subr.mxu0 0.0
      %2225 = vmatpush1.xpose.msra.mxu0 0.0
      %2226 = vmatprep.subr.mxu0 0.0
      %2227 = vmatpush1.xpose.msra.mxu0 0.0
      %2228 = vmatprep.subr.mxu0 0.0
      %2229 = vmatpush1.xpose.msra.mxu0 0.0
      %2230 = vmatprep.subr.mxu0 0.0
      %2231 = vmatpush1.xpose.msra.mxu0 0.0
      %2232 = vmatprep.subr.mxu0 0.0
      %2233 = vmatpush1.xpose.msra.mxu0 0.0
      %2234 = vmatprep.subr.mxu0 0.0
      %2235 = vmatpush1.xpose.msra.mxu0 0.0
      %2236 = vmatprep.subr.mxu0 0.0
      %2237 = vmatpush1.xpose.msra.mxu0 0.0
      %2238 = vmatprep.subr.mxu0 0.0
      %2239 = vmatpush1.xpose.msra.mxu0 0.0
      %2240 = vmatprep.subr.mxu0 0.0
      %2241 = vmatpush1.xpose.msra.mxu0 0.0
      %2242 = vmatprep.subr.mxu0 0.0
      %2243 = vmatpush1.xpose.msra.mxu0 0.0
      %2244 = vmatprep.subr.mxu0 0.0
      %2245 = vmatpush1.xpose.msra.mxu0 0.0
      %2246 = vmatprep.subr.mxu0 0.0
      %2247 = vmatpush1.xpose.msra.mxu0 0.0
      %2248 = vmatprep.subr.mxu0 0.0
      %2249 = vmatpush1.xpose.msra.mxu0 0.0
      %2250 = vmatprep.subr.mxu0 0.0
      %2251 = vmatpush1.xpose.msra.mxu0 0.0
      %2252 = vmatprep.subr.mxu0 0.0
      %2253 = vmatpush1.xpose.msra.mxu0 %v2222
      %2254 = vmatprep.subr.mxu0 0.0
      %2255 = vmatpush1.xpose.msra.mxu0 %v2219
      %2256 = vmatprep.subr.mxu0 0.0
      %2257 = vmatpush2.xpose.msra.mxu0 0.0
      %2258 = vmatprep.subr.mxu0 0.0
      %2259 = vmatpush2.xpose.msra.mxu0 0.0
      %2260 = vmatprep.subr.mxu0 0.0
      %2261 = vmatpush2.xpose.msra.mxu0 0.0
      %2262 = vmatprep.subr.mxu0 0.0
      %2263 = vmatpush2.xpose.msra.mxu0 0.0
      %2264 = vmatprep.subr.mxu0 0.0
      %2265 = vmatpush2.xpose.msra.mxu0 0.0
      %2266 = vmatprep.subr.mxu0 0.0
      %2267 = vmatpush2.xpose.msra.mxu0 0.0
      %2268 = vmatprep.subr.mxu0 0.0
      %2269 = vmatpush2.xpose.msra.mxu0 0.0
      %2270 = vmatprep.subr.mxu0 0.0
      %2271 = vmatpush2.xpose.msra.mxu0 0.0
      %2272 = vmatprep.subr.mxu0 0.0
      %2273 = vmatpush2.xpose.msra.mxu0 0.0
      %2274 = vmatprep.subr.mxu0 0.0
      %2275 = vmatpush2.xpose.msra.mxu0 0.0
      %2276 = vmatprep.subr.mxu0 0.0
      %2277 = vmatpush2.xpose.msra.mxu0 0.0
      %2278 = vmatprep.subr.mxu0 0.0
      %2279 = vmatpush2.xpose.msra.mxu0 0.0
      %2280 = vmatprep.subr.mxu0 0.0
      %2281 = vmatpush2.xpose.msra.mxu0 0.0
      %2282 = vmatprep.subr.mxu0 0.0
      %2283 = vmatpush2.xpose.msra.mxu0 0.0
      %2284 = vmatprep.subr.mxu0 0.0
      %2285 = vmatpush2.xpose.msra.mxu0 0.0
      %2286 = vmatprep.subr.mxu0 0.0
      %2287 = vmatpush2.xpose.msra.mxu0 0.0
      %2288 = vmatprep.mubr.f32.mxu0 0.0
      %2289 = vmatmul.mubr.f32.gmra.mxu0 %v2213
      %v2290 = vpop.f32.mrf.mxu0
      %v2291 = vadd.f32 0.0, %v2290
      %v2292 = vpop.f32.mrf.mxu0
      %2293 = vmatprep.mubr.f32.mxu0 0.0
      %2294 = vmatmul.mubr.f32.gmra.mxu0 %v2216
      %v2295 = vpop.f32.mrf.mxu0
      %v2296 = vadd.f32 0.0, %v2295
      %v2297 = vpop.f32.mrf.mxu0
      %2298 = vdwg.mxu0
      %v2300 = vsel %vm2211, %v2022, 0
      %v2303 = vsel %vm2211, %v2023, 0
      %v2306 = vsel %vm2211, %v2209, 0
      %v2309 = vsel %vm2211, %v2210, 0
      %2311 = vmatprep.subr.mxu0 0.0
      %2312 = vmatpush1.xpose.msra.mxu0 0.0
      %2313 = vmatprep.subr.mxu0 0.0
      %2314 = vmatpush1.xpose.msra.mxu0 0.0
      %2315 = vmatprep.subr.mxu0 0.0
      %2316 = vmatpush1.xpose.msra.mxu0 0.0
      %2317 = vmatprep.subr.mxu0 0.0
      %2318 = vmatpush1.xpose.msra.mxu0 0.0
      %2319 = vmatprep.subr.mxu0 0.0
      %2320 = vmatpush1.xpose.msra.mxu0 0.0
      %2321 = vmatprep.subr.mxu0 0.0
      %2322 = vmatpush1.xpose.msra.mxu0 0.0
      %2323 = vmatprep.subr.mxu0 0.0
      %2324 = vmatpush1.xpose.msra.mxu0 0.0
      %2325 = vmatprep.subr.mxu0 0.0
      %2326 = vmatpush1.xpose.msra.mxu0 0.0
      %2327 = vmatprep.subr.mxu0 0.0
      %2328 = vmatpush1.xpose.msra.mxu0 0.0
      %2329 = vmatprep.subr.mxu0 0.0
      %2330 = vmatpush1.xpose.msra.mxu0 0.0
      %2331 = vmatprep.subr.mxu0 0.0
      %2332 = vmatpush1.xpose.msra.mxu0 0.0
      %2333 = vmatprep.subr.mxu0 0.0
      %2334 = vmatpush1.xpose.msra.mxu0 0.0
      %2335 = vmatprep.subr.mxu0 0.0
      %2336 = vmatpush1.xpose.msra.mxu0 0.0
      %2337 = vmatprep.subr.mxu0 0.0
      %2338 = vmatpush1.xpose.msra.mxu0 0.0
      %2339 = vmatprep.subr.mxu0 0.0
      %2340 = vmatpush1.xpose.msra.mxu0 %v2309
      %2341 = vmatprep.subr.mxu0 0.0
      %2342 = vmatpush1.xpose.msra.mxu0 %v2306
      %2343 = vmatprep.subr.mxu0 0.0
      %2344 = vmatpush2.xpose.msra.mxu0 0.0
      %2345 = vmatprep.subr.mxu0 0.0
      %2346 = vmatpush2.xpose.msra.mxu0 0.0
      %2347 = vmatprep.subr.mxu0 0.0
      %2348 = vmatpush2.xpose.msra.mxu0 0.0
      %2349 = vmatprep.subr.mxu0 0.0
      %2350 = vmatpush2.xpose.msra.mxu0 0.0
      %2351 = vmatprep.subr.mxu0 0.0
      %2352 = vmatpush2.xpose.msra.mxu0 0.0
      %2353 = vmatprep.subr.mxu0 0.0
      %2354 = vmatpush2.xpose.msra.mxu0 0.0
      %2355 = vmatprep.subr.mxu0 0.0
      %2356 = vmatpush2.xpose.msra.mxu0 0.0
      %2357 = vmatprep.subr.mxu0 0.0
      %2358 = vmatpush2.xpose.msra.mxu0 0.0
      %2359 = vmatprep.subr.mxu0 0.0
      %2360 = vmatpush2.xpose.msra.mxu0 0.0
      %2361 = vmatprep.subr.mxu0 0.0
      %2362 = vmatpush2.xpose.msra.mxu0 0.0
      %2363 = vmatprep.subr.mxu0 0.0
      %2364 = vmatpush2.xpose.msra.mxu0 0.0
      %2365 = vmatprep.subr.mxu0 0.0
      %2366 = vmatpush2.xpose.msra.mxu0 0.0
      %2367 = vmatprep.subr.mxu0 0.0
      %2368 = vmatpush2.xpose.msra.mxu0 0.0
      %2369 = vmatprep.subr.mxu0 0.0
      %2370 = vmatpush2.xpose.msra.mxu0 0.0
      %2371 = vmatprep.subr.mxu0 0.0
      %2372 = vmatpush2.xpose.msra.mxu0 0.0
      %2373 = vmatprep.subr.mxu0 0.0
      %2374 = vmatpush2.xpose.msra.mxu0 0.0
      %2375 = vmatprep.mubr.f32.mxu0 0.0
      %2376 = vmatmul.mubr.f32.gmra.mxu0 %v2300
      %v2377 = vpop.f32.mrf.mxu0
      %v2378 = vadd.f32 0.0, %v2377
      %v2379 = vpop.f32.mrf.mxu0
      %2380 = vmatprep.mubr.f32.mxu0 0.0
      %2381 = vmatmul.mubr.f32.gmra.mxu0 %v2303
      %v2382 = vpop.f32.mrf.mxu0
      %v2383 = vadd.f32 0.0, %v2382
      %v2384 = vpop.f32.mrf.mxu0
      %2385 = vdwg.mxu0
      %v2386 = vsel %vm2211, %v2291, -inf
      %2387 = vmax.xlane.f32.xlu0 %v2386
      %v2388 = vpop.xlane.xlu0 %2387
      %v2389 = vsel %vm2211, %v2296, -inf
      %2390 = vmax.xlane.f32.xlu0 %v2389
      %v2391 = vpop.xlane.xlu0 %2390
      %v2392 = vsel %vm2211, %v2378, -inf
      %2393 = vmax.xlane.f32.xlu0 %v2392
      %v2394 = vpop.xlane.xlu0 %2393
      %v2395 = vsel %vm2211, %v2383, -inf
      %2396 = vmax.xlane.f32.xlu0 %v2395
      %v2397 = vpop.xlane.xlu0 %2396
      %v2398 = vmax.f32 %v2388, %v2391
      %v2399 = vrot.slane %v2398, 4
      %v2400 = vmax.f32 %v2398, %v2399
      %v2401 = vrot.slane %v2400, 2
      %v2402 = vmax.f32 %v2400, %v2401
      %v2403 = vrot.slane %v2402, 1
      %v2404 = vmax.f32 %v2402, %v2403
      %v2405 = vmax.f32 %v2394, %v2397
      %v2406 = vrot.slane %v2405, 4
      %v2407 = vmax.f32 %v2405, %v2406
      %v2408 = vrot.slane %v2407, 2
      %v2409 = vmax.f32 %v2407, %v2408
      %v2410 = vrot.slane %v2409, 1
      %v2411 = vmax.f32 %v2409, %v2410
      %v2412 = vsub.f32 %v2291, %v2404
      %v2413 = vsub.f32 %v2296, %v2404
      %v2414 = vsub.f32 %v2378, %v2411
      %v2415 = vsub.f32 %v2383, %v2411
      %v2416 = vmul.f32 %v2412, 1.442695
      %v2417 = vpow.pop %v2416
      %v2418 = vmul.f32 %v2413, 1.442695
      %v2419 = vpow.pop %v2418
      %v2420 = vmul.f32 %v2414, 1.442695
      %v2421 = vpow.pop %v2420
      %v2422 = vmul.f32 %v2415, 1.442695
      %v2423 = vpow.pop %v2422
      %v2424 = vsel %vm2211, %v2417, 0.0
      %2425 = vadd.xlane.f32.xlu0 %v2424
      %v2426 = vpop.xlane.xlu0 %2425
      %v2427 = vsel %vm2211, %v2419, 0.0
      %2428 = vadd.xlane.f32.xlu0 %v2427
      %v2429 = vpop.xlane.xlu0 %2428
      %v2430 = vsel %vm2211, %v2421, 0.0
      %2431 = vadd.xlane.f32.xlu0 %v2430
      %v2432 = vpop.xlane.xlu0 %2431
      %v2433 = vsel %vm2211, %v2423, 0.0
      %2434 = vadd.xlane.f32.xlu0 %v2433
      %v2435 = vpop.xlane.xlu0 %2434
      %v2436 = vadd.f32 %v2426, %v2429
      %v2437 = vrot.slane %v2436, 4
      %v2438 = vadd.f32 %v2436, %v2437
      %v2439 = vrot.slane %v2438, 2
      %v2440 = vadd.f32 %v2438, %v2439
      %v2441 = vrot.slane %v2440, 1
      %v2442 = vadd.f32 %v2440, %v2441
      %v2443 = vadd.f32 %v2432, %v2435
      %v2444 = vrot.slane %v2443, 4
      %v2445 = vadd.f32 %v2443, %v2444
      %v2446 = vrot.slane %v2445, 2
      %v2447 = vadd.f32 %v2445, %v2446
      %v2448 = vrot.slane %v2447, 1
      %v2449 = vadd.f32 %v2447, %v2448
      %v2450 = vrcp.pop %v2442
      %v2451 = vmul.f32 %v2417, %v2450
      %v2452 = vmul.f32 %v2419, %v2450
      %v2453 = vrcp.pop %v2449
      %v2454 = vmul.f32 %v2421, %v2453
      %v2455 = vmul.f32 %v2423, %v2453
      %2456 = vxpose.xlu0.b32.start [1/16] %v2020, 128
      %2457 = vxpose.xlu0.b32.cont [2/16] %v2021, 128
      %2458 = vxpose.xlu0.b32.cont [3/16] 0.0, 128
      %2459 = vxpose.xlu0.b32.cont [4/16] 0.0, 128
      %2460 = vxpose.xlu0.b32.cont [5/16] 0.0, 128
      %2461 = vxpose.xlu0.b32.cont [6/16] 0.0, 128
      %2462 = vxpose.xlu0.b32.cont [7/16] 0.0, 128
      %2463 = vxpose.xlu0.b32.cont [8/16] 0.0, 128
      %2464 = vxpose.xlu0.b32.cont [9/16] 0.0, 128
      %2465 = vxpose.xlu0.b32.cont [10/16] 0.0, 128
      %2466 = vxpose.xlu0.b32.cont [11/16] 0.0, 128
      %2467 = vxpose.xlu0.b32.cont [12/16] 0.0, 128
      %2468 = vxpose.xlu0.b32.cont [13/16] 0.0, 128
      %2469 = vxpose.xlu0.b32.cont [14/16] 0.0, 128
      %2470 = vxpose.xlu0.b32.cont [15/16] 0.0, 128
      %2471 = vxpose.xlu0.b32.end [16/16] 0.0, 128
      %v2472 = vpop.trf.xlu0
      %v2473 = vpop.trf.xlu0
      %v2474 = vpop.trf.xlu0
      %v2475 = vpop.trf.xlu0
      %v2476 = vpop.trf.xlu0
      %v2477 = vpop.trf.xlu0
      %v2478 = vpop.trf.xlu0
      %v2479 = vpop.trf.xlu0
      %v2480 = vpop.trf.xlu0
      %v2481 = vpop.trf.xlu0
      %v2482 = vpop.trf.xlu0
      %v2483 = vpop.trf.xlu0
      %v2484 = vpop.trf.xlu0
      %v2485 = vpop.trf.xlu0
      %v2486 = vpop.trf.xlu0
      %v2487 = vpop.trf.xlu0
      %v2489 = vsel %vm2211, %v2472, 0
      %v2492 = vsel %vm2211, %v2473, 0
      %2494 = vmatprep.subr.mxu0 0.0
      %2495 = vmatpush1.msra.mxu0 0.0
      %2496 = vmatprep.subr.mxu0 0.0
      %2497 = vmatpush1.msra.mxu0 0.0
      %2498 = vmatprep.subr.mxu0 0.0
      %2499 = vmatpush1.msra.mxu0 0.0
      %2500 = vmatprep.subr.mxu0 0.0
      %2501 = vmatpush1.msra.mxu0 0.0
      %2502 = vmatprep.subr.mxu0 0.0
      %2503 = vmatpush1.msra.mxu0 0.0
      %2504 = vmatprep.subr.mxu0 0.0
      %2505 = vmatpush1.msra.mxu0 0.0
      %2506 = vmatprep.subr.mxu0 0.0
      %2507 = vmatpush1.msra.mxu0 0.0
      %2508 = vmatprep.subr.mxu0 0.0
      %2509 = vmatpush1.msra.mxu0 0.0
      %2510 = vmatprep.subr.mxu0 0.0
      %2511 = vmatpush1.msra.mxu0 0.0
      %2512 = vmatprep.subr.mxu0 0.0
      %2513 = vmatpush1.msra.mxu0 0.0
      %2514 = vmatprep.subr.mxu0 0.0
      %2515 = vmatpush1.msra.mxu0 0.0
      %2516 = vmatprep.subr.mxu0 0.0
      %2517 = vmatpush1.msra.mxu0 0.0
      %2518 = vmatprep.subr.mxu0 0.0
      %2519 = vmatpush1.msra.mxu0 0.0
      %2520 = vmatprep.subr.mxu0 0.0
      %2521 = vmatpush1.msra.mxu0 0.0
      %2522 = vmatprep.subr.mxu0 0.0
      %2523 = vmatpush1.msra.mxu0 %v2452
      %2524 = vmatprep.subr.mxu0 0.0
      %2525 = vmatpush1.msra.mxu0 %v2451
      %2526 = vmatprep.subr.mxu0 0.0
      %2527 = vmatpush2.msra.mxu0 0.0
      %2528 = vmatprep.subr.mxu0 0.0
      %2529 = vmatpush2.msra.mxu0 0.0
      %2530 = vmatprep.subr.mxu0 0.0
      %2531 = vmatpush2.msra.mxu0 0.0
      %2532 = vmatprep.subr.mxu0 0.0
      %2533 = vmatpush2.msra.mxu0 0.0
      %2534 = vmatprep.subr.mxu0 0.0
      %2535 = vmatpush2.msra.mxu0 0.0
      %2536 = vmatprep.subr.mxu0 0.0
      %2537 = vmatpush2.msra.mxu0 0.0
      %2538 = vmatprep.subr.mxu0 0.0
      %2539 = vmatpush2.msra.mxu0 0.0
      %2540 = vmatprep.subr.mxu0 0.0
      %2541 = vmatpush2.msra.mxu0 0.0
      %2542 = vmatprep.subr.mxu0 0.0
      %2543 = vmatpush2.msra.mxu0 0.0
      %2544 = vmatprep.subr.mxu0 0.0
      %2545 = vmatpush2.msra.mxu0 0.0
      %2546 = vmatprep.subr.mxu0 0.0
      %2547 = vmatpush2.msra.mxu0 0.0
      %2548 = vmatprep.subr.mxu0 0.0
      %2549 = vmatpush2.msra.mxu0 0.0
      %2550 = vmatprep.subr.mxu0 0.0
      %2551 = vmatpush2.msra.mxu0 0.0
      %2552 = vmatprep.subr.mxu0 0.0
      %2553 = vmatpush2.msra.mxu0 0.0
      %2554 = vmatprep.subr.mxu0 0.0
      %2555 = vmatpush2.msra.mxu0 0.0
      %2556 = vmatprep.subr.mxu0 0.0
      %2557 = vmatpush2.msra.mxu0 0.0
      %2558 = vmatprep.mubr.f32.mxu0 0.0
      %2559 = vmatmul.mubr.f32.gmra.mxu0 %v2489
      %v2560 = vpop.f32.mrf.mxu0
      %v2561 = vadd.f32 0.0, %v2560
      %v2562 = vpop.f32.mrf.mxu0
      %2563 = vmatprep.mubr.f32.mxu0 0.0
      %2564 = vmatmul.mubr.f32.gmra.mxu0 %v2492
      %v2565 = vpop.f32.mrf.mxu0
      %v2566 = vadd.f32 0.0, %v2565
      %v2567 = vpop.f32.mrf.mxu0
      %2568 = vdwg.mxu0
      %2569 = vxpose.xlu0.b32.start [1/16] %v2022, 128
      %2570 = vxpose.xlu0.b32.cont [2/16] %v2023, 128
      %2571 = vxpose.xlu0.b32.cont [3/16] 0.0, 128
      %2572 = vxpose.xlu0.b32.cont [4/16] 0.0, 128
      %2573 = vxpose.xlu0.b32.cont [5/16] 0.0, 128
      %2574 = vxpose.xlu0.b32.cont [6/16] 0.0, 128
      %2575 = vxpose.xlu0.b32.cont [7/16] 0.0, 128
      %2576 = vxpose.xlu0.b32.cont [8/16] 0.0, 128
      %2577 = vxpose.xlu0.b32.cont [9/16] 0.0, 128
      %2578 = vxpose.xlu0.b32.cont [10/16] 0.0, 128
      %2579 = vxpose.xlu0.b32.cont [11/16] 0.0, 128
      %2580 = vxpose.xlu0.b32.cont [12/16] 0.0, 128
      %2581 = vxpose.xlu0.b32.cont [13/16] 0.0, 128
      %2582 = vxpose.xlu0.b32.cont [14/16] 0.0, 128
      %2583 = vxpose.xlu0.b32.cont [15/16] 0.0, 128
      %2584 = vxpose.xlu0.b32.end [16/16] 0.0, 128
      %v2585 = vpop.trf.xlu0
      %v2586 = vpop.trf.xlu0
      %v2587 = vpop.trf.xlu0
      %v2588 = vpop.trf.xlu0
      %v2589 = vpop.trf.xlu0
      %v2590 = vpop.trf.xlu0
      %v2591 = vpop.trf.xlu0
      %v2592 = vpop.trf.xlu0
      %v2593 = vpop.trf.xlu0
      %v2594 = vpop.trf.xlu0
      %v2595 = vpop.trf.xlu0
      %v2596 = vpop.trf.xlu0
      %v2597 = vpop.trf.xlu0
      %v2598 = vpop.trf.xlu0
      %v2599 = vpop.trf.xlu0
      %v2600 = vpop.trf.xlu0
      %v2602 = vsel %vm2211, %v2585, 0
      %v2605 = vsel %vm2211, %v2586, 0
      %2607 = vmatprep.subr.mxu0 0.0
      %2608 = vmatpush1.msra.mxu0 0.0
      %2609 = vmatprep.subr.mxu0 0.0
      %2610 = vmatpush1.msra.mxu0 0.0
      %2611 = vmatprep.subr.mxu0 0.0
      %2612 = vmatpush1.msra.mxu0 0.0
      %2613 = vmatprep.subr.mxu0 0.0
      %2614 = vmatpush1.msra.mxu0 0.0
      %2615 = vmatprep.subr.mxu0 0.0
      %2616 = vmatpush1.msra.mxu0 0.0
      %2617 = vmatprep.subr.mxu0 0.0
      %2618 = vmatpush1.msra.mxu0 0.0
      %2619 = vmatprep.subr.mxu0 0.0
      %2620 = vmatpush1.msra.mxu0 0.0
      %2621 = vmatprep.subr.mxu0 0.0
      %2622 = vmatpush1.msra.mxu0 0.0
      %2623 = vmatprep.subr.mxu0 0.0
      %2624 = vmatpush1.msra.mxu0 0.0
      %2625 = vmatprep.subr.mxu0 0.0
      %2626 = vmatpush1.msra.mxu0 0.0
      %2627 = vmatprep.subr.mxu0 0.0
      %2628 = vmatpush1.msra.mxu0 0.0
      %2629 = vmatprep.subr.mxu0 0.0
      %2630 = vmatpush1.msra.mxu0 0.0
      %2631 = vmatprep.subr.mxu0 0.0
      %2632 = vmatpush1.msra.mxu0 0.0
      %2633 = vmatprep.subr.mxu0 0.0
      %2634 = vmatpush1.msra.mxu0 0.0
      %2635 = vmatprep.subr.mxu0 0.0
      %2636 = vmatpush1.msra.mxu0 %v2455
      %2637 = vmatprep.subr.mxu0 0.0
      %2638 = vmatpush1.msra.mxu0 %v2454
      %2639 = vmatprep.subr.mxu0 0.0
      %2640 = vmatpush2.msra.mxu0 0.0
      %2641 = vmatprep.subr.mxu0 0.0
      %2642 = vmatpush2.msra.mxu0 0.0
      %2643 = vmatprep.subr.mxu0 0.0
      %2644 = vmatpush2.msra.mxu0 0.0
      %2645 = vmatprep.subr.mxu0 0.0
      %2646 = vmatpush2.msra.mxu0 0.0
      %2647 = vmatprep.subr.mxu0 0.0
      %2648 = vmatpush2.msra.mxu0 0.0
      %2649 = vmatprep.subr.mxu0 0.0
      %2650 = vmatpush2.msra.mxu0 0.0
      %2651 = vmatprep.subr.mxu0 0.0
      %2652 = vmatpush2.msra.mxu0 0.0
      %2653 = vmatprep.subr.mxu0 0.0
      %2654 = vmatpush2.msra.mxu0 0.0
      %2655 = vmatprep.subr.mxu0 0.0
      %2656 = vmatpush2.msra.mxu0 0.0
      %2657 = vmatprep.subr.mxu0 0.0
      %2658 = vmatpush2.msra.mxu0 0.0
      %2659 = vmatprep.subr.mxu0 0.0
      %2660 = vmatpush2.msra.mxu0 0.0
      %2661 = vmatprep.subr.mxu0 0.0
      %2662 = vmatpush2.msra.mxu0 0.0
      %2663 = vmatprep.subr.mxu0 0.0
      %2664 = vmatpush2.msra.mxu0 0.0
      %2665 = vmatprep.subr.mxu0 0.0
      %2666 = vmatpush2.msra.mxu0 0.0
      %2667 = vmatprep.subr.mxu0 0.0
      %2668 = vmatpush2.msra.mxu0 0.0
      %2669 = vmatprep.subr.mxu0 0.0
      %2670 = vmatpush2.msra.mxu0 0.0
      %2671 = vmatprep.mubr.f32.mxu0 0.0
      %2672 = vmatmul.mubr.f32.gmra.mxu0 %v2602
      %v2673 = vpop.f32.mrf.mxu0
      %v2674 = vadd.f32 0.0, %v2673
      %v2675 = vpop.f32.mrf.mxu0
      %2676 = vmatprep.mubr.f32.mxu0 0.0
      %2677 = vmatmul.mubr.f32.gmra.mxu0 %v2605
      %v2678 = vpop.f32.mrf.mxu0
      %v2679 = vadd.f32 0.0, %v2678
      %v2680 = vpop.f32.mrf.mxu0
      %2681 = vdwg.mxu0
      %v2685 = vunpack.c.l.s4 1983009808
      %v2686 = vunpack.c.0.s8 %v2685
      %v2687 = vlaneseq
      %v2688 = vshrl.u32 %v2687, 7
      %v2689 = vsub.s32 %v2686, %v2688
      %v2690 = vrot.slane %v2561, %v2689
      %v2692 = vunpack.c.l.s4 1983009808
      %v2693 = vunpack.c.0.s8 %v2692
      %v2694 = vlaneseq
      %v2695 = vshrl.u32 %v2694, 7
      %v2696 = vsub.s32 %v2693, %v2695
      %v2697 = vrot.slane %v2674, %v2696
      %vm2698 = vcmask 1044484
      %v2699 = vsel %vm2698, %v2690, %v2690
      %vm2700 = vcmask 1046534
      %v2701 = vsel %vm2700, %v2690, %v2699
      %v2702 = vrot.slane %v2697, 7
      %vm2703 = vcmask 1041409
      %v2704 = vsel %vm2703, %v2702, %v2701
      %vm2705 = vcmask 1043459
      %v2706 = vsel %vm2705, %v2702, %v2704
      %vm2707 = vcmask 1045509
      %v2708 = vsel %vm2707, %v2702, %v2706
      %vm2709 = vcmask 1047559
      %v2710 = vsel %vm2709, %v2702, %v2708
      %vm2712 = vcmask 123904
      %2713 = vst.msk [vmem:[#allocation2] sm:$0x3] %vm2712, %v2710
      %v2714 = vrot.slane %v2690, 1
      %v2715 = vsel %vm2698, %v2714, %v2714
      %v2716 = vsel %vm2700, %v2714, %v2715
      %v2717 = vsel %vm2703, %v2697, %v2716
      %v2718 = vsel %vm2705, %v2697, %v2717
      %v2719 = vsel %vm2707, %v2697, %v2718
      %v2720 = vsel %vm2709, %v2697, %v2719
      %2721 = vrot.lane.b32.xlu0 %v2720, 16
      %v2722 = vpop.permute.xlu0 %2721
      %vm2724 = vcmask 255104
      %2725 = vst.msk [vmem:[#allocation2] sm:$0x3] %vm2724, %v2722
      %v2726 = vcombine.high %v2690, %v2690
      %v2727 = vcombine.high %v2697, %v2697
      %v2728 = vsel %vm2698, %v2726, %v2726
      %v2729 = vsel %vm2700, %v2726, %v2728
      %v2730 = vrot.slane %v2727, 7
      %v2731 = vsel %vm2703, %v2730, %v2729
      %v2732 = vsel %vm2705, %v2730, %v2731
      %v2733 = vsel %vm2707, %v2730, %v2732
      %v2734 = vsel %vm2709, %v2730, %v2733
      %2735 = vrot.lane.b32.xlu0 %v2734, 32
      %v2736 = vpop.permute.xlu0 %2735
      %vm2738 = vcmask 386304
      %2739 = vst.msk [vmem:[#allocation2] sm:$0x3] %vm2738, %v2736
      %v2740 = vrot.slane %v2726, 1
      %v2741 = vsel %vm2698, %v2740, %v2740
      %v2742 = vsel %vm2700, %v2740, %v2741
      %v2743 = vsel %vm2703, %v2727, %v2742
      %v2744 = vsel %vm2705, %v2727, %v2743
      %v2745 = vsel %vm2707, %v2727, %v2744
      %v2746 = vsel %vm2709, %v2727, %v2745
      %2747 = vrot.lane.b32.xlu0 %v2746, 48
      %v2748 = vpop.permute.xlu0 %2747
      %vm2750 = vcmask 517504
      %2751 = vst.msk [vmem:[#allocation2] sm:$0x3] %vm2750, %v2748
      %v2752 = vcombine.high %v2561, %v2561
      %v2754 = vunpack.c.l.s4 1983009808
      %v2755 = vunpack.c.0.s8 %v2754
      %v2756 = vlaneseq
      %v2757 = vshrl.u32 %v2756, 7
      %v2758 = vsub.s32 %v2755, %v2757
      %v2759 = vrot.slane %v2752, %v2758
      %v2760 = vcombine.high %v2674, %v2674
      %v2762 = vunpack.c.l.s4 1983009808
      %v2763 = vunpack.c.0.s8 %v2762
      %v2764 = vlaneseq
      %v2765 = vshrl.u32 %v2764, 7
      %v2766 = vsub.s32 %v2763, %v2765
      %v2767 = vrot.slane %v2760, %v2766
      %v2768 = vsel %vm2698, %v2759, %v2759
      %v2769 = vsel %vm2700, %v2759, %v2768
      %v2770 = vrot.slane %v2767, 7
      %v2771 = vsel %vm2703, %v2770, %v2769
      %v2772 = vsel %vm2705, %v2770, %v2771
      %v2773 = vsel %vm2707, %v2770, %v2772
      %v2774 = vsel %vm2709, %v2770, %v2773
      %2775 = vrot.lane.b32.xlu0 %v2774, 64
      %v2776 = vpop.permute.xlu0 %2775
      %vm2778 = vcmask 648704
      %2779 = vst.msk [vmem:[#allocation2] sm:$0x3] %vm2778, %v2776
      %v2780 = vrot.slane %v2759, 1
      %v2781 = vsel %vm2698, %v2780, %v2780
      %v2782 = vsel %vm2700, %v2780, %v2781
      %v2783 = vsel %vm2703, %v2767, %v2782
      %v2784 = vsel %vm2705, %v2767, %v2783
      %v2785 = vsel %vm2707, %v2767, %v2784
      %v2786 = vsel %vm2709, %v2767, %v2785
      %2787 = vrot.lane.b32.xlu0 %v2786, 80
      %v2788 = vpop.permute.xlu0 %2787
      %vm2790 = vcmask 779904
      %2791 = vst.msk [vmem:[#allocation2] sm:$0x3] %vm2790, %v2788
      %v2792 = vcombine.high %v2759, %v2759
      %v2793 = vcombine.high %v2767, %v2767
      %v2794 = vsel %vm2698, %v2792, %v2792
      %v2795 = vsel %vm2700, %v2792, %v2794
      %v2796 = vrot.slane %v2793, 7
      %v2797 = vsel %vm2703, %v2796, %v2795
      %v2798 = vsel %vm2705, %v2796, %v2797
      %v2799 = vsel %vm2707, %v2796, %v2798
      %v2800 = vsel %vm2709, %v2796, %v2799
      %2801 = vrot.lane.b32.xlu0 %v2800, 96
      %v2802 = vpop.permute.xlu0 %2801
      %vm2804 = vcmask 911104
      %2805 = vst.msk [vmem:[#allocation2] sm:$0x3] %vm2804, %v2802
      %v2806 = vrot.slane %v2792, 1
      %v2807 = vsel %vm2698, %v2806, %v2806
      %v2808 = vsel %vm2700, %v2806, %v2807
      %v2809 = vsel %vm2703, %v2793, %v2808
      %v2810 = vsel %vm2705, %v2793, %v2809
      %v2811 = vsel %vm2707, %v2793, %v2810
      %v2812 = vsel %vm2709, %v2793, %v2811
      %2813 = vrot.lane.b32.xlu0 %v2812, 112
      %v2814 = vpop.permute.xlu0 %2813
      %vm2816 = vcmask 1042304
      %2817 = vst.msk [vmem:[#allocation2] sm:$0x3] %vm2816, %v2814
      %v2821 = vunpack.c.l.s4 1983009808
      %v2822 = vunpack.c.0.s8 %v2821
      %v2823 = vlaneseq
      %v2824 = vshrl.u32 %v2823, 7
      %v2825 = vsub.s32 %v2822, %v2824
      %v2826 = vrot.slane %v2566, %v2825
      %v2828 = vunpack.c.l.s4 1983009808
      %v2829 = vunpack.c.0.s8 %v2828
      %v2830 = vlaneseq
      %v2831 = vshrl.u32 %v2830, 7
      %v2832 = vsub.s32 %v2829, %v2831
      %v2833 = vrot.slane %v2679, %v2832
      %v2834 = vsel %vm2698, %v2826, %v2826
      %v2835 = vsel %vm2700, %v2826, %v2834
      %v2836 = vrot.slane %v2833, 7
      %v2837 = vsel %vm2703, %v2836, %v2835
      %v2838 = vsel %vm2705, %v2836, %v2837
      %v2839 = vsel %vm2707, %v2836, %v2838
      %v2840 = vsel %vm2709, %v2836, %v2839
      %2842 = vst.msk [vmem:[#allocation2 + $0x2] sm:$0x3] %vm2712, %v2840
      %v2843 = vrot.slane %v2826, 1
      %v2844 = vsel %vm2698, %v2843, %v2843
      %v2845 = vsel %vm2700, %v2843, %v2844
      %v2846 = vsel %vm2703, %v2833, %v2845
      %v2847 = vsel %vm2705, %v2833, %v2846
      %v2848 = vsel %vm2707, %v2833, %v2847
      %v2849 = vsel %vm2709, %v2833, %v2848
      %2850 = vrot.lane.b32.xlu0 %v2849, 16
      %v2851 = vpop.permute.xlu0 %2850
      %2853 = vst.msk [vmem:[#allocation2 + $0x2] sm:$0x3] %vm2724, %v2851
      %v2854 = vcombine.high %v2826, %v2826
      %v2855 = vcombine.high %v2833, %v2833
      %v2856 = vsel %vm2698, %v2854, %v2854
      %v2857 = vsel %vm2700, %v2854, %v2856
      %v2858 = vrot.slane %v2855, 7
      %v2859 = vsel %vm2703, %v2858, %v2857
      %v2860 = vsel %vm2705, %v2858, %v2859
      %v2861 = vsel %vm2707, %v2858, %v2860
      %v2862 = vsel %vm2709, %v2858, %v2861
      %2863 = vrot.lane.b32.xlu0 %v2862, 32
      %v2864 = vpop.permute.xlu0 %2863
      %2866 = vst.msk [vmem:[#allocation2 + $0x2] sm:$0x3] %vm2738, %v2864
      %v2867 = vrot.slane %v2854, 1
      %v2868 = vsel %vm2698, %v2867, %v2867
      %v2869 = vsel %vm2700, %v2867, %v2868
      %v2870 = vsel %vm2703, %v2855, %v2869
      %v2871 = vsel %vm2705, %v2855, %v2870
      %v2872 = vsel %vm2707, %v2855, %v2871
      %v2873 = vsel %vm2709, %v2855, %v2872
      %2874 = vrot.lane.b32.xlu0 %v2873, 48
      %v2875 = vpop.permute.xlu0 %2874
      %2877 = vst.msk [vmem:[#allocation2 + $0x2] sm:$0x3] %vm2750, %v2875
      %v2878 = vcombine.high %v2566, %v2566
      %v2880 = vunpack.c.l.s4 1983009808
      %v2881 = vunpack.c.0.s8 %v2880
      %v2882 = vlaneseq
      %v2883 = vshrl.u32 %v2882, 7
      %v2884 = vsub.s32 %v2881, %v2883
      %v2885 = vrot.slane %v2878, %v2884
      %v2886 = vcombine.high %v2679, %v2679
      %v2888 = vunpack.c.l.s4 1983009808
      %v2889 = vunpack.c.0.s8 %v2888
      %v2890 = vlaneseq
      %v2891 = vshrl.u32 %v2890, 7
      %v2892 = vsub.s32 %v2889, %v2891
      %v2893 = vrot.slane %v2886, %v2892
      %v2894 = vsel %vm2698, %v2885, %v2885
      %v2895 = vsel %vm2700, %v2885, %v2894
      %v2896 = vrot.slane %v2893, 7
      %v2897 = vsel %vm2703, %v2896, %v2895
      %v2898 = vsel %vm2705, %v2896, %v2897
      %v2899 = vsel %vm2707, %v2896, %v2898
      %v2900 = vsel %vm2709, %v2896, %v2899
      %2901 = vrot.lane.b32.xlu0 %v2900, 64
      %v2902 = vpop.permute.xlu0 %2901
      %2904 = vst.msk [vmem:[#allocation2 + $0x2] sm:$0x3] %vm2778, %v2902
      %v2905 = vrot.slane %v2885, 1
      %v2906 = vsel %vm2698, %v2905, %v2905
      %v2907 = vsel %vm2700, %v2905, %v2906
      %v2908 = vsel %vm2703, %v2893, %v2907
      %v2909 = vsel %vm2705, %v2893, %v2908
      %v2910 = vsel %vm2707, %v2893, %v2909
      %v2911 = vsel %vm2709, %v2893, %v2910
      %2912 = vrot.lane.b32.xlu0 %v2911, 80
      %v2913 = vpop.permute.xlu0 %2912
      %2915 = vst.msk [vmem:[#allocation2 + $0x2] sm:$0x3] %vm2790, %v2913
      %v2916 = vcombine.high %v2885, %v2885
      %v2917 = vcombine.high %v2893, %v2893
      %v2918 = vsel %vm2698, %v2916, %v2916
      %v2919 = vsel %vm2700, %v2916, %v2918
      %v2920 = vrot.slane %v2917, 7
      %v2921 = vsel %vm2703, %v2920, %v2919
      %v2922 = vsel %vm2705, %v2920, %v2921
      %v2923 = vsel %vm2707, %v2920, %v2922
      %v2924 = vsel %vm2709, %v2920, %v2923
      %2925 = vrot.lane.b32.xlu0 %v2924, 96
      %v2926 = vpop.permute.xlu0 %2925
      %2928 = vst.msk [vmem:[#allocation2 + $0x2] sm:$0x3] %vm2804, %v2926
      %v2929 = vrot.slane %v2916, 1
      %v2930 = vsel %vm2698, %v2929, %v2929
      %v2931 = vsel %vm2700, %v2929, %v2930
      %v2932 = vsel %vm2703, %v2917, %v2931
      %v2933 = vsel %vm2705, %v2917, %v2932
      %v2934 = vsel %vm2707, %v2917, %v2933
      %v2935 = vsel %vm2709, %v2917, %v2934
      %2936 = vrot.lane.b32.xlu0 %v2935, 112
      %v2937 = vpop.permute.xlu0 %2936
      %2939 = vst.msk [vmem:[#allocation2 + $0x2] sm:$0x3] %vm2816, %v2937
      %v2940 = vcombine.low %v2014, %v2015
      %v2942 = vunpack.c.l.s4 1983009808
      %v2943 = vunpack.c.0.s8 %v2942
      %v2944 = vlaneseq
      %v2945 = vshrl.u32 %v2944, 7
      %v2946 = vsub.s32 %v2943, %v2945
      %v2947 = vrot.slane %v2940, %v2946
      %2949 = vst [vmem:[#allocation2 + $0x4] sm:$0xf] %v2947
      %v2950 = vld [vmem:[#allocation2] sm:$0xff]
      %v2952 = vcombine.high %v2950, %v2950
      %v2954 = vunpack.c.l.s4 1983009808
      %v2955 = vunpack.c.0.s8 %v2954
      %v2956 = vlaneseq
      %v2957 = vshrl.u32 %v2956, 7
      %v2958 = vsub.s32 %v2955, %v2957
      %v2959 = vrot.slane %v2950, %v2958
      %v2961 = vunpack.c.l.s4 1983009808
      %v2962 = vunpack.c.0.s8 %v2961
      %v2963 = vlaneseq
      %v2964 = vshrl.u32 %v2963, 7
      %v2965 = vsub.s32 %v2962, %v2964
      %v2966 = vrot.slane %v2952, %v2965
      %v2967 = vcombine.high %v2959, %v2959
      %v2968 = vcombine.high %v2966, %v2966
      %v2973 = vpack.c.bf16 %v2959, %v2959
      %v2974 = vpack.c.bf16 %v2967, %v2967
      %v2975 = vpack.c.bf16 %v2966, %v2966
      %v2976 = vpack.c.bf16 %v2968, %v2968
      %v2977 = vld [vmem:[%s2] sm:$0xff]
      %v2978 = vld [vmem:[%s2 + $0x8] sm:$0xff]
      %v2979 = vld [vmem:[%s2 + $0x10] sm:$0xff]
      %v2980 = vld [vmem:[%s2 + $0x18] sm:$0xff]
      %v2981 = vld [vmem:[%s2 + $0x20] sm:$0xff]
      %v2982 = vld [vmem:[%s2 + $0x28] sm:$0xff]
      %v2983 = vld [vmem:[%s2 + $0x30] sm:$0xff]
      %v2984 = vld [vmem:[%s2 + $0x38] sm:$0xff]
      %v2985 = vld [vmem:[%s2 + $0x40] sm:$0xff]
      %v2986 = vld [vmem:[%s2 + $0x48] sm:$0xff]
      %v2987 = vld [vmem:[%s2 + $0x50] sm:$0xff]
      %v2988 = vld [vmem:[%s2 + $0x58] sm:$0xff]
      %v2989 = vld [vmem:[%s2 + $0x60] sm:$0xff]
      %v2990 = vld [vmem:[%s2 + $0x68] sm:$0xff]
      %v2991 = vld [vmem:[%s2 + $0x70] sm:$0xff]
      %v2992 = vld [vmem:[%s2 + $0x78] sm:$0xff]
      %v2993 = vld [vmem:[%s2 + $0x80] sm:$0xff]
      %v2994 = vld [vmem:[%s2 + $0x88] sm:$0xff]
      %v2995 = vld [vmem:[%s2 + $0x90] sm:$0xff]
      %v2996 = vld [vmem:[%s2 + $0x98] sm:$0xff]
      %v2997 = vld [vmem:[%s2 + $0xa0] sm:$0xff]
      %v2998 = vld [vmem:[%s2 + $0xa8] sm:$0xff]
      %v2999 = vld [vmem:[%s2 + $0xb0] sm:$0xff]
      %v3000 = vld [vmem:[%s2 + $0xb8] sm:$0xff]
      %v3001 = vld [vmem:[%s2 + $0xc0] sm:$0xff]
      %v3002 = vld [vmem:[%s2 + $0xc8] sm:$0xff]
      %v3003 = vld [vmem:[%s2 + $0xd0] sm:$0xff]
      %v3004 = vld [vmem:[%s2 + $0xd8] sm:$0xff]
      %v3005 = vld [vmem:[%s2 + $0xe0] sm:$0xff]
      %v3006 = vld [vmem:[%s2 + $0xe8] sm:$0xff]
      %v3007 = vld [vmem:[%s2 + $0xf0] sm:$0xff]
      %v3008 = vld [vmem:[%s2 + $0xf8] sm:$0xff]
      %v3009 = vld [vmem:[%s2 + $0x100] sm:$0xff]
      %v3010 = vld [vmem:[%s2 + $0x108] sm:$0xff]
      %v3011 = vld [vmem:[%s2 + $0x110] sm:$0xff]
      %v3012 = vld [vmem:[%s2 + $0x118] sm:$0xff]
      %v3013 = vld [vmem:[%s2 + $0x120] sm:$0xff]
      %v3014 = vld [vmem:[%s2 + $0x128] sm:$0xff]
      %v3015 = vld [vmem:[%s2 + $0x130] sm:$0xff]
      %v3016 = vld [vmem:[%s2 + $0x138] sm:$0xff]
      %v3017 = vld [vmem:[%s2 + $0x140] sm:$0xff]
      %v3018 = vld [vmem:[%s2 + $0x148] sm:$0xff]
      %v3019 = vld [vmem:[%s2 + $0x150] sm:$0xff]
      %v3020 = vld [vmem:[%s2 + $0x158] sm:$0xff]
      %v3021 = vld [vmem:[%s2 + $0x160] sm:$0xff]
      %v3022 = vld [vmem:[%s2 + $0x168] sm:$0xff]
      %v3023 = vld [vmem:[%s2 + $0x170] sm:$0xff]
      %v3024 = vld [vmem:[%s2 + $0x178] sm:$0xff]
      %v3025 = vld [vmem:[%s2 + $0x180] sm:$0xff]
      %v3026 = vld [vmem:[%s2 + $0x188] sm:$0xff]
      %v3027 = vld [vmem:[%s2 + $0x190] sm:$0xff]
      %v3028 = vld [vmem:[%s2 + $0x198] sm:$0xff]
      %v3029 = vld [vmem:[%s2 + $0x1a0] sm:$0xff]
      %v3030 = vld [vmem:[%s2 + $0x1a8] sm:$0xff]
      %v3031 = vld [vmem:[%s2 + $0x1b0] sm:$0xff]
      %v3032 = vld [vmem:[%s2 + $0x1b8] sm:$0xff]
      %v3033 = vld [vmem:[%s2 + $0x1c0] sm:$0xff]
      %v3034 = vld [vmem:[%s2 + $0x1c8] sm:$0xff]
      %v3035 = vld [vmem:[%s2 + $0x1d0] sm:$0xff]
      %v3036 = vld [vmem:[%s2 + $0x1d8] sm:$0xff]
      %v3037 = vld [vmem:[%s2 + $0x1e0] sm:$0xff]
      %v3038 = vld [vmem:[%s2 + $0x1e8] sm:$0xff]
      %v3039 = vld [vmem:[%s2 + $0x1f0] sm:$0xff]
      %v3040 = vld [vmem:[%s2 + $0x1f8] sm:$0xff]
      %v3041 = vld [vmem:[%s2 + $0x200] sm:$0xff]
      %v3042 = vld [vmem:[%s2 + $0x208] sm:$0xff]
      %v3043 = vld [vmem:[%s2 + $0x210] sm:$0xff]
      %v3044 = vld [vmem:[%s2 + $0x218] sm:$0xff]
      %v3045 = vld [vmem:[%s2 + $0x220] sm:$0xff]
      %v3046 = vld [vmem:[%s2 + $0x228] sm:$0xff]
      %v3047 = vld [vmem:[%s2 + $0x230] sm:$0xff]
      %v3048 = vld [vmem:[%s2 + $0x238] sm:$0xff]
      %v3049 = vld [vmem:[%s2 + $0x240] sm:$0xff]
      %v3050 = vld [vmem:[%s2 + $0x248] sm:$0xff]
      %v3051 = vld [vmem:[%s2 + $0x250] sm:$0xff]
      %v3052 = vld [vmem:[%s2 + $0x258] sm:$0xff]
      %v3053 = vld [vmem:[%s2 + $0x260] sm:$0xff]
      %v3054 = vld [vmem:[%s2 + $0x268] sm:$0xff]
      %v3055 = vld [vmem:[%s2 + $0x270] sm:$0xff]
      %v3056 = vld [vmem:[%s2 + $0x278] sm:$0xff]
      %v3057 = vld [vmem:[%s2 + $0x280] sm:$0xff]
      %v3058 = vld [vmem:[%s2 + $0x288] sm:$0xff]
      %v3059 = vld [vmem:[%s2 + $0x290] sm:$0xff]
      %v3060 = vld [vmem:[%s2 + $0x298] sm:$0xff]
      %v3061 = vld [vmem:[%s2 + $0x2a0] sm:$0xff]
      %v3062 = vld [vmem:[%s2 + $0x2a8] sm:$0xff]
      %v3063 = vld [vmem:[%s2 + $0x2b0] sm:$0xff]
      %v3064 = vld [vmem:[%s2 + $0x2b8] sm:$0xff]
      %v3065 = vld [vmem:[%s2 + $0x2c0] sm:$0xff]
      %v3066 = vld [vmem:[%s2 + $0x2c8] sm:$0xff]
      %v3067 = vld [vmem:[%s2 + $0x2d0] sm:$0xff]
      %v3068 = vld [vmem:[%s2 + $0x2d8] sm:$0xff]
      %v3069 = vld [vmem:[%s2 + $0x2e0] sm:$0xff]
      %v3070 = vld [vmem:[%s2 + $0x2e8] sm:$0xff]
      %v3071 = vld [vmem:[%s2 + $0x2f0] sm:$0xff]
      %v3072 = vld [vmem:[%s2 + $0x2f8] sm:$0xff]
      %v3073 = vld [vmem:[%s2 + $0x300] sm:$0xff]
      %v3074 = vld [vmem:[%s2 + $0x308] sm:$0xff]
      %v3075 = vld [vmem:[%s2 + $0x310] sm:$0xff]
      %v3076 = vld [vmem:[%s2 + $0x318] sm:$0xff]
      %v3077 = vld [vmem:[%s2 + $0x320] sm:$0xff]
      %v3078 = vld [vmem:[%s2 + $0x328] sm:$0xff]
      %v3079 = vld [vmem:[%s2 + $0x330] sm:$0xff]
      %v3080 = vld [vmem:[%s2 + $0x338] sm:$0xff]
      %v3081 = vld [vmem:[%s2 + $0x340] sm:$0xff]
      %v3082 = vld [vmem:[%s2 + $0x348] sm:$0xff]
      %v3083 = vld [vmem:[%s2 + $0x350] sm:$0xff]
      %v3084 = vld [vmem:[%s2 + $0x358] sm:$0xff]
      %v3085 = vld [vmem:[%s2 + $0x360] sm:$0xff]
      %v3086 = vld [vmem:[%s2 + $0x368] sm:$0xff]
      %v3087 = vld [vmem:[%s2 + $0x370] sm:$0xff]
      %v3088 = vld [vmem:[%s2 + $0x378] sm:$0xff]
      %v3089 = vld [vmem:[%s2 + $0x380] sm:$0xff]
      %v3090 = vld [vmem:[%s2 + $0x388] sm:$0xff]
      %v3091 = vld [vmem:[%s2 + $0x390] sm:$0xff]
      %v3092 = vld [vmem:[%s2 + $0x398] sm:$0xff]
      %v3093 = vld [vmem:[%s2 + $0x3a0] sm:$0xff]
      %v3094 = vld [vmem:[%s2 + $0x3a8] sm:$0xff]
      %v3095 = vld [vmem:[%s2 + $0x3b0] sm:$0xff]
      %v3096 = vld [vmem:[%s2 + $0x3b8] sm:$0xff]
      %v3097 = vld [vmem:[%s2 + $0x3c0] sm:$0xff]
      %v3098 = vld [vmem:[%s2 + $0x3c8] sm:$0xff]
      %v3099 = vld [vmem:[%s2 + $0x3d0] sm:$0xff]
      %v3100 = vld [vmem:[%s2 + $0x3d8] sm:$0xff]
      %v3101 = vld [vmem:[%s2 + $0x3e0] sm:$0xff]
      %v3102 = vld [vmem:[%s2 + $0x3e8] sm:$0xff]
      %v3103 = vld [vmem:[%s2 + $0x3f0] sm:$0xff]
      %v3104 = vld [vmem:[%s2 + $0x3f8] sm:$0xff]
      %v3105 = vld [vmem:[%s2 + $0x400] sm:$0xff]
      %v3106 = vld [vmem:[%s2 + $0x408] sm:$0xff]
      %v3107 = vld [vmem:[%s2 + $0x410] sm:$0xff]
      %v3108 = vld [vmem:[%s2 + $0x418] sm:$0xff]
      %v3109 = vld [vmem:[%s2 + $0x420] sm:$0xff]
      %v3110 = vld [vmem:[%s2 + $0x428] sm:$0xff]
      %v3111 = vld [vmem:[%s2 + $0x430] sm:$0xff]
      %v3112 = vld [vmem:[%s2 + $0x438] sm:$0xff]
      %v3113 = vld [vmem:[%s2 + $0x440] sm:$0xff]
      %v3114 = vld [vmem:[%s2 + $0x448] sm:$0xff]
      %v3115 = vld [vmem:[%s2 + $0x450] sm:$0xff]
      %v3116 = vld [vmem:[%s2 + $0x458] sm:$0xff]
      %v3117 = vld [vmem:[%s2 + $0x460] sm:$0xff]
      %v3118 = vld [vmem:[%s2 + $0x468] sm:$0xff]
      %v3119 = vld [vmem:[%s2 + $0x470] sm:$0xff]
      %v3120 = vld [vmem:[%s2 + $0x478] sm:$0xff]
      %v3121 = vld [vmem:[%s2 + $0x480] sm:$0xff]
      %v3122 = vld [vmem:[%s2 + $0x488] sm:$0xff]
      %v3123 = vld [vmem:[%s2 + $0x490] sm:$0xff]
      %v3124 = vld [vmem:[%s2 + $0x498] sm:$0xff]
      %v3125 = vld [vmem:[%s2 + $0x4a0] sm:$0xff]
      %v3126 = vld [vmem:[%s2 + $0x4a8] sm:$0xff]
      %v3127 = vld [vmem:[%s2 + $0x4b0] sm:$0xff]
      %v3128 = vld [vmem:[%s2 + $0x4b8] sm:$0xff]
      %v3129 = vld [vmem:[%s2 + $0x4c0] sm:$0xff]
      %v3130 = vld [vmem:[%s2 + $0x4c8] sm:$0xff]
      %v3131 = vld [vmem:[%s2 + $0x4d0] sm:$0xff]
      %v3132 = vld [vmem:[%s2 + $0x4d8] sm:$0xff]
      %v3133 = vld [vmem:[%s2 + $0x4e0] sm:$0xff]
      %v3134 = vld [vmem:[%s2 + $0x4e8] sm:$0xff]
      %v3135 = vld [vmem:[%s2 + $0x4f0] sm:$0xff]
      %v3136 = vld [vmem:[%s2 + $0x4f8] sm:$0xff]
      %v3137 = vld [vmem:[%s2 + $0x500] sm:$0xff]
      %v3138 = vld [vmem:[%s2 + $0x508] sm:$0xff]
      %v3139 = vld [vmem:[%s2 + $0x510] sm:$0xff]
      %v3140 = vld [vmem:[%s2 + $0x518] sm:$0xff]
      %v3141 = vld [vmem:[%s2 + $0x520] sm:$0xff]
      %v3142 = vld [vmem:[%s2 + $0x528] sm:$0xff]
      %v3143 = vld [vmem:[%s2 + $0x530] sm:$0xff]
      %v3144 = vld [vmem:[%s2 + $0x538] sm:$0xff]
      %v3145 = vld [vmem:[%s2 + $0x540] sm:$0xff]
      %v3146 = vld [vmem:[%s2 + $0x548] sm:$0xff]
      %v3147 = vld [vmem:[%s2 + $0x550] sm:$0xff]
      %v3148 = vld [vmem:[%s2 + $0x558] sm:$0xff]
      %v3149 = vld [vmem:[%s2 + $0x560] sm:$0xff]
      %v3150 = vld [vmem:[%s2 + $0x568] sm:$0xff]
      %v3151 = vld [vmem:[%s2 + $0x570] sm:$0xff]
      %v3152 = vld [vmem:[%s2 + $0x578] sm:$0xff]
      %v3153 = vld [vmem:[%s2 + $0x580] sm:$0xff]
      %v3154 = vld [vmem:[%s2 + $0x588] sm:$0xff]
      %v3155 = vld [vmem:[%s2 + $0x590] sm:$0xff]
      %v3156 = vld [vmem:[%s2 + $0x598] sm:$0xff]
      %v3157 = vld [vmem:[%s2 + $0x5a0] sm:$0xff]
      %v3158 = vld [vmem:[%s2 + $0x5a8] sm:$0xff]
      %v3159 = vld [vmem:[%s2 + $0x5b0] sm:$0xff]
      %v3160 = vld [vmem:[%s2 + $0x5b8] sm:$0xff]
      %v3161 = vld [vmem:[%s2 + $0x5c0] sm:$0xff]
      %v3162 = vld [vmem:[%s2 + $0x5c8] sm:$0xff]
      %v3163 = vld [vmem:[%s2 + $0x5d0] sm:$0xff]
      %v3164 = vld [vmem:[%s2 + $0x5d8] sm:$0xff]
      %v3165 = vld [vmem:[%s2 + $0x5e0] sm:$0xff]
      %v3166 = vld [vmem:[%s2 + $0x5e8] sm:$0xff]
      %v3167 = vld [vmem:[%s2 + $0x5f0] sm:$0xff]
      %v3168 = vld [vmem:[%s2 + $0x5f8] sm:$0xff]
      %v3169 = vld [vmem:[%s2 + $0x600] sm:$0xff]
      %v3170 = vld [vmem:[%s2 + $0x608] sm:$0xff]
      %v3171 = vld [vmem:[%s2 + $0x610] sm:$0xff]
      %v3172 = vld [vmem:[%s2 + $0x618] sm:$0xff]
      %v3173 = vld [vmem:[%s2 + $0x620] sm:$0xff]
      %v3174 = vld [vmem:[%s2 + $0x628] sm:$0xff]
      %v3175 = vld [vmem:[%s2 + $0x630] sm:$0xff]
      %v3176 = vld [vmem:[%s2 + $0x638] sm:$0xff]
      %v3177 = vld [vmem:[%s2 + $0x640] sm:$0xff]
      %v3178 = vld [vmem:[%s2 + $0x648] sm:$0xff]
      %v3179 = vld [vmem:[%s2 + $0x650] sm:$0xff]
      %v3180 = vld [vmem:[%s2 + $0x658] sm:$0xff]
      %v3181 = vld [vmem:[%s2 + $0x660] sm:$0xff]
      %v3182 = vld [vmem:[%s2 + $0x668] sm:$0xff]
      %v3183 = vld [vmem:[%s2 + $0x670] sm:$0xff]
      %v3184 = vld [vmem:[%s2 + $0x678] sm:$0xff]
      %v3185 = vld [vmem:[%s2 + $0x680] sm:$0xff]
      %v3186 = vld [vmem:[%s2 + $0x688] sm:$0xff]
      %v3187 = vld [vmem:[%s2 + $0x690] sm:$0xff]
      %v3188 = vld [vmem:[%s2 + $0x698] sm:$0xff]
      %v3189 = vld [vmem:[%s2 + $0x6a0] sm:$0xff]
      %v3190 = vld [vmem:[%s2 + $0x6a8] sm:$0xff]
      %v3191 = vld [vmem:[%s2 + $0x6b0] sm:$0xff]
      %v3192 = vld [vmem:[%s2 + $0x6b8] sm:$0xff]
      %v3193 = vld [vmem:[%s2 + $0x6c0] sm:$0xff]
      %v3194 = vld [vmem:[%s2 + $0x6c8] sm:$0xff]
      %v3195 = vld [vmem:[%s2 + $0x6d0] sm:$0xff]
      %v3196 = vld [vmem:[%s2 + $0x6d8] sm:$0xff]
      %v3197 = vld [vmem:[%s2 + $0x6e0] sm:$0xff]
      %v3198 = vld [vmem:[%s2 + $0x6e8] sm:$0xff]
      %v3199 = vld [vmem:[%s2 + $0x6f0] sm:$0xff]
      %v3200 = vld [vmem:[%s2 + $0x6f8] sm:$0xff]
      %v3201 = vld [vmem:[%s2 + $0x700] sm:$0xff]
      %v3202 = vld [vmem:[%s2 + $0x708] sm:$0xff]
      %v3203 = vld [vmem:[%s2 + $0x710] sm:$0xff]
      %v3204 = vld [vmem:[%s2 + $0x718] sm:$0xff]
      %v3205 = vld [vmem:[%s2 + $0x720] sm:$0xff]
      %v3206 = vld [vmem:[%s2 + $0x728] sm:$0xff]
      %v3207 = vld [vmem:[%s2 + $0x730] sm:$0xff]
      %v3208 = vld [vmem:[%s2 + $0x738] sm:$0xff]
      %v3209 = vld [vmem:[%s2 + $0x740] sm:$0xff]
      %v3210 = vld [vmem:[%s2 + $0x748] sm:$0xff]
      %v3211 = vld [vmem:[%s2 + $0x750] sm:$0xff]
      %v3212 = vld [vmem:[%s2 + $0x758] sm:$0xff]
      %v3213 = vld [vmem:[%s2 + $0x760] sm:$0xff]
      %v3214 = vld [vmem:[%s2 + $0x768] sm:$0xff]
      %v3215 = vld [vmem:[%s2 + $0x770] sm:$0xff]
      %v3216 = vld [vmem:[%s2 + $0x778] sm:$0xff]
      %v3217 = vld [vmem:[%s2 + $0x780] sm:$0xff]
      %v3218 = vld [vmem:[%s2 + $0x788] sm:$0xff]
      %v3219 = vld [vmem:[%s2 + $0x790] sm:$0xff]
      %v3220 = vld [vmem:[%s2 + $0x798] sm:$0xff]
      %v3221 = vld [vmem:[%s2 + $0x7a0] sm:$0xff]
      %v3222 = vld [vmem:[%s2 + $0x7a8] sm:$0xff]
      %v3223 = vld [vmem:[%s2 + $0x7b0] sm:$0xff]
      %v3224 = vld [vmem:[%s2 + $0x7b8] sm:$0xff]
      %v3225 = vld [vmem:[%s2 + $0x7c0] sm:$0xff]
      %v3226 = vld [vmem:[%s2 + $0x7c8] sm:$0xff]
      %v3227 = vld [vmem:[%s2 + $0x7d0] sm:$0xff]
      %v3228 = vld [vmem:[%s2 + $0x7d8] sm:$0xff]
      %v3229 = vld [vmem:[%s2 + $0x7e0] sm:$0xff]
      %v3230 = vld [vmem:[%s2 + $0x7e8] sm:$0xff]
      %v3231 = vld [vmem:[%s2 + $0x7f0] sm:$0xff]
      %v3232 = vld [vmem:[%s2 + $0x7f8] sm:$0xff]
      %v3233 = vld [vmem:[%s3] sm:$0xff]
      %v3235 = vlaneseq
      %v3236 = vshrl.u32 %v3235, 7
      %v3237 = vsub.s32 0, %v3236
      %v3238 = vrot.slane %v3233, %v3237
      %v3239 = vlaneseq
      %v3240 = vshrl.u32 %v3239, 7
      %v3241 = vsub.s32 1, %v3240
      %v3242 = vrot.slane %v3233, %v3241
      %v3243 = vlaneseq
      %v3244 = vshrl.u32 %v3243, 7
      %v3245 = vsub.s32 2, %v3244
      %v3246 = vrot.slane %v3233, %v3245
      %v3247 = vlaneseq
      %v3248 = vshrl.u32 %v3247, 7
      %v3249 = vsub.s32 3, %v3248
      %v3250 = vrot.slane %v3233, %v3249
      %v3251 = vlaneseq
      %v3252 = vshrl.u32 %v3251, 7
      %v3253 = vsub.s32 4, %v3252
      %v3254 = vrot.slane %v3233, %v3253
      %v3255 = vlaneseq
      %v3256 = vshrl.u32 %v3255, 7
      %v3257 = vsub.s32 5, %v3256
      %v3258 = vrot.slane %v3233, %v3257
      %v3259 = vlaneseq
      %v3260 = vshrl.u32 %v3259, 7
      %v3261 = vsub.s32 6, %v3260
      %v3262 = vrot.slane %v3233, %v3261
      %v3263 = vlaneseq
      %v3264 = vshrl.u32 %v3263, 7
      %v3265 = vsub.s32 7, %v3264
      %v3266 = vrot.slane %v3233, %v3265
      %v3531 = vunpack.c.l.b16 %v2977
      %v3532 = vunpack.c.h.b16 %v2977
      %v3533 = vunpack.c.l.b16 %v2978
      %v3534 = vunpack.c.h.b16 %v2978
      %v3535 = vunpack.c.l.b16 %v2979
      %v3536 = vunpack.c.h.b16 %v2979
      %v3537 = vunpack.c.l.b16 %v2980
      %v3538 = vunpack.c.h.b16 %v2980
      %v3539 = vunpack.c.l.b16 %v2981
      %v3540 = vunpack.c.h.b16 %v2981
      %v3541 = vunpack.c.l.b16 %v2982
      %v3542 = vunpack.c.h.b16 %v2982
      %v3543 = vunpack.c.l.b16 %v2983
      %v3544 = vunpack.c.h.b16 %v2983
      %v3545 = vunpack.c.l.b16 %v2984
      %v3546 = vunpack.c.h.b16 %v2984
      %v3547 = vunpack.c.l.b16 %v2985
      %v3548 = vunpack.c.h.b16 %v2985
      %v3549 = vunpack.c.l.b16 %v2986
      %v3550 = vunpack.c.h.b16 %v2986
      %v3551 = vunpack.c.l.b16 %v2987
      %v3552 = vunpack.c.h.b16 %v2987
      %v3553 = vunpack.c.l.b16 %v2988
      %v3554 = vunpack.c.h.b16 %v2988
      %v3555 = vunpack.c.l.b16 %v2989
      %v3556 = vunpack.c.h.b16 %v2989
      %v3557 = vunpack.c.l.b16 %v2990
      %v3558 = vunpack.c.h.b16 %v2990
      %v3559 = vunpack.c.l.b16 %v2991
      %v3560 = vunpack.c.h.b16 %v2991
      %v3561 = vunpack.c.l.b16 %v2992
      %v3562 = vunpack.c.h.b16 %v2992
      %v3563 = vunpack.c.l.b16 %v2993
      %v3564 = vunpack.c.h.b16 %v2993
      %v3565 = vunpack.c.l.b16 %v2994
      %v3566 = vunpack.c.h.b16 %v2994
      %v3567 = vunpack.c.l.b16 %v2995
      %v3568 = vunpack.c.h.b16 %v2995
      %v3569 = vunpack.c.l.b16 %v2996
      %v3570 = vunpack.c.h.b16 %v2996
      %v3571 = vunpack.c.l.b16 %v2997
      %v3572 = vunpack.c.h.b16 %v2997
      %v3573 = vunpack.c.l.b16 %v2998
      %v3574 = vunpack.c.h.b16 %v2998
      %v3575 = vunpack.c.l.b16 %v2999
      %v3576 = vunpack.c.h.b16 %v2999
      %v3577 = vunpack.c.l.b16 %v3000
      %v3578 = vunpack.c.h.b16 %v3000
      %v3579 = vunpack.c.l.b16 %v3001
      %v3580 = vunpack.c.h.b16 %v3001
      %v3581 = vunpack.c.l.b16 %v3002
      %v3582 = vunpack.c.h.b16 %v3002
      %v3583 = vunpack.c.l.b16 %v3003
      %v3584 = vunpack.c.h.b16 %v3003
      %v3585 = vunpack.c.l.b16 %v3004
      %v3586 = vunpack.c.h.b16 %v3004
      %v3587 = vunpack.c.l.b16 %v3005
      %v3588 = vunpack.c.h.b16 %v3005
      %v3589 = vunpack.c.l.b16 %v3006
      %v3590 = vunpack.c.h.b16 %v3006
      %v3591 = vunpack.c.l.b16 %v3007
      %v3592 = vunpack.c.h.b16 %v3007
      %v3593 = vunpack.c.l.b16 %v3008
      %v3594 = vunpack.c.h.b16 %v3008
      %v3595 = vunpack.c.l.b16 %v3009
      %v3596 = vunpack.c.h.b16 %v3009
      %v3597 = vunpack.c.l.b16 %v3010
      %v3598 = vunpack.c.h.b16 %v3010
      %v3599 = vunpack.c.l.b16 %v3011
      %v3600 = vunpack.c.h.b16 %v3011
      %v3601 = vunpack.c.l.b16 %v3012
      %v3602 = vunpack.c.h.b16 %v3012
      %v3603 = vunpack.c.l.b16 %v3013
      %v3604 = vunpack.c.h.b16 %v3013
      %v3605 = vunpack.c.l.b16 %v3014
      %v3606 = vunpack.c.h.b16 %v3014
      %v3607 = vunpack.c.l.b16 %v3015
      %v3608 = vunpack.c.h.b16 %v3015
      %v3609 = vunpack.c.l.b16 %v3016
      %v3610 = vunpack.c.h.b16 %v3016
      %v3611 = vunpack.c.l.b16 %v3017
      %v3612 = vunpack.c.h.b16 %v3017
      %v3613 = vunpack.c.l.b16 %v3018
      %v3614 = vunpack.c.h.b16 %v3018
      %v3615 = vunpack.c.l.b16 %v3019
      %v3616 = vunpack.c.h.b16 %v3019
      %v3617 = vunpack.c.l.b16 %v3020
      %v3618 = vunpack.c.h.b16 %v3020
      %v3619 = vunpack.c.l.b16 %v3021
      %v3620 = vunpack.c.h.b16 %v3021
      %v3621 = vunpack.c.l.b16 %v3022
      %v3622 = vunpack.c.h.b16 %v3022
      %v3623 = vunpack.c.l.b16 %v3023
      %v3624 = vunpack.c.h.b16 %v3023
      %v3625 = vunpack.c.l.b16 %v3024
      %v3626 = vunpack.c.h.b16 %v3024
      %v3627 = vunpack.c.l.b16 %v3025
      %v3628 = vunpack.c.h.b16 %v3025
      %v3629 = vunpack.c.l.b16 %v3026
      %v3630 = vunpack.c.h.b16 %v3026
      %v3631 = vunpack.c.l.b16 %v3027
      %v3632 = vunpack.c.h.b16 %v3027
      %v3633 = vunpack.c.l.b16 %v3028
      %v3634 = vunpack.c.h.b16 %v3028
      %v3635 = vunpack.c.l.b16 %v3029
      %v3636 = vunpack.c.h.b16 %v3029
      %v3637 = vunpack.c.l.b16 %v3030
      %v3638 = vunpack.c.h.b16 %v3030
      %v3639 = vunpack.c.l.b16 %v3031
      %v3640 = vunpack.c.h.b16 %v3031
      %v3641 = vunpack.c.l.b16 %v3032
      %v3642 = vunpack.c.h.b16 %v3032
      %v3643 = vunpack.c.l.b16 %v3033
      %v3644 = vunpack.c.h.b16 %v3033
      %v3645 = vunpack.c.l.b16 %v3034
      %v3646 = vunpack.c.h.b16 %v3034
      %v3647 = vunpack.c.l.b16 %v3035
      %v3648 = vunpack.c.h.b16 %v3035
      %v3649 = vunpack.c.l.b16 %v3036
      %v3650 = vunpack.c.h.b16 %v3036
      %v3651 = vunpack.c.l.b16 %v3037
      %v3652 = vunpack.c.h.b16 %v3037
      %v3653 = vunpack.c.l.b16 %v3038
      %v3654 = vunpack.c.h.b16 %v3038
      %v3655 = vunpack.c.l.b16 %v3039
      %v3656 = vunpack.c.h.b16 %v3039
      %v3657 = vunpack.c.l.b16 %v3040
      %v3658 = vunpack.c.h.b16 %v3040
      %v3659 = vunpack.c.l.b16 %v3041
      %v3660 = vunpack.c.h.b16 %v3041
      %v3661 = vunpack.c.l.b16 %v3042
      %v3662 = vunpack.c.h.b16 %v3042
      %v3663 = vunpack.c.l.b16 %v3043
      %v3664 = vunpack.c.h.b16 %v3043
      %v3665 = vunpack.c.l.b16 %v3044
      %v3666 = vunpack.c.h.b16 %v3044
      %v3667 = vunpack.c.l.b16 %v3045
      %v3668 = vunpack.c.h.b16 %v3045
      %v3669 = vunpack.c.l.b16 %v3046
      %v3670 = vunpack.c.h.b16 %v3046
      %v3671 = vunpack.c.l.b16 %v3047
      %v3672 = vunpack.c.h.b16 %v3047
      %v3673 = vunpack.c.l.b16 %v3048
      %v3674 = vunpack.c.h.b16 %v3048
      %v3675 = vunpack.c.l.b16 %v3049
      %v3676 = vunpack.c.h.b16 %v3049
      %v3677 = vunpack.c.l.b16 %v3050
      %v3678 = vunpack.c.h.b16 %v3050
      %v3679 = vunpack.c.l.b16 %v3051
      %v3680 = vunpack.c.h.b16 %v3051
      %v3681 = vunpack.c.l.b16 %v3052
      %v3682 = vunpack.c.h.b16 %v3052
      %v3683 = vunpack.c.l.b16 %v3053
      %v3684 = vunpack.c.h.b16 %v3053
      %v3685 = vunpack.c.l.b16 %v3054
      %v3686 = vunpack.c.h.b16 %v3054
      %v3687 = vunpack.c.l.b16 %v3055
      %v3688 = vunpack.c.h.b16 %v3055
      %v3689 = vunpack.c.l.b16 %v3056
      %v3690 = vunpack.c.h.b16 %v3056
      %v3691 = vunpack.c.l.b16 %v3057
      %v3692 = vunpack.c.h.b16 %v3057
      %v3693 = vunpack.c.l.b16 %v3058
      %v3694 = vunpack.c.h.b16 %v3058
      %v3695 = vunpack.c.l.b16 %v3059
      %v3696 = vunpack.c.h.b16 %v3059
      %v3697 = vunpack.c.l.b16 %v3060
      %v3698 = vunpack.c.h.b16 %v3060
      %v3699 = vunpack.c.l.b16 %v3061
      %v3700 = vunpack.c.h.b16 %v3061
      %v3701 = vunpack.c.l.b16 %v3062
      %v3702 = vunpack.c.h.b16 %v3062
      %v3703 = vunpack.c.l.b16 %v3063
      %v3704 = vunpack.c.h.b16 %v3063
      %v3705 = vunpack.c.l.b16 %v3064
      %v3706 = vunpack.c.h.b16 %v3064
      %v3707 = vunpack.c.l.b16 %v3065
      %v3708 = vunpack.c.h.b16 %v3065
      %v3709 = vunpack.c.l.b16 %v3066
      %v3710 = vunpack.c.h.b16 %v3066
      %v3711 = vunpack.c.l.b16 %v3067
      %v3712 = vunpack.c.h.b16 %v3067
      %v3713 = vunpack.c.l.b16 %v3068
      %v3714 = vunpack.c.h.b16 %v3068
      %v3715 = vunpack.c.l.b16 %v3069
      %v3716 = vunpack.c.h.b16 %v3069
      %v3717 = vunpack.c.l.b16 %v3070
      %v3718 = vunpack.c.h.b16 %v3070
      %v3719 = vunpack.c.l.b16 %v3071
      %v3720 = vunpack.c.h.b16 %v3071
      %v3721 = vunpack.c.l.b16 %v3072
      %v3722 = vunpack.c.h.b16 %v3072
      %v3723 = vunpack.c.l.b16 %v3073
      %v3724 = vunpack.c.h.b16 %v3073
      %v3725 = vunpack.c.l.b16 %v3074
      %v3726 = vunpack.c.h.b16 %v3074
      %v3727 = vunpack.c.l.b16 %v3075
      %v3728 = vunpack.c.h.b16 %v3075
      %v3729 = vunpack.c.l.b16 %v3076
      %v3730 = vunpack.c.h.b16 %v3076
      %v3731 = vunpack.c.l.b16 %v3077
      %v3732 = vunpack.c.h.b16 %v3077
      %v3733 = vunpack.c.l.b16 %v3078
      %v3734 = vunpack.c.h.b16 %v3078
      %v3735 = vunpack.c.l.b16 %v3079
      %v3736 = vunpack.c.h.b16 %v3079
      %v3737 = vunpack.c.l.b16 %v3080
      %v3738 = vunpack.c.h.b16 %v3080
      %v3739 = vunpack.c.l.b16 %v3081
      %v3740 = vunpack.c.h.b16 %v3081
      %v3741 = vunpack.c.l.b16 %v3082
      %v3742 = vunpack.c.h.b16 %v3082
      %v3743 = vunpack.c.l.b16 %v3083
      %v3744 = vunpack.c.h.b16 %v3083
      %v3745 = vunpack.c.l.b16 %v3084
      %v3746 = vunpack.c.h.b16 %v3084
      %v3747 = vunpack.c.l.b16 %v3085
      %v3748 = vunpack.c.h.b16 %v3085
      %v3749 = vunpack.c.l.b16 %v3086
      %v3750 = vunpack.c.h.b16 %v3086
      %v3751 = vunpack.c.l.b16 %v3087
      %v3752 = vunpack.c.h.b16 %v3087
      %v3753 = vunpack.c.l.b16 %v3088
      %v3754 = vunpack.c.h.b16 %v3088
      %v3755 = vunpack.c.l.b16 %v3089
      %v3756 = vunpack.c.h.b16 %v3089
      %v3757 = vunpack.c.l.b16 %v3090
      %v3758 = vunpack.c.h.b16 %v3090
      %v3759 = vunpack.c.l.b16 %v3091
      %v3760 = vunpack.c.h.b16 %v3091
      %v3761 = vunpack.c.l.b16 %v3092
      %v3762 = vunpack.c.h.b16 %v3092
      %v3763 = vunpack.c.l.b16 %v3093
      %v3764 = vunpack.c.h.b16 %v3093
      %v3765 = vunpack.c.l.b16 %v3094
      %v3766 = vunpack.c.h.b16 %v3094
      %v3767 = vunpack.c.l.b16 %v3095
      %v3768 = vunpack.c.h.b16 %v3095
      %v3769 = vunpack.c.l.b16 %v3096
      %v3770 = vunpack.c.h.b16 %v3096
      %v3771 = vunpack.c.l.b16 %v3097
      %v3772 = vunpack.c.h.b16 %v3097
      %v3773 = vunpack.c.l.b16 %v3098
      %v3774 = vunpack.c.h.b16 %v3098
      %v3775 = vunpack.c.l.b16 %v3099
      %v3776 = vunpack.c.h.b16 %v3099
      %v3777 = vunpack.c.l.b16 %v3100
      %v3778 = vunpack.c.h.b16 %v3100
      %v3779 = vunpack.c.l.b16 %v3101
      %v3780 = vunpack.c.h.b16 %v3101
      %v3781 = vunpack.c.l.b16 %v3102
      %v3782 = vunpack.c.h.b16 %v3102
      %v3783 = vunpack.c.l.b16 %v3103
      %v3784 = vunpack.c.h.b16 %v3103
      %v3785 = vunpack.c.l.b16 %v3104
      %v3786 = vunpack.c.h.b16 %v3104
      %v3787 = vunpack.c.l.b16 %v3105
      %v3788 = vunpack.c.h.b16 %v3105
      %v3789 = vunpack.c.l.b16 %v3106
      %v3790 = vunpack.c.h.b16 %v3106
      %v3791 = vunpack.c.l.b16 %v3107
      %v3792 = vunpack.c.h.b16 %v3107
      %v3793 = vunpack.c.l.b16 %v3108
      %v3794 = vunpack.c.h.b16 %v3108
      %v3795 = vunpack.c.l.b16 %v3109
      %v3796 = vunpack.c.h.b16 %v3109
      %v3797 = vunpack.c.l.b16 %v3110
      %v3798 = vunpack.c.h.b16 %v3110
      %v3799 = vunpack.c.l.b16 %v3111
      %v3800 = vunpack.c.h.b16 %v3111
      %v3801 = vunpack.c.l.b16 %v3112
      %v3802 = vunpack.c.h.b16 %v3112
      %v3803 = vunpack.c.l.b16 %v3113
      %v3804 = vunpack.c.h.b16 %v3113
      %v3805 = vunpack.c.l.b16 %v3114
      %v3806 = vunpack.c.h.b16 %v3114
      %v3807 = vunpack.c.l.b16 %v3115
      %v3808 = vunpack.c.h.b16 %v3115
      %v3809 = vunpack.c.l.b16 %v3116
      %v3810 = vunpack.c.h.b16 %v3116
      %v3811 = vunpack.c.l.b16 %v3117
      %v3812 = vunpack.c.h.b16 %v3117
      %v3813 = vunpack.c.l.b16 %v3118
      %v3814 = vunpack.c.h.b16 %v3118
      %v3815 = vunpack.c.l.b16 %v3119
      %v3816 = vunpack.c.h.b16 %v3119
      %v3817 = vunpack.c.l.b16 %v3120
      %v3818 = vunpack.c.h.b16 %v3120
      %v3819 = vunpack.c.l.b16 %v3121
      %v3820 = vunpack.c.h.b16 %v3121
      %v3821 = vunpack.c.l.b16 %v3122
      %v3822 = vunpack.c.h.b16 %v3122
      %v3823 = vunpack.c.l.b16 %v3123
      %v3824 = vunpack.c.h.b16 %v3123
      %v3825 = vunpack.c.l.b16 %v3124
      %v3826 = vunpack.c.h.b16 %v3124
      %v3827 = vunpack.c.l.b16 %v3125
      %v3828 = vunpack.c.h.b16 %v3125
      %v3829 = vunpack.c.l.b16 %v3126
      %v3830 = vunpack.c.h.b16 %v3126
      %v3831 = vunpack.c.l.b16 %v3127
      %v3832 = vunpack.c.h.b16 %v3127
      %v3833 = vunpack.c.l.b16 %v3128
      %v3834 = vunpack.c.h.b16 %v3128
      %v3835 = vunpack.c.l.b16 %v3129
      %v3836 = vunpack.c.h.b16 %v3129
      %v3837 = vunpack.c.l.b16 %v3130
      %v3838 = vunpack.c.h.b16 %v3130
      %v3839 = vunpack.c.l.b16 %v3131
      %v3840 = vunpack.c.h.b16 %v3131
      %v3841 = vunpack.c.l.b16 %v3132
      %v3842 = vunpack.c.h.b16 %v3132
      %v3843 = vunpack.c.l.b16 %v3133
      %v3844 = vunpack.c.h.b16 %v3133
      %v3845 = vunpack.c.l.b16 %v3134
      %v3846 = vunpack.c.h.b16 %v3134
      %v3847 = vunpack.c.l.b16 %v3135
      %v3848 = vunpack.c.h.b16 %v3135
      %v3849 = vunpack.c.l.b16 %v3136
      %v3850 = vunpack.c.h.b16 %v3136
      %v3851 = vunpack.c.l.b16 %v3137
      %v3852 = vunpack.c.h.b16 %v3137
      %v3853 = vunpack.c.l.b16 %v3138
      %v3854 = vunpack.c.h.b16 %v3138
      %v3855 = vunpack.c.l.b16 %v3139
      %v3856 = vunpack.c.h.b16 %v3139
      %v3857 = vunpack.c.l.b16 %v3140
      %v3858 = vunpack.c.h.b16 %v3140
      %v3859 = vunpack.c.l.b16 %v3141
      %v3860 = vunpack.c.h.b16 %v3141
      %v3861 = vunpack.c.l.b16 %v3142
      %v3862 = vunpack.c.h.b16 %v3142
      %v3863 = vunpack.c.l.b16 %v3143
      %v3864 = vunpack.c.h.b16 %v3143
      %v3865 = vunpack.c.l.b16 %v3144
      %v3866 = vunpack.c.h.b16 %v3144
      %v3867 = vunpack.c.l.b16 %v3145
      %v3868 = vunpack.c.h.b16 %v3145
      %v3869 = vunpack.c.l.b16 %v3146
      %v3870 = vunpack.c.h.b16 %v3146
      %v3871 = vunpack.c.l.b16 %v3147
      %v3872 = vunpack.c.h.b16 %v3147
      %v3873 = vunpack.c.l.b16 %v3148
      %v3874 = vunpack.c.h.b16 %v3148
      %v3875 = vunpack.c.l.b16 %v3149
      %v3876 = vunpack.c.h.b16 %v3149
      %v3877 = vunpack.c.l.b16 %v3150
      %v3878 = vunpack.c.h.b16 %v3150
      %v3879 = vunpack.c.l.b16 %v3151
      %v3880 = vunpack.c.h.b16 %v3151
      %v3881 = vunpack.c.l.b16 %v3152
      %v3882 = vunpack.c.h.b16 %v3152
      %v3883 = vunpack.c.l.b16 %v3153
      %v3884 = vunpack.c.h.b16 %v3153
      %v3885 = vunpack.c.l.b16 %v3154
      %v3886 = vunpack.c.h.b16 %v3154
      %v3887 = vunpack.c.l.b16 %v3155
      %v3888 = vunpack.c.h.b16 %v3155
      %v3889 = vunpack.c.l.b16 %v3156
      %v3890 = vunpack.c.h.b16 %v3156
      %v3891 = vunpack.c.l.b16 %v3157
      %v3892 = vunpack.c.h.b16 %v3157
      %v3893 = vunpack.c.l.b16 %v3158
      %v3894 = vunpack.c.h.b16 %v3158
      %v3895 = vunpack.c.l.b16 %v3159
      %v3896 = vunpack.c.h.b16 %v3159
      %v3897 = vunpack.c.l.b16 %v3160
      %v3898 = vunpack.c.h.b16 %v3160
      %v3899 = vunpack.c.l.b16 %v3161
      %v3900 = vunpack.c.h.b16 %v3161
      %v3901 = vunpack.c.l.b16 %v3162
      %v3902 = vunpack.c.h.b16 %v3162
      %v3903 = vunpack.c.l.b16 %v3163
      %v3904 = vunpack.c.h.b16 %v3163
      %v3905 = vunpack.c.l.b16 %v3164
      %v3906 = vunpack.c.h.b16 %v3164
      %v3907 = vunpack.c.l.b16 %v3165
      %v3908 = vunpack.c.h.b16 %v3165
      %v3909 = vunpack.c.l.b16 %v3166
      %v3910 = vunpack.c.h.b16 %v3166
      %v3911 = vunpack.c.l.b16 %v3167
      %v3912 = vunpack.c.h.b16 %v3167
      %v3913 = vunpack.c.l.b16 %v3168
      %v3914 = vunpack.c.h.b16 %v3168
      %v3915 = vunpack.c.l.b16 %v3169
      %v3916 = vunpack.c.h.b16 %v3169
      %v3917 = vunpack.c.l.b16 %v3170
      %v3918 = vunpack.c.h.b16 %v3170
      %v3919 = vunpack.c.l.b16 %v3171
      %v3920 = vunpack.c.h.b16 %v3171
      %v3921 = vunpack.c.l.b16 %v3172
      %v3922 = vunpack.c.h.b16 %v3172
      %v3923 = vunpack.c.l.b16 %v3173
      %v3924 = vunpack.c.h.b16 %v3173
      %v3925 = vunpack.c.l.b16 %v3174
      %v3926 = vunpack.c.h.b16 %v3174
      %v3927 = vunpack.c.l.b16 %v3175
      %v3928 = vunpack.c.h.b16 %v3175
      %v3929 = vunpack.c.l.b16 %v3176
      %v3930 = vunpack.c.h.b16 %v3176
      %v3931 = vunpack.c.l.b16 %v3177
      %v3932 = vunpack.c.h.b16 %v3177
      %v3933 = vunpack.c.l.b16 %v3178
      %v3934 = vunpack.c.h.b16 %v3178
      %v3935 = vunpack.c.l.b16 %v3179
      %v3936 = vunpack.c.h.b16 %v3179
      %v3937 = vunpack.c.l.b16 %v3180
      %v3938 = vunpack.c.h.b16 %v3180
      %v3939 = vunpack.c.l.b16 %v3181
      %v3940 = vunpack.c.h.b16 %v3181
      %v3941 = vunpack.c.l.b16 %v3182
      %v3942 = vunpack.c.h.b16 %v3182
      %v3943 = vunpack.c.l.b16 %v3183
      %v3944 = vunpack.c.h.b16 %v3183
      %v3945 = vunpack.c.l.b16 %v3184
      %v3946 = vunpack.c.h.b16 %v3184
      %v3947 = vunpack.c.l.b16 %v3185
      %v3948 = vunpack.c.h.b16 %v3185
      %v3949 = vunpack.c.l.b16 %v3186
      %v3950 = vunpack.c.h.b16 %v3186
      %v3951 = vunpack.c.l.b16 %v3187
      %v3952 = vunpack.c.h.b16 %v3187
      %v3953 = vunpack.c.l.b16 %v3188
      %v3954 = vunpack.c.h.b16 %v3188
      %v3955 = vunpack.c.l.b16 %v3189
      %v3956 = vunpack.c.h.b16 %v3189
      %v3957 = vunpack.c.l.b16 %v3190
      %v3958 = vunpack.c.h.b16 %v3190
      %v3959 = vunpack.c.l.b16 %v3191
      %v3960 = vunpack.c.h.b16 %v3191
      %v3961 = vunpack.c.l.b16 %v3192
      %v3962 = vunpack.c.h.b16 %v3192
      %v3963 = vunpack.c.l.b16 %v3193
      %v3964 = vunpack.c.h.b16 %v3193
      %v3965 = vunpack.c.l.b16 %v3194
      %v3966 = vunpack.c.h.b16 %v3194
      %v3967 = vunpack.c.l.b16 %v3195
      %v3968 = vunpack.c.h.b16 %v3195
      %v3969 = vunpack.c.l.b16 %v3196
      %v3970 = vunpack.c.h.b16 %v3196
      %v3971 = vunpack.c.l.b16 %v3197
      %v3972 = vunpack.c.h.b16 %v3197
      %v3973 = vunpack.c.l.b16 %v3198
      %v3974 = vunpack.c.h.b16 %v3198
      %v3975 = vunpack.c.l.b16 %v3199
      %v3976 = vunpack.c.h.b16 %v3199
      %v3977 = vunpack.c.l.b16 %v3200
      %v3978 = vunpack.c.h.b16 %v3200
      %v3979 = vunpack.c.l.b16 %v3201
      %v3980 = vunpack.c.h.b16 %v3201
      %v3981 = vunpack.c.l.b16 %v3202
      %v3982 = vunpack.c.h.b16 %v3202
      %v3983 = vunpack.c.l.b16 %v3203
      %v3984 = vunpack.c.h.b16 %v3203
      %v3985 = vunpack.c.l.b16 %v3204
      %v3986 = vunpack.c.h.b16 %v3204
      %v3987 = vunpack.c.l.b16 %v3205
      %v3988 = vunpack.c.h.b16 %v3205
      %v3989 = vunpack.c.l.b16 %v3206
      %v3990 = vunpack.c.h.b16 %v3206
      %v3991 = vunpack.c.l.b16 %v3207
      %v3992 = vunpack.c.h.b16 %v3207
      %v3993 = vunpack.c.l.b16 %v3208
      %v3994 = vunpack.c.h.b16 %v3208
      %v3995 = vunpack.c.l.b16 %v3209
      %v3996 = vunpack.c.h.b16 %v3209
      %v3997 = vunpack.c.l.b16 %v3210
      %v3998 = vunpack.c.h.b16 %v3210
      %v3999 = vunpack.c.l.b16 %v3211
      %v4000 = vunpack.c.h.b16 %v3211
      %v4001 = vunpack.c.l.b16 %v3212
      %v4002 = vunpack.c.h.b16 %v3212
      %v4003 = vunpack.c.l.b16 %v3213
      %v4004 = vunpack.c.h.b16 %v3213
      %v4005 = vunpack.c.l.b16 %v3214
      %v4006 = vunpack.c.h.b16 %v3214
      %v4007 = vunpack.c.l.b16 %v3215
      %v4008 = vunpack.c.h.b16 %v3215
      %v4009 = vunpack.c.l.b16 %v3216
      %v4010 = vunpack.c.h.b16 %v3216
      %v4011 = vunpack.c.l.b16 %v3217
      %v4012 = vunpack.c.h.b16 %v3217
      %v4013 = vunpack.c.l.b16 %v3218
      %v4014 = vunpack.c.h.b16 %v3218
      %v4015 = vunpack.c.l.b16 %v3219
      %v4016 = vunpack.c.h.b16 %v3219
      %v4017 = vunpack.c.l.b16 %v3220
      %v4018 = vunpack.c.h.b16 %v3220
      %v4019 = vunpack.c.l.b16 %v3221
      %v4020 = vunpack.c.h.b16 %v3221
      %v4021 = vunpack.c.l.b16 %v3222
      %v4022 = vunpack.c.h.b16 %v3222
      %v4023 = vunpack.c.l.b16 %v3223
      %v4024 = vunpack.c.h.b16 %v3223
      %v4025 = vunpack.c.l.b16 %v3224
      %v4026 = vunpack.c.h.b16 %v3224
      %v4027 = vunpack.c.l.b16 %v3225
      %v4028 = vunpack.c.h.b16 %v3225
      %v4029 = vunpack.c.l.b16 %v3226
      %v4030 = vunpack.c.h.b16 %v3226
      %v4031 = vunpack.c.l.b16 %v3227
      %v4032 = vunpack.c.h.b16 %v3227
      %v4033 = vunpack.c.l.b16 %v3228
      %v4034 = vunpack.c.h.b16 %v3228
      %v4035 = vunpack.c.l.b16 %v3229
      %v4036 = vunpack.c.h.b16 %v3229
      %v4037 = vunpack.c.l.b16 %v3230
      %v4038 = vunpack.c.h.b16 %v3230
      %v4039 = vunpack.c.l.b16 %v3231
      %v4040 = vunpack.c.h.b16 %v3231
      %v4041 = vunpack.c.l.b16 %v3232
      %v4042 = vunpack.c.h.b16 %v3232
      %v4043 = vpack.c.b16 %v3539, %v3531
      %v4044 = vpack.c.b16 %v3540, %v3532
      %v4045 = vpack.c.b16 %v3541, %v3533
      %v4046 = vpack.c.b16 %v3542, %v3534
      %v4047 = vpack.c.b16 %v3543, %v3535
      %v4048 = vpack.c.b16 %v3544, %v3536
      %v4049 = vpack.c.b16 %v3545, %v3537
      %v4050 = vpack.c.b16 %v3546, %v3538
      %v4051 = vpack.c.b16 %v3555, %v3547
      %v4052 = vpack.c.b16 %v3556, %v3548
      %v4053 = vpack.c.b16 %v3557, %v3549
      %v4054 = vpack.c.b16 %v3558, %v3550
      %v4055 = vpack.c.b16 %v3559, %v3551
      %v4056 = vpack.c.b16 %v3560, %v3552
      %v4057 = vpack.c.b16 %v3561, %v3553
      %v4058 = vpack.c.b16 %v3562, %v3554
      %v4059 = vpack.c.b16 %v3571, %v3563
      %v4060 = vpack.c.b16 %v3572, %v3564
      %v4061 = vpack.c.b16 %v3573, %v3565
      %v4062 = vpack.c.b16 %v3574, %v3566
      %v4063 = vpack.c.b16 %v3575, %v3567
      %v4064 = vpack.c.b16 %v3576, %v3568
      %v4065 = vpack.c.b16 %v3577, %v3569
      %v4066 = vpack.c.b16 %v3578, %v3570
      %v4067 = vpack.c.b16 %v3587, %v3579
      %v4068 = vpack.c.b16 %v3588, %v3580
      %v4069 = vpack.c.b16 %v3589, %v3581
      %v4070 = vpack.c.b16 %v3590, %v3582
      %v4071 = vpack.c.b16 %v3591, %v3583
      %v4072 = vpack.c.b16 %v3592, %v3584
      %v4073 = vpack.c.b16 %v3593, %v3585
      %v4074 = vpack.c.b16 %v3594, %v3586
      %v4075 = vpack.c.b16 %v3603, %v3595
      %v4076 = vpack.c.b16 %v3604, %v3596
      %v4077 = vpack.c.b16 %v3605, %v3597
      %v4078 = vpack.c.b16 %v3606, %v3598
      %v4079 = vpack.c.b16 %v3607, %v3599
      %v4080 = vpack.c.b16 %v3608, %v3600
      %v4081 = vpack.c.b16 %v3609, %v3601
      %v4082 = vpack.c.b16 %v3610, %v3602
      %v4083 = vpack.c.b16 %v3619, %v3611
      %v4084 = vpack.c.b16 %v3620, %v3612
      %v4085 = vpack.c.b16 %v3621, %v3613
      %v4086 = vpack.c.b16 %v3622, %v3614
      %v4087 = vpack.c.b16 %v3623, %v3615
      %v4088 = vpack.c.b16 %v3624, %v3616
      %v4089 = vpack.c.b16 %v3625, %v3617
      %v4090 = vpack.c.b16 %v3626, %v3618
      %v4091 = vpack.c.b16 %v3635, %v3627
      %v4092 = vpack.c.b16 %v3636, %v3628
      %v4093 = vpack.c.b16 %v3637, %v3629
      %v4094 = vpack.c.b16 %v3638, %v3630
      %v4095 = vpack.c.b16 %v3639, %v3631
      %v4096 = vpack.c.b16 %v3640, %v3632
      %v4097 = vpack.c.b16 %v3641, %v3633
      %v4098 = vpack.c.b16 %v3642, %v3634
      %v4099 = vpack.c.b16 %v3651, %v3643
      %v4100 = vpack.c.b16 %v3652, %v3644
      %v4101 = vpack.c.b16 %v3653, %v3645
      %v4102 = vpack.c.b16 %v3654, %v3646
      %v4103 = vpack.c.b16 %v3655, %v3647
      %v4104 = vpack.c.b16 %v3656, %v3648
      %v4105 = vpack.c.b16 %v3657, %v3649
      %v4106 = vpack.c.b16 %v3658, %v3650
      %v4107 = vpack.c.b16 %v3667, %v3659
      %v4108 = vpack.c.b16 %v3668, %v3660
      %v4109 = vpack.c.b16 %v3669, %v3661
      %v4110 = vpack.c.b16 %v3670, %v3662
      %v4111 = vpack.c.b16 %v3671, %v3663
      %v4112 = vpack.c.b16 %v3672, %v3664
      %v4113 = vpack.c.b16 %v3673, %v3665
      %v4114 = vpack.c.b16 %v3674, %v3666
      %v4115 = vpack.c.b16 %v3683, %v3675
      %v4116 = vpack.c.b16 %v3684, %v3676
      %v4117 = vpack.c.b16 %v3685, %v3677
      %v4118 = vpack.c.b16 %v3686, %v3678
      %v4119 = vpack.c.b16 %v3687, %v3679
      %v4120 = vpack.c.b16 %v3688, %v3680
      %v4121 = vpack.c.b16 %v3689, %v3681
      %v4122 = vpack.c.b16 %v3690, %v3682
      %v4123 = vpack.c.b16 %v3699, %v3691
      %v4124 = vpack.c.b16 %v3700, %v3692
      %v4125 = vpack.c.b16 %v3701, %v3693
      %v4126 = vpack.c.b16 %v3702, %v3694
      %v4127 = vpack.c.b16 %v3703, %v3695
      %v4128 = vpack.c.b16 %v3704, %v3696
      %v4129 = vpack.c.b16 %v3705, %v3697
      %v4130 = vpack.c.b16 %v3706, %v3698
      %v4131 = vpack.c.b16 %v3715, %v3707
      %v4132 = vpack.c.b16 %v3716, %v3708
      %v4133 = vpack.c.b16 %v3717, %v3709
      %v4134 = vpack.c.b16 %v3718, %v3710
      %v4135 = vpack.c.b16 %v3719, %v3711
      %v4136 = vpack.c.b16 %v3720, %v3712
      %v4137 = vpack.c.b16 %v3721, %v3713
      %v4138 = vpack.c.b16 %v3722, %v3714
      %v4139 = vpack.c.b16 %v3731, %v3723
      %v4140 = vpack.c.b16 %v3732, %v3724
      %v4141 = vpack.c.b16 %v3733, %v3725
      %v4142 = vpack.c.b16 %v3734, %v3726
      %v4143 = vpack.c.b16 %v3735, %v3727
      %v4144 = vpack.c.b16 %v3736, %v3728
      %v4145 = vpack.c.b16 %v3737, %v3729
      %v4146 = vpack.c.b16 %v3738, %v3730
      %v4147 = vpack.c.b16 %v3747, %v3739
      %v4148 = vpack.c.b16 %v3748, %v3740
      %v4149 = vpack.c.b16 %v3749, %v3741
      %v4150 = vpack.c.b16 %v3750, %v3742
      %v4151 = vpack.c.b16 %v3751, %v3743
      %v4152 = vpack.c.b16 %v3752, %v3744
      %v4153 = vpack.c.b16 %v3753, %v3745
      %v4154 = vpack.c.b16 %v3754, %v3746
      %v4155 = vpack.c.b16 %v3763, %v3755
      %v4156 = vpack.c.b16 %v3764, %v3756
      %v4157 = vpack.c.b16 %v3765, %v3757
      %v4158 = vpack.c.b16 %v3766, %v3758
      %v4159 = vpack.c.b16 %v3767, %v3759
      %v4160 = vpack.c.b16 %v3768, %v3760
      %v4161 = vpack.c.b16 %v3769, %v3761
      %v4162 = vpack.c.b16 %v3770, %v3762
      %v4163 = vpack.c.b16 %v3779, %v3771
      %v4164 = vpack.c.b16 %v3780, %v3772
      %v4165 = vpack.c.b16 %v3781, %v3773
      %v4166 = vpack.c.b16 %v3782, %v3774
      %v4167 = vpack.c.b16 %v3783, %v3775
      %v4168 = vpack.c.b16 %v3784, %v3776
      %v4169 = vpack.c.b16 %v3785, %v3777
      %v4170 = vpack.c.b16 %v3786, %v3778
      %v4171 = vpack.c.b16 %v3795, %v3787
      %v4172 = vpack.c.b16 %v3796, %v3788
      %v4173 = vpack.c.b16 %v3797, %v3789
      %v4174 = vpack.c.b16 %v3798, %v3790
      %v4175 = vpack.c.b16 %v3799, %v3791
      %v4176 = vpack.c.b16 %v3800, %v3792
      %v4177 = vpack.c.b16 %v3801, %v3793
      %v4178 = vpack.c.b16 %v3802, %v3794
      %v4179 = vpack.c.b16 %v3811, %v3803
      %v4180 = vpack.c.b16 %v3812, %v3804
      %v4181 = vpack.c.b16 %v3813, %v3805
      %v4182 = vpack.c.b16 %v3814, %v3806
      %v4183 = vpack.c.b16 %v3815, %v3807
      %v4184 = vpack.c.b16 %v3816, %v3808
      %v4185 = vpack.c.b16 %v3817, %v3809
      %v4186 = vpack.c.b16 %v3818, %v3810
      %v4187 = vpack.c.b16 %v3827, %v3819
      %v4188 = vpack.c.b16 %v3828, %v3820
      %v4189 = vpack.c.b16 %v3829, %v3821
      %v4190 = vpack.c.b16 %v3830, %v3822
      %v4191 = vpack.c.b16 %v3831, %v3823
      %v4192 = vpack.c.b16 %v3832, %v3824
      %v4193 = vpack.c.b16 %v3833, %v3825
      %v4194 = vpack.c.b16 %v3834, %v3826
      %v4195 = vpack.c.b16 %v3843, %v3835
      %v4196 = vpack.c.b16 %v3844, %v3836
      %v4197 = vpack.c.b16 %v3845, %v3837
      %v4198 = vpack.c.b16 %v3846, %v3838
      %v4199 = vpack.c.b16 %v3847, %v3839
      %v4200 = vpack.c.b16 %v3848, %v3840
      %v4201 = vpack.c.b16 %v3849, %v3841
      %v4202 = vpack.c.b16 %v3850, %v3842
      %v4203 = vpack.c.b16 %v3859, %v3851
      %v4204 = vpack.c.b16 %v3860, %v3852
      %v4205 = vpack.c.b16 %v3861, %v3853
      %v4206 = vpack.c.b16 %v3862, %v3854
      %v4207 = vpack.c.b16 %v3863, %v3855
      %v4208 = vpack.c.b16 %v3864, %v3856
      %v4209 = vpack.c.b16 %v3865, %v3857
      %v4210 = vpack.c.b16 %v3866, %v3858
      %v4211 = vpack.c.b16 %v3875, %v3867
      %v4212 = vpack.c.b16 %v3876, %v3868
      %v4213 = vpack.c.b16 %v3877, %v3869
      %v4214 = vpack.c.b16 %v3878, %v3870
      %v4215 = vpack.c.b16 %v3879, %v3871
      %v4216 = vpack.c.b16 %v3880, %v3872
      %v4217 = vpack.c.b16 %v3881, %v3873
      %v4218 = vpack.c.b16 %v3882, %v3874
      %v4219 = vpack.c.b16 %v3891, %v3883
      %v4220 = vpack.c.b16 %v3892, %v3884
      %v4221 = vpack.c.b16 %v3893, %v3885
      %v4222 = vpack.c.b16 %v3894, %v3886
      %v4223 = vpack.c.b16 %v3895, %v3887
      %v4224 = vpack.c.b16 %v3896, %v3888
      %v4225 = vpack.c.b16 %v3897, %v3889
      %v4226 = vpack.c.b16 %v3898, %v3890
      %v4227 = vpack.c.b16 %v3907, %v3899
      %v4228 = vpack.c.b16 %v3908, %v3900
      %v4229 = vpack.c.b16 %v3909, %v3901
      %v4230 = vpack.c.b16 %v3910, %v3902
      %v4231 = vpack.c.b16 %v3911, %v3903
      %v4232 = vpack.c.b16 %v3912, %v3904
      %v4233 = vpack.c.b16 %v3913, %v3905
      %v4234 = vpack.c.b16 %v3914, %v3906
      %v4235 = vpack.c.b16 %v3923, %v3915
      %v4236 = vpack.c.b16 %v3924, %v3916
      %v4237 = vpack.c.b16 %v3925, %v3917
      %v4238 = vpack.c.b16 %v3926, %v3918
      %v4239 = vpack.c.b16 %v3927, %v3919
      %v4240 = vpack.c.b16 %v3928, %v3920
      %v4241 = vpack.c.b16 %v3929, %v3921
      %v4242 = vpack.c.b16 %v3930, %v3922
      %v4243 = vpack.c.b16 %v3939, %v3931
      %v4244 = vpack.c.b16 %v3940, %v3932
      %v4245 = vpack.c.b16 %v3941, %v3933
      %v4246 = vpack.c.b16 %v3942, %v3934
      %v4247 = vpack.c.b16 %v3943, %v3935
      %v4248 = vpack.c.b16 %v3944, %v3936
      %v4249 = vpack.c.b16 %v3945, %v3937
      %v4250 = vpack.c.b16 %v3946, %v3938
      %v4251 = vpack.c.b16 %v3955, %v3947
      %v4252 = vpack.c.b16 %v3956, %v3948
      %v4253 = vpack.c.b16 %v3957, %v3949
      %v4254 = vpack.c.b16 %v3958, %v3950
      %v4255 = vpack.c.b16 %v3959, %v3951
      %v4256 = vpack.c.b16 %v3960, %v3952
      %v4257 = vpack.c.b16 %v3961, %v3953
      %v4258 = vpack.c.b16 %v3962, %v3954
      %v4259 = vpack.c.b16 %v3971, %v3963
      %v4260 = vpack.c.b16 %v3972, %v3964
      %v4261 = vpack.c.b16 %v3973, %v3965
      %v4262 = vpack.c.b16 %v3974, %v3966
      %v4263 = vpack.c.b16 %v3975, %v3967
      %v4264 = vpack.c.b16 %v3976, %v3968
      %v4265 = vpack.c.b16 %v3977, %v3969
      %v4266 = vpack.c.b16 %v3978, %v3970
      %v4267 = vpack.c.b16 %v3987, %v3979
      %v4268 = vpack.c.b16 %v3988, %v3980
      %v4269 = vpack.c.b16 %v3989, %v3981
      %v4270 = vpack.c.b16 %v3990, %v3982
      %v4271 = vpack.c.b16 %v3991, %v3983
      %v4272 = vpack.c.b16 %v3992, %v3984
      %v4273 = vpack.c.b16 %v3993, %v3985
      %v4274 = vpack.c.b16 %v3994, %v3986
      %v4275 = vpack.c.b16 %v4003, %v3995
      %v4276 = vpack.c.b16 %v4004, %v3996
      %v4277 = vpack.c.b16 %v4005, %v3997
      %v4278 = vpack.c.b16 %v4006, %v3998
      %v4279 = vpack.c.b16 %v4007, %v3999
      %v4280 = vpack.c.b16 %v4008, %v4000
      %v4281 = vpack.c.b16 %v4009, %v4001
      %v4282 = vpack.c.b16 %v4010, %v4002
      %v4283 = vpack.c.b16 %v4019, %v4011
      %v4284 = vpack.c.b16 %v4020, %v4012
      %v4285 = vpack.c.b16 %v4021, %v4013
      %v4286 = vpack.c.b16 %v4022, %v4014
      %v4287 = vpack.c.b16 %v4023, %v4015
      %v4288 = vpack.c.b16 %v4024, %v4016
      %v4289 = vpack.c.b16 %v4025, %v4017
      %v4290 = vpack.c.b16 %v4026, %v4018
      %v4291 = vpack.c.b16 %v4035, %v4027
      %v4292 = vpack.c.b16 %v4036, %v4028
      %v4293 = vpack.c.b16 %v4037, %v4029
      %v4294 = vpack.c.b16 %v4038, %v4030
      %v4295 = vpack.c.b16 %v4039, %v4031
      %v4296 = vpack.c.b16 %v4040, %v4032
      %v4297 = vpack.c.b16 %v4041, %v4033
      %v4298 = vpack.c.b16 %v4042, %v4034
      %4555 = vmatprep.subr.bf16.mxu0 %v4100
      %4556 = vmatpush1.bf16.msra.mxu0 %v4099
      %4557 = vmatprep.subr.bf16.mxu0 %v4092
      %4558 = vmatpush1.bf16.msra.mxu0 %v4091
      %4559 = vmatprep.subr.bf16.mxu0 %v4084
      %4560 = vmatpush1.bf16.msra.mxu0 %v4083
      %4561 = vmatprep.subr.bf16.mxu0 %v4076
      %4562 = vmatpush1.bf16.msra.mxu0 %v4075
      %4563 = vmatprep.subr.bf16.mxu0 %v4068
      %4564 = vmatpush1.bf16.msra.mxu0 %v4067
      %4565 = vmatprep.subr.bf16.mxu0 %v4060
      %4566 = vmatpush1.bf16.msra.mxu0 %v4059
      %4567 = vmatprep.subr.bf16.mxu0 %v4052
      %4568 = vmatpush1.bf16.msra.mxu0 %v4051
      %4569 = vmatprep.subr.bf16.mxu0 %v4044
      %4570 = vmatpush1.bf16.msra.mxu0 %v4043
      %4571 = vmatprep.subr.bf16.mxu0 %v4164
      %4572 = vmatpush2.bf16.msra.mxu0 %v4163
      %4573 = vmatprep.subr.bf16.mxu0 %v4156
      %4574 = vmatpush2.bf16.msra.mxu0 %v4155
      %4575 = vmatprep.subr.bf16.mxu0 %v4148
      %4576 = vmatpush2.bf16.msra.mxu0 %v4147
      %4577 = vmatprep.subr.bf16.mxu0 %v4140
      %4578 = vmatpush2.bf16.msra.mxu0 %v4139
      %4579 = vmatprep.subr.bf16.mxu0 %v4132
      %4580 = vmatpush2.bf16.msra.mxu0 %v4131
      %4581 = vmatprep.subr.bf16.mxu0 %v4124
      %4582 = vmatpush2.bf16.msra.mxu0 %v4123
      %4583 = vmatprep.subr.bf16.mxu0 %v4116
      %4584 = vmatpush2.bf16.msra.mxu0 %v4115
      %4585 = vmatprep.subr.bf16.mxu0 %v4108
      %4586 = vmatpush2.bf16.msra.mxu0 %v4107
      %4587 = vmatprep.mubr.bf16.mxu0 %v2974
      %4588 = vmatmul.mubr.bf16.gmra.mxu0 %v2973
      %v4589 = vpop.f32.mrf.mxu0
      %v4590 = vadd.f32 %v3238, %v4589
      %v4591 = vpop.f32.mrf.mxu0
      %v4592 = vadd.f32 %v3242, %v4591
      %v4593 = vpop.f32.mrf.mxu0
      %v4594 = vpop.f32.mrf.mxu0
      %4595 = vdwg.mxu0
      %4596 = vmatprep.subr.bf16.mxu0 %v4228
      %4597 = vmatpush1.bf16.msra.mxu0 %v4227
      %4598 = vmatprep.subr.bf16.mxu0 %v4220
      %4599 = vmatpush1.bf16.msra.mxu0 %v4219
      %4600 = vmatprep.subr.bf16.mxu0 %v4212
      %4601 = vmatpush1.bf16.msra.mxu0 %v4211
      %4602 = vmatprep.subr.bf16.mxu0 %v4204
      %4603 = vmatpush1.bf16.msra.mxu0 %v4203
      %4604 = vmatprep.subr.bf16.mxu0 %v4196
      %4605 = vmatpush1.bf16.msra.mxu0 %v4195
      %4606 = vmatprep.subr.bf16.mxu0 %v4188
      %4607 = vmatpush1.bf16.msra.mxu0 %v4187
      %4608 = vmatprep.subr.bf16.mxu0 %v4180
      %4609 = vmatpush1.bf16.msra.mxu0 %v4179
      %4610 = vmatprep.subr.bf16.mxu0 %v4172
      %4611 = vmatpush1.bf16.msra.mxu0 %v4171
      %4612 = vmatprep.subr.bf16.mxu0 %v4292
      %4613 = vmatpush2.bf16.msra.mxu0 %v4291
      %4614 = vmatprep.subr.bf16.mxu0 %v4284
      %4615 = vmatpush2.bf16.msra.mxu0 %v4283
      %4616 = vmatprep.subr.bf16.mxu0 %v4276
      %4617 = vmatpush2.bf16.msra.mxu0 %v4275
      %4618 = vmatprep.subr.bf16.mxu0 %v4268
      %4619 = vmatpush2.bf16.msra.mxu0 %v4267
      %4620 = vmatprep.subr.bf16.mxu0 %v4260
      %4621 = vmatpush2.bf16.msra.mxu0 %v4259
      %4622 = vmatprep.subr.bf16.mxu0 %v4252
      %4623 = vmatpush2.bf16.msra.mxu0 %v4251
      %4624 = vmatprep.subr.bf16.mxu0 %v4244
      %4625 = vmatpush2.bf16.msra.mxu0 %v4243
      %4626 = vmatprep.subr.bf16.mxu0 %v4236
      %4627 = vmatpush2.bf16.msra.mxu0 %v4235
      %4628 = vmatprep.mubr.bf16.mxu0 %v2976
      %4629 = vmatmul.mubr.bf16.gmra.mxu0 %v2975
      %v4630 = vpop.f32.mrf.mxu0
      %v4631 = vadd.f32 %v4590, %v4630
      %v4632 = vpop.f32.mrf.mxu0
      %v4633 = vadd.f32 %v4592, %v4632
      %v4634 = vpop.f32.mrf.mxu0
      %v4635 = vpop.f32.mrf.mxu0
      %4636 = vdwg.mxu0
      %4637 = vmatprep.subr.bf16.mxu0 %v4102
      %4638 = vmatpush1.bf16.msra.mxu0 %v4101
      %4639 = vmatprep.subr.bf16.mxu0 %v4094
      %4640 = vmatpush1.bf16.msra.mxu0 %v4093
      %4641 = vmatprep.subr.bf16.mxu0 %v4086
      %4642 = vmatpush1.bf16.msra.mxu0 %v4085
      %4643 = vmatprep.subr.bf16.mxu0 %v4078
      %4644 = vmatpush1.bf16.msra.mxu0 %v4077
      %4645 = vmatprep.subr.bf16.mxu0 %v4070
      %4646 = vmatpush1.bf16.msra.mxu0 %v4069
      %4647 = vmatprep.subr.bf16.mxu0 %v4062
      %4648 = vmatpush1.bf16.msra.mxu0 %v4061
      %4649 = vmatprep.subr.bf16.mxu0 %v4054
      %4650 = vmatpush1.bf16.msra.mxu0 %v4053
      %4651 = vmatprep.subr.bf16.mxu0 %v4046
      %4652 = vmatpush1.bf16.msra.mxu0 %v4045
      %4653 = vmatprep.subr.bf16.mxu0 %v4166
      %4654 = vmatpush2.bf16.msra.mxu0 %v4165
      %4655 = vmatprep.subr.bf16.mxu0 %v4158
      %4656 = vmatpush2.bf16.msra.mxu0 %v4157
      %4657 = vmatprep.subr.bf16.mxu0 %v4150
      %4658 = vmatpush2.bf16.msra.mxu0 %v4149
      %4659 = vmatprep.subr.bf16.mxu0 %v4142
      %4660 = vmatpush2.bf16.msra.mxu0 %v4141
      %4661 = vmatprep.subr.bf16.mxu0 %v4134
      %4662 = vmatpush2.bf16.msra.mxu0 %v4133
      %4663 = vmatprep.subr.bf16.mxu0 %v4126
      %4664 = vmatpush2.bf16.msra.mxu0 %v4125
      %4665 = vmatprep.subr.bf16.mxu0 %v4118
      %4666 = vmatpush2.bf16.msra.mxu0 %v4117
      %4667 = vmatprep.subr.bf16.mxu0 %v4110
      %4668 = vmatpush2.bf16.msra.mxu0 %v4109
      %4669 = vmatprep.mubr.bf16.mxu0 %v2974
      %4670 = vmatmul.mubr.bf16.gmra.mxu0 %v2973
      %v4671 = vpop.f32.mrf.mxu0
      %v4672 = vadd.f32 %v3246, %v4671
      %v4673 = vpop.f32.mrf.mxu0
      %v4674 = vadd.f32 %v3250, %v4673
      %v4675 = vpop.f32.mrf.mxu0
      %v4676 = vpop.f32.mrf.mxu0
      %4677 = vdwg.mxu0
      %4678 = vmatprep.subr.bf16.mxu0 %v4230
      %4679 = vmatpush1.bf16.msra.mxu0 %v4229
      %4680 = vmatprep.subr.bf16.mxu0 %v4222
      %4681 = vmatpush1.bf16.msra.mxu0 %v4221
      %4682 = vmatprep.subr.bf16.mxu0 %v4214
      %4683 = vmatpush1.bf16.msra.mxu0 %v4213
      %4684 = vmatprep.subr.bf16.mxu0 %v4206
      %4685 = vmatpush1.bf16.msra.mxu0 %v4205
      %4686 = vmatprep.subr.bf16.mxu0 %v4198
      %4687 = vmatpush1.bf16.msra.mxu0 %v4197
      %4688 = vmatprep.subr.bf16.mxu0 %v4190
      %4689 = vmatpush1.bf16.msra.mxu0 %v4189
      %4690 = vmatprep.subr.bf16.mxu0 %v4182
      %4691 = vmatpush1.bf16.msra.mxu0 %v4181
      %4692 = vmatprep.subr.bf16.mxu0 %v4174
      %4693 = vmatpush1.bf16.msra.mxu0 %v4173
      %4694 = vmatprep.subr.bf16.mxu0 %v4294
      %4695 = vmatpush2.bf16.msra.mxu0 %v4293
      %4696 = vmatprep.subr.bf16.mxu0 %v4286
      %4697 = vmatpush2.bf16.msra.mxu0 %v4285
      %4698 = vmatprep.subr.bf16.mxu0 %v4278
      %4699 = vmatpush2.bf16.msra.mxu0 %v4277
      %4700 = vmatprep.subr.bf16.mxu0 %v4270
      %4701 = vmatpush2.bf16.msra.mxu0 %v4269
      %4702 = vmatprep.subr.bf16.mxu0 %v4262
      %4703 = vmatpush2.bf16.msra.mxu0 %v4261
      %4704 = vmatprep.subr.bf16.mxu0 %v4254
      %4705 = vmatpush2.bf16.msra.mxu0 %v4253
      %4706 = vmatprep.subr.bf16.mxu0 %v4246
      %4707 = vmatpush2.bf16.msra.mxu0 %v4245
      %4708 = vmatprep.subr.bf16.mxu0 %v4238
      %4709 = vmatpush2.bf16.msra.mxu0 %v4237
      %4710 = vmatprep.mubr.bf16.mxu0 %v2976
      %4711 = vmatmul.mubr.bf16.gmra.mxu0 %v2975
      %v4712 = vpop.f32.mrf.mxu0
      %v4713 = vadd.f32 %v4672, %v4712
      %v4714 = vpop.f32.mrf.mxu0
      %v4715 = vadd.f32 %v4674, %v4714
      %v4716 = vpop.f32.mrf.mxu0
      %v4717 = vpop.f32.mrf.mxu0
      %4718 = vdwg.mxu0
      %4719 = vmatprep.subr.bf16.mxu0 %v4104
      %4720 = vmatpush1.bf16.msra.mxu0 %v4103
      %4721 = vmatprep.subr.bf16.mxu0 %v4096
      %4722 = vmatpush1.bf16.msra.mxu0 %v4095
      %4723 = vmatprep.subr.bf16.mxu0 %v4088
      %4724 = vmatpush1.bf16.msra.mxu0 %v4087
      %4725 = vmatprep.subr.bf16.mxu0 %v4080
      %4726 = vmatpush1.bf16.msra.mxu0 %v4079
      %4727 = vmatprep.subr.bf16.mxu0 %v4072
      %4728 = vmatpush1.bf16.msra.mxu0 %v4071
      %4729 = vmatprep.subr.bf16.mxu0 %v4064
      %4730 = vmatpush1.bf16.msra.mxu0 %v4063
      %4731 = vmatprep.subr.bf16.mxu0 %v4056
      %4732 = vmatpush1.bf16.msra.mxu0 %v4055
      %4733 = vmatprep.subr.bf16.mxu0 %v4048
      %4734 = vmatpush1.bf16.msra.mxu0 %v4047
      %4735 = vmatprep.subr.bf16.mxu0 %v4168
      %4736 = vmatpush2.bf16.msra.mxu0 %v4167
      %4737 = vmatprep.subr.bf16.mxu0 %v4160
      %4738 = vmatpush2.bf16.msra.mxu0 %v4159
      %4739 = vmatprep.subr.bf16.mxu0 %v4152
      %4740 = vmatpush2.bf16.msra.mxu0 %v4151
      %4741 = vmatprep.subr.bf16.mxu0 %v4144
      %4742 = vmatpush2.bf16.msra.mxu0 %v4143
      %4743 = vmatprep.subr.bf16.mxu0 %v4136
      %4744 = vmatpush2.bf16.msra.mxu0 %v4135
      %4745 = vmatprep.subr.bf16.mxu0 %v4128
      %4746 = vmatpush2.bf16.msra.mxu0 %v4127
      %4747 = vmatprep.subr.bf16.mxu0 %v4120
      %4748 = vmatpush2.bf16.msra.mxu0 %v4119
      %4749 = vmatprep.subr.bf16.mxu0 %v4112
      %4750 = vmatpush2.bf16.msra.mxu0 %v4111
      %4751 = vmatprep.mubr.bf16.mxu0 %v2974
      %4752 = vmatmul.mubr.bf16.gmra.mxu0 %v2973
      %v4753 = vpop.f32.mrf.mxu0
      %v4754 = vadd.f32 %v3254, %v4753
      %v4755 = vpop.f32.mrf.mxu0
      %v4756 = vadd.f32 %v3258, %v4755
      %v4757 = vpop.f32.mrf.mxu0
      %v4758 = vpop.f32.mrf.mxu0
      %4759 = vdwg.mxu0
      %4760 = vmatprep.subr.bf16.mxu0 %v4232
      %4761 = vmatpush1.bf16.msra.mxu0 %v4231
      %4762 = vmatprep.subr.bf16.mxu0 %v4224
      %4763 = vmatpush1.bf16.msra.mxu0 %v4223
      %4764 = vmatprep.subr.bf16.mxu0 %v4216
      %4765 = vmatpush1.bf16.msra.mxu0 %v4215
      %4766 = vmatprep.subr.bf16.mxu0 %v4208
      %4767 = vmatpush1.bf16.msra.mxu0 %v4207
      %4768 = vmatprep.subr.bf16.mxu0 %v4200
      %4769 = vmatpush1.bf16.msra.mxu0 %v4199
      %4770 = vmatprep.subr.bf16.mxu0 %v4192
      %4771 = vmatpush1.bf16.msra.mxu0 %v4191
      %4772 = vmatprep.subr.bf16.mxu0 %v4184
      %4773 = vmatpush1.bf16.msra.mxu0 %v4183
      %4774 = vmatprep.subr.bf16.mxu0 %v4176
      %4775 = vmatpush1.bf16.msra.mxu0 %v4175
      %4776 = vmatprep.subr.bf16.mxu0 %v4296
      %4777 = vmatpush2.bf16.msra.mxu0 %v4295
      %4778 = vmatprep.subr.bf16.mxu0 %v4288
      %4779 = vmatpush2.bf16.msra.mxu0 %v4287
      %4780 = vmatprep.subr.bf16.mxu0 %v4280
      %4781 = vmatpush2.bf16.msra.mxu0 %v4279
      %4782 = vmatprep.subr.bf16.mxu0 %v4272
      %4783 = vmatpush2.bf16.msra.mxu0 %v4271
      %4784 = vmatprep.subr.bf16.mxu0 %v4264
      %4785 = vmatpush2.bf16.msra.mxu0 %v4263
      %4786 = vmatprep.subr.bf16.mxu0 %v4256
      %4787 = vmatpush2.bf16.msra.mxu0 %v4255
      %4788 = vmatprep.subr.bf16.mxu0 %v4248
      %4789 = vmatpush2.bf16.msra.mxu0 %v4247
      %4790 = vmatprep.subr.bf16.mxu0 %v4240
      %4791 = vmatpush2.bf16.msra.mxu0 %v4239
      %4792 = vmatprep.mubr.bf16.mxu0 %v2976
      %4793 = vmatmul.mubr.bf16.gmra.mxu0 %v2975
      %v4794 = vpop.f32.mrf.mxu0
      %v4795 = vadd.f32 %v4754, %v4794
      %v4796 = vpop.f32.mrf.mxu0
      %v4797 = vadd.f32 %v4756, %v4796
      %v4798 = vpop.f32.mrf.mxu0
      %v4799 = vpop.f32.mrf.mxu0
      %4800 = vdwg.mxu0
      %4801 = vmatprep.subr.bf16.mxu0 %v4106
      %4802 = vmatpush1.bf16.msra.mxu0 %v4105
      %4803 = vmatprep.subr.bf16.mxu0 %v4098
      %4804 = vmatpush1.bf16.msra.mxu0 %v4097
      %4805 = vmatprep.subr.bf16.mxu0 %v4090
      %4806 = vmatpush1.bf16.msra.mxu0 %v4089
      %4807 = vmatprep.subr.bf16.mxu0 %v4082
      %4808 = vmatpush1.bf16.msra.mxu0 %v4081
      %4809 = vmatprep.subr.bf16.mxu0 %v4074
      %4810 = vmatpush1.bf16.msra.mxu0 %v4073
      %4811 = vmatprep.subr.bf16.mxu0 %v4066
      %4812 = vmatpush1.bf16.msra.mxu0 %v4065
      %4813 = vmatprep.subr.bf16.mxu0 %v4058
      %4814 = vmatpush1.bf16.msra.mxu0 %v4057
      %4815 = vmatprep.subr.bf16.mxu0 %v4050
      %4816 = vmatpush1.bf16.msra.mxu0 %v4049
      %4817 = vmatprep.subr.bf16.mxu0 %v4170
      %4818 = vmatpush2.bf16.msra.mxu0 %v4169
      %4819 = vmatprep.subr.bf16.mxu0 %v4162
      %4820 = vmatpush2.bf16.msra.mxu0 %v4161
      %4821 = vmatprep.subr.bf16.mxu0 %v4154
      %4822 = vmatpush2.bf16.msra.mxu0 %v4153
      %4823 = vmatprep.subr.bf16.mxu0 %v4146
      %4824 = vmatpush2.bf16.msra.mxu0 %v4145
      %4825 = vmatprep.subr.bf16.mxu0 %v4138
      %4826 = vmatpush2.bf16.msra.mxu0 %v4137
      %4827 = vmatprep.subr.bf16.mxu0 %v4130
      %4828 = vmatpush2.bf16.msra.mxu0 %v4129
      %4829 = vmatprep.subr.bf16.mxu0 %v4122
      %4830 = vmatpush2.bf16.msra.mxu0 %v4121
      %4831 = vmatprep.subr.bf16.mxu0 %v4114
      %4832 = vmatpush2.bf16.msra.mxu0 %v4113
      %4833 = vmatprep.mubr.bf16.mxu0 %v2974
      %4834 = vmatmul.mubr.bf16.gmra.mxu0 %v2973
      %v4835 = vpop.f32.mrf.mxu0
      %v4836 = vadd.f32 %v3262, %v4835
      %v4837 = vpop.f32.mrf.mxu0
      %v4838 = vadd.f32 %v3266, %v4837
      %v4839 = vpop.f32.mrf.mxu0
      %v4840 = vpop.f32.mrf.mxu0
      %4841 = vdwg.mxu0
      %4842 = vmatprep.subr.bf16.mxu0 %v4234
      %4843 = vmatpush1.bf16.msra.mxu0 %v4233
      %4844 = vmatprep.subr.bf16.mxu0 %v4226
      %4845 = vmatpush1.bf16.msra.mxu0 %v4225
      %4846 = vmatprep.subr.bf16.mxu0 %v4218
      %4847 = vmatpush1.bf16.msra.mxu0 %v4217
      %4848 = vmatprep.subr.bf16.mxu0 %v4210
      %4849 = vmatpush1.bf16.msra.mxu0 %v4209
      %4850 = vmatprep.subr.bf16.mxu0 %v4202
      %4851 = vmatpush1.bf16.msra.mxu0 %v4201
      %4852 = vmatprep.subr.bf16.mxu0 %v4194
      %4853 = vmatpush1.bf16.msra.mxu0 %v4193
      %4854 = vmatprep.subr.bf16.mxu0 %v4186
      %4855 = vmatpush1.bf16.msra.mxu0 %v4185
      %4856 = vmatprep.subr.bf16.mxu0 %v4178
      %4857 = vmatpush1.bf16.msra.mxu0 %v4177
      %4858 = vmatprep.subr.bf16.mxu0 %v4298
      %4859 = vmatpush2.bf16.msra.mxu0 %v4297
      %4860 = vmatprep.subr.bf16.mxu0 %v4290
      %4861 = vmatpush2.bf16.msra.mxu0 %v4289
      %4862 = vmatprep.subr.bf16.mxu0 %v4282
      %4863 = vmatpush2.bf16.msra.mxu0 %v4281
      %4864 = vmatprep.subr.bf16.mxu0 %v4274
      %4865 = vmatpush2.bf16.msra.mxu0 %v4273
      %4866 = vmatprep.subr.bf16.mxu0 %v4266
      %4867 = vmatpush2.bf16.msra.mxu0 %v4265
      %4868 = vmatprep.subr.bf16.mxu0 %v4258
      %4869 = vmatpush2.bf16.msra.mxu0 %v4257
      %4870 = vmatprep.subr.bf16.mxu0 %v4250
      %4871 = vmatpush2.bf16.msra.mxu0 %v4249
      %4872 = vmatprep.subr.bf16.mxu0 %v4242
      %4873 = vmatpush2.bf16.msra.mxu0 %v4241
      %4874 = vmatprep.mubr.bf16.mxu0 %v2976
      %4875 = vmatmul.mubr.bf16.gmra.mxu0 %v2975
      %v4876 = vpop.f32.mrf.mxu0
      %v4877 = vadd.f32 %v4836, %v4876
      %v4878 = vpop.f32.mrf.mxu0
      %v4879 = vadd.f32 %v4838, %v4878
      %v4880 = vpop.f32.mrf.mxu0
      %v4881 = vpop.f32.mrf.mxu0
      %4882 = vdwg.mxu0
      %v4883 = vxor.u32 %v4631, 2147483648
      %v4884 = vxor.u32 %v4633, 2147483648
      %v4885 = vmul.f32 %v4883, 1.442695
      %v4886 = vpow.pop %v4885
      %v4887 = vmul.f32 %v4884, 1.442695
      %v4888 = vpow.pop %v4887
      %v4889 = vadd.f32 %v4886, 1.0
      %v4890 = vadd.f32 %v4888, 1.0
      %v4891 = vrcp.pop %v4889
      %v4892 = vmul.f32 1.0, %v4891
      %v4893 = vrcp.pop %v4890
      %v4894 = vmul.f32 1.0, %v4893
      %v4895 = vxor.u32 %v4713, 2147483648
      %v4896 = vxor.u32 %v4715, 2147483648
      %v4897 = vmul.f32 %v4895, 1.442695
      %v4898 = vpow.pop %v4897
      %v4899 = vmul.f32 %v4896, 1.442695
      %v4900 = vpow.pop %v4899
      %v4901 = vadd.f32 %v4898, 1.0
      %v4902 = vadd.f32 %v4900, 1.0
      %v4903 = vrcp.pop %v4901
      %v4904 = vmul.f32 1.0, %v4903
      %v4905 = vrcp.pop %v4902
      %v4906 = vmul.f32 1.0, %v4905
      %v4907 = vtanh.pop %v4795
      %v4908 = vtanh.pop %v4797
      %v4909 = vxor.u32 %v4877, 2147483648
      %v4910 = vxor.u32 %v4879, 2147483648
      %v4911 = vmul.f32 %v4909, 1.442695
      %v4912 = vpow.pop %v4911
      %v4913 = vmul.f32 %v4910, 1.442695
      %v4914 = vpow.pop %v4913
      %v4915 = vadd.f32 %v4912, 1.0
      %v4916 = vadd.f32 %v4914, 1.0
      %v4917 = vrcp.pop %v4915
      %v4918 = vmul.f32 1.0, %v4917
      %v4919 = vrcp.pop %v4916
      %v4920 = vmul.f32 1.0, %v4919
      %v4921 = vmul.f32 %v4904, %v2016
      %v4922 = vmul.f32 %v4906, %v2017
      %v4923 = vmul.f32 %v4892, %v4907
      %v4924 = vmul.f32 %v4894, %v4908
      %v4925 = vadd.f32 %v4921, %v4923
      %v4926 = vadd.f32 %v4922, %v4924
      %v4927 = vtanh.pop %v4925
      %v4928 = vtanh.pop %v4926
      %v4929 = vmul.f32 %v4918, %v4927
      %v4930 = vmul.f32 %v4920, %v4928
    $region30: #{conv_attention_lstm_forward.5} parent=1 // loop_footer
      %s2013 = sadd.s32 1, %s2009
    $region31: #{conv_attention_lstm_forward.5} parent=1 // loop_footer_branch
      %2008 = sbr.rel target = $region27
    $region32: #{conv_attention_lstm_forward.5} parent=1 // loop_exit
      _
    %v4931 = vpack.c.bf16 %v2014, %v2014
    %v4932 = vpack.c.bf16 %v2015, %v2015
    %v4933 = vld [vmem:[%s4] sm:$0xff]
    %v4934 = vld [vmem:[%s4 + $0x8] sm:$0xff]
    %v4935 = vld [vmem:[%s4 + $0x10] sm:$0xff]
    %v4936 = vld [vmem:[%s4 + $0x18] sm:$0xff]
    %v4937 = vld [vmem:[%s4 + $0x20] sm:$0xff]
    %v4938 = vld [vmem:[%s4 + $0x28] sm:$0xff]
    %v4939 = vld [vmem:[%s4 + $0x30] sm:$0xff]
    %v4940 = vld [vmem:[%s4 + $0x38] sm:$0xff]
    %v4941 = vld [vmem:[%s4 + $0x40] sm:$0xff]
    %v4942 = vld [vmem:[%s4 + $0x48] sm:$0xff]
    %v4943 = vld [vmem:[%s4 + $0x50] sm:$0xff]
    %v4944 = vld [vmem:[%s4 + $0x58] sm:$0xff]
    %v4945 = vld [vmem:[%s4 + $0x60] sm:$0xff]
    %v4946 = vld [vmem:[%s4 + $0x68] sm:$0xff]
    %v4947 = vld [vmem:[%s4 + $0x70] sm:$0xff]
    %v4948 = vld [vmem:[%s4 + $0x78] sm:$0xff]
    %v4949 = vld [vmem:[%s4 + $0x80] sm:$0xff]
    %v4950 = vld [vmem:[%s4 + $0x88] sm:$0xff]
    %v4951 = vld [vmem:[%s4 + $0x90] sm:$0xff]
    %v4952 = vld [vmem:[%s4 + $0x98] sm:$0xff]
    %v4953 = vld [vmem:[%s4 + $0xa0] sm:$0xff]
    %v4954 = vld [vmem:[%s4 + $0xa8] sm:$0xff]
    %v4955 = vld [vmem:[%s4 + $0xb0] sm:$0xff]
    %v4956 = vld [vmem:[%s4 + $0xb8] sm:$0xff]
    %v4957 = vld [vmem:[%s4 + $0xc0] sm:$0xff]
    %v4958 = vld [vmem:[%s4 + $0xc8] sm:$0xff]
    %v4959 = vld [vmem:[%s4 + $0xd0] sm:$0xff]
    %v4960 = vld [vmem:[%s4 + $0xd8] sm:$0xff]
    %v4961 = vld [vmem:[%s4 + $0xe0] sm:$0xff]
    %v4962 = vld [vmem:[%s4 + $0xe8] sm:$0xff]
    %v4963 = vld [vmem:[%s4 + $0xf0] sm:$0xff]
    %v4964 = vld [vmem:[%s4 + $0xf8] sm:$0xff]
    %v4965 = vld [vmem:[%s5] sm:$0x3]
    %v4967 = vlaneseq
    %v4968 = vshrl.u32 %v4967, 7
    %v4969 = vsub.s32 0, %v4968
    %v4970 = vrot.slane %v4965, %v4969
    %v4971 = vlaneseq
    %v4972 = vshrl.u32 %v4971, 7
    %v4973 = vsub.s32 1, %v4972
    %v4974 = vrot.slane %v4965, %v4973
    %v5009 = vunpack.c.l.b16 %v4933
    %v5010 = vunpack.c.h.b16 %v4933
    %v5011 = vunpack.c.l.b16 %v4934
    %v5012 = vunpack.c.h.b16 %v4934
    %v5013 = vunpack.c.l.b16 %v4935
    %v5014 = vunpack.c.h.b16 %v4935
    %v5015 = vunpack.c.l.b16 %v4936
    %v5016 = vunpack.c.h.b16 %v4936
    %v5017 = vunpack.c.l.b16 %v4937
    %v5018 = vunpack.c.h.b16 %v4937
    %v5019 = vunpack.c.l.b16 %v4938
    %v5020 = vunpack.c.h.b16 %v4938
    %v5021 = vunpack.c.l.b16 %v4939
    %v5022 = vunpack.c.h.b16 %v4939
    %v5023 = vunpack.c.l.b16 %v4940
    %v5024 = vunpack.c.h.b16 %v4940
    %v5025 = vunpack.c.l.b16 %v4941
    %v5026 = vunpack.c.h.b16 %v4941
    %v5027 = vunpack.c.l.b16 %v4942
    %v5028 = vunpack.c.h.b16 %v4942
    %v5029 = vunpack.c.l.b16 %v4943
    %v5030 = vunpack.c.h.b16 %v4943
    %v5031 = vunpack.c.l.b16 %v4944
    %v5032 = vunpack.c.h.b16 %v4944
    %v5033 = vunpack.c.l.b16 %v4945
    %v5034 = vunpack.c.h.b16 %v4945
    %v5035 = vunpack.c.l.b16 %v4946
    %v5036 = vunpack.c.h.b16 %v4946
    %v5037 = vunpack.c.l.b16 %v4947
    %v5038 = vunpack.c.h.b16 %v4947
    %v5039 = vunpack.c.l.b16 %v4948
    %v5040 = vunpack.c.h.b16 %v4948
    %v5041 = vunpack.c.l.b16 %v4949
    %v5042 = vunpack.c.h.b16 %v4949
    %v5043 = vunpack.c.l.b16 %v4950
    %v5044 = vunpack.c.h.b16 %v4950
    %v5045 = vunpack.c.l.b16 %v4951
    %v5046 = vunpack.c.h.b16 %v4951
    %v5047 = vunpack.c.l.b16 %v4952
    %v5048 = vunpack.c.h.b16 %v4952
    %v5049 = vunpack.c.l.b16 %v4953
    %v5050 = vunpack.c.h.b16 %v4953
    %v5051 = vunpack.c.l.b16 %v4954
    %v5052 = vunpack.c.h.b16 %v4954
    %v5053 = vunpack.c.l.b16 %v4955
    %v5054 = vunpack.c.h.b16 %v4955
    %v5055 = vunpack.c.l.b16 %v4956
    %v5056 = vunpack.c.h.b16 %v4956
    %v5057 = vunpack.c.l.b16 %v4957
    %v5058 = vunpack.c.h.b16 %v4957
    %v5059 = vunpack.c.l.b16 %v4958
    %v5060 = vunpack.c.h.b16 %v4958
    %v5061 = vunpack.c.l.b16 %v4959
    %v5062 = vunpack.c.h.b16 %v4959
    %v5063 = vunpack.c.l.b16 %v4960
    %v5064 = vunpack.c.h.b16 %v4960
    %v5065 = vunpack.c.l.b16 %v4961
    %v5066 = vunpack.c.h.b16 %v4961
    %v5067 = vunpack.c.l.b16 %v4962
    %v5068 = vunpack.c.h.b16 %v4962
    %v5069 = vunpack.c.l.b16 %v4963
    %v5070 = vunpack.c.h.b16 %v4963
    %v5071 = vunpack.c.l.b16 %v4964
    %v5072 = vunpack.c.h.b16 %v4964
    %v5073 = vpack.c.b16 %v5011, %v5009
    %v5074 = vpack.c.b16 %v5012, %v5010
    %v5075 = vpack.c.b16 %v5015, %v5013
    %v5076 = vpack.c.b16 %v5016, %v5014
    %v5077 = vpack.c.b16 %v5019, %v5017
    %v5078 = vpack.c.b16 %v5020, %v5018
    %v5079 = vpack.c.b16 %v5023, %v5021
    %v5080 = vpack.c.b16 %v5024, %v5022
    %v5081 = vpack.c.b16 %v5027, %v5025
    %v5082 = vpack.c.b16 %v5028, %v5026
    %v5083 = vpack.c.b16 %v5031, %v5029
    %v5084 = vpack.c.b16 %v5032, %v5030
    %v5085 = vpack.c.b16 %v5035, %v5033
    %v5086 = vpack.c.b16 %v5036, %v5034
    %v5087 = vpack.c.b16 %v5039, %v5037
    %v5088 = vpack.c.b16 %v5040, %v5038
    %v5089 = vpack.c.b16 %v5043, %v5041
    %v5090 = vpack.c.b16 %v5044, %v5042
    %v5091 = vpack.c.b16 %v5047, %v5045
    %v5092 = vpack.c.b16 %v5048, %v5046
    %v5093 = vpack.c.b16 %v5051, %v5049
    %v5094 = vpack.c.b16 %v5052, %v5050
    %v5095 = vpack.c.b16 %v5055, %v5053
    %v5096 = vpack.c.b16 %v5056, %v5054
    %v5097 = vpack.c.b16 %v5059, %v5057
    %v5098 = vpack.c.b16 %v5060, %v5058
    %v5099 = vpack.c.b16 %v5063, %v5061
    %v5100 = vpack.c.b16 %v5064, %v5062
    %v5101 = vpack.c.b16 %v5067, %v5065
    %v5102 = vpack.c.b16 %v5068, %v5066
    %v5103 = vpack.c.b16 %v5071, %v5069
    %v5104 = vpack.c.b16 %v5072, %v5070
    %5137 = vmatprep.subr.bf16.mxu0 %v5088
    %5138 = vmatpush1.bf16.msra.mxu0 %v5087
    %5139 = vmatprep.subr.bf16.mxu0 %v5086
    %5140 = vmatpush1.bf16.msra.mxu0 %v5085
    %5141 = vmatprep.subr.bf16.mxu0 %v5084
    %5142 = vmatpush1.bf16.msra.mxu0 %v5083
    %5143 = vmatprep.subr.bf16.mxu0 %v5082
    %5144 = vmatpush1.bf16.msra.mxu0 %v5081
    %5145 = vmatprep.subr.bf16.mxu0 %v5080
    %5146 = vmatpush1.bf16.msra.mxu0 %v5079
    %5147 = vmatprep.subr.bf16.mxu0 %v5078
    %5148 = vmatpush1.bf16.msra.mxu0 %v5077
    %5149 = vmatprep.subr.bf16.mxu0 %v5076
    %5150 = vmatpush1.bf16.msra.mxu0 %v5075
    %5151 = vmatprep.subr.bf16.mxu0 %v5074
    %5152 = vmatpush1.bf16.msra.mxu0 %v5073
    %5153 = vmatprep.subr.bf16.mxu0 %v5104
    %5154 = vmatpush2.bf16.msra.mxu0 %v5103
    %5155 = vmatprep.subr.bf16.mxu0 %v5102
    %5156 = vmatpush2.bf16.msra.mxu0 %v5101
    %5157 = vmatprep.subr.bf16.mxu0 %v5100
    %5158 = vmatpush2.bf16.msra.mxu0 %v5099
    %5159 = vmatprep.subr.bf16.mxu0 %v5098
    %5160 = vmatpush2.bf16.msra.mxu0 %v5097
    %5161 = vmatprep.subr.bf16.mxu0 %v5096
    %5162 = vmatpush2.bf16.msra.mxu0 %v5095
    %5163 = vmatprep.subr.bf16.mxu0 %v5094
    %5164 = vmatpush2.bf16.msra.mxu0 %v5093
    %5165 = vmatprep.subr.bf16.mxu0 %v5092
    %5166 = vmatpush2.bf16.msra.mxu0 %v5091
    %5167 = vmatprep.subr.bf16.mxu0 %v5090
    %5168 = vmatpush2.bf16.msra.mxu0 %v5089
    %5169 = vmatprep.mubr.bf16.mxu0 %v4932
    %5170 = vmatmul.mubr.bf16.gmra.mxu0 %v4931
    %v5171 = vpop.f32.mrf.mxu0
    %v5172 = vadd.f32 %v4970, %v5171
    %v5173 = vpop.f32.mrf.mxu0
    %v5174 = vadd.f32 %v4974, %v5173
    %v5175 = vpop.f32.mrf.mxu0
    %v5176 = vpop.f32.mrf.mxu0
    %5177 = vdwg.mxu0
    %v5180 = vcombine.low %v5172, %v5174
    %v5182 = vunpack.c.l.s4 1983009808
    %v5183 = vunpack.c.0.s8 %v5182
    %v5184 = vlaneseq
    %v5185 = vshrl.u32 %v5184, 7
    %v5186 = vsub.s32 %v5183, %v5185
    %v5187 = vrot.slane %v5180, %v5186
    %5189 = vst [vmem:[#allocation4] sm:$0xf] %v5187
    // Predicated region
    $region33: #{conv_attention_lstm_forward.5} parent=1 // pred_check
      _
    $region34: #{conv_attention_lstm_forward.5} parent=1 // pred_check_branch
      %5191 = sbr.rel (0) target = $region36
    $region35: #{conv_attention_lstm_forward.5} parent=1 // pred_region
      %s5193 = ssub.s32 64, 64
      %5194 = vsyncadd [#allocation5], %s5193
      %s5196 = sshll.u32 [#allocation4], 4
      %s5197 = int_to_ptr.vmem [resolvable:$true] %s5196
      %5199 = dma.vmem_to_hbm [thread:$0]  %s5197, 64, %s6, [#allocation5]
    $region36: #{conv_attention_lstm_forward.5} parent=1 // pred_fallthru
      _
    // Predicated region
    $region37: #{conv_attention_lstm_forward.5} parent=1 // pred_check
      _
    $region38: #{conv_attention_lstm_forward.5} parent=1 // pred_check_branch
      %5201 = sbr.rel (0) target = $region40
    $region39: #{conv_attention_lstm_forward.5} parent=1 // pred_region
      %5202 = dma.done [#allocation5], 64
    $region40: #{conv_attention_lstm_forward.5} parent=1 // pred_fallthru
      _
    %5203 = vsyncpa [#allocation5], 1

</llo_original>
